<compile_context>
chip_gen: v6e
topology: v6e:2x2x1
jax: 0.10.0
libtpu: 0.0.40
codegen_flags: <defaults>
</compile_context>

<pallas_src>
import functools
import math

import jax
import jax.numpy as jnp
from jax.experimental import pallas as pl
from jax.experimental.pallas import tpu as pltpu

_VMEM_LIMIT = 32 * 1024 * 1024
_LN_EPS = 1e-5  # PyTorch nn.LayerNorm default

# Row layout of the packed (16, D) f32 parameter slab.
_R_BQ, _R_BK, _R_BV, _R_B1, _R_B2, _R_G1, _R_BE1, _R_G2, _R_BE2 = range(9)
_PACK_ROWS = 16  # padded to a sublane multiple


def _layernorm(t, gamma, beta):
    mu = jnp.mean(t, axis=-1, keepdims=True)
    ctr = t - mu
    var = jnp.mean(ctr * ctr, axis=-1, keepdims=True)
    return ctr * jax.lax.rsqrt(var + _LN_EPS) * gamma + beta


# --------------------------------------------------------------------------
# Pallas kernel: whole InitialEncoder forward for `blk` batch elements
# --------------------------------------------------------------------------
def _initial_encoder_kernel(lam_ref,                       # scalar prefetch (SMEM)
                            x_ref, wqkv_ref, w1_ref, w2_ref, p_ref,
                            o_ref, *, blk, seq, d):
    x = x_ref[...].reshape(blk * seq, d)                   # (M, D) f32, M = blk*S
    xb = x.astype(jnp.bfloat16)

    # ---- fused QKV projection: one bf16 MXU pass, f32 accumulation ---------
    qkv = jnp.dot(xb, wqkv_ref[...], preferred_element_type=jnp.float32)  # (M, 3D)

    # lane-aligned slices at D-lane boundaries; f32 bias adds.
    # 1/sqrt(D) is pre-folded into the Q weight and bias at pack time.
    q = (qkv[:, 0:d]         + p_ref[_R_BQ:_R_BQ + 1, :]).astype(jnp.bfloat16)
    k = (qkv[:, d:2 * d]     + p_ref[_R_BK:_R_BK + 1, :]).astype(jnp.bfloat16)
    v = (qkv[:, 2 * d:3 * d] + p_ref[_R_BV:_R_BV + 1, :]).astype(jnp.bfloat16)

    qb = q.reshape(blk, seq, d)
    kb = k.reshape(blk, seq, d)
    vb = v.reshape(blk, seq, d)

    # scores = q @ k^T (scale already folded into q); softmax over keys
    scores = jnp.einsum("bqd,bkd->bqk", qb, kb,
                        preferred_element_type=jnp.float32)         # (blk, S, S)
    m = jnp.max(scores, axis=-1, keepdims=True)
    e = jnp.exp(scores - m)
    denom = jnp.sum(e, axis=-1, keepdims=True)
    attn = e * pl.reciprocal(denom, approx=True)

    weighted = jnp.einsum("bqk,bkd->bqd", attn.astype(jnp.bfloat16), vb,
                          preferred_element_type=jnp.float32).reshape(blk * seq, d)

    # ---- lambda residual mix:  x*lam + weighted*(1-lam) == weighted + lam*(x-weighted)
    lam = lam_ref[0]
    mixed = weighted + lam * (x - weighted)

    # ---- LN1 -> fc1 -> residual -> LN2 -> fc2 -------------------------------
    h = _layernorm(mixed, p_ref[_R_G1:_R_G1 + 1, :], p_ref[_R_BE1:_R_BE1 + 1, :])
    h_fc1 = jnp.dot(h.astype(jnp.bfloat16), w1_ref[...],
                    preferred_element_type=jnp.float32) + p_ref[_R_B1:_R_B1 + 1, :]
    h2 = _layernorm(h + h_fc1, p_ref[_R_G2:_R_G2 + 1, :], p_ref[_R_BE2:_R_BE2 + 1, :])
    out = jnp.dot(h2.astype(jnp.bfloat16), w2_ref[...],
                  preferred_element_type=jnp.float32) + p_ref[_R_B2:_R_B2 + 1, :]

    o_ref[...] = out.reshape(blk, seq, d).astype(o_ref.dtype)


# --------------------------------------------------------------------------
# Parameter packing (done once, outside the jitted forward)
# --------------------------------------------------------------------------
def prepare_kernel_params(params, D):
    inv = 1.0 / math.sqrt(D)
    wqkv_t = jnp.concatenate(
        [params["wq_t"] * inv, params["wk_t"], params["wv_t"]], axis=1
    ).astype(jnp.bfloat16)                                  # (D, 3D)
    w1_t = params["w1_t"].astype(jnp.bfloat16)
    w2_t = params["w2_t"].astype(jnp.bfloat16)

    rows = [params["bq"] * inv, params["bk"], params["bv"],
            params["b1"], params["b2"],
            params["ln1_g"], params["ln1_b"], params["ln2_g"], params["ln2_b"]]
    pad = jnp.zeros((_PACK_ROWS - len(rows), D), jnp.float32)
    packed = jnp.concatenate(rows + [pad], axis=0)          # (16, D) f32

    lam = jnp.reshape(params["lambda"], (1,)).astype(jnp.float32)
    return {"wqkv_t": wqkv_t, "w1_t": w1_t, "w2_t": w2_t,
            "packed": packed, "lam": lam}


# --------------------------------------------------------------------------
# Wrapper
# --------------------------------------------------------------------------
def initial_encoder_forward(x, kp, *, block_b=1):
    # x: (B, S, D) float32.  block_b=1 keeps the batch grid axis available for
    # v7x megacore sharding at small B; use block_b=2..4 on v5e/v6e when B allows.
    B, S, D = x.shape
    assert B % block_b == 0
    kern = functools.partial(_initial_encoder_kernel, blk=block_b, seq=S, d=D)

    # index_maps receive (grid index, *scalar-prefetch refs)
    x_spec = pl.BlockSpec((block_b, S, D), lambda b, lam_ref: (b, 0, 0))
    wqkv_spec = pl.BlockSpec((D, 3 * D), lambda b, lam_ref: (0, 0))   # grid-invariant
    w_spec = pl.BlockSpec((D, D), lambda b, lam_ref: (0, 0))          # grid-invariant
    p_spec = pl.BlockSpec((_PACK_ROWS, D), lambda b, lam_ref: (0, 0))

    grid_spec = pltpu.PrefetchScalarGridSpec(
        num_scalar_prefetch=1,
        grid=(B // block_b,),
        in_specs=[x_spec, wqkv_spec, w_spec, w_spec, p_spec],
        out_specs=pl.BlockSpec((block_b, S, D), lambda b, lam_ref: (b, 0, 0)),
    )

    cost = pl.CostEstimate(
        flops=2 * B * S * D * (5 * D) + 4 * B * S * S * D,
        transcendentals=B * S * S + B * S,
        bytes_accessed=(5 * D * D) * 2 + _PACK_ROWS * D * 4 + 2 * B * S * D * 4,
    )

    return pl.pallas_call(
        kern,
        out_shape=jax.ShapeDtypeStruct((B, S, D), jnp.float32),
        grid_spec=grid_spec,
        cost_estimate=cost,
        compiler_params=pltpu.CompilerParams(
            dimension_semantics=("parallel",),   # shard batch across TCs (v7x)
            vmem_limit_bytes=_VMEM_LIMIT),
    )(kp["lam"], x, kp["wqkv_t"], kp["w1_t"], kp["w2_t"], kp["packed"])


# --------------------------------------------------------------------------
# Pure-JAX reference (f32 weights, faithful to the PyTorch module)
# --------------------------------------------------------------------------
def initial_encoder_ref(x, params):
    D = x.shape[-1]

    def lin(t, w_t, b):
        return t @ w_t + b

    q = lin(x, params["wq_t"], params["bq"])
    k = lin(x, params["wk_t"], params["bk"])
    v = lin(x, params["wv_t"], params["bv"])
    scores = jnp.einsum("bqd,bkd->bqk", q, k) / math.sqrt(D)
    attn = jax.nn.softmax(scores, axis=-1)
    weighted = jnp.einsum("bqk,bkd->bqd", attn, v)

    lam = params["lambda"]
    mixed = x * lam + weighted * (1.0 - lam)

    def ln(t, g, b):
        mu = jnp.mean(t, -1, keepdims=True)
        var = jnp.mean((t - mu) ** 2, -1, keepdims=True)
        return (t - mu) / jnp.sqrt(var + _LN_EPS) * g + b

    h = ln(mixed, params["ln1_g"], params["ln1_b"])
    h2 = ln(h + lin(h, params["w1_t"], params["b1"]),
            params["ln2_g"], params["ln2_b"])
    return lin(h2, params["w2_t"], params["b2"])


# --------------------------------------------------------------------------
# Deterministic parameter construction (PyTorch-style Linear init, f32)
# --------------------------------------------------------------------------
def build_params(key, D):
    ks = jax.random.split(key, 11)
    lim = 1.0 / math.sqrt(D)

    def linear(kw, kb):
        w = jax.random.uniform(kw, (D, D), jnp.float32, -lim, lim)   # (out, in)
        b = jax.random.uniform(kb, (D,), jnp.float32, -lim, lim)
        return w.T, b.reshape(1, D)                                  # store (in, out)

    wq_t, bq = linear(ks[0], ks[1])
    wk_t, bk = linear(ks[2], ks[3])
    wv_t, bv = linear(ks[4], ks[5])
    w1_t, b1 = linear(ks[6], ks[7])
    w2_t, b2 = linear(ks[8], ks[9])
    # PyTorch inits lambda_ to 1.0 (which zeroes the attention branch); use a
    # deterministic value in (0, 1) so the whole datapath is exercised.
    lam = jax.random.uniform(ks[10], (), jnp.float32, 0.25, 0.75)

    return {
        "wq_t": wq_t, "bq": bq, "wk_t": wk_t, "bk": bk, "wv_t": wv_t, "bv": bv,
        "w1_t": w1_t, "b1": b1, "w2_t": w2_t, "b2": b2,
        "ln1_g": jnp.ones((1, D), jnp.float32), "ln1_b": jnp.zeros((1, D), jnp.float32),
        "ln2_g": jnp.ones((1, D), jnp.float32), "ln2_b": jnp.zeros((1, D), jnp.float32),
        "lambda": lam,
    }


if __name__ == "__main__":
    key = jax.random.PRNGKey(0)
    k_x, k_p = jax.random.split(key)

    B, S, D = 2, 128, 512          # input_dim = 512 is the module default
    params = build_params(k_p, D)
    kparams = prepare_kernel_params(params, D)
    x = jax.random.normal(k_x, (B, S, D), jnp.float32)

    fwd = jax.jit(functools.partial(initial_encoder_forward, block_b=1))
    out = jax.block_until_ready(fwd(x, kparams))

    assert out.shape == (B, S, D), out.shape
    assert bool(jnp.all(jnp.isfinite(out)))

    ref = initial_encoder_ref(x, params)
    rel_err = float(jnp.linalg.norm(out - ref) / (jnp.linalg.norm(ref) + 1e-6))
    max_abs = float(jnp.max(jnp.abs(out - ref)))
    assert rel_err < 5e-2, rel_err          # bf16 operands, f32 accumulate
    assert max_abs < 2e-1, max_abs          # per-element sanity check

    print("KERNEL_OK")
</pallas_src>

<mosaic_0001>
module attributes {stable_mosaic.version = 11 : i64} {
  func.func @_initial_encoder_kernel(%arg0: i32, %arg1: memref<1xf32, #tpu.memory_space<smem>>, %arg2: memref<1x128x512xf32, #tpu.memory_space<vmem>>, %arg3: memref<512x1536xbf16, #tpu.memory_space<vmem>>, %arg4: memref<512x512xbf16, #tpu.memory_space<vmem>>, %arg5: memref<512x512xbf16, #tpu.memory_space<vmem>>, %arg6: memref<16x512xf32, #tpu.memory_space<vmem>>, %arg7: memref<1x128x512xf32, #tpu.memory_space<vmem>>) attributes {dimension_semantics = [#tpu.dimension_semantics<parallel>], iteration_bounds = array<i64: 2>, scalar_prefetch = 1 : i64, scratch_operands = 0 : i64, tpu.core_type = #tpu.core_type<tc>, window_params = [{transform_indices = @transform_0, window_bounds = array<i64: 1, 128, 512>}, {pipeline_mode = #tpu.pipeline_mode<synchronous>, transform_indices = @transform_1, window_bounds = array<i64: 512, 1536>}, {pipeline_mode = #tpu.pipeline_mode<synchronous>, transform_indices = @transform_2, window_bounds = array<i64: 512, 512>}, {pipeline_mode = #tpu.pipeline_mode<synchronous>, transform_indices = @transform_3, window_bounds = array<i64: 512, 512>}, {pipeline_mode = #tpu.pipeline_mode<synchronous>, transform_indices = @transform_4, window_bounds = array<i64: 16, 512>}, {transform_indices = @transform_5, window_bounds = array<i64: 1, 128, 512>}]} {
    %c0 = arith.constant 0 : index
    %c0_0 = arith.constant 0 : index
    %c0_1 = arith.constant 0 : index
    %0 = vector.load %arg2[%c0, %c0_0, %c0_1] : memref<1x128x512xf32, #tpu.memory_space<vmem>>, vector<1x128x512xf32>
    %1 = vector.shape_cast %0 : vector<1x128x512xf32> to vector<128x512xf32>
    %2 = arith.truncf %1 : vector<128x512xf32> to vector<128x512xbf16>
    %c0_2 = arith.constant 0 : index
    %c0_3 = arith.constant 0 : index
    %3 = vector.load %arg3[%c0_2, %c0_3] : memref<512x1536xbf16, #tpu.memory_space<vmem>>, vector<512x1536xbf16>
    %cst = arith.constant dense<0.000000e+00> : vector<128x1536xf32>
    %4 = tpu.matmul %2, %3, %cst {dimension_numbers = #tpu.dot_dimension_numbers<[1], [0], [0], [1], [0, 0, 1, 1], [], []>} : vector<128x512xbf16>, vector<512x1536xbf16>, vector<128x1536xf32> -> vector<128x1536xf32>
    %5 = vector.extract_strided_slice %4 {offsets = [0, 0], sizes = [128, 512], strides = [1, 1]} : vector<128x1536xf32> to vector<128x512xf32>
    %c0_4 = arith.constant 0 : index
    %c0_5 = arith.constant 0 : index
    %6 = vector.load %arg6[%c0_4, %c0_5] : memref<16x512xf32, #tpu.memory_space<vmem>>, vector<1x512xf32>
    %7 = vector.broadcast %6 : vector<1x512xf32> to vector<128x512xf32>
    %8 = arith.addf %5, %7 : vector<128x512xf32>
    %9 = arith.truncf %8 : vector<128x512xf32> to vector<128x512xbf16>
    %10 = vector.extract_strided_slice %4 {offsets = [0, 512], sizes = [128, 512], strides = [1, 1]} : vector<128x1536xf32> to vector<128x512xf32>
    %c1 = arith.constant 1 : index
    %c0_6 = arith.constant 0 : index
    %11 = vector.load %arg6[%c1, %c0_6] : memref<16x512xf32, #tpu.memory_space<vmem>>, vector<1x512xf32>
    %12 = vector.broadcast %11 : vector<1x512xf32> to vector<128x512xf32>
    %13 = arith.addf %10, %12 : vector<128x512xf32>
    %14 = arith.truncf %13 : vector<128x512xf32> to vector<128x512xbf16>
    %15 = vector.extract_strided_slice %4 {offsets = [0, 1024], sizes = [128, 512], strides = [1, 1]} : vector<128x1536xf32> to vector<128x512xf32>
    %c2 = arith.constant 2 : index
    %c0_7 = arith.constant 0 : index
    %16 = vector.load %arg6[%c2, %c0_7] : memref<16x512xf32, #tpu.memory_space<vmem>>, vector<1x512xf32>
    %17 = vector.broadcast %16 : vector<1x512xf32> to vector<128x512xf32>
    %18 = arith.addf %15, %17 : vector<128x512xf32>
    %19 = arith.truncf %18 : vector<128x512xf32> to vector<128x512xbf16>
    %20 = vector.shape_cast %9 : vector<128x512xbf16> to vector<1x128x512xbf16>
    %21 = vector.shape_cast %14 : vector<128x512xbf16> to vector<1x128x512xbf16>
    %22 = vector.shape_cast %19 : vector<128x512xbf16> to vector<1x128x512xbf16>
    "tpu.trace_start"() <{level = 10 : i32, message = "bqd,bkd->bqk"}> : () -> ()
    %cst_8 = arith.constant dense<0.000000e+00> : vector<1x128x128xf32>
    %23 = tpu.matmul %20, %21, %cst_8 {dimension_numbers = #tpu.dot_dimension_numbers<[2], [2], [1], [1], [0, 0, 0, 1, 1, 1], [0], [0]>} : vector<1x128x512xbf16>, vector<1x128x512xbf16>, vector<1x128x128xf32> -> vector<1x128x128xf32>
    "tpu.trace_stop"() : () -> ()
    %cst_9 = arith.constant dense<0xFF800000> : vector<1x128xf32>
    %24 = vector.multi_reduction <maximumf>, %23, %cst_9 [2] : vector<1x128x128xf32> to vector<1x128xf32>
    %25 = vector.shape_cast %24 : vector<1x128xf32> to vector<1x128x1xf32>
    %26 = vector.broadcast %25 : vector<1x128x1xf32> to vector<1x128x128xf32>
    %27 = arith.subf %23, %26 : vector<1x128x128xf32>
    %28 = math.exp %27 : vector<1x128x128xf32>
    %cst_10 = arith.constant dense<0.000000e+00> : vector<1x128xf32>
    %29 = vector.multi_reduction <add>, %28, %cst_10 [2] : vector<1x128x128xf32> to vector<1x128xf32>
    %30 = vector.shape_cast %29 : vector<1x128xf32> to vector<1x128x1xf32>
    %31 = tpu.reciprocal %30 {approx = true} : vector<1x128x1xf32> -> vector<1x128x1xf32>
    %32 = vector.broadcast %31 : vector<1x128x1xf32> to vector<1x128x128xf32>
    %33 = arith.mulf %28, %32 : vector<1x128x128xf32>
    %34 = arith.truncf %33 : vector<1x128x128xf32> to vector<1x128x128xbf16>
    "tpu.trace_start"() <{level = 10 : i32, message = "bqk,bkd->bqd"}> : () -> ()
    %cst_11 = arith.constant dense<0.000000e+00> : vector<1x128x512xf32>
    %35 = tpu.matmul %34, %22, %cst_11 {dimension_numbers = #tpu.dot_dimension_numbers<[2], [1], [1], [2], [0, 0, 0, 1, 1, 2], [0], [0]>} : vector<1x128x128xbf16>, vector<1x128x512xbf16>, vector<1x128x512xf32> -> vector<1x128x512xf32>
    "tpu.trace_stop"() : () -> ()
    %36 = vector.shape_cast %35 : vector<1x128x512xf32> to vector<128x512xf32>
    %c0_12 = arith.constant 0 : index
    %37 = memref.load %arg1[%c0_12] : memref<1xf32, #tpu.memory_space<smem>>
    %38 = arith.subf %1, %36 : vector<128x512xf32>
    %39 = vector.broadcast %37 : f32 to vector<128x512xf32>
    %40 = arith.mulf %39, %38 : vector<128x512xf32>
    %41 = arith.addf %36, %40 : vector<128x512xf32>
    %c5 = arith.constant 5 : index
    %c0_13 = arith.constant 0 : index
    %42 = vector.load %arg6[%c5, %c0_13] : memref<16x512xf32, #tpu.memory_space<vmem>>, vector<1x512xf32>
    %c6 = arith.constant 6 : index
    %c0_14 = arith.constant 0 : index
    %43 = vector.load %arg6[%c6, %c0_14] : memref<16x512xf32, #tpu.memory_space<vmem>>, vector<1x512xf32>
    %cst_15 = arith.constant dense<0.000000e+00> : vector<128xf32>
    %44 = vector.multi_reduction <add>, %41, %cst_15 [1] : vector<128x512xf32> to vector<128xf32>
    %45 = vector.shape_cast %44 : vector<128xf32> to vector<128x1xf32>
    %cst_16 = arith.constant 5.120000e+02 : f32
    %46 = vector.broadcast %cst_16 : f32 to vector<128x1xf32>
    %47 = arith.divf %45, %46 : vector<128x1xf32>
    %48 = vector.broadcast %47 : vector<128x1xf32> to vector<128x512xf32>
    %49 = arith.subf %41, %48 : vector<128x512xf32>
    %50 = arith.mulf %49, %49 : vector<128x512xf32>
    %cst_17 = arith.constant dense<0.000000e+00> : vector<128xf32>
    %51 = vector.multi_reduction <add>, %50, %cst_17 [1] : vector<128x512xf32> to vector<128xf32>
    %52 = vector.shape_cast %51 : vector<128xf32> to vector<128x1xf32>
    %cst_18 = arith.constant 5.120000e+02 : f32
    %53 = vector.broadcast %cst_18 : f32 to vector<128x1xf32>
    %54 = arith.divf %52, %53 : vector<128x1xf32>
    %cst_19 = arith.constant 9.99999974E-6 : f32
    %55 = vector.broadcast %cst_19 : f32 to vector<128x1xf32>
    %56 = arith.addf %54, %55 : vector<128x1xf32>
    %57 = math.rsqrt %56 : vector<128x1xf32>
    %58 = vector.broadcast %57 : vector<128x1xf32> to vector<128x512xf32>
    %59 = arith.mulf %49, %58 : vector<128x512xf32>
    %60 = vector.broadcast %42 : vector<1x512xf32> to vector<128x512xf32>
    %61 = arith.mulf %59, %60 : vector<128x512xf32>
    %62 = vector.broadcast %43 : vector<1x512xf32> to vector<128x512xf32>
    %63 = arith.addf %61, %62 : vector<128x512xf32>
    %64 = arith.truncf %63 : vector<128x512xf32> to vector<128x512xbf16>
    %c0_20 = arith.constant 0 : index
    %c0_21 = arith.constant 0 : index
    %65 = vector.load %arg4[%c0_20, %c0_21] : memref<512x512xbf16, #tpu.memory_space<vmem>>, vector<512x512xbf16>
    %cst_22 = arith.constant dense<0.000000e+00> : vector<128x512xf32>
    %66 = tpu.matmul %64, %65, %cst_22 {dimension_numbers = #tpu.dot_dimension_numbers<[1], [0], [0], [1], [0, 0, 1, 1], [], []>} : vector<128x512xbf16>, vector<512x512xbf16>, vector<128x512xf32> -> vector<128x512xf32>
    %c3 = arith.constant 3 : index
    %c0_23 = arith.constant 0 : index
    %67 = vector.load %arg6[%c3, %c0_23] : memref<16x512xf32, #tpu.memory_space<vmem>>, vector<1x512xf32>
    %68 = vector.broadcast %67 : vector<1x512xf32> to vector<128x512xf32>
    %69 = arith.addf %66, %68 : vector<128x512xf32>
    %70 = arith.addf %63, %69 : vector<128x512xf32>
    %c7 = arith.constant 7 : index
    %c0_24 = arith.constant 0 : index
    %71 = vector.load %arg6[%c7, %c0_24] : memref<16x512xf32, #tpu.memory_space<vmem>>, vector<1x512xf32>
    %c8 = arith.constant 8 : index
    %c0_25 = arith.constant 0 : index
    %72 = vector.load %arg6[%c8, %c0_25] : memref<16x512xf32, #tpu.memory_space<vmem>>, vector<1x512xf32>
    %cst_26 = arith.constant dense<0.000000e+00> : vector<128xf32>
    %73 = vector.multi_reduction <add>, %70, %cst_26 [1] : vector<128x512xf32> to vector<128xf32>
    %74 = vector.shape_cast %73 : vector<128xf32> to vector<128x1xf32>
    %cst_27 = arith.constant 5.120000e+02 : f32
    %75 = vector.broadcast %cst_27 : f32 to vector<128x1xf32>
    %76 = arith.divf %74, %75 : vector<128x1xf32>
    %77 = vector.broadcast %76 : vector<128x1xf32> to vector<128x512xf32>
    %78 = arith.subf %70, %77 : vector<128x512xf32>
    %79 = arith.mulf %78, %78 : vector<128x512xf32>
    %cst_28 = arith.constant dense<0.000000e+00> : vector<128xf32>
    %80 = vector.multi_reduction <add>, %79, %cst_28 [1] : vector<128x512xf32> to vector<128xf32>
    %81 = vector.shape_cast %80 : vector<128xf32> to vector<128x1xf32>
    %cst_29 = arith.constant 5.120000e+02 : f32
    %82 = vector.broadcast %cst_29 : f32 to vector<128x1xf32>
    %83 = arith.divf %81, %82 : vector<128x1xf32>
    %cst_30 = arith.constant 9.99999974E-6 : f32
    %84 = vector.broadcast %cst_30 : f32 to vector<128x1xf32>
    %85 = arith.addf %83, %84 : vector<128x1xf32>
    %86 = math.rsqrt %85 : vector<128x1xf32>
    %87 = vector.broadcast %86 : vector<128x1xf32> to vector<128x512xf32>
    %88 = arith.mulf %78, %87 : vector<128x512xf32>
    %89 = vector.broadcast %71 : vector<1x512xf32> to vector<128x512xf32>
    %90 = arith.mulf %88, %89 : vector<128x512xf32>
    %91 = vector.broadcast %72 : vector<1x512xf32> to vector<128x512xf32>
    %92 = arith.addf %90, %91 : vector<128x512xf32>
    %93 = arith.truncf %92 : vector<128x512xf32> to vector<128x512xbf16>
    %c0_31 = arith.constant 0 : index
    %c0_32 = arith.constant 0 : index
    %94 = vector.load %arg5[%c0_31, %c0_32] : memref<512x512xbf16, #tpu.memory_space<vmem>>, vector<512x512xbf16>
    %cst_33 = arith.constant dense<0.000000e+00> : vector<128x512xf32>
    %95 = tpu.matmul %93, %94, %cst_33 {dimension_numbers = #tpu.dot_dimension_numbers<[1], [0], [0], [1], [0, 0, 1, 1], [], []>} : vector<128x512xbf16>, vector<512x512xbf16>, vector<128x512xf32> -> vector<128x512xf32>
    %c4 = arith.constant 4 : index
    %c0_34 = arith.constant 0 : index
    %96 = vector.load %arg6[%c4, %c0_34] : memref<16x512xf32, #tpu.memory_space<vmem>>, vector<1x512xf32>
    %97 = vector.broadcast %96 : vector<1x512xf32> to vector<128x512xf32>
    %98 = arith.addf %95, %97 : vector<128x512xf32>
    %99 = vector.shape_cast %98 : vector<128x512xf32> to vector<1x128x512xf32>
    %c0_35 = arith.constant 0 : index
    %c0_36 = arith.constant 0 : index
    %c0_37 = arith.constant 0 : index
    %100 = vector.load %arg7[%c0_35, %c0_36, %c0_37] : memref<1x128x512xf32, #tpu.memory_space<vmem>>, vector<1x128x512xf32>
    tpu.vector_store %arg7[%c0_35, %c0_36, %c0_37], %99 {strides = array<i32>} : memref<1x128x512xf32, #tpu.memory_space<vmem>>, vector<1x128x512xf32>,
    return
  }
  func.func @transform_0(%arg0: i32, %arg1: memref<1xf32, #tpu.memory_space<smem>>) -> (i32, i32, i32) {
    %c0_i32 = arith.constant 0 : i32
    %c0_i32_0 = arith.constant 0 : i32
    %c0_i32_1 = arith.constant 0 : i32
    return %arg0, %c0_i32, %c0_i32_0 : i32, i32, i32
  }
  func.func @transform_1(%arg0: i32, %arg1: memref<1xf32, #tpu.memory_space<smem>>) -> (i32, i32) {
    %c0_i32 = arith.constant 0 : i32
    %c0_i32_0 = arith.constant 0 : i32
    %c0_i32_1 = arith.constant 0 : i32
    return %c0_i32, %c0_i32_0 : i32, i32
  }
  func.func @transform_2(%arg0: i32, %arg1: memref<1xf32, #tpu.memory_space<smem>>) -> (i32, i32) {
    %c0_i32 = arith.constant 0 : i32
    %c0_i32_0 = arith.constant 0 : i32
    %c0_i32_1 = arith.constant 0 : i32
    return %c0_i32, %c0_i32_0 : i32, i32
  }
  func.func @transform_3(%arg0: i32, %arg1: memref<1xf32, #tpu.memory_space<smem>>) -> (i32, i32) {
    %c0_i32 = arith.constant 0 : i32
    %c0_i32_0 = arith.constant 0 : i32
    %c0_i32_1 = arith.constant 0 : i32
    return %c0_i32, %c0_i32_0 : i32, i32
  }
  func.func @transform_4(%arg0: i32, %arg1: memref<1xf32, #tpu.memory_space<smem>>) -> (i32, i32) {
    %c0_i32 = arith.constant 0 : i32
    %c0_i32_0 = arith.constant 0 : i32
    %c0_i32_1 = arith.constant 0 : i32
    return %c0_i32, %c0_i32_0 : i32, i32
  }
  func.func @transform_5(%arg0: i32, %arg1: memref<1xf32, #tpu.memory_space<smem>>) -> (i32, i32, i32) {
    %c0_i32 = arith.constant 0 : i32
    %c0_i32_0 = arith.constant 0 : i32
    %c0_i32_1 = arith.constant 0 : i32
    return %arg0, %c0_i32, %c0_i32_0 : i32, i32, i32
  }
}

</mosaic_0001>

<llo_original>
// kernel: initial_encoder_forward.1
$region0: #{initial_encoder_forward.1}
  #allocation0 [shape = 'u32[]', space=smem, size = 0x4, offset = 0x4, fixed_abs, tag = 'smem constant byte address 0x4 - core index']
  #allocation1 [shape = 'u32[144,128]{1,0:T(1,128)}', space=vmem, size = 0x12000, scoped, tag = 'internal scratch']
  #allocation2 [shape = 's32[1]{0}', space=sflag, size = 0x4, scoped, tag = 'scoped memory for initial_encoder_forward.1']
  #allocation3 [shape = 'f32[1]{0:T(128)S(6)}', space=smem, size = 0x200, scoped, tag = 'prefetched SMEM operand 0']
  %s0 = inlined_call_operand.<no memory space> [shape: f32[1], index: 0, kind: input, shape index: {}]
  %s1 = inlined_call_operand.hbm [shape: f32[2,128,512], index: 1, kind: input, shape index: {}]
  %s2 = inlined_call_operand.hbm [shape: bf16[512,1536], index: 2, kind: input, shape index: {}]
  %s3 = inlined_call_operand.hbm [shape: bf16[512,512], index: 3, kind: input, shape index: {}]
  %s4 = inlined_call_operand.hbm [shape: bf16[512,512], index: 4, kind: input, shape index: {}]
  %s5 = inlined_call_operand.hbm [shape: f32[16,512], index: 5, kind: input, shape index: {}]
  %s6 = inlined_call_operand.hbm [shape: f32[2,128,512], index: 6, kind: output, shape index: {}]
  %s7 = sld [smem:[#allocation0]]
  $region73: #{initial_encoder_forward.1} parent=0
    _
  %s9 = ssub.s32 1, %s7
  %s10 = scalar_select 0, %s9, %s7
  %11 = sst [smem:[#allocation3]] %s0
  $region1: #{initial_encoder_forward.1} parent=0
    #allocation4 [shape = 'u8[524288]{0}', space=vmem, size = 0x80000, scoped, tag = 'input window, operand 1']
    #allocation5 [shape = 's32[2]{0}', space=sflag, size = 0x8, scoped, tag = 'scoped memory for initial_encoder_forward.1']
    #allocation6 [shape = 's32[2]{0}', space=sflag, size = 0x8, scoped, tag = 'scoped memory for initial_encoder_forward.1']
    #allocation7 [shape = 'u8[1572864]{0}', space=vmem, size = 0x180000, scoped, tag = 'input window, operand 2, single buffered']
    #allocation8 [shape = 's32[1]{0}', space=sflag, size = 0x4, scoped, tag = 'scoped memory for initial_encoder_forward.1']
    #allocation9 [shape = 'u8[524288]{0}', space=vmem, size = 0x80000, scoped, tag = 'input window, operand 3, single buffered']
    #allocation10 [shape = 'u8[524288]{0}', space=vmem, size = 0x80000, scoped, tag = 'input window, operand 4, single buffered']
    #allocation11 [shape = 's32[1]{0}', space=sflag, size = 0x4, scoped, tag = 'scoped memory for initial_encoder_forward.1']
    #allocation12 [shape = 'u8[32768]{0}', space=vmem, size = 0x8000, scoped, tag = 'input window, operand 5, single buffered']
    #allocation13 [shape = 'u8[524288]{0}', space=vmem, size = 0x80000, scoped, tag = 'output window, operand 0']
    %12 = vsyncpa [#allocation5], 0
    %s13 = scalar_lea.sflag [#allocation5], 1
    %14 = vsyncpa %s13, 0
    %15 = vsyncpa [#allocation8], 0
    %16 = vsyncpa [#allocation11], 0
    %17 = vsyncpa [#allocation6], 0
    %s18 = scalar_lea.sflag [#allocation6], 1
    %19 = vsyncpa %s18, 0
    loop: start=0, step=1, limit=4
    $region2: #{initial_encoder_forward.1} parent=1 // loop_pre_header
      _
    $region3: #{initial_encoder_forward.1} parent=1 // loop_header
      %s21 = sphi 0, %s25
      %p22 = scmp.ge.s32.totalorder %s21, 4
      %s31 = sphi 0, %s33
      %s34 = sphi 0, %s31
      %s35 = sphi 0, %s34
      %s51 = sphi 0, %s35
      %s55 = sphi 0, %s55
      %s57 = sphi 0, %s55
      %s58 = sphi 0, %s57
      %s72 = sphi 0, %s58
      %s76 = sphi 0, %s76
      %s78 = sphi 0, %s76
      %s79 = sphi 0, %s78
      %s93 = sphi 0, %s79
      %s97 = sphi 0, %s97
      %s99 = sphi 0, %s97
      %s100 = sphi 0, %s99
      %s114 = sphi 0, %s100
      %s118 = sphi 0, %s118
      %s120 = sphi 0, %s118
      %s121 = sphi 0, %s120
      %s135 = sphi 0, %s121
      %s141 = sphi 0, %s143
      %s144 = sphi 0, %s141
      %s145 = sphi 0, %s144
      %s161 = sphi 0, %s145
    $region4: #{initial_encoder_forward.1} parent=1 // loop_header_branch
      %24 = sbr.rel (%p22) target = $region8
    $region5: #{initial_encoder_forward.1} parent=1 // loop_body
      %s26 = ssub.s32 %s21, 1
      %s27 = ssub.s32 %s21, 2
      %s28 = sadd.s32 %s21, 1
      %s29 = ssub.s32 %s21, %s28
      %p30 = scmp.eq.s32.totalorder %s29, 0
      %s32 = sadd.s32 %s31, 1
      %s33 = scalar_select %p30, %s31, %s32
      %p36 = pneg %p30
      %p37 = scmp.eq.s32.totalorder %s21, 1
      %p38 = por %p36, %p37
      %p39 = scmp.ne.s32.totalorder %s31, %s34
      %p40 = scmp.eq.s32.totalorder %s21, 0
      %p41 = por %p39, %p40
      %p42 = scmp.ne.s32.totalorder %s31, %s34
      %p43 = scmp.eq.s32.totalorder %s26, 1
      %p44 = por %p42, %p43
      %p45 = scmp.ne.s32.totalorder %s34, %s35
      %p46 = scmp.eq.s32.totalorder %s26, 0
      %p47 = por %p45, %p46
      %p48 = scmp.ne.s32.totalorder %s34, %s35
      %p49 = scmp.eq.s32.totalorder %s27, 1
      %p50 = por %p48, %p49
      %p52 = scmp.ne.s32.totalorder %s35, %s51
      %p53 = scmp.eq.s32.totalorder %s27, 0
      %p54 = por %p52, %p53
      %s56 = sadd.s32 %s55, 1
      %p59 = scmp.eq.s32.totalorder %s21, 1
      %p60 = scmp.ne.s32.totalorder %s55, %s57
      %p61 = scmp.eq.s32.totalorder %s21, 0
      %p62 = por %p60, %p61
      %p63 = scmp.ne.s32.totalorder %s55, %s57
      %p64 = scmp.eq.s32.totalorder %s26, 1
      %p65 = por %p63, %p64
      %p66 = scmp.ne.s32.totalorder %s57, %s58
      %p67 = scmp.eq.s32.totalorder %s26, 0
      %p68 = por %p66, %p67
      %p69 = scmp.ne.s32.totalorder %s57, %s58
      %p70 = scmp.eq.s32.totalorder %s27, 1
      %p71 = por %p69, %p70
      %p73 = scmp.ne.s32.totalorder %s58, %s72
      %p74 = scmp.eq.s32.totalorder %s27, 0
      %p75 = por %p73, %p74
      %s77 = sadd.s32 %s76, 1
      %p80 = scmp.eq.s32.totalorder %s21, 1
      %p81 = scmp.ne.s32.totalorder %s76, %s78
      %p82 = scmp.eq.s32.totalorder %s21, 0
      %p83 = por %p81, %p82
      %p84 = scmp.ne.s32.totalorder %s76, %s78
      %p85 = scmp.eq.s32.totalorder %s26, 1
      %p86 = por %p84, %p85
      %p87 = scmp.ne.s32.totalorder %s78, %s79
      %p88 = scmp.eq.s32.totalorder %s26, 0
      %p89 = por %p87, %p88
      %p90 = scmp.ne.s32.totalorder %s78, %s79
      %p91 = scmp.eq.s32.totalorder %s27, 1
      %p92 = por %p90, %p91
      %p94 = scmp.ne.s32.totalorder %s79, %s93
      %p95 = scmp.eq.s32.totalorder %s27, 0
      %p96 = por %p94, %p95
      %s98 = sadd.s32 %s97, 1
      %p101 = scmp.eq.s32.totalorder %s21, 1
      %p102 = scmp.ne.s32.totalorder %s97, %s99
      %p103 = scmp.eq.s32.totalorder %s21, 0
      %p104 = por %p102, %p103
      %p105 = scmp.ne.s32.totalorder %s97, %s99
      %p106 = scmp.eq.s32.totalorder %s26, 1
      %p107 = por %p105, %p106
      %p108 = scmp.ne.s32.totalorder %s99, %s100
      %p109 = scmp.eq.s32.totalorder %s26, 0
      %p110 = por %p108, %p109
      %p111 = scmp.ne.s32.totalorder %s99, %s100
      %p112 = scmp.eq.s32.totalorder %s27, 1
      %p113 = por %p111, %p112
      %p115 = scmp.ne.s32.totalorder %s100, %s114
      %p116 = scmp.eq.s32.totalorder %s27, 0
      %p117 = por %p115, %p116
      %s119 = sadd.s32 %s118, 1
      %p122 = scmp.eq.s32.totalorder %s21, 1
      %p123 = scmp.ne.s32.totalorder %s118, %s120
      %p124 = scmp.eq.s32.totalorder %s21, 0
      %p125 = por %p123, %p124
      %p126 = scmp.ne.s32.totalorder %s118, %s120
      %p127 = scmp.eq.s32.totalorder %s26, 1
      %p128 = por %p126, %p127
      %p129 = scmp.ne.s32.totalorder %s120, %s121
      %p130 = scmp.eq.s32.totalorder %s26, 0
      %p131 = por %p129, %p130
      %p132 = scmp.ne.s32.totalorder %s120, %s121
      %p133 = scmp.eq.s32.totalorder %s27, 1
      %p134 = por %p132, %p133
      %p136 = scmp.ne.s32.totalorder %s121, %s135
      %p137 = scmp.eq.s32.totalorder %s27, 0
      %p138 = por %p136, %p137
      %s139 = ssub.s32 %s21, %s28
      %p140 = scmp.eq.s32.totalorder %s139, 0
      %s142 = sadd.s32 %s141, 1
      %s143 = scalar_select %p140, %s141, %s142
      %p146 = pneg %p140
      %p147 = scmp.eq.s32.totalorder %s21, 1
      %p148 = por %p146, %p147
      %p149 = scmp.ne.s32.totalorder %s141, %s144
      %p150 = scmp.eq.s32.totalorder %s21, 0
      %p151 = por %p149, %p150
      %p152 = scmp.ne.s32.totalorder %s141, %s144
      %p153 = scmp.eq.s32.totalorder %s26, 1
      %p154 = por %p152, %p153
      %p155 = scmp.ne.s32.totalorder %s144, %s145
      %p156 = scmp.eq.s32.totalorder %s26, 0
      %p157 = por %p155, %p156
      %p158 = scmp.ne.s32.totalorder %s144, %s145
      %p159 = scmp.eq.s32.totalorder %s27, 1
      %p160 = por %p158, %p159
      %p162 = scmp.ne.s32.totalorder %s145, %s161
      %p163 = scmp.eq.s32.totalorder %s27, 0
      %p164 = por %p162, %p163
      %p165 = scmp.le.s32.totalorder 1, %s21
      %p166 = scmp.lt.s32.totalorder %s21, 3
      %p167 = pnand %p165, %p166
      %p168 = pneg %p167
      // Predicated region
      $region9: #{initial_encoder_forward.1} parent=5 // pred_check
        _
      $region10: #{initial_encoder_forward.1} parent=5 // pred_check_branch
        %170 = sbr.rel (%p167) target = $region12
      $region11: #{initial_encoder_forward.1} parent=5 // pred_region
        %s171 = ssub.s32 %s21, 1
        // Predicated region
        $region13: #{initial_encoder_forward.1} parent=11 // pred_check
          %p172 = pneg %p68
        $region14: #{initial_encoder_forward.1} parent=11 // pred_check_branch
          %174 = sbr.rel (%p172) target = $region16
        $region15: #{initial_encoder_forward.1} parent=11 // pred_region
          %s176 = ssub.s32 49152, 49152
          %177 = vsyncadd [#allocation8], %s176
          %s178 = sshll.u32 [#allocation7], 4
          %s179 = int_to_ptr.vmem [resolvable:$true] %s178
          %184 = dma.hbm_to_vmem [thread:$0]  %s2, 49152, %s179, [#allocation8], 768, 768, 48
        $region16: #{initial_encoder_forward.1} parent=11 // pred_fallthru
          _
        // Predicated region
        $region17: #{initial_encoder_forward.1} parent=11 // pred_check
          %p185 = pneg %p89
        $region18: #{initial_encoder_forward.1} parent=11 // pred_check_branch
          %187 = sbr.rel (%p185) target = $region20
        $region19: #{initial_encoder_forward.1} parent=11 // pred_region
          %s189 = ssub.s32 16384, 16384
          %190 = vsyncadd [#allocation8], %s189
          %s191 = sshll.u32 [#allocation9], 4
          %s192 = int_to_ptr.vmem [resolvable:$true] %s191
          %197 = dma.hbm_to_vmem [thread:$0]  %s3, 16384, %s192, [#allocation8], 256, 256, 16
        $region20: #{initial_encoder_forward.1} parent=11 // pred_fallthru
          _
        // Predicated region
        $region21: #{initial_encoder_forward.1} parent=11 // pred_check
          %p198 = pneg %p110
        $region22: #{initial_encoder_forward.1} parent=11 // pred_check_branch
          %200 = sbr.rel (%p198) target = $region24
        $region23: #{initial_encoder_forward.1} parent=11 // pred_region
          %s202 = ssub.s32 16384, 16384
          %203 = vsyncadd [#allocation11], %s202
          %s204 = sshll.u32 [#allocation10], 4
          %s205 = int_to_ptr.vmem [resolvable:$true] %s204
          %210 = dma.hbm_to_vmem [thread:$0]  %s4, 16384, %s205, [#allocation11], 256, 256, 16
        $region24: #{initial_encoder_forward.1} parent=11 // pred_fallthru
          _
        // Predicated region
        $region25: #{initial_encoder_forward.1} parent=11 // pred_check
          %p211 = pneg %p131
        $region26: #{initial_encoder_forward.1} parent=11 // pred_check_branch
          %213 = sbr.rel (%p211) target = $region28
        $region27: #{initial_encoder_forward.1} parent=11 // pred_region
          %s215 = ssub.s32 1024, 1024
          %216 = vsyncadd [#allocation11], %s215
          %s217 = sshll.u32 [#allocation12], 4
          %s218 = int_to_ptr.vmem [resolvable:$true] %s217
          %223 = dma.hbm_to_vmem [thread:$0]  %s5, 1024, %s218, [#allocation11], 512, 512, 32
        $region28: #{initial_encoder_forward.1} parent=11 // pred_fallthru
          _
      $region12: #{initial_encoder_forward.1} parent=5 // pred_fallthru
        _
      %p224 = scmp.lt.s32.totalorder %s21, 2
      // Predicated region
      $region29: #{initial_encoder_forward.1} parent=5 // pred_check
        %p225 = pneg %p224
      $region30: #{initial_encoder_forward.1} parent=5 // pred_check_branch
        %227 = sbr.rel (%p225) target = $region32
      $region31: #{initial_encoder_forward.1} parent=5 // pred_region
        // Predicated region
        $region33: #{initial_encoder_forward.1} parent=31 // pred_check
          %p228 = pneg %p41
        $region34: #{initial_encoder_forward.1} parent=31 // pred_check_branch
          %230 = sbr.rel (%p228) target = $region36
        $region35: #{initial_encoder_forward.1} parent=31 // pred_region
          %s231 = sand.u32 %s31, 1
          %s232 = scalar_lea.sflag [#allocation5], %s231
          %s233 = sand.u32 %s31, 1
          %s234 = smul.addr %s233, 512
          %s235 = scalar_lea.vmem [#allocation4], %s234
          %s237 = ssub.s32 8192, 8192
          %238 = vsyncadd %s232, %s237
          %s239 = smul.addr %s21, 64
          %s240 = smul.addr %s239, 128
          %s241 = scalar_lea.hbm %s1, %s240
          %s242 = sshll.u32 %s235, 4
          %s243 = int_to_ptr.vmem [resolvable:$true] %s242
          %248 = dma.hbm_to_vmem [thread:$0]  %s241, 8192, %s243, %s232, 512, 512, 32
        $region36: #{initial_encoder_forward.1} parent=31 // pred_fallthru
          _
      $region32: #{initial_encoder_forward.1} parent=5 // pred_fallthru
        _
      %p249 = scmp.le.s32.totalorder 1, %s21
      %p250 = scmp.lt.s32.totalorder %s21, 3
      %p251 = pnand %p249, %p250
      %p252 = pneg %p251
      // Predicated region
      $region37: #{initial_encoder_forward.1} parent=5 // pred_check
        _
      $region38: #{initial_encoder_forward.1} parent=5 // pred_check_branch
        %254 = sbr.rel (%p251) target = $region40
      $region39: #{initial_encoder_forward.1} parent=5 // pred_region
        %s255 = ssub.s32 %s21, 1
        %s256 = sand.u32 %s34, 1
        %s257 = scalar_lea.sflag [#allocation5], %s256
        %s258 = sand.u32 %s34, 1
        %s259 = smul.addr %s258, 512
        %s260 = scalar_lea.vmem [#allocation4], %s259
        // Predicated region
        $region41: #{initial_encoder_forward.1} parent=39 // pred_check
          %p261 = pneg %p47
        $region42: #{initial_encoder_forward.1} parent=39 // pred_check_branch
          %263 = sbr.rel (%p261) target = $region44
        $region43: #{initial_encoder_forward.1} parent=39 // pred_region
          %264 = dma.done %s257, 8192
        $region44: #{initial_encoder_forward.1} parent=39 // pred_fallthru
          _
        // Predicated region
        $region45: #{initial_encoder_forward.1} parent=39 // pred_check
          %p265 = pneg %p68
        $region46: #{initial_encoder_forward.1} parent=39 // pred_check_branch
          %267 = sbr.rel (%p265) target = $region48
        $region47: #{initial_encoder_forward.1} parent=39 // pred_region
          %268 = dma.done [#allocation8], 49152
        $region48: #{initial_encoder_forward.1} parent=39 // pred_fallthru
          _
        // Predicated region
        $region49: #{initial_encoder_forward.1} parent=39 // pred_check
          %p269 = pneg %p89
        $region50: #{initial_encoder_forward.1} parent=39 // pred_check_branch
          %271 = sbr.rel (%p269) target = $region52
        $region51: #{initial_encoder_forward.1} parent=39 // pred_region
          %272 = dma.done [#allocation8], 16384
        $region52: #{initial_encoder_forward.1} parent=39 // pred_fallthru
          _
        // Predicated region
        $region53: #{initial_encoder_forward.1} parent=39 // pred_check
          %p273 = pneg %p110
        $region54: #{initial_encoder_forward.1} parent=39 // pred_check_branch
          %275 = sbr.rel (%p273) target = $region56
        $region55: #{initial_encoder_forward.1} parent=39 // pred_region
          %276 = dma.done [#allocation11], 16384
        $region56: #{initial_encoder_forward.1} parent=39 // pred_fallthru
          _
        // Predicated region
        $region57: #{initial_encoder_forward.1} parent=39 // pred_check
          %p277 = pneg %p131
        $region58: #{initial_encoder_forward.1} parent=39 // pred_check_branch
          %279 = sbr.rel (%p277) target = $region60
        $region59: #{initial_encoder_forward.1} parent=39 // pred_region
          %280 = dma.done [#allocation11], 1024
        $region60: #{initial_encoder_forward.1} parent=39 // pred_fallthru
          _
        %s281 = sand.u32 %s34, 1
        %s282 = scalar_lea.sflag [#allocation5], %s281
        %s283 = sand.u32 %s34, 1
        %s284 = smul.addr %s283, 512
        %s285 = scalar_lea.vmem [#allocation4], %s284
        %p286 = pneg %p47
        %p287 = pneg %p44
        %p288 = pneg %p68
        %p289 = pneg %p65
        %p290 = pneg %p89
        %p291 = pneg %p86
        %p292 = pneg %p110
        %p293 = pneg %p107
        %p294 = pneg %p131
        %p295 = pneg %p128
        %p296 = pneg %p157
        %p297 = pneg %p154
        %s298 = sand.u32 %s144, 1
        %s299 = scalar_lea.sflag [#allocation6], %s298
        %s300 = sand.u32 %s144, 1
        %s301 = smul.addr %s300, 512
        %s302 = scalar_lea.vmem [#allocation13], %s301
        %v304 = vld [vmem:[%s260] sm:$0xff]
        %v305 = vld [vmem:[%s260 + $0x8] sm:$0xff]
        %v306 = vld [vmem:[%s260 + $0x10] sm:$0xff]
        %v307 = vld [vmem:[%s260 + $0x18] sm:$0xff]
        %v308 = vld [vmem:[%s260 + $0x20] sm:$0xff]
        %v309 = vld [vmem:[%s260 + $0x28] sm:$0xff]
        %v310 = vld [vmem:[%s260 + $0x30] sm:$0xff]
        %v311 = vld [vmem:[%s260 + $0x38] sm:$0xff]
        %v312 = vld [vmem:[%s260 + $0x40] sm:$0xff]
        %v313 = vld [vmem:[%s260 + $0x48] sm:$0xff]
        %v314 = vld [vmem:[%s260 + $0x50] sm:$0xff]
        %v315 = vld [vmem:[%s260 + $0x58] sm:$0xff]
        %v316 = vld [vmem:[%s260 + $0x60] sm:$0xff]
        %v317 = vld [vmem:[%s260 + $0x68] sm:$0xff]
        %v318 = vld [vmem:[%s260 + $0x70] sm:$0xff]
        %v319 = vld [vmem:[%s260 + $0x78] sm:$0xff]
        %v320 = vld [vmem:[%s260 + $0x80] sm:$0xff]
        %v321 = vld [vmem:[%s260 + $0x88] sm:$0xff]
        %v322 = vld [vmem:[%s260 + $0x90] sm:$0xff]
        %v323 = vld [vmem:[%s260 + $0x98] sm:$0xff]
        %v324 = vld [vmem:[%s260 + $0xa0] sm:$0xff]
        %v325 = vld [vmem:[%s260 + $0xa8] sm:$0xff]
        %v326 = vld [vmem:[%s260 + $0xb0] sm:$0xff]
        %v327 = vld [vmem:[%s260 + $0xb8] sm:$0xff]
        %v328 = vld [vmem:[%s260 + $0xc0] sm:$0xff]
        %v329 = vld [vmem:[%s260 + $0xc8] sm:$0xff]
        %v330 = vld [vmem:[%s260 + $0xd0] sm:$0xff]
        %v331 = vld [vmem:[%s260 + $0xd8] sm:$0xff]
        %v332 = vld [vmem:[%s260 + $0xe0] sm:$0xff]
        %v333 = vld [vmem:[%s260 + $0xe8] sm:$0xff]
        %v334 = vld [vmem:[%s260 + $0xf0] sm:$0xff]
        %v335 = vld [vmem:[%s260 + $0xf8] sm:$0xff]
        %v336 = vld [vmem:[%s260 + $0x100] sm:$0xff]
        %v337 = vld [vmem:[%s260 + $0x108] sm:$0xff]
        %v338 = vld [vmem:[%s260 + $0x110] sm:$0xff]
        %v339 = vld [vmem:[%s260 + $0x118] sm:$0xff]
        %v340 = vld [vmem:[%s260 + $0x120] sm:$0xff]
        %v341 = vld [vmem:[%s260 + $0x128] sm:$0xff]
        %v342 = vld [vmem:[%s260 + $0x130] sm:$0xff]
        %v343 = vld [vmem:[%s260 + $0x138] sm:$0xff]
        %v344 = vld [vmem:[%s260 + $0x140] sm:$0xff]
        %v345 = vld [vmem:[%s260 + $0x148] sm:$0xff]
        %v346 = vld [vmem:[%s260 + $0x150] sm:$0xff]
        %v347 = vld [vmem:[%s260 + $0x158] sm:$0xff]
        %v348 = vld [vmem:[%s260 + $0x160] sm:$0xff]
        %v349 = vld [vmem:[%s260 + $0x168] sm:$0xff]
        %v350 = vld [vmem:[%s260 + $0x170] sm:$0xff]
        %v351 = vld [vmem:[%s260 + $0x178] sm:$0xff]
        %v352 = vld [vmem:[%s260 + $0x180] sm:$0xff]
        %v353 = vld [vmem:[%s260 + $0x188] sm:$0xff]
        %v354 = vld [vmem:[%s260 + $0x190] sm:$0xff]
        %v355 = vld [vmem:[%s260 + $0x198] sm:$0xff]
        %v356 = vld [vmem:[%s260 + $0x1a0] sm:$0xff]
        %v357 = vld [vmem:[%s260 + $0x1a8] sm:$0xff]
        %v358 = vld [vmem:[%s260 + $0x1b0] sm:$0xff]
        %v359 = vld [vmem:[%s260 + $0x1b8] sm:$0xff]
        %v360 = vld [vmem:[%s260 + $0x1c0] sm:$0xff]
        %v361 = vld [vmem:[%s260 + $0x1c8] sm:$0xff]
        %v362 = vld [vmem:[%s260 + $0x1d0] sm:$0xff]
        %v363 = vld [vmem:[%s260 + $0x1d8] sm:$0xff]
        %v364 = vld [vmem:[%s260 + $0x1e0] sm:$0xff]
        %v365 = vld [vmem:[%s260 + $0x1e8] sm:$0xff]
        %v366 = vld [vmem:[%s260 + $0x1f0] sm:$0xff]
        %v367 = vld [vmem:[%s260 + $0x1f8] sm:$0xff]
        %v368 = vpack.c.bf16 %v308, %v304
        %v369 = vpack.c.bf16 %v309, %v305
        %v370 = vpack.c.bf16 %v310, %v306
        %v371 = vpack.c.bf16 %v311, %v307
        %v372 = vpack.c.bf16 %v316, %v312
        %v373 = vpack.c.bf16 %v317, %v313
        %v374 = vpack.c.bf16 %v318, %v314
        %v375 = vpack.c.bf16 %v319, %v315
        %v376 = vpack.c.bf16 %v324, %v320
        %v377 = vpack.c.bf16 %v325, %v321
        %v378 = vpack.c.bf16 %v326, %v322
        %v379 = vpack.c.bf16 %v327, %v323
        %v380 = vpack.c.bf16 %v332, %v328
        %v381 = vpack.c.bf16 %v333, %v329
        %v382 = vpack.c.bf16 %v334, %v330
        %v383 = vpack.c.bf16 %v335, %v331
        %v384 = vpack.c.bf16 %v340, %v336
        %v385 = vpack.c.bf16 %v341, %v337
        %v386 = vpack.c.bf16 %v342, %v338
        %v387 = vpack.c.bf16 %v343, %v339
        %v388 = vpack.c.bf16 %v348, %v344
        %v389 = vpack.c.bf16 %v349, %v345
        %v390 = vpack.c.bf16 %v350, %v346
        %v391 = vpack.c.bf16 %v351, %v347
        %v392 = vpack.c.bf16 %v356, %v352
        %v393 = vpack.c.bf16 %v357, %v353
        %v394 = vpack.c.bf16 %v358, %v354
        %v395 = vpack.c.bf16 %v359, %v355
        %v396 = vpack.c.bf16 %v364, %v360
        %v397 = vpack.c.bf16 %v365, %v361
        %v398 = vpack.c.bf16 %v366, %v362
        %v399 = vpack.c.bf16 %v367, %v363
        %v400 = vld [vmem:[#allocation7] sm:$0xff]
        %v401 = vld [vmem:[#allocation7 + $0x8] sm:$0xff]
        %v402 = vld [vmem:[#allocation7 + $0x10] sm:$0xff]
        %v403 = vld [vmem:[#allocation7 + $0x18] sm:$0xff]
        %v404 = vld [vmem:[#allocation7 + $0x20] sm:$0xff]
        %v405 = vld [vmem:[#allocation7 + $0x28] sm:$0xff]
        %v406 = vld [vmem:[#allocation7 + $0x30] sm:$0xff]
        %v407 = vld [vmem:[#allocation7 + $0x38] sm:$0xff]
        %v408 = vld [vmem:[#allocation7 + $0x40] sm:$0xff]
        %v409 = vld [vmem:[#allocation7 + $0x48] sm:$0xff]
        %v410 = vld [vmem:[#allocation7 + $0x50] sm:$0xff]
        %v411 = vld [vmem:[#allocation7 + $0x58] sm:$0xff]
        %v412 = vld [vmem:[#allocation7 + $0x60] sm:$0xff]
        %v413 = vld [vmem:[#allocation7 + $0x68] sm:$0xff]
        %v414 = vld [vmem:[#allocation7 + $0x70] sm:$0xff]
        %v415 = vld [vmem:[#allocation7 + $0x78] sm:$0xff]
        %v416 = vld [vmem:[#allocation7 + $0x80] sm:$0xff]
        %v417 = vld [vmem:[#allocation7 + $0x88] sm:$0xff]
        %v418 = vld [vmem:[#allocation7 + $0x90] sm:$0xff]
        %v419 = vld [vmem:[#allocation7 + $0x98] sm:$0xff]
        %v420 = vld [vmem:[#allocation7 + $0xa0] sm:$0xff]
        %v421 = vld [vmem:[#allocation7 + $0xa8] sm:$0xff]
        %v422 = vld [vmem:[#allocation7 + $0xb0] sm:$0xff]
        %v423 = vld [vmem:[#allocation7 + $0xb8] sm:$0xff]
        %v424 = vld [vmem:[#allocation7 + $0xc0] sm:$0xff]
        %v425 = vld [vmem:[#allocation7 + $0xc8] sm:$0xff]
        %v426 = vld [vmem:[#allocation7 + $0xd0] sm:$0xff]
        %v427 = vld [vmem:[#allocation7 + $0xd8] sm:$0xff]
        %v428 = vld [vmem:[#allocation7 + $0xe0] sm:$0xff]
        %v429 = vld [vmem:[#allocation7 + $0xe8] sm:$0xff]
        %v430 = vld [vmem:[#allocation7 + $0xf0] sm:$0xff]
        %v431 = vld [vmem:[#allocation7 + $0xf8] sm:$0xff]
        %v432 = vld [vmem:[#allocation7 + $0x100] sm:$0xff]
        %v433 = vld [vmem:[#allocation7 + $0x108] sm:$0xff]
        %v434 = vld [vmem:[#allocation7 + $0x110] sm:$0xff]
        %v435 = vld [vmem:[#allocation7 + $0x118] sm:$0xff]
        %v436 = vld [vmem:[#allocation7 + $0x120] sm:$0xff]
        %v437 = vld [vmem:[#allocation7 + $0x128] sm:$0xff]
        %v438 = vld [vmem:[#allocation7 + $0x130] sm:$0xff]
        %v439 = vld [vmem:[#allocation7 + $0x138] sm:$0xff]
        %v440 = vld [vmem:[#allocation7 + $0x140] sm:$0xff]
        %v441 = vld [vmem:[#allocation7 + $0x148] sm:$0xff]
        %v442 = vld [vmem:[#allocation7 + $0x150] sm:$0xff]
        %v443 = vld [vmem:[#allocation7 + $0x158] sm:$0xff]
        %v444 = vld [vmem:[#allocation7 + $0x160] sm:$0xff]
        %v445 = vld [vmem:[#allocation7 + $0x168] sm:$0xff]
        %v446 = vld [vmem:[#allocation7 + $0x170] sm:$0xff]
        %v447 = vld [vmem:[#allocation7 + $0x178] sm:$0xff]
        %v448 = vld [vmem:[#allocation7 + $0x180] sm:$0xff]
        %v449 = vld [vmem:[#allocation7 + $0x188] sm:$0xff]
        %v450 = vld [vmem:[#allocation7 + $0x190] sm:$0xff]
        %v451 = vld [vmem:[#allocation7 + $0x198] sm:$0xff]
        %v452 = vld [vmem:[#allocation7 + $0x1a0] sm:$0xff]
        %v453 = vld [vmem:[#allocation7 + $0x1a8] sm:$0xff]
        %v454 = vld [vmem:[#allocation7 + $0x1b0] sm:$0xff]
        %v455 = vld [vmem:[#allocation7 + $0x1b8] sm:$0xff]
        %v456 = vld [vmem:[#allocation7 + $0x1c0] sm:$0xff]
        %v457 = vld [vmem:[#allocation7 + $0x1c8] sm:$0xff]
        %v458 = vld [vmem:[#allocation7 + $0x1d0] sm:$0xff]
        %v459 = vld [vmem:[#allocation7 + $0x1d8] sm:$0xff]
        %v460 = vld [vmem:[#allocation7 + $0x1e0] sm:$0xff]
        %v461 = vld [vmem:[#allocation7 + $0x1e8] sm:$0xff]
        %v462 = vld [vmem:[#allocation7 + $0x1f0] sm:$0xff]
        %v463 = vld [vmem:[#allocation7 + $0x1f8] sm:$0xff]
        %v464 = vld [vmem:[#allocation7 + $0x200] sm:$0xff]
        %v465 = vld [vmem:[#allocation7 + $0x208] sm:$0xff]
        %v466 = vld [vmem:[#allocation7 + $0x210] sm:$0xff]
        %v467 = vld [vmem:[#allocation7 + $0x218] sm:$0xff]
        %v468 = vld [vmem:[#allocation7 + $0x220] sm:$0xff]
        %v469 = vld [vmem:[#allocation7 + $0x228] sm:$0xff]
        %v470 = vld [vmem:[#allocation7 + $0x230] sm:$0xff]
        %v471 = vld [vmem:[#allocation7 + $0x238] sm:$0xff]
        %v472 = vld [vmem:[#allocation7 + $0x240] sm:$0xff]
        %v473 = vld [vmem:[#allocation7 + $0x248] sm:$0xff]
        %v474 = vld [vmem:[#allocation7 + $0x250] sm:$0xff]
        %v475 = vld [vmem:[#allocation7 + $0x258] sm:$0xff]
        %v476 = vld [vmem:[#allocation7 + $0x260] sm:$0xff]
        %v477 = vld [vmem:[#allocation7 + $0x268] sm:$0xff]
        %v478 = vld [vmem:[#allocation7 + $0x270] sm:$0xff]
        %v479 = vld [vmem:[#allocation7 + $0x278] sm:$0xff]
        %v480 = vld [vmem:[#allocation7 + $0x280] sm:$0xff]
        %v481 = vld [vmem:[#allocation7 + $0x288] sm:$0xff]
        %v482 = vld [vmem:[#allocation7 + $0x290] sm:$0xff]
        %v483 = vld [vmem:[#allocation7 + $0x298] sm:$0xff]
        %v484 = vld [vmem:[#allocation7 + $0x2a0] sm:$0xff]
        %v485 = vld [vmem:[#allocation7 + $0x2a8] sm:$0xff]
        %v486 = vld [vmem:[#allocation7 + $0x2b0] sm:$0xff]
        %v487 = vld [vmem:[#allocation7 + $0x2b8] sm:$0xff]
        %v488 = vld [vmem:[#allocation7 + $0x2c0] sm:$0xff]
        %v489 = vld [vmem:[#allocation7 + $0x2c8] sm:$0xff]
        %v490 = vld [vmem:[#allocation7 + $0x2d0] sm:$0xff]
        %v491 = vld [vmem:[#allocation7 + $0x2d8] sm:$0xff]
        %v492 = vld [vmem:[#allocation7 + $0x2e0] sm:$0xff]
        %v493 = vld [vmem:[#allocation7 + $0x2e8] sm:$0xff]
        %v494 = vld [vmem:[#allocation7 + $0x2f0] sm:$0xff]
        %v495 = vld [vmem:[#allocation7 + $0x2f8] sm:$0xff]
        %v496 = vld [vmem:[#allocation7 + $0x300] sm:$0xff]
        %v497 = vld [vmem:[#allocation7 + $0x308] sm:$0xff]
        %v498 = vld [vmem:[#allocation7 + $0x310] sm:$0xff]
        %v499 = vld [vmem:[#allocation7 + $0x318] sm:$0xff]
        %v500 = vld [vmem:[#allocation7 + $0x320] sm:$0xff]
        %v501 = vld [vmem:[#allocation7 + $0x328] sm:$0xff]
        %v502 = vld [vmem:[#allocation7 + $0x330] sm:$0xff]
        %v503 = vld [vmem:[#allocation7 + $0x338] sm:$0xff]
        %v504 = vld [vmem:[#allocation7 + $0x340] sm:$0xff]
        %v505 = vld [vmem:[#allocation7 + $0x348] sm:$0xff]
        %v506 = vld [vmem:[#allocation7 + $0x350] sm:$0xff]
        %v507 = vld [vmem:[#allocation7 + $0x358] sm:$0xff]
        %v508 = vld [vmem:[#allocation7 + $0x360] sm:$0xff]
        %v509 = vld [vmem:[#allocation7 + $0x368] sm:$0xff]
        %v510 = vld [vmem:[#allocation7 + $0x370] sm:$0xff]
        %v511 = vld [vmem:[#allocation7 + $0x378] sm:$0xff]
        %v512 = vld [vmem:[#allocation7 + $0x380] sm:$0xff]
        %v513 = vld [vmem:[#allocation7 + $0x388] sm:$0xff]
        %v514 = vld [vmem:[#allocation7 + $0x390] sm:$0xff]
        %v515 = vld [vmem:[#allocation7 + $0x398] sm:$0xff]
        %v516 = vld [vmem:[#allocation7 + $0x3a0] sm:$0xff]
        %v517 = vld [vmem:[#allocation7 + $0x3a8] sm:$0xff]
        %v518 = vld [vmem:[#allocation7 + $0x3b0] sm:$0xff]
        %v519 = vld [vmem:[#allocation7 + $0x3b8] sm:$0xff]
        %v520 = vld [vmem:[#allocation7 + $0x3c0] sm:$0xff]
        %v521 = vld [vmem:[#allocation7 + $0x3c8] sm:$0xff]
        %v522 = vld [vmem:[#allocation7 + $0x3d0] sm:$0xff]
        %v523 = vld [vmem:[#allocation7 + $0x3d8] sm:$0xff]
        %v524 = vld [vmem:[#allocation7 + $0x3e0] sm:$0xff]
        %v525 = vld [vmem:[#allocation7 + $0x3e8] sm:$0xff]
        %v526 = vld [vmem:[#allocation7 + $0x3f0] sm:$0xff]
        %v527 = vld [vmem:[#allocation7 + $0x3f8] sm:$0xff]
        %v528 = vld [vmem:[#allocation7 + $0x400] sm:$0xff]
        %v529 = vld [vmem:[#allocation7 + $0x408] sm:$0xff]
        %v530 = vld [vmem:[#allocation7 + $0x410] sm:$0xff]
        %v531 = vld [vmem:[#allocation7 + $0x418] sm:$0xff]
        %v532 = vld [vmem:[#allocation7 + $0x420] sm:$0xff]
        %v533 = vld [vmem:[#allocation7 + $0x428] sm:$0xff]
        %v534 = vld [vmem:[#allocation7 + $0x430] sm:$0xff]
        %v535 = vld [vmem:[#allocation7 + $0x438] sm:$0xff]
        %v536 = vld [vmem:[#allocation7 + $0x440] sm:$0xff]
        %v537 = vld [vmem:[#allocation7 + $0x448] sm:$0xff]
        %v538 = vld [vmem:[#allocation7 + $0x450] sm:$0xff]
        %v539 = vld [vmem:[#allocation7 + $0x458] sm:$0xff]
        %v540 = vld [vmem:[#allocation7 + $0x460] sm:$0xff]
        %v541 = vld [vmem:[#allocation7 + $0x468] sm:$0xff]
        %v542 = vld [vmem:[#allocation7 + $0x470] sm:$0xff]
        %v543 = vld [vmem:[#allocation7 + $0x478] sm:$0xff]
        %v544 = vld [vmem:[#allocation7 + $0x480] sm:$0xff]
        %v545 = vld [vmem:[#allocation7 + $0x488] sm:$0xff]
        %v546 = vld [vmem:[#allocation7 + $0x490] sm:$0xff]
        %v547 = vld [vmem:[#allocation7 + $0x498] sm:$0xff]
        %v548 = vld [vmem:[#allocation7 + $0x4a0] sm:$0xff]
        %v549 = vld [vmem:[#allocation7 + $0x4a8] sm:$0xff]
        %v550 = vld [vmem:[#allocation7 + $0x4b0] sm:$0xff]
        %v551 = vld [vmem:[#allocation7 + $0x4b8] sm:$0xff]
        %v552 = vld [vmem:[#allocation7 + $0x4c0] sm:$0xff]
        %v553 = vld [vmem:[#allocation7 + $0x4c8] sm:$0xff]
        %v554 = vld [vmem:[#allocation7 + $0x4d0] sm:$0xff]
        %v555 = vld [vmem:[#allocation7 + $0x4d8] sm:$0xff]
        %v556 = vld [vmem:[#allocation7 + $0x4e0] sm:$0xff]
        %v557 = vld [vmem:[#allocation7 + $0x4e8] sm:$0xff]
        %v558 = vld [vmem:[#allocation7 + $0x4f0] sm:$0xff]
        %v559 = vld [vmem:[#allocation7 + $0x4f8] sm:$0xff]
        %v560 = vld [vmem:[#allocation7 + $0x500] sm:$0xff]
        %v561 = vld [vmem:[#allocation7 + $0x508] sm:$0xff]
        %v562 = vld [vmem:[#allocation7 + $0x510] sm:$0xff]
        %v563 = vld [vmem:[#allocation7 + $0x518] sm:$0xff]
        %v564 = vld [vmem:[#allocation7 + $0x520] sm:$0xff]
        %v565 = vld [vmem:[#allocation7 + $0x528] sm:$0xff]
        %v566 = vld [vmem:[#allocation7 + $0x530] sm:$0xff]
        %v567 = vld [vmem:[#allocation7 + $0x538] sm:$0xff]
        %v568 = vld [vmem:[#allocation7 + $0x540] sm:$0xff]
        %v569 = vld [vmem:[#allocation7 + $0x548] sm:$0xff]
        %v570 = vld [vmem:[#allocation7 + $0x550] sm:$0xff]
        %v571 = vld [vmem:[#allocation7 + $0x558] sm:$0xff]
        %v572 = vld [vmem:[#allocation7 + $0x560] sm:$0xff]
        %v573 = vld [vmem:[#allocation7 + $0x568] sm:$0xff]
        %v574 = vld [vmem:[#allocation7 + $0x570] sm:$0xff]
        %v575 = vld [vmem:[#allocation7 + $0x578] sm:$0xff]
        %v576 = vld [vmem:[#allocation7 + $0x580] sm:$0xff]
        %v577 = vld [vmem:[#allocation7 + $0x588] sm:$0xff]
        %v578 = vld [vmem:[#allocation7 + $0x590] sm:$0xff]
        %v579 = vld [vmem:[#allocation7 + $0x598] sm:$0xff]
        %v580 = vld [vmem:[#allocation7 + $0x5a0] sm:$0xff]
        %v581 = vld [vmem:[#allocation7 + $0x5a8] sm:$0xff]
        %v582 = vld [vmem:[#allocation7 + $0x5b0] sm:$0xff]
        %v583 = vld [vmem:[#allocation7 + $0x5b8] sm:$0xff]
        %v584 = vld [vmem:[#allocation7 + $0x5c0] sm:$0xff]
        %v585 = vld [vmem:[#allocation7 + $0x5c8] sm:$0xff]
        %v586 = vld [vmem:[#allocation7 + $0x5d0] sm:$0xff]
        %v587 = vld [vmem:[#allocation7 + $0x5d8] sm:$0xff]
        %v588 = vld [vmem:[#allocation7 + $0x5e0] sm:$0xff]
        %v589 = vld [vmem:[#allocation7 + $0x5e8] sm:$0xff]
        %v590 = vld [vmem:[#allocation7 + $0x5f0] sm:$0xff]
        %v591 = vld [vmem:[#allocation7 + $0x5f8] sm:$0xff]
        %v592 = vld [vmem:[#allocation7 + $0x600] sm:$0xff]
        %v593 = vld [vmem:[#allocation7 + $0x608] sm:$0xff]
        %v594 = vld [vmem:[#allocation7 + $0x610] sm:$0xff]
        %v595 = vld [vmem:[#allocation7 + $0x618] sm:$0xff]
        %v596 = vld [vmem:[#allocation7 + $0x620] sm:$0xff]
        %v597 = vld [vmem:[#allocation7 + $0x628] sm:$0xff]
        %v598 = vld [vmem:[#allocation7 + $0x630] sm:$0xff]
        %v599 = vld [vmem:[#allocation7 + $0x638] sm:$0xff]
        %v600 = vld [vmem:[#allocation7 + $0x640] sm:$0xff]
        %v601 = vld [vmem:[#allocation7 + $0x648] sm:$0xff]
        %v602 = vld [vmem:[#allocation7 + $0x650] sm:$0xff]
        %v603 = vld [vmem:[#allocation7 + $0x658] sm:$0xff]
        %v604 = vld [vmem:[#allocation7 + $0x660] sm:$0xff]
        %v605 = vld [vmem:[#allocation7 + $0x668] sm:$0xff]
        %v606 = vld [vmem:[#allocation7 + $0x670] sm:$0xff]
        %v607 = vld [vmem:[#allocation7 + $0x678] sm:$0xff]
        %v608 = vld [vmem:[#allocation7 + $0x680] sm:$0xff]
        %v609 = vld [vmem:[#allocation7 + $0x688] sm:$0xff]
        %v610 = vld [vmem:[#allocation7 + $0x690] sm:$0xff]
        %v611 = vld [vmem:[#allocation7 + $0x698] sm:$0xff]
        %v612 = vld [vmem:[#allocation7 + $0x6a0] sm:$0xff]
        %v613 = vld [vmem:[#allocation7 + $0x6a8] sm:$0xff]
        %v614 = vld [vmem:[#allocation7 + $0x6b0] sm:$0xff]
        %v615 = vld [vmem:[#allocation7 + $0x6b8] sm:$0xff]
        %v616 = vld [vmem:[#allocation7 + $0x6c0] sm:$0xff]
        %v617 = vld [vmem:[#allocation7 + $0x6c8] sm:$0xff]
        %v618 = vld [vmem:[#allocation7 + $0x6d0] sm:$0xff]
        %v619 = vld [vmem:[#allocation7 + $0x6d8] sm:$0xff]
        %v620 = vld [vmem:[#allocation7 + $0x6e0] sm:$0xff]
        %v621 = vld [vmem:[#allocation7 + $0x6e8] sm:$0xff]
        %v622 = vld [vmem:[#allocation7 + $0x6f0] sm:$0xff]
        %v623 = vld [vmem:[#allocation7 + $0x6f8] sm:$0xff]
        %v624 = vld [vmem:[#allocation7 + $0x700] sm:$0xff]
        %v625 = vld [vmem:[#allocation7 + $0x708] sm:$0xff]
        %v626 = vld [vmem:[#allocation7 + $0x710] sm:$0xff]
        %v627 = vld [vmem:[#allocation7 + $0x718] sm:$0xff]
        %v628 = vld [vmem:[#allocation7 + $0x720] sm:$0xff]
        %v629 = vld [vmem:[#allocation7 + $0x728] sm:$0xff]
        %v630 = vld [vmem:[#allocation7 + $0x730] sm:$0xff]
        %v631 = vld [vmem:[#allocation7 + $0x738] sm:$0xff]
        %v632 = vld [vmem:[#allocation7 + $0x740] sm:$0xff]
        %v633 = vld [vmem:[#allocation7 + $0x748] sm:$0xff]
        %v634 = vld [vmem:[#allocation7 + $0x750] sm:$0xff]
        %v635 = vld [vmem:[#allocation7 + $0x758] sm:$0xff]
        %v636 = vld [vmem:[#allocation7 + $0x760] sm:$0xff]
        %v637 = vld [vmem:[#allocation7 + $0x768] sm:$0xff]
        %v638 = vld [vmem:[#allocation7 + $0x770] sm:$0xff]
        %v639 = vld [vmem:[#allocation7 + $0x778] sm:$0xff]
        %v640 = vld [vmem:[#allocation7 + $0x780] sm:$0xff]
        %v641 = vld [vmem:[#allocation7 + $0x788] sm:$0xff]
        %v642 = vld [vmem:[#allocation7 + $0x790] sm:$0xff]
        %v643 = vld [vmem:[#allocation7 + $0x798] sm:$0xff]
        %v644 = vld [vmem:[#allocation7 + $0x7a0] sm:$0xff]
        %v645 = vld [vmem:[#allocation7 + $0x7a8] sm:$0xff]
        %v646 = vld [vmem:[#allocation7 + $0x7b0] sm:$0xff]
        %v647 = vld [vmem:[#allocation7 + $0x7b8] sm:$0xff]
        %v648 = vld [vmem:[#allocation7 + $0x7c0] sm:$0xff]
        %v649 = vld [vmem:[#allocation7 + $0x7c8] sm:$0xff]
        %v650 = vld [vmem:[#allocation7 + $0x7d0] sm:$0xff]
        %v651 = vld [vmem:[#allocation7 + $0x7d8] sm:$0xff]
        %v652 = vld [vmem:[#allocation7 + $0x7e0] sm:$0xff]
        %v653 = vld [vmem:[#allocation7 + $0x7e8] sm:$0xff]
        %v654 = vld [vmem:[#allocation7 + $0x7f0] sm:$0xff]
        %v655 = vld [vmem:[#allocation7 + $0x7f8] sm:$0xff]
        %v656 = vld [vmem:[#allocation7 + $0x800] sm:$0xff]
        %v657 = vld [vmem:[#allocation7 + $0x808] sm:$0xff]
        %v658 = vld [vmem:[#allocation7 + $0x810] sm:$0xff]
        %v659 = vld [vmem:[#allocation7 + $0x818] sm:$0xff]
        %v660 = vld [vmem:[#allocation7 + $0x820] sm:$0xff]
        %v661 = vld [vmem:[#allocation7 + $0x828] sm:$0xff]
        %v662 = vld [vmem:[#allocation7 + $0x830] sm:$0xff]
        %v663 = vld [vmem:[#allocation7 + $0x838] sm:$0xff]
        %v664 = vld [vmem:[#allocation7 + $0x840] sm:$0xff]
        %v665 = vld [vmem:[#allocation7 + $0x848] sm:$0xff]
        %v666 = vld [vmem:[#allocation7 + $0x850] sm:$0xff]
        %v667 = vld [vmem:[#allocation7 + $0x858] sm:$0xff]
        %v668 = vld [vmem:[#allocation7 + $0x860] sm:$0xff]
        %v669 = vld [vmem:[#allocation7 + $0x868] sm:$0xff]
        %v670 = vld [vmem:[#allocation7 + $0x870] sm:$0xff]
        %v671 = vld [vmem:[#allocation7 + $0x878] sm:$0xff]
        %v672 = vld [vmem:[#allocation7 + $0x880] sm:$0xff]
        %v673 = vld [vmem:[#allocation7 + $0x888] sm:$0xff]
        %v674 = vld [vmem:[#allocation7 + $0x890] sm:$0xff]
        %v675 = vld [vmem:[#allocation7 + $0x898] sm:$0xff]
        %v676 = vld [vmem:[#allocation7 + $0x8a0] sm:$0xff]
        %v677 = vld [vmem:[#allocation7 + $0x8a8] sm:$0xff]
        %v678 = vld [vmem:[#allocation7 + $0x8b0] sm:$0xff]
        %v679 = vld [vmem:[#allocation7 + $0x8b8] sm:$0xff]
        %v680 = vld [vmem:[#allocation7 + $0x8c0] sm:$0xff]
        %v681 = vld [vmem:[#allocation7 + $0x8c8] sm:$0xff]
        %v682 = vld [vmem:[#allocation7 + $0x8d0] sm:$0xff]
        %v683 = vld [vmem:[#allocation7 + $0x8d8] sm:$0xff]
        %v684 = vld [vmem:[#allocation7 + $0x8e0] sm:$0xff]
        %v685 = vld [vmem:[#allocation7 + $0x8e8] sm:$0xff]
        %v686 = vld [vmem:[#allocation7 + $0x8f0] sm:$0xff]
        %v687 = vld [vmem:[#allocation7 + $0x8f8] sm:$0xff]
        %v688 = vld [vmem:[#allocation7 + $0x900] sm:$0xff]
        %v689 = vld [vmem:[#allocation7 + $0x908] sm:$0xff]
        %v690 = vld [vmem:[#allocation7 + $0x910] sm:$0xff]
        %v691 = vld [vmem:[#allocation7 + $0x918] sm:$0xff]
        %v692 = vld [vmem:[#allocation7 + $0x920] sm:$0xff]
        %v693 = vld [vmem:[#allocation7 + $0x928] sm:$0xff]
        %v694 = vld [vmem:[#allocation7 + $0x930] sm:$0xff]
        %v695 = vld [vmem:[#allocation7 + $0x938] sm:$0xff]
        %v696 = vld [vmem:[#allocation7 + $0x940] sm:$0xff]
        %v697 = vld [vmem:[#allocation7 + $0x948] sm:$0xff]
        %v698 = vld [vmem:[#allocation7 + $0x950] sm:$0xff]
        %v699 = vld [vmem:[#allocation7 + $0x958] sm:$0xff]
        %v700 = vld [vmem:[#allocation7 + $0x960] sm:$0xff]
        %v701 = vld [vmem:[#allocation7 + $0x968] sm:$0xff]
        %v702 = vld [vmem:[#allocation7 + $0x970] sm:$0xff]
        %v703 = vld [vmem:[#allocation7 + $0x978] sm:$0xff]
        %v704 = vld [vmem:[#allocation7 + $0x980] sm:$0xff]
        %v705 = vld [vmem:[#allocation7 + $0x988] sm:$0xff]
        %v706 = vld [vmem:[#allocation7 + $0x990] sm:$0xff]
        %v707 = vld [vmem:[#allocation7 + $0x998] sm:$0xff]
        %v708 = vld [vmem:[#allocation7 + $0x9a0] sm:$0xff]
        %v709 = vld [vmem:[#allocation7 + $0x9a8] sm:$0xff]
        %v710 = vld [vmem:[#allocation7 + $0x9b0] sm:$0xff]
        %v711 = vld [vmem:[#allocation7 + $0x9b8] sm:$0xff]
        %v712 = vld [vmem:[#allocation7 + $0x9c0] sm:$0xff]
        %v713 = vld [vmem:[#allocation7 + $0x9c8] sm:$0xff]
        %v714 = vld [vmem:[#allocation7 + $0x9d0] sm:$0xff]
        %v715 = vld [vmem:[#allocation7 + $0x9d8] sm:$0xff]
        %v716 = vld [vmem:[#allocation7 + $0x9e0] sm:$0xff]
        %v717 = vld [vmem:[#allocation7 + $0x9e8] sm:$0xff]
        %v718 = vld [vmem:[#allocation7 + $0x9f0] sm:$0xff]
        %v719 = vld [vmem:[#allocation7 + $0x9f8] sm:$0xff]
        %v720 = vld [vmem:[#allocation7 + $0xa00] sm:$0xff]
        %v721 = vld [vmem:[#allocation7 + $0xa08] sm:$0xff]
        %v722 = vld [vmem:[#allocation7 + $0xa10] sm:$0xff]
        %v723 = vld [vmem:[#allocation7 + $0xa18] sm:$0xff]
        %v724 = vld [vmem:[#allocation7 + $0xa20] sm:$0xff]
        %v725 = vld [vmem:[#allocation7 + $0xa28] sm:$0xff]
        %v726 = vld [vmem:[#allocation7 + $0xa30] sm:$0xff]
        %v727 = vld [vmem:[#allocation7 + $0xa38] sm:$0xff]
        %v728 = vld [vmem:[#allocation7 + $0xa40] sm:$0xff]
        %v729 = vld [vmem:[#allocation7 + $0xa48] sm:$0xff]
        %v730 = vld [vmem:[#allocation7 + $0xa50] sm:$0xff]
        %v731 = vld [vmem:[#allocation7 + $0xa58] sm:$0xff]
        %v732 = vld [vmem:[#allocation7 + $0xa60] sm:$0xff]
        %v733 = vld [vmem:[#allocation7 + $0xa68] sm:$0xff]
        %v734 = vld [vmem:[#allocation7 + $0xa70] sm:$0xff]
        %v735 = vld [vmem:[#allocation7 + $0xa78] sm:$0xff]
        %v736 = vld [vmem:[#allocation7 + $0xa80] sm:$0xff]
        %v737 = vld [vmem:[#allocation7 + $0xa88] sm:$0xff]
        %v738 = vld [vmem:[#allocation7 + $0xa90] sm:$0xff]
        %v739 = vld [vmem:[#allocation7 + $0xa98] sm:$0xff]
        %v740 = vld [vmem:[#allocation7 + $0xaa0] sm:$0xff]
        %v741 = vld [vmem:[#allocation7 + $0xaa8] sm:$0xff]
        %v742 = vld [vmem:[#allocation7 + $0xab0] sm:$0xff]
        %v743 = vld [vmem:[#allocation7 + $0xab8] sm:$0xff]
        %v744 = vld [vmem:[#allocation7 + $0xac0] sm:$0xff]
        %v745 = vld [vmem:[#allocation7 + $0xac8] sm:$0xff]
        %v746 = vld [vmem:[#allocation7 + $0xad0] sm:$0xff]
        %v747 = vld [vmem:[#allocation7 + $0xad8] sm:$0xff]
        %v748 = vld [vmem:[#allocation7 + $0xae0] sm:$0xff]
        %v749 = vld [vmem:[#allocation7 + $0xae8] sm:$0xff]
        %v750 = vld [vmem:[#allocation7 + $0xaf0] sm:$0xff]
        %v751 = vld [vmem:[#allocation7 + $0xaf8] sm:$0xff]
        %v752 = vld [vmem:[#allocation7 + $0xb00] sm:$0xff]
        %v753 = vld [vmem:[#allocation7 + $0xb08] sm:$0xff]
        %v754 = vld [vmem:[#allocation7 + $0xb10] sm:$0xff]
        %v755 = vld [vmem:[#allocation7 + $0xb18] sm:$0xff]
        %v756 = vld [vmem:[#allocation7 + $0xb20] sm:$0xff]
        %v757 = vld [vmem:[#allocation7 + $0xb28] sm:$0xff]
        %v758 = vld [vmem:[#allocation7 + $0xb30] sm:$0xff]
        %v759 = vld [vmem:[#allocation7 + $0xb38] sm:$0xff]
        %v760 = vld [vmem:[#allocation7 + $0xb40] sm:$0xff]
        %v761 = vld [vmem:[#allocation7 + $0xb48] sm:$0xff]
        %v762 = vld [vmem:[#allocation7 + $0xb50] sm:$0xff]
        %v763 = vld [vmem:[#allocation7 + $0xb58] sm:$0xff]
        %v764 = vld [vmem:[#allocation7 + $0xb60] sm:$0xff]
        %v765 = vld [vmem:[#allocation7 + $0xb68] sm:$0xff]
        %v766 = vld [vmem:[#allocation7 + $0xb70] sm:$0xff]
        %v767 = vld [vmem:[#allocation7 + $0xb78] sm:$0xff]
        %v768 = vld [vmem:[#allocation7 + $0xb80] sm:$0xff]
        %v769 = vld [vmem:[#allocation7 + $0xb88] sm:$0xff]
        %v770 = vld [vmem:[#allocation7 + $0xb90] sm:$0xff]
        %v771 = vld [vmem:[#allocation7 + $0xb98] sm:$0xff]
        %v772 = vld [vmem:[#allocation7 + $0xba0] sm:$0xff]
        %v773 = vld [vmem:[#allocation7 + $0xba8] sm:$0xff]
        %v774 = vld [vmem:[#allocation7 + $0xbb0] sm:$0xff]
        %v775 = vld [vmem:[#allocation7 + $0xbb8] sm:$0xff]
        %v776 = vld [vmem:[#allocation7 + $0xbc0] sm:$0xff]
        %v777 = vld [vmem:[#allocation7 + $0xbc8] sm:$0xff]
        %v778 = vld [vmem:[#allocation7 + $0xbd0] sm:$0xff]
        %v779 = vld [vmem:[#allocation7 + $0xbd8] sm:$0xff]
        %v780 = vld [vmem:[#allocation7 + $0xbe0] sm:$0xff]
        %v781 = vld [vmem:[#allocation7 + $0xbe8] sm:$0xff]
        %v782 = vld [vmem:[#allocation7 + $0xbf0] sm:$0xff]
        %v783 = vld [vmem:[#allocation7 + $0xbf8] sm:$0xff]
        %v1168 = vunpack.c.l.b16 %v400
        %v1169 = vunpack.c.h.b16 %v400
        %v1170 = vunpack.c.l.b16 %v401
        %v1171 = vunpack.c.h.b16 %v401
        %v1172 = vunpack.c.l.b16 %v402
        %v1173 = vunpack.c.h.b16 %v402
        %v1174 = vunpack.c.l.b16 %v403
        %v1175 = vunpack.c.h.b16 %v403
        %v1176 = vunpack.c.l.b16 %v404
        %v1177 = vunpack.c.h.b16 %v404
        %v1178 = vunpack.c.l.b16 %v405
        %v1179 = vunpack.c.h.b16 %v405
        %v1180 = vunpack.c.l.b16 %v406
        %v1181 = vunpack.c.h.b16 %v406
        %v1182 = vunpack.c.l.b16 %v407
        %v1183 = vunpack.c.h.b16 %v407
        %v1184 = vunpack.c.l.b16 %v408
        %v1185 = vunpack.c.h.b16 %v408
        %v1186 = vunpack.c.l.b16 %v409
        %v1187 = vunpack.c.h.b16 %v409
        %v1188 = vunpack.c.l.b16 %v410
        %v1189 = vunpack.c.h.b16 %v410
        %v1190 = vunpack.c.l.b16 %v411
        %v1191 = vunpack.c.h.b16 %v411
        %v1192 = vunpack.c.l.b16 %v412
        %v1193 = vunpack.c.h.b16 %v412
        %v1194 = vunpack.c.l.b16 %v413
        %v1195 = vunpack.c.h.b16 %v413
        %v1196 = vunpack.c.l.b16 %v414
        %v1197 = vunpack.c.h.b16 %v414
        %v1198 = vunpack.c.l.b16 %v415
        %v1199 = vunpack.c.h.b16 %v415
        %v1200 = vunpack.c.l.b16 %v416
        %v1201 = vunpack.c.h.b16 %v416
        %v1202 = vunpack.c.l.b16 %v417
        %v1203 = vunpack.c.h.b16 %v417
        %v1204 = vunpack.c.l.b16 %v418
        %v1205 = vunpack.c.h.b16 %v418
        %v1206 = vunpack.c.l.b16 %v419
        %v1207 = vunpack.c.h.b16 %v419
        %v1208 = vunpack.c.l.b16 %v420
        %v1209 = vunpack.c.h.b16 %v420
        %v1210 = vunpack.c.l.b16 %v421
        %v1211 = vunpack.c.h.b16 %v421
        %v1212 = vunpack.c.l.b16 %v422
        %v1213 = vunpack.c.h.b16 %v422
        %v1214 = vunpack.c.l.b16 %v423
        %v1215 = vunpack.c.h.b16 %v423
        %v1216 = vunpack.c.l.b16 %v424
        %v1217 = vunpack.c.h.b16 %v424
        %v1218 = vunpack.c.l.b16 %v425
        %v1219 = vunpack.c.h.b16 %v425
        %v1220 = vunpack.c.l.b16 %v426
        %v1221 = vunpack.c.h.b16 %v426
        %v1222 = vunpack.c.l.b16 %v427
        %v1223 = vunpack.c.h.b16 %v427
        %v1224 = vunpack.c.l.b16 %v428
        %v1225 = vunpack.c.h.b16 %v428
        %v1226 = vunpack.c.l.b16 %v429
        %v1227 = vunpack.c.h.b16 %v429
        %v1228 = vunpack.c.l.b16 %v430
        %v1229 = vunpack.c.h.b16 %v430
        %v1230 = vunpack.c.l.b16 %v431
        %v1231 = vunpack.c.h.b16 %v431
        %v1232 = vunpack.c.l.b16 %v432
        %v1233 = vunpack.c.h.b16 %v432
        %v1234 = vunpack.c.l.b16 %v433
        %v1235 = vunpack.c.h.b16 %v433
        %v1236 = vunpack.c.l.b16 %v434
        %v1237 = vunpack.c.h.b16 %v434
        %v1238 = vunpack.c.l.b16 %v435
        %v1239 = vunpack.c.h.b16 %v435
        %v1240 = vunpack.c.l.b16 %v436
        %v1241 = vunpack.c.h.b16 %v436
        %v1242 = vunpack.c.l.b16 %v437
        %v1243 = vunpack.c.h.b16 %v437
        %v1244 = vunpack.c.l.b16 %v438
        %v1245 = vunpack.c.h.b16 %v438
        %v1246 = vunpack.c.l.b16 %v439
        %v1247 = vunpack.c.h.b16 %v439
        %v1248 = vunpack.c.l.b16 %v440
        %v1249 = vunpack.c.h.b16 %v440
        %v1250 = vunpack.c.l.b16 %v441
        %v1251 = vunpack.c.h.b16 %v441
        %v1252 = vunpack.c.l.b16 %v442
        %v1253 = vunpack.c.h.b16 %v442
        %v1254 = vunpack.c.l.b16 %v443
        %v1255 = vunpack.c.h.b16 %v443
        %v1256 = vunpack.c.l.b16 %v444
        %v1257 = vunpack.c.h.b16 %v444
        %v1258 = vunpack.c.l.b16 %v445
        %v1259 = vunpack.c.h.b16 %v445
        %v1260 = vunpack.c.l.b16 %v446
        %v1261 = vunpack.c.h.b16 %v446
        %v1262 = vunpack.c.l.b16 %v447
        %v1263 = vunpack.c.h.b16 %v447
        %v1264 = vunpack.c.l.b16 %v448
        %v1265 = vunpack.c.h.b16 %v448
        %v1266 = vunpack.c.l.b16 %v449
        %v1267 = vunpack.c.h.b16 %v449
        %v1268 = vunpack.c.l.b16 %v450
        %v1269 = vunpack.c.h.b16 %v450
        %v1270 = vunpack.c.l.b16 %v451
        %v1271 = vunpack.c.h.b16 %v451
        %v1272 = vunpack.c.l.b16 %v452
        %v1273 = vunpack.c.h.b16 %v452
        %v1274 = vunpack.c.l.b16 %v453
        %v1275 = vunpack.c.h.b16 %v453
        %v1276 = vunpack.c.l.b16 %v454
        %v1277 = vunpack.c.h.b16 %v454
        %v1278 = vunpack.c.l.b16 %v455
        %v1279 = vunpack.c.h.b16 %v455
        %v1280 = vunpack.c.l.b16 %v456
        %v1281 = vunpack.c.h.b16 %v456
        %v1282 = vunpack.c.l.b16 %v457
        %v1283 = vunpack.c.h.b16 %v457
        %v1284 = vunpack.c.l.b16 %v458
        %v1285 = vunpack.c.h.b16 %v458
        %v1286 = vunpack.c.l.b16 %v459
        %v1287 = vunpack.c.h.b16 %v459
        %v1288 = vunpack.c.l.b16 %v460
        %v1289 = vunpack.c.h.b16 %v460
        %v1290 = vunpack.c.l.b16 %v461
        %v1291 = vunpack.c.h.b16 %v461
        %v1292 = vunpack.c.l.b16 %v462
        %v1293 = vunpack.c.h.b16 %v462
        %v1294 = vunpack.c.l.b16 %v463
        %v1295 = vunpack.c.h.b16 %v463
        %v1296 = vunpack.c.l.b16 %v464
        %v1297 = vunpack.c.h.b16 %v464
        %v1298 = vunpack.c.l.b16 %v465
        %v1299 = vunpack.c.h.b16 %v465
        %v1300 = vunpack.c.l.b16 %v466
        %v1301 = vunpack.c.h.b16 %v466
        %v1302 = vunpack.c.l.b16 %v467
        %v1303 = vunpack.c.h.b16 %v467
        %v1304 = vunpack.c.l.b16 %v468
        %v1305 = vunpack.c.h.b16 %v468
        %v1306 = vunpack.c.l.b16 %v469
        %v1307 = vunpack.c.h.b16 %v469
        %v1308 = vunpack.c.l.b16 %v470
        %v1309 = vunpack.c.h.b16 %v470
        %v1310 = vunpack.c.l.b16 %v471
        %v1311 = vunpack.c.h.b16 %v471
        %v1312 = vunpack.c.l.b16 %v472
        %v1313 = vunpack.c.h.b16 %v472
        %v1314 = vunpack.c.l.b16 %v473
        %v1315 = vunpack.c.h.b16 %v473
        %v1316 = vunpack.c.l.b16 %v474
        %v1317 = vunpack.c.h.b16 %v474
        %v1318 = vunpack.c.l.b16 %v475
        %v1319 = vunpack.c.h.b16 %v475
        %v1320 = vunpack.c.l.b16 %v476
        %v1321 = vunpack.c.h.b16 %v476
        %v1322 = vunpack.c.l.b16 %v477
        %v1323 = vunpack.c.h.b16 %v477
        %v1324 = vunpack.c.l.b16 %v478
        %v1325 = vunpack.c.h.b16 %v478
        %v1326 = vunpack.c.l.b16 %v479
        %v1327 = vunpack.c.h.b16 %v479
        %v1328 = vunpack.c.l.b16 %v480
        %v1329 = vunpack.c.h.b16 %v480
        %v1330 = vunpack.c.l.b16 %v481
        %v1331 = vunpack.c.h.b16 %v481
        %v1332 = vunpack.c.l.b16 %v482
        %v1333 = vunpack.c.h.b16 %v482
        %v1334 = vunpack.c.l.b16 %v483
        %v1335 = vunpack.c.h.b16 %v483
        %v1336 = vunpack.c.l.b16 %v484
        %v1337 = vunpack.c.h.b16 %v484
        %v1338 = vunpack.c.l.b16 %v485
        %v1339 = vunpack.c.h.b16 %v485
        %v1340 = vunpack.c.l.b16 %v486
        %v1341 = vunpack.c.h.b16 %v486
        %v1342 = vunpack.c.l.b16 %v487
        %v1343 = vunpack.c.h.b16 %v487
        %v1344 = vunpack.c.l.b16 %v488
        %v1345 = vunpack.c.h.b16 %v488
        %v1346 = vunpack.c.l.b16 %v489
        %v1347 = vunpack.c.h.b16 %v489
        %v1348 = vunpack.c.l.b16 %v490
        %v1349 = vunpack.c.h.b16 %v490
        %v1350 = vunpack.c.l.b16 %v491
        %v1351 = vunpack.c.h.b16 %v491
        %v1352 = vunpack.c.l.b16 %v492
        %v1353 = vunpack.c.h.b16 %v492
        %v1354 = vunpack.c.l.b16 %v493
        %v1355 = vunpack.c.h.b16 %v493
        %v1356 = vunpack.c.l.b16 %v494
        %v1357 = vunpack.c.h.b16 %v494
        %v1358 = vunpack.c.l.b16 %v495
        %v1359 = vunpack.c.h.b16 %v495
        %v1360 = vunpack.c.l.b16 %v496
        %v1361 = vunpack.c.h.b16 %v496
        %v1362 = vunpack.c.l.b16 %v497
        %v1363 = vunpack.c.h.b16 %v497
        %v1364 = vunpack.c.l.b16 %v498
        %v1365 = vunpack.c.h.b16 %v498
        %v1366 = vunpack.c.l.b16 %v499
        %v1367 = vunpack.c.h.b16 %v499
        %v1368 = vunpack.c.l.b16 %v500
        %v1369 = vunpack.c.h.b16 %v500
        %v1370 = vunpack.c.l.b16 %v501
        %v1371 = vunpack.c.h.b16 %v501
        %v1372 = vunpack.c.l.b16 %v502
        %v1373 = vunpack.c.h.b16 %v502
        %v1374 = vunpack.c.l.b16 %v503
        %v1375 = vunpack.c.h.b16 %v503
        %v1376 = vunpack.c.l.b16 %v504
        %v1377 = vunpack.c.h.b16 %v504
        %v1378 = vunpack.c.l.b16 %v505
        %v1379 = vunpack.c.h.b16 %v505
        %v1380 = vunpack.c.l.b16 %v506
        %v1381 = vunpack.c.h.b16 %v506
        %v1382 = vunpack.c.l.b16 %v507
        %v1383 = vunpack.c.h.b16 %v507
        %v1384 = vunpack.c.l.b16 %v508
        %v1385 = vunpack.c.h.b16 %v508
        %v1386 = vunpack.c.l.b16 %v509
        %v1387 = vunpack.c.h.b16 %v509
        %v1388 = vunpack.c.l.b16 %v510
        %v1389 = vunpack.c.h.b16 %v510
        %v1390 = vunpack.c.l.b16 %v511
        %v1391 = vunpack.c.h.b16 %v511
        %v1392 = vunpack.c.l.b16 %v512
        %v1393 = vunpack.c.h.b16 %v512
        %v1394 = vunpack.c.l.b16 %v513
        %v1395 = vunpack.c.h.b16 %v513
        %v1396 = vunpack.c.l.b16 %v514
        %v1397 = vunpack.c.h.b16 %v514
        %v1398 = vunpack.c.l.b16 %v515
        %v1399 = vunpack.c.h.b16 %v515
        %v1400 = vunpack.c.l.b16 %v516
        %v1401 = vunpack.c.h.b16 %v516
        %v1402 = vunpack.c.l.b16 %v517
        %v1403 = vunpack.c.h.b16 %v517
        %v1404 = vunpack.c.l.b16 %v518
        %v1405 = vunpack.c.h.b16 %v518
        %v1406 = vunpack.c.l.b16 %v519
        %v1407 = vunpack.c.h.b16 %v519
        %v1408 = vunpack.c.l.b16 %v520
        %v1409 = vunpack.c.h.b16 %v520
        %v1410 = vunpack.c.l.b16 %v521
        %v1411 = vunpack.c.h.b16 %v521
        %v1412 = vunpack.c.l.b16 %v522
        %v1413 = vunpack.c.h.b16 %v522
        %v1414 = vunpack.c.l.b16 %v523
        %v1415 = vunpack.c.h.b16 %v523
        %v1416 = vunpack.c.l.b16 %v524
        %v1417 = vunpack.c.h.b16 %v524
        %v1418 = vunpack.c.l.b16 %v525
        %v1419 = vunpack.c.h.b16 %v525
        %v1420 = vunpack.c.l.b16 %v526
        %v1421 = vunpack.c.h.b16 %v526
        %v1422 = vunpack.c.l.b16 %v527
        %v1423 = vunpack.c.h.b16 %v527
        %v1424 = vunpack.c.l.b16 %v528
        %v1425 = vunpack.c.h.b16 %v528
        %v1426 = vunpack.c.l.b16 %v529
        %v1427 = vunpack.c.h.b16 %v529
        %v1428 = vunpack.c.l.b16 %v530
        %v1429 = vunpack.c.h.b16 %v530
        %v1430 = vunpack.c.l.b16 %v531
        %v1431 = vunpack.c.h.b16 %v531
        %v1432 = vunpack.c.l.b16 %v532
        %v1433 = vunpack.c.h.b16 %v532
        %v1434 = vunpack.c.l.b16 %v533
        %v1435 = vunpack.c.h.b16 %v533
        %v1436 = vunpack.c.l.b16 %v534
        %v1437 = vunpack.c.h.b16 %v534
        %v1438 = vunpack.c.l.b16 %v535
        %v1439 = vunpack.c.h.b16 %v535
        %v1440 = vunpack.c.l.b16 %v536
        %v1441 = vunpack.c.h.b16 %v536
        %v1442 = vunpack.c.l.b16 %v537
        %v1443 = vunpack.c.h.b16 %v537
        %v1444 = vunpack.c.l.b16 %v538
        %v1445 = vunpack.c.h.b16 %v538
        %v1446 = vunpack.c.l.b16 %v539
        %v1447 = vunpack.c.h.b16 %v539
        %v1448 = vunpack.c.l.b16 %v540
        %v1449 = vunpack.c.h.b16 %v540
        %v1450 = vunpack.c.l.b16 %v541
        %v1451 = vunpack.c.h.b16 %v541
        %v1452 = vunpack.c.l.b16 %v542
        %v1453 = vunpack.c.h.b16 %v542
        %v1454 = vunpack.c.l.b16 %v543
        %v1455 = vunpack.c.h.b16 %v543
        %v1456 = vunpack.c.l.b16 %v544
        %v1457 = vunpack.c.h.b16 %v544
        %v1458 = vunpack.c.l.b16 %v545
        %v1459 = vunpack.c.h.b16 %v545
        %v1460 = vunpack.c.l.b16 %v546
        %v1461 = vunpack.c.h.b16 %v546
        %v1462 = vunpack.c.l.b16 %v547
        %v1463 = vunpack.c.h.b16 %v547
        %v1464 = vunpack.c.l.b16 %v548
        %v1465 = vunpack.c.h.b16 %v548
        %v1466 = vunpack.c.l.b16 %v549
        %v1467 = vunpack.c.h.b16 %v549
        %v1468 = vunpack.c.l.b16 %v550
        %v1469 = vunpack.c.h.b16 %v550
        %v1470 = vunpack.c.l.b16 %v551
        %v1471 = vunpack.c.h.b16 %v551
        %v1472 = vunpack.c.l.b16 %v552
        %v1473 = vunpack.c.h.b16 %v552
        %v1474 = vunpack.c.l.b16 %v553
        %v1475 = vunpack.c.h.b16 %v553
        %v1476 = vunpack.c.l.b16 %v554
        %v1477 = vunpack.c.h.b16 %v554
        %v1478 = vunpack.c.l.b16 %v555
        %v1479 = vunpack.c.h.b16 %v555
        %v1480 = vunpack.c.l.b16 %v556
        %v1481 = vunpack.c.h.b16 %v556
        %v1482 = vunpack.c.l.b16 %v557
        %v1483 = vunpack.c.h.b16 %v557
        %v1484 = vunpack.c.l.b16 %v558
        %v1485 = vunpack.c.h.b16 %v558
        %v1486 = vunpack.c.l.b16 %v559
        %v1487 = vunpack.c.h.b16 %v559
        %v1488 = vunpack.c.l.b16 %v560
        %v1489 = vunpack.c.h.b16 %v560
        %v1490 = vunpack.c.l.b16 %v561
        %v1491 = vunpack.c.h.b16 %v561
        %v1492 = vunpack.c.l.b16 %v562
        %v1493 = vunpack.c.h.b16 %v562
        %v1494 = vunpack.c.l.b16 %v563
        %v1495 = vunpack.c.h.b16 %v563
        %v1496 = vunpack.c.l.b16 %v564
        %v1497 = vunpack.c.h.b16 %v564
        %v1498 = vunpack.c.l.b16 %v565
        %v1499 = vunpack.c.h.b16 %v565
        %v1500 = vunpack.c.l.b16 %v566
        %v1501 = vunpack.c.h.b16 %v566
        %v1502 = vunpack.c.l.b16 %v567
        %v1503 = vunpack.c.h.b16 %v567
        %v1504 = vunpack.c.l.b16 %v568
        %v1505 = vunpack.c.h.b16 %v568
        %v1506 = vunpack.c.l.b16 %v569
        %v1507 = vunpack.c.h.b16 %v569
        %v1508 = vunpack.c.l.b16 %v570
        %v1509 = vunpack.c.h.b16 %v570
        %v1510 = vunpack.c.l.b16 %v571
        %v1511 = vunpack.c.h.b16 %v571
        %v1512 = vunpack.c.l.b16 %v572
        %v1513 = vunpack.c.h.b16 %v572
        %v1514 = vunpack.c.l.b16 %v573
        %v1515 = vunpack.c.h.b16 %v573
        %v1516 = vunpack.c.l.b16 %v574
        %v1517 = vunpack.c.h.b16 %v574
        %v1518 = vunpack.c.l.b16 %v575
        %v1519 = vunpack.c.h.b16 %v575
        %v1520 = vunpack.c.l.b16 %v576
        %v1521 = vunpack.c.h.b16 %v576
        %v1522 = vunpack.c.l.b16 %v577
        %v1523 = vunpack.c.h.b16 %v577
        %v1524 = vunpack.c.l.b16 %v578
        %v1525 = vunpack.c.h.b16 %v578
        %v1526 = vunpack.c.l.b16 %v579
        %v1527 = vunpack.c.h.b16 %v579
        %v1528 = vunpack.c.l.b16 %v580
        %v1529 = vunpack.c.h.b16 %v580
        %v1530 = vunpack.c.l.b16 %v581
        %v1531 = vunpack.c.h.b16 %v581
        %v1532 = vunpack.c.l.b16 %v582
        %v1533 = vunpack.c.h.b16 %v582
        %v1534 = vunpack.c.l.b16 %v583
        %v1535 = vunpack.c.h.b16 %v583
        %v1536 = vunpack.c.l.b16 %v584
        %v1537 = vunpack.c.h.b16 %v584
        %v1538 = vunpack.c.l.b16 %v585
        %v1539 = vunpack.c.h.b16 %v585
        %v1540 = vunpack.c.l.b16 %v586
        %v1541 = vunpack.c.h.b16 %v586
        %v1542 = vunpack.c.l.b16 %v587
        %v1543 = vunpack.c.h.b16 %v587
        %v1544 = vunpack.c.l.b16 %v588
        %v1545 = vunpack.c.h.b16 %v588
        %v1546 = vunpack.c.l.b16 %v589
        %v1547 = vunpack.c.h.b16 %v589
        %v1548 = vunpack.c.l.b16 %v590
        %v1549 = vunpack.c.h.b16 %v590
        %v1550 = vunpack.c.l.b16 %v591
        %v1551 = vunpack.c.h.b16 %v591
        %v1552 = vunpack.c.l.b16 %v592
        %v1553 = vunpack.c.h.b16 %v592
        %v1554 = vunpack.c.l.b16 %v593
        %v1555 = vunpack.c.h.b16 %v593
        %v1556 = vunpack.c.l.b16 %v594
        %v1557 = vunpack.c.h.b16 %v594
        %v1558 = vunpack.c.l.b16 %v595
        %v1559 = vunpack.c.h.b16 %v595
        %v1560 = vunpack.c.l.b16 %v596
        %v1561 = vunpack.c.h.b16 %v596
        %v1562 = vunpack.c.l.b16 %v597
        %v1563 = vunpack.c.h.b16 %v597
        %v1564 = vunpack.c.l.b16 %v598
        %v1565 = vunpack.c.h.b16 %v598
        %v1566 = vunpack.c.l.b16 %v599
        %v1567 = vunpack.c.h.b16 %v599
        %v1568 = vunpack.c.l.b16 %v600
        %v1569 = vunpack.c.h.b16 %v600
        %v1570 = vunpack.c.l.b16 %v601
        %v1571 = vunpack.c.h.b16 %v601
        %v1572 = vunpack.c.l.b16 %v602
        %v1573 = vunpack.c.h.b16 %v602
        %v1574 = vunpack.c.l.b16 %v603
        %v1575 = vunpack.c.h.b16 %v603
        %v1576 = vunpack.c.l.b16 %v604
        %v1577 = vunpack.c.h.b16 %v604
        %v1578 = vunpack.c.l.b16 %v605
        %v1579 = vunpack.c.h.b16 %v605
        %v1580 = vunpack.c.l.b16 %v606
        %v1581 = vunpack.c.h.b16 %v606
        %v1582 = vunpack.c.l.b16 %v607
        %v1583 = vunpack.c.h.b16 %v607
        %v1584 = vunpack.c.l.b16 %v608
        %v1585 = vunpack.c.h.b16 %v608
        %v1586 = vunpack.c.l.b16 %v609
        %v1587 = vunpack.c.h.b16 %v609
        %v1588 = vunpack.c.l.b16 %v610
        %v1589 = vunpack.c.h.b16 %v610
        %v1590 = vunpack.c.l.b16 %v611
        %v1591 = vunpack.c.h.b16 %v611
        %v1592 = vunpack.c.l.b16 %v612
        %v1593 = vunpack.c.h.b16 %v612
        %v1594 = vunpack.c.l.b16 %v613
        %v1595 = vunpack.c.h.b16 %v613
        %v1596 = vunpack.c.l.b16 %v614
        %v1597 = vunpack.c.h.b16 %v614
        %v1598 = vunpack.c.l.b16 %v615
        %v1599 = vunpack.c.h.b16 %v615
        %v1600 = vunpack.c.l.b16 %v616
        %v1601 = vunpack.c.h.b16 %v616
        %v1602 = vunpack.c.l.b16 %v617
        %v1603 = vunpack.c.h.b16 %v617
        %v1604 = vunpack.c.l.b16 %v618
        %v1605 = vunpack.c.h.b16 %v618
        %v1606 = vunpack.c.l.b16 %v619
        %v1607 = vunpack.c.h.b16 %v619
        %v1608 = vunpack.c.l.b16 %v620
        %v1609 = vunpack.c.h.b16 %v620
        %v1610 = vunpack.c.l.b16 %v621
        %v1611 = vunpack.c.h.b16 %v621
        %v1612 = vunpack.c.l.b16 %v622
        %v1613 = vunpack.c.h.b16 %v622
        %v1614 = vunpack.c.l.b16 %v623
        %v1615 = vunpack.c.h.b16 %v623
        %v1616 = vunpack.c.l.b16 %v624
        %v1617 = vunpack.c.h.b16 %v624
        %v1618 = vunpack.c.l.b16 %v625
        %v1619 = vunpack.c.h.b16 %v625
        %v1620 = vunpack.c.l.b16 %v626
        %v1621 = vunpack.c.h.b16 %v626
        %v1622 = vunpack.c.l.b16 %v627
        %v1623 = vunpack.c.h.b16 %v627
        %v1624 = vunpack.c.l.b16 %v628
        %v1625 = vunpack.c.h.b16 %v628
        %v1626 = vunpack.c.l.b16 %v629
        %v1627 = vunpack.c.h.b16 %v629
        %v1628 = vunpack.c.l.b16 %v630
        %v1629 = vunpack.c.h.b16 %v630
        %v1630 = vunpack.c.l.b16 %v631
        %v1631 = vunpack.c.h.b16 %v631
        %v1632 = vunpack.c.l.b16 %v632
        %v1633 = vunpack.c.h.b16 %v632
        %v1634 = vunpack.c.l.b16 %v633
        %v1635 = vunpack.c.h.b16 %v633
        %v1636 = vunpack.c.l.b16 %v634
        %v1637 = vunpack.c.h.b16 %v634
        %v1638 = vunpack.c.l.b16 %v635
        %v1639 = vunpack.c.h.b16 %v635
        %v1640 = vunpack.c.l.b16 %v636
        %v1641 = vunpack.c.h.b16 %v636
        %v1642 = vunpack.c.l.b16 %v637
        %v1643 = vunpack.c.h.b16 %v637
        %v1644 = vunpack.c.l.b16 %v638
        %v1645 = vunpack.c.h.b16 %v638
        %v1646 = vunpack.c.l.b16 %v639
        %v1647 = vunpack.c.h.b16 %v639
        %v1648 = vunpack.c.l.b16 %v640
        %v1649 = vunpack.c.h.b16 %v640
        %v1650 = vunpack.c.l.b16 %v641
        %v1651 = vunpack.c.h.b16 %v641
        %v1652 = vunpack.c.l.b16 %v642
        %v1653 = vunpack.c.h.b16 %v642
        %v1654 = vunpack.c.l.b16 %v643
        %v1655 = vunpack.c.h.b16 %v643
        %v1656 = vunpack.c.l.b16 %v644
        %v1657 = vunpack.c.h.b16 %v644
        %v1658 = vunpack.c.l.b16 %v645
        %v1659 = vunpack.c.h.b16 %v645
        %v1660 = vunpack.c.l.b16 %v646
        %v1661 = vunpack.c.h.b16 %v646
        %v1662 = vunpack.c.l.b16 %v647
        %v1663 = vunpack.c.h.b16 %v647
        %v1664 = vunpack.c.l.b16 %v648
        %v1665 = vunpack.c.h.b16 %v648
        %v1666 = vunpack.c.l.b16 %v649
        %v1667 = vunpack.c.h.b16 %v649
        %v1668 = vunpack.c.l.b16 %v650
        %v1669 = vunpack.c.h.b16 %v650
        %v1670 = vunpack.c.l.b16 %v651
        %v1671 = vunpack.c.h.b16 %v651
        %v1672 = vunpack.c.l.b16 %v652
        %v1673 = vunpack.c.h.b16 %v652
        %v1674 = vunpack.c.l.b16 %v653
        %v1675 = vunpack.c.h.b16 %v653
        %v1676 = vunpack.c.l.b16 %v654
        %v1677 = vunpack.c.h.b16 %v654
        %v1678 = vunpack.c.l.b16 %v655
        %v1679 = vunpack.c.h.b16 %v655
        %v1680 = vunpack.c.l.b16 %v656
        %v1681 = vunpack.c.h.b16 %v656
        %v1682 = vunpack.c.l.b16 %v657
        %v1683 = vunpack.c.h.b16 %v657
        %v1684 = vunpack.c.l.b16 %v658
        %v1685 = vunpack.c.h.b16 %v658
        %v1686 = vunpack.c.l.b16 %v659
        %v1687 = vunpack.c.h.b16 %v659
        %v1688 = vunpack.c.l.b16 %v660
        %v1689 = vunpack.c.h.b16 %v660
        %v1690 = vunpack.c.l.b16 %v661
        %v1691 = vunpack.c.h.b16 %v661
        %v1692 = vunpack.c.l.b16 %v662
        %v1693 = vunpack.c.h.b16 %v662
        %v1694 = vunpack.c.l.b16 %v663
        %v1695 = vunpack.c.h.b16 %v663
        %v1696 = vunpack.c.l.b16 %v664
        %v1697 = vunpack.c.h.b16 %v664
        %v1698 = vunpack.c.l.b16 %v665
        %v1699 = vunpack.c.h.b16 %v665
        %v1700 = vunpack.c.l.b16 %v666
        %v1701 = vunpack.c.h.b16 %v666
        %v1702 = vunpack.c.l.b16 %v667
        %v1703 = vunpack.c.h.b16 %v667
        %v1704 = vunpack.c.l.b16 %v668
        %v1705 = vunpack.c.h.b16 %v668
        %v1706 = vunpack.c.l.b16 %v669
        %v1707 = vunpack.c.h.b16 %v669
        %v1708 = vunpack.c.l.b16 %v670
        %v1709 = vunpack.c.h.b16 %v670
        %v1710 = vunpack.c.l.b16 %v671
        %v1711 = vunpack.c.h.b16 %v671
        %v1712 = vunpack.c.l.b16 %v672
        %v1713 = vunpack.c.h.b16 %v672
        %v1714 = vunpack.c.l.b16 %v673
        %v1715 = vunpack.c.h.b16 %v673
        %v1716 = vunpack.c.l.b16 %v674
        %v1717 = vunpack.c.h.b16 %v674
        %v1718 = vunpack.c.l.b16 %v675
        %v1719 = vunpack.c.h.b16 %v675
        %v1720 = vunpack.c.l.b16 %v676
        %v1721 = vunpack.c.h.b16 %v676
        %v1722 = vunpack.c.l.b16 %v677
        %v1723 = vunpack.c.h.b16 %v677
        %v1724 = vunpack.c.l.b16 %v678
        %v1725 = vunpack.c.h.b16 %v678
        %v1726 = vunpack.c.l.b16 %v679
        %v1727 = vunpack.c.h.b16 %v679
        %v1728 = vunpack.c.l.b16 %v680
        %v1729 = vunpack.c.h.b16 %v680
        %v1730 = vunpack.c.l.b16 %v681
        %v1731 = vunpack.c.h.b16 %v681
        %v1732 = vunpack.c.l.b16 %v682
        %v1733 = vunpack.c.h.b16 %v682
        %v1734 = vunpack.c.l.b16 %v683
        %v1735 = vunpack.c.h.b16 %v683
        %v1736 = vunpack.c.l.b16 %v684
        %v1737 = vunpack.c.h.b16 %v684
        %v1738 = vunpack.c.l.b16 %v685
        %v1739 = vunpack.c.h.b16 %v685
        %v1740 = vunpack.c.l.b16 %v686
        %v1741 = vunpack.c.h.b16 %v686
        %v1742 = vunpack.c.l.b16 %v687
        %v1743 = vunpack.c.h.b16 %v687
        %v1744 = vunpack.c.l.b16 %v688
        %v1745 = vunpack.c.h.b16 %v688
        %v1746 = vunpack.c.l.b16 %v689
        %v1747 = vunpack.c.h.b16 %v689
        %v1748 = vunpack.c.l.b16 %v690
        %v1749 = vunpack.c.h.b16 %v690
        %v1750 = vunpack.c.l.b16 %v691
        %v1751 = vunpack.c.h.b16 %v691
        %v1752 = vunpack.c.l.b16 %v692
        %v1753 = vunpack.c.h.b16 %v692
        %v1754 = vunpack.c.l.b16 %v693
        %v1755 = vunpack.c.h.b16 %v693
        %v1756 = vunpack.c.l.b16 %v694
        %v1757 = vunpack.c.h.b16 %v694
        %v1758 = vunpack.c.l.b16 %v695
        %v1759 = vunpack.c.h.b16 %v695
        %v1760 = vunpack.c.l.b16 %v696
        %v1761 = vunpack.c.h.b16 %v696
        %v1762 = vunpack.c.l.b16 %v697
        %v1763 = vunpack.c.h.b16 %v697
        %v1764 = vunpack.c.l.b16 %v698
        %v1765 = vunpack.c.h.b16 %v698
        %v1766 = vunpack.c.l.b16 %v699
        %v1767 = vunpack.c.h.b16 %v699
        %v1768 = vunpack.c.l.b16 %v700
        %v1769 = vunpack.c.h.b16 %v700
        %v1770 = vunpack.c.l.b16 %v701
        %v1771 = vunpack.c.h.b16 %v701
        %v1772 = vunpack.c.l.b16 %v702
        %v1773 = vunpack.c.h.b16 %v702
        %v1774 = vunpack.c.l.b16 %v703
        %v1775 = vunpack.c.h.b16 %v703
        %v1776 = vunpack.c.l.b16 %v704
        %v1777 = vunpack.c.h.b16 %v704
        %v1778 = vunpack.c.l.b16 %v705
        %v1779 = vunpack.c.h.b16 %v705
        %v1780 = vunpack.c.l.b16 %v706
        %v1781 = vunpack.c.h.b16 %v706
        %v1782 = vunpack.c.l.b16 %v707
        %v1783 = vunpack.c.h.b16 %v707
        %v1784 = vunpack.c.l.b16 %v708
        %v1785 = vunpack.c.h.b16 %v708
        %v1786 = vunpack.c.l.b16 %v709
        %v1787 = vunpack.c.h.b16 %v709
        %v1788 = vunpack.c.l.b16 %v710
        %v1789 = vunpack.c.h.b16 %v710
        %v1790 = vunpack.c.l.b16 %v711
        %v1791 = vunpack.c.h.b16 %v711
        %v1792 = vunpack.c.l.b16 %v712
        %v1793 = vunpack.c.h.b16 %v712
        %v1794 = vunpack.c.l.b16 %v713
        %v1795 = vunpack.c.h.b16 %v713
        %v1796 = vunpack.c.l.b16 %v714
        %v1797 = vunpack.c.h.b16 %v714
        %v1798 = vunpack.c.l.b16 %v715
        %v1799 = vunpack.c.h.b16 %v715
        %v1800 = vunpack.c.l.b16 %v716
        %v1801 = vunpack.c.h.b16 %v716
        %v1802 = vunpack.c.l.b16 %v717
        %v1803 = vunpack.c.h.b16 %v717
        %v1804 = vunpack.c.l.b16 %v718
        %v1805 = vunpack.c.h.b16 %v718
        %v1806 = vunpack.c.l.b16 %v719
        %v1807 = vunpack.c.h.b16 %v719
        %v1808 = vunpack.c.l.b16 %v720
        %v1809 = vunpack.c.h.b16 %v720
        %v1810 = vunpack.c.l.b16 %v721
        %v1811 = vunpack.c.h.b16 %v721
        %v1812 = vunpack.c.l.b16 %v722
        %v1813 = vunpack.c.h.b16 %v722
        %v1814 = vunpack.c.l.b16 %v723
        %v1815 = vunpack.c.h.b16 %v723
        %v1816 = vunpack.c.l.b16 %v724
        %v1817 = vunpack.c.h.b16 %v724
        %v1818 = vunpack.c.l.b16 %v725
        %v1819 = vunpack.c.h.b16 %v725
        %v1820 = vunpack.c.l.b16 %v726
        %v1821 = vunpack.c.h.b16 %v726
        %v1822 = vunpack.c.l.b16 %v727
        %v1823 = vunpack.c.h.b16 %v727
        %v1824 = vunpack.c.l.b16 %v728
        %v1825 = vunpack.c.h.b16 %v728
        %v1826 = vunpack.c.l.b16 %v729
        %v1827 = vunpack.c.h.b16 %v729
        %v1828 = vunpack.c.l.b16 %v730
        %v1829 = vunpack.c.h.b16 %v730
        %v1830 = vunpack.c.l.b16 %v731
        %v1831 = vunpack.c.h.b16 %v731
        %v1832 = vunpack.c.l.b16 %v732
        %v1833 = vunpack.c.h.b16 %v732
        %v1834 = vunpack.c.l.b16 %v733
        %v1835 = vunpack.c.h.b16 %v733
        %v1836 = vunpack.c.l.b16 %v734
        %v1837 = vunpack.c.h.b16 %v734
        %v1838 = vunpack.c.l.b16 %v735
        %v1839 = vunpack.c.h.b16 %v735
        %v1840 = vunpack.c.l.b16 %v736
        %v1841 = vunpack.c.h.b16 %v736
        %v1842 = vunpack.c.l.b16 %v737
        %v1843 = vunpack.c.h.b16 %v737
        %v1844 = vunpack.c.l.b16 %v738
        %v1845 = vunpack.c.h.b16 %v738
        %v1846 = vunpack.c.l.b16 %v739
        %v1847 = vunpack.c.h.b16 %v739
        %v1848 = vunpack.c.l.b16 %v740
        %v1849 = vunpack.c.h.b16 %v740
        %v1850 = vunpack.c.l.b16 %v741
        %v1851 = vunpack.c.h.b16 %v741
        %v1852 = vunpack.c.l.b16 %v742
        %v1853 = vunpack.c.h.b16 %v742
        %v1854 = vunpack.c.l.b16 %v743
        %v1855 = vunpack.c.h.b16 %v743
        %v1856 = vunpack.c.l.b16 %v744
        %v1857 = vunpack.c.h.b16 %v744
        %v1858 = vunpack.c.l.b16 %v745
        %v1859 = vunpack.c.h.b16 %v745
        %v1860 = vunpack.c.l.b16 %v746
        %v1861 = vunpack.c.h.b16 %v746
        %v1862 = vunpack.c.l.b16 %v747
        %v1863 = vunpack.c.h.b16 %v747
        %v1864 = vunpack.c.l.b16 %v748
        %v1865 = vunpack.c.h.b16 %v748
        %v1866 = vunpack.c.l.b16 %v749
        %v1867 = vunpack.c.h.b16 %v749
        %v1868 = vunpack.c.l.b16 %v750
        %v1869 = vunpack.c.h.b16 %v750
        %v1870 = vunpack.c.l.b16 %v751
        %v1871 = vunpack.c.h.b16 %v751
        %v1872 = vunpack.c.l.b16 %v752
        %v1873 = vunpack.c.h.b16 %v752
        %v1874 = vunpack.c.l.b16 %v753
        %v1875 = vunpack.c.h.b16 %v753
        %v1876 = vunpack.c.l.b16 %v754
        %v1877 = vunpack.c.h.b16 %v754
        %v1878 = vunpack.c.l.b16 %v755
        %v1879 = vunpack.c.h.b16 %v755
        %v1880 = vunpack.c.l.b16 %v756
        %v1881 = vunpack.c.h.b16 %v756
        %v1882 = vunpack.c.l.b16 %v757
        %v1883 = vunpack.c.h.b16 %v757
        %v1884 = vunpack.c.l.b16 %v758
        %v1885 = vunpack.c.h.b16 %v758
        %v1886 = vunpack.c.l.b16 %v759
        %v1887 = vunpack.c.h.b16 %v759
        %v1888 = vunpack.c.l.b16 %v760
        %v1889 = vunpack.c.h.b16 %v760
        %v1890 = vunpack.c.l.b16 %v761
        %v1891 = vunpack.c.h.b16 %v761
        %v1892 = vunpack.c.l.b16 %v762
        %v1893 = vunpack.c.h.b16 %v762
        %v1894 = vunpack.c.l.b16 %v763
        %v1895 = vunpack.c.h.b16 %v763
        %v1896 = vunpack.c.l.b16 %v764
        %v1897 = vunpack.c.h.b16 %v764
        %v1898 = vunpack.c.l.b16 %v765
        %v1899 = vunpack.c.h.b16 %v765
        %v1900 = vunpack.c.l.b16 %v766
        %v1901 = vunpack.c.h.b16 %v766
        %v1902 = vunpack.c.l.b16 %v767
        %v1903 = vunpack.c.h.b16 %v767
        %v1904 = vunpack.c.l.b16 %v768
        %v1905 = vunpack.c.h.b16 %v768
        %v1906 = vunpack.c.l.b16 %v769
        %v1907 = vunpack.c.h.b16 %v769
        %v1908 = vunpack.c.l.b16 %v770
        %v1909 = vunpack.c.h.b16 %v770
        %v1910 = vunpack.c.l.b16 %v771
        %v1911 = vunpack.c.h.b16 %v771
        %v1912 = vunpack.c.l.b16 %v772
        %v1913 = vunpack.c.h.b16 %v772
        %v1914 = vunpack.c.l.b16 %v773
        %v1915 = vunpack.c.h.b16 %v773
        %v1916 = vunpack.c.l.b16 %v774
        %v1917 = vunpack.c.h.b16 %v774
        %v1918 = vunpack.c.l.b16 %v775
        %v1919 = vunpack.c.h.b16 %v775
        %v1920 = vunpack.c.l.b16 %v776
        %v1921 = vunpack.c.h.b16 %v776
        %v1922 = vunpack.c.l.b16 %v777
        %v1923 = vunpack.c.h.b16 %v777
        %v1924 = vunpack.c.l.b16 %v778
        %v1925 = vunpack.c.h.b16 %v778
        %v1926 = vunpack.c.l.b16 %v779
        %v1927 = vunpack.c.h.b16 %v779
        %v1928 = vunpack.c.l.b16 %v780
        %v1929 = vunpack.c.h.b16 %v780
        %v1930 = vunpack.c.l.b16 %v781
        %v1931 = vunpack.c.h.b16 %v781
        %v1932 = vunpack.c.l.b16 %v782
        %v1933 = vunpack.c.h.b16 %v782
        %v1934 = vunpack.c.l.b16 %v783
        %v1935 = vunpack.c.h.b16 %v783
        %v1936 = vpack.c.b16 %v1180, %v1168
        %v1937 = vpack.c.b16 %v1181, %v1169
        %v1938 = vpack.c.b16 %v1182, %v1170
        %v1939 = vpack.c.b16 %v1183, %v1171
        %v1940 = vpack.c.b16 %v1184, %v1172
        %v1941 = vpack.c.b16 %v1185, %v1173
        %v1942 = vpack.c.b16 %v1186, %v1174
        %v1943 = vpack.c.b16 %v1187, %v1175
        %v1944 = vpack.c.b16 %v1188, %v1176
        %v1945 = vpack.c.b16 %v1189, %v1177
        %v1946 = vpack.c.b16 %v1190, %v1178
        %v1947 = vpack.c.b16 %v1191, %v1179
        %v1948 = vpack.c.b16 %v1204, %v1192
        %v1949 = vpack.c.b16 %v1205, %v1193
        %v1950 = vpack.c.b16 %v1206, %v1194
        %v1951 = vpack.c.b16 %v1207, %v1195
        %v1952 = vpack.c.b16 %v1208, %v1196
        %v1953 = vpack.c.b16 %v1209, %v1197
        %v1954 = vpack.c.b16 %v1210, %v1198
        %v1955 = vpack.c.b16 %v1211, %v1199
        %v1956 = vpack.c.b16 %v1212, %v1200
        %v1957 = vpack.c.b16 %v1213, %v1201
        %v1958 = vpack.c.b16 %v1214, %v1202
        %v1959 = vpack.c.b16 %v1215, %v1203
        %v1960 = vpack.c.b16 %v1228, %v1216
        %v1961 = vpack.c.b16 %v1229, %v1217
        %v1962 = vpack.c.b16 %v1230, %v1218
        %v1963 = vpack.c.b16 %v1231, %v1219
        %v1964 = vpack.c.b16 %v1232, %v1220
        %v1965 = vpack.c.b16 %v1233, %v1221
        %v1966 = vpack.c.b16 %v1234, %v1222
        %v1967 = vpack.c.b16 %v1235, %v1223
        %v1968 = vpack.c.b16 %v1236, %v1224
        %v1969 = vpack.c.b16 %v1237, %v1225
        %v1970 = vpack.c.b16 %v1238, %v1226
        %v1971 = vpack.c.b16 %v1239, %v1227
        %v1972 = vpack.c.b16 %v1252, %v1240
        %v1973 = vpack.c.b16 %v1253, %v1241
        %v1974 = vpack.c.b16 %v1254, %v1242
        %v1975 = vpack.c.b16 %v1255, %v1243
        %v1976 = vpack.c.b16 %v1256, %v1244
        %v1977 = vpack.c.b16 %v1257, %v1245
        %v1978 = vpack.c.b16 %v1258, %v1246
        %v1979 = vpack.c.b16 %v1259, %v1247
        %v1980 = vpack.c.b16 %v1260, %v1248
        %v1981 = vpack.c.b16 %v1261, %v1249
        %v1982 = vpack.c.b16 %v1262, %v1250
        %v1983 = vpack.c.b16 %v1263, %v1251
        %v1984 = vpack.c.b16 %v1276, %v1264
        %v1985 = vpack.c.b16 %v1277, %v1265
        %v1986 = vpack.c.b16 %v1278, %v1266
        %v1987 = vpack.c.b16 %v1279, %v1267
        %v1988 = vpack.c.b16 %v1280, %v1268
        %v1989 = vpack.c.b16 %v1281, %v1269
        %v1990 = vpack.c.b16 %v1282, %v1270
        %v1991 = vpack.c.b16 %v1283, %v1271
        %v1992 = vpack.c.b16 %v1284, %v1272
        %v1993 = vpack.c.b16 %v1285, %v1273
        %v1994 = vpack.c.b16 %v1286, %v1274
        %v1995 = vpack.c.b16 %v1287, %v1275
        %v1996 = vpack.c.b16 %v1300, %v1288
        %v1997 = vpack.c.b16 %v1301, %v1289
        %v1998 = vpack.c.b16 %v1302, %v1290
        %v1999 = vpack.c.b16 %v1303, %v1291
        %v2000 = vpack.c.b16 %v1304, %v1292
        %v2001 = vpack.c.b16 %v1305, %v1293
        %v2002 = vpack.c.b16 %v1306, %v1294
        %v2003 = vpack.c.b16 %v1307, %v1295
        %v2004 = vpack.c.b16 %v1308, %v1296
        %v2005 = vpack.c.b16 %v1309, %v1297
        %v2006 = vpack.c.b16 %v1310, %v1298
        %v2007 = vpack.c.b16 %v1311, %v1299
        %v2008 = vpack.c.b16 %v1324, %v1312
        %v2009 = vpack.c.b16 %v1325, %v1313
        %v2010 = vpack.c.b16 %v1326, %v1314
        %v2011 = vpack.c.b16 %v1327, %v1315
        %v2012 = vpack.c.b16 %v1328, %v1316
        %v2013 = vpack.c.b16 %v1329, %v1317
        %v2014 = vpack.c.b16 %v1330, %v1318
        %v2015 = vpack.c.b16 %v1331, %v1319
        %v2016 = vpack.c.b16 %v1332, %v1320
        %v2017 = vpack.c.b16 %v1333, %v1321
        %v2018 = vpack.c.b16 %v1334, %v1322
        %v2019 = vpack.c.b16 %v1335, %v1323
        %v2020 = vpack.c.b16 %v1348, %v1336
        %v2021 = vpack.c.b16 %v1349, %v1337
        %v2022 = vpack.c.b16 %v1350, %v1338
        %v2023 = vpack.c.b16 %v1351, %v1339
        %v2024 = vpack.c.b16 %v1352, %v1340
        %v2025 = vpack.c.b16 %v1353, %v1341
        %v2026 = vpack.c.b16 %v1354, %v1342
        %v2027 = vpack.c.b16 %v1355, %v1343
        %v2028 = vpack.c.b16 %v1356, %v1344
        %v2029 = vpack.c.b16 %v1357, %v1345
        %v2030 = vpack.c.b16 %v1358, %v1346
        %v2031 = vpack.c.b16 %v1359, %v1347
        %v2032 = vpack.c.b16 %v1372, %v1360
        %v2033 = vpack.c.b16 %v1373, %v1361
        %v2034 = vpack.c.b16 %v1374, %v1362
        %v2035 = vpack.c.b16 %v1375, %v1363
        %v2036 = vpack.c.b16 %v1376, %v1364
        %v2037 = vpack.c.b16 %v1377, %v1365
        %v2038 = vpack.c.b16 %v1378, %v1366
        %v2039 = vpack.c.b16 %v1379, %v1367
        %v2040 = vpack.c.b16 %v1380, %v1368
        %v2041 = vpack.c.b16 %v1381, %v1369
        %v2042 = vpack.c.b16 %v1382, %v1370
        %v2043 = vpack.c.b16 %v1383, %v1371
        %v2044 = vpack.c.b16 %v1396, %v1384
        %v2045 = vpack.c.b16 %v1397, %v1385
        %v2046 = vpack.c.b16 %v1398, %v1386
        %v2047 = vpack.c.b16 %v1399, %v1387
        %v2048 = vpack.c.b16 %v1400, %v1388
        %v2049 = vpack.c.b16 %v1401, %v1389
        %v2050 = vpack.c.b16 %v1402, %v1390
        %v2051 = vpack.c.b16 %v1403, %v1391
        %v2052 = vpack.c.b16 %v1404, %v1392
        %v2053 = vpack.c.b16 %v1405, %v1393
        %v2054 = vpack.c.b16 %v1406, %v1394
        %v2055 = vpack.c.b16 %v1407, %v1395
        %v2056 = vpack.c.b16 %v1420, %v1408
        %v2057 = vpack.c.b16 %v1421, %v1409
        %v2058 = vpack.c.b16 %v1422, %v1410
        %v2059 = vpack.c.b16 %v1423, %v1411
        %v2060 = vpack.c.b16 %v1424, %v1412
        %v2061 = vpack.c.b16 %v1425, %v1413
        %v2062 = vpack.c.b16 %v1426, %v1414
        %v2063 = vpack.c.b16 %v1427, %v1415
        %v2064 = vpack.c.b16 %v1428, %v1416
        %v2065 = vpack.c.b16 %v1429, %v1417
        %v2066 = vpack.c.b16 %v1430, %v1418
        %v2067 = vpack.c.b16 %v1431, %v1419
        %v2068 = vpack.c.b16 %v1444, %v1432
        %v2069 = vpack.c.b16 %v1445, %v1433
        %v2070 = vpack.c.b16 %v1446, %v1434
        %v2071 = vpack.c.b16 %v1447, %v1435
        %v2072 = vpack.c.b16 %v1448, %v1436
        %v2073 = vpack.c.b16 %v1449, %v1437
        %v2074 = vpack.c.b16 %v1450, %v1438
        %v2075 = vpack.c.b16 %v1451, %v1439
        %v2076 = vpack.c.b16 %v1452, %v1440
        %v2077 = vpack.c.b16 %v1453, %v1441
        %v2078 = vpack.c.b16 %v1454, %v1442
        %v2079 = vpack.c.b16 %v1455, %v1443
        %v2080 = vpack.c.b16 %v1468, %v1456
        %v2081 = vpack.c.b16 %v1469, %v1457
        %v2082 = vpack.c.b16 %v1470, %v1458
        %v2083 = vpack.c.b16 %v1471, %v1459
        %v2084 = vpack.c.b16 %v1472, %v1460
        %v2085 = vpack.c.b16 %v1473, %v1461
        %v2086 = vpack.c.b16 %v1474, %v1462
        %v2087 = vpack.c.b16 %v1475, %v1463
        %v2088 = vpack.c.b16 %v1476, %v1464
        %v2089 = vpack.c.b16 %v1477, %v1465
        %v2090 = vpack.c.b16 %v1478, %v1466
        %v2091 = vpack.c.b16 %v1479, %v1467
        %v2092 = vpack.c.b16 %v1492, %v1480
        %v2093 = vpack.c.b16 %v1493, %v1481
        %v2094 = vpack.c.b16 %v1494, %v1482
        %v2095 = vpack.c.b16 %v1495, %v1483
        %v2096 = vpack.c.b16 %v1496, %v1484
        %v2097 = vpack.c.b16 %v1497, %v1485
        %v2098 = vpack.c.b16 %v1498, %v1486
        %v2099 = vpack.c.b16 %v1499, %v1487
        %v2100 = vpack.c.b16 %v1500, %v1488
        %v2101 = vpack.c.b16 %v1501, %v1489
        %v2102 = vpack.c.b16 %v1502, %v1490
        %v2103 = vpack.c.b16 %v1503, %v1491
        %v2104 = vpack.c.b16 %v1516, %v1504
        %v2105 = vpack.c.b16 %v1517, %v1505
        %v2106 = vpack.c.b16 %v1518, %v1506
        %v2107 = vpack.c.b16 %v1519, %v1507
        %v2108 = vpack.c.b16 %v1520, %v1508
        %v2109 = vpack.c.b16 %v1521, %v1509
        %v2110 = vpack.c.b16 %v1522, %v1510
        %v2111 = vpack.c.b16 %v1523, %v1511
        %v2112 = vpack.c.b16 %v1524, %v1512
        %v2113 = vpack.c.b16 %v1525, %v1513
        %v2114 = vpack.c.b16 %v1526, %v1514
        %v2115 = vpack.c.b16 %v1527, %v1515
        %v2116 = vpack.c.b16 %v1540, %v1528
        %v2117 = vpack.c.b16 %v1541, %v1529
        %v2118 = vpack.c.b16 %v1542, %v1530
        %v2119 = vpack.c.b16 %v1543, %v1531
        %v2120 = vpack.c.b16 %v1544, %v1532
        %v2121 = vpack.c.b16 %v1545, %v1533
        %v2122 = vpack.c.b16 %v1546, %v1534
        %v2123 = vpack.c.b16 %v1547, %v1535
        %v2124 = vpack.c.b16 %v1548, %v1536
        %v2125 = vpack.c.b16 %v1549, %v1537
        %v2126 = vpack.c.b16 %v1550, %v1538
        %v2127 = vpack.c.b16 %v1551, %v1539
        %v2128 = vpack.c.b16 %v1564, %v1552
        %v2129 = vpack.c.b16 %v1565, %v1553
        %v2130 = vpack.c.b16 %v1566, %v1554
        %v2131 = vpack.c.b16 %v1567, %v1555
        %v2132 = vpack.c.b16 %v1568, %v1556
        %v2133 = vpack.c.b16 %v1569, %v1557
        %v2134 = vpack.c.b16 %v1570, %v1558
        %v2135 = vpack.c.b16 %v1571, %v1559
        %v2136 = vpack.c.b16 %v1572, %v1560
        %v2137 = vpack.c.b16 %v1573, %v1561
        %v2138 = vpack.c.b16 %v1574, %v1562
        %v2139 = vpack.c.b16 %v1575, %v1563
        %v2140 = vpack.c.b16 %v1588, %v1576
        %v2141 = vpack.c.b16 %v1589, %v1577
        %v2142 = vpack.c.b16 %v1590, %v1578
        %v2143 = vpack.c.b16 %v1591, %v1579
        %v2144 = vpack.c.b16 %v1592, %v1580
        %v2145 = vpack.c.b16 %v1593, %v1581
        %v2146 = vpack.c.b16 %v1594, %v1582
        %v2147 = vpack.c.b16 %v1595, %v1583
        %v2148 = vpack.c.b16 %v1596, %v1584
        %v2149 = vpack.c.b16 %v1597, %v1585
        %v2150 = vpack.c.b16 %v1598, %v1586
        %v2151 = vpack.c.b16 %v1599, %v1587
        %v2152 = vpack.c.b16 %v1612, %v1600
        %v2153 = vpack.c.b16 %v1613, %v1601
        %v2154 = vpack.c.b16 %v1614, %v1602
        %v2155 = vpack.c.b16 %v1615, %v1603
        %v2156 = vpack.c.b16 %v1616, %v1604
        %v2157 = vpack.c.b16 %v1617, %v1605
        %v2158 = vpack.c.b16 %v1618, %v1606
        %v2159 = vpack.c.b16 %v1619, %v1607
        %v2160 = vpack.c.b16 %v1620, %v1608
        %v2161 = vpack.c.b16 %v1621, %v1609
        %v2162 = vpack.c.b16 %v1622, %v1610
        %v2163 = vpack.c.b16 %v1623, %v1611
        %v2164 = vpack.c.b16 %v1636, %v1624
        %v2165 = vpack.c.b16 %v1637, %v1625
        %v2166 = vpack.c.b16 %v1638, %v1626
        %v2167 = vpack.c.b16 %v1639, %v1627
        %v2168 = vpack.c.b16 %v1640, %v1628
        %v2169 = vpack.c.b16 %v1641, %v1629
        %v2170 = vpack.c.b16 %v1642, %v1630
        %v2171 = vpack.c.b16 %v1643, %v1631
        %v2172 = vpack.c.b16 %v1644, %v1632
        %v2173 = vpack.c.b16 %v1645, %v1633
        %v2174 = vpack.c.b16 %v1646, %v1634
        %v2175 = vpack.c.b16 %v1647, %v1635
        %v2176 = vpack.c.b16 %v1660, %v1648
        %v2177 = vpack.c.b16 %v1661, %v1649
        %v2178 = vpack.c.b16 %v1662, %v1650
        %v2179 = vpack.c.b16 %v1663, %v1651
        %v2180 = vpack.c.b16 %v1664, %v1652
        %v2181 = vpack.c.b16 %v1665, %v1653
        %v2182 = vpack.c.b16 %v1666, %v1654
        %v2183 = vpack.c.b16 %v1667, %v1655
        %v2184 = vpack.c.b16 %v1668, %v1656
        %v2185 = vpack.c.b16 %v1669, %v1657
        %v2186 = vpack.c.b16 %v1670, %v1658
        %v2187 = vpack.c.b16 %v1671, %v1659
        %v2188 = vpack.c.b16 %v1684, %v1672
        %v2189 = vpack.c.b16 %v1685, %v1673
        %v2190 = vpack.c.b16 %v1686, %v1674
        %v2191 = vpack.c.b16 %v1687, %v1675
        %v2192 = vpack.c.b16 %v1688, %v1676
        %v2193 = vpack.c.b16 %v1689, %v1677
        %v2194 = vpack.c.b16 %v1690, %v1678
        %v2195 = vpack.c.b16 %v1691, %v1679
        %v2196 = vpack.c.b16 %v1692, %v1680
        %v2197 = vpack.c.b16 %v1693, %v1681
        %v2198 = vpack.c.b16 %v1694, %v1682
        %v2199 = vpack.c.b16 %v1695, %v1683
        %v2200 = vpack.c.b16 %v1708, %v1696
        %v2201 = vpack.c.b16 %v1709, %v1697
        %v2202 = vpack.c.b16 %v1710, %v1698
        %v2203 = vpack.c.b16 %v1711, %v1699
        %v2204 = vpack.c.b16 %v1712, %v1700
        %v2205 = vpack.c.b16 %v1713, %v1701
        %v2206 = vpack.c.b16 %v1714, %v1702
        %v2207 = vpack.c.b16 %v1715, %v1703
        %v2208 = vpack.c.b16 %v1716, %v1704
        %v2209 = vpack.c.b16 %v1717, %v1705
        %v2210 = vpack.c.b16 %v1718, %v1706
        %v2211 = vpack.c.b16 %v1719, %v1707
        %v2212 = vpack.c.b16 %v1732, %v1720
        %v2213 = vpack.c.b16 %v1733, %v1721
        %v2214 = vpack.c.b16 %v1734, %v1722
        %v2215 = vpack.c.b16 %v1735, %v1723
        %v2216 = vpack.c.b16 %v1736, %v1724
        %v2217 = vpack.c.b16 %v1737, %v1725
        %v2218 = vpack.c.b16 %v1738, %v1726
        %v2219 = vpack.c.b16 %v1739, %v1727
        %v2220 = vpack.c.b16 %v1740, %v1728
        %v2221 = vpack.c.b16 %v1741, %v1729
        %v2222 = vpack.c.b16 %v1742, %v1730
        %v2223 = vpack.c.b16 %v1743, %v1731
        %v2224 = vpack.c.b16 %v1756, %v1744
        %v2225 = vpack.c.b16 %v1757, %v1745
        %v2226 = vpack.c.b16 %v1758, %v1746
        %v2227 = vpack.c.b16 %v1759, %v1747
        %v2228 = vpack.c.b16 %v1760, %v1748
        %v2229 = vpack.c.b16 %v1761, %v1749
        %v2230 = vpack.c.b16 %v1762, %v1750
        %v2231 = vpack.c.b16 %v1763, %v1751
        %v2232 = vpack.c.b16 %v1764, %v1752
        %v2233 = vpack.c.b16 %v1765, %v1753
        %v2234 = vpack.c.b16 %v1766, %v1754
        %v2235 = vpack.c.b16 %v1767, %v1755
        %v2236 = vpack.c.b16 %v1780, %v1768
        %v2237 = vpack.c.b16 %v1781, %v1769
        %v2238 = vpack.c.b16 %v1782, %v1770
        %v2239 = vpack.c.b16 %v1783, %v1771
        %v2240 = vpack.c.b16 %v1784, %v1772
        %v2241 = vpack.c.b16 %v1785, %v1773
        %v2242 = vpack.c.b16 %v1786, %v1774
        %v2243 = vpack.c.b16 %v1787, %v1775
        %v2244 = vpack.c.b16 %v1788, %v1776
        %v2245 = vpack.c.b16 %v1789, %v1777
        %v2246 = vpack.c.b16 %v1790, %v1778
        %v2247 = vpack.c.b16 %v1791, %v1779
        %v2248 = vpack.c.b16 %v1804, %v1792
        %v2249 = vpack.c.b16 %v1805, %v1793
        %v2250 = vpack.c.b16 %v1806, %v1794
        %v2251 = vpack.c.b16 %v1807, %v1795
        %v2252 = vpack.c.b16 %v1808, %v1796
        %v2253 = vpack.c.b16 %v1809, %v1797
        %v2254 = vpack.c.b16 %v1810, %v1798
        %v2255 = vpack.c.b16 %v1811, %v1799
        %v2256 = vpack.c.b16 %v1812, %v1800
        %v2257 = vpack.c.b16 %v1813, %v1801
        %v2258 = vpack.c.b16 %v1814, %v1802
        %v2259 = vpack.c.b16 %v1815, %v1803
        %v2260 = vpack.c.b16 %v1828, %v1816
        %v2261 = vpack.c.b16 %v1829, %v1817
        %v2262 = vpack.c.b16 %v1830, %v1818
        %v2263 = vpack.c.b16 %v1831, %v1819
        %v2264 = vpack.c.b16 %v1832, %v1820
        %v2265 = vpack.c.b16 %v1833, %v1821
        %v2266 = vpack.c.b16 %v1834, %v1822
        %v2267 = vpack.c.b16 %v1835, %v1823
        %v2268 = vpack.c.b16 %v1836, %v1824
        %v2269 = vpack.c.b16 %v1837, %v1825
        %v2270 = vpack.c.b16 %v1838, %v1826
        %v2271 = vpack.c.b16 %v1839, %v1827
        %v2272 = vpack.c.b16 %v1852, %v1840
        %v2273 = vpack.c.b16 %v1853, %v1841
        %v2274 = vpack.c.b16 %v1854, %v1842
        %v2275 = vpack.c.b16 %v1855, %v1843
        %v2276 = vpack.c.b16 %v1856, %v1844
        %v2277 = vpack.c.b16 %v1857, %v1845
        %v2278 = vpack.c.b16 %v1858, %v1846
        %v2279 = vpack.c.b16 %v1859, %v1847
        %v2280 = vpack.c.b16 %v1860, %v1848
        %v2281 = vpack.c.b16 %v1861, %v1849
        %v2282 = vpack.c.b16 %v1862, %v1850
        %v2283 = vpack.c.b16 %v1863, %v1851
        %v2284 = vpack.c.b16 %v1876, %v1864
        %v2285 = vpack.c.b16 %v1877, %v1865
        %v2286 = vpack.c.b16 %v1878, %v1866
        %v2287 = vpack.c.b16 %v1879, %v1867
        %v2288 = vpack.c.b16 %v1880, %v1868
        %v2289 = vpack.c.b16 %v1881, %v1869
        %v2290 = vpack.c.b16 %v1882, %v1870
        %v2291 = vpack.c.b16 %v1883, %v1871
        %v2292 = vpack.c.b16 %v1884, %v1872
        %v2293 = vpack.c.b16 %v1885, %v1873
        %v2294 = vpack.c.b16 %v1886, %v1874
        %v2295 = vpack.c.b16 %v1887, %v1875
        %v2296 = vpack.c.b16 %v1900, %v1888
        %v2297 = vpack.c.b16 %v1901, %v1889
        %v2298 = vpack.c.b16 %v1902, %v1890
        %v2299 = vpack.c.b16 %v1903, %v1891
        %v2300 = vpack.c.b16 %v1904, %v1892
        %v2301 = vpack.c.b16 %v1905, %v1893
        %v2302 = vpack.c.b16 %v1906, %v1894
        %v2303 = vpack.c.b16 %v1907, %v1895
        %v2304 = vpack.c.b16 %v1908, %v1896
        %v2305 = vpack.c.b16 %v1909, %v1897
        %v2306 = vpack.c.b16 %v1910, %v1898
        %v2307 = vpack.c.b16 %v1911, %v1899
        %v2308 = vpack.c.b16 %v1924, %v1912
        %v2309 = vpack.c.b16 %v1925, %v1913
        %v2310 = vpack.c.b16 %v1926, %v1914
        %v2311 = vpack.c.b16 %v1927, %v1915
        %v2312 = vpack.c.b16 %v1928, %v1916
        %v2313 = vpack.c.b16 %v1929, %v1917
        %v2314 = vpack.c.b16 %v1930, %v1918
        %v2315 = vpack.c.b16 %v1931, %v1919
        %v2316 = vpack.c.b16 %v1932, %v1920
        %v2317 = vpack.c.b16 %v1933, %v1921
        %v2318 = vpack.c.b16 %v1934, %v1922
        %v2319 = vpack.c.b16 %v1935, %v1923
        %2704 = vmatprep.subr.bf16.mxu0 %v2021
        %2705 = vmatpush1.bf16.msra.mxu0 %v2020
        %2706 = vmatprep.subr.bf16.mxu0 %v2009
        %2707 = vmatpush1.bf16.msra.mxu0 %v2008
        %2708 = vmatprep.subr.bf16.mxu0 %v1997
        %2709 = vmatpush1.bf16.msra.mxu0 %v1996
        %2710 = vmatprep.subr.bf16.mxu0 %v1985
        %2711 = vmatpush1.bf16.msra.mxu0 %v1984
        %2712 = vmatprep.subr.bf16.mxu0 %v1973
        %2713 = vmatpush1.bf16.msra.mxu0 %v1972
        %2714 = vmatprep.subr.bf16.mxu0 %v1961
        %2715 = vmatpush1.bf16.msra.mxu0 %v1960
        %2716 = vmatprep.subr.bf16.mxu0 %v1949
        %2717 = vmatpush1.bf16.msra.mxu0 %v1948
        %2718 = vmatprep.subr.bf16.mxu0 %v1937
        %2719 = vmatpush1.bf16.msra.mxu0 %v1936
        %2720 = vmatprep.subr.bf16.mxu0 %v2117
        %2721 = vmatpush2.bf16.msra.mxu0 %v2116
        %2722 = vmatprep.subr.bf16.mxu0 %v2105
        %2723 = vmatpush2.bf16.msra.mxu0 %v2104
        %2724 = vmatprep.subr.bf16.mxu0 %v2093
        %2725 = vmatpush2.bf16.msra.mxu0 %v2092
        %2726 = vmatprep.subr.bf16.mxu0 %v2081
        %2727 = vmatpush2.bf16.msra.mxu0 %v2080
        %2728 = vmatprep.subr.bf16.mxu0 %v2069
        %2729 = vmatpush2.bf16.msra.mxu0 %v2068
        %2730 = vmatprep.subr.bf16.mxu0 %v2057
        %2731 = vmatpush2.bf16.msra.mxu0 %v2056
        %2732 = vmatprep.subr.bf16.mxu0 %v2045
        %2733 = vmatpush2.bf16.msra.mxu0 %v2044
        %2734 = vmatprep.subr.bf16.mxu0 %v2033
        %2735 = vmatpush2.bf16.msra.mxu0 %v2032
        %2736 = vmatprep.mubr.bf16.mxu0 %v369
        %2737 = vmatmul.mubr.bf16.gmra.mxu0 %v368
        %v2738 = vpop.f32.mrf.mxu0
        %v2739 = vadd.f32 0.0, %v2738
        %v2740 = vpop.f32.mrf.mxu0
        %v2741 = vadd.f32 0.0, %v2740
        %v2742 = vpop.f32.mrf.mxu0
        %v2743 = vadd.f32 0.0, %v2742
        %v2744 = vpop.f32.mrf.mxu0
        %v2745 = vadd.f32 0.0, %v2744
        %2746 = vmatprep.mubr.bf16.mxu0 %v373
        %2747 = vmatmul.mubr.bf16.gmra.mxu0 %v372
        %v2748 = vpop.f32.mrf.mxu0
        %v2749 = vadd.f32 0.0, %v2748
        %v2750 = vpop.f32.mrf.mxu0
        %v2751 = vadd.f32 0.0, %v2750
        %v2752 = vpop.f32.mrf.mxu0
        %v2753 = vadd.f32 0.0, %v2752
        %v2754 = vpop.f32.mrf.mxu0
        %v2755 = vadd.f32 0.0, %v2754
        %2756 = vmatprep.mubr.bf16.mxu0 %v377
        %2757 = vmatmul.mubr.bf16.gmra.mxu0 %v376
        %v2758 = vpop.f32.mrf.mxu0
        %v2759 = vadd.f32 0.0, %v2758
        %v2760 = vpop.f32.mrf.mxu0
        %v2761 = vadd.f32 0.0, %v2760
        %v2762 = vpop.f32.mrf.mxu0
        %v2763 = vadd.f32 0.0, %v2762
        %v2764 = vpop.f32.mrf.mxu0
        %v2765 = vadd.f32 0.0, %v2764
        %2766 = vmatprep.mubr.bf16.mxu0 %v381
        %2767 = vmatmul.mubr.bf16.gmra.mxu0 %v380
        %v2768 = vpop.f32.mrf.mxu0
        %v2769 = vadd.f32 0.0, %v2768
        %v2770 = vpop.f32.mrf.mxu0
        %v2771 = vadd.f32 0.0, %v2770
        %v2772 = vpop.f32.mrf.mxu0
        %v2773 = vadd.f32 0.0, %v2772
        %v2774 = vpop.f32.mrf.mxu0
        %v2775 = vadd.f32 0.0, %v2774
        %2776 = vmatprep.mubr.bf16.mxu0 %v385
        %2777 = vmatmul.mubr.bf16.gmra.mxu0 %v384
        %v2778 = vpop.f32.mrf.mxu0
        %v2779 = vadd.f32 0.0, %v2778
        %v2780 = vpop.f32.mrf.mxu0
        %v2781 = vadd.f32 0.0, %v2780
        %v2782 = vpop.f32.mrf.mxu0
        %v2783 = vadd.f32 0.0, %v2782
        %v2784 = vpop.f32.mrf.mxu0
        %v2785 = vadd.f32 0.0, %v2784
        %2786 = vmatprep.mubr.bf16.mxu0 %v389
        %2787 = vmatmul.mubr.bf16.gmra.mxu0 %v388
        %v2788 = vpop.f32.mrf.mxu0
        %v2789 = vadd.f32 0.0, %v2788
        %v2790 = vpop.f32.mrf.mxu0
        %v2791 = vadd.f32 0.0, %v2790
        %v2792 = vpop.f32.mrf.mxu0
        %v2793 = vadd.f32 0.0, %v2792
        %v2794 = vpop.f32.mrf.mxu0
        %v2795 = vadd.f32 0.0, %v2794
        %2796 = vmatprep.mubr.bf16.mxu0 %v393
        %2797 = vmatmul.mubr.bf16.gmra.mxu0 %v392
        %v2798 = vpop.f32.mrf.mxu0
        %v2799 = vadd.f32 0.0, %v2798
        %v2800 = vpop.f32.mrf.mxu0
        %v2801 = vadd.f32 0.0, %v2800
        %v2802 = vpop.f32.mrf.mxu0
        %v2803 = vadd.f32 0.0, %v2802
        %v2804 = vpop.f32.mrf.mxu0
        %v2805 = vadd.f32 0.0, %v2804
        %2806 = vmatprep.mubr.bf16.mxu0 %v397
        %2807 = vmatmul.mubr.bf16.gmra.mxu0 %v396
        %v2808 = vpop.f32.mrf.mxu0
        %v2809 = vadd.f32 0.0, %v2808
        %v2810 = vpop.f32.mrf.mxu0
        %v2811 = vadd.f32 0.0, %v2810
        %v2812 = vpop.f32.mrf.mxu0
        %v2813 = vadd.f32 0.0, %v2812
        %v2814 = vpop.f32.mrf.mxu0
        %v2815 = vadd.f32 0.0, %v2814
        %2816 = vdwg.mxu0
        %2817 = vmatprep.subr.bf16.mxu0 %v2213
        %2818 = vmatpush1.bf16.msra.mxu0 %v2212
        %2819 = vmatprep.subr.bf16.mxu0 %v2201
        %2820 = vmatpush1.bf16.msra.mxu0 %v2200
        %2821 = vmatprep.subr.bf16.mxu0 %v2189
        %2822 = vmatpush1.bf16.msra.mxu0 %v2188
        %2823 = vmatprep.subr.bf16.mxu0 %v2177
        %2824 = vmatpush1.bf16.msra.mxu0 %v2176
        %2825 = vmatprep.subr.bf16.mxu0 %v2165
        %2826 = vmatpush1.bf16.msra.mxu0 %v2164
        %2827 = vmatprep.subr.bf16.mxu0 %v2153
        %2828 = vmatpush1.bf16.msra.mxu0 %v2152
        %2829 = vmatprep.subr.bf16.mxu0 %v2141
        %2830 = vmatpush1.bf16.msra.mxu0 %v2140
        %2831 = vmatprep.subr.bf16.mxu0 %v2129
        %2832 = vmatpush1.bf16.msra.mxu0 %v2128
        %2833 = vmatprep.subr.bf16.mxu0 %v2309
        %2834 = vmatpush2.bf16.msra.mxu0 %v2308
        %2835 = vmatprep.subr.bf16.mxu0 %v2297
        %2836 = vmatpush2.bf16.msra.mxu0 %v2296
        %2837 = vmatprep.subr.bf16.mxu0 %v2285
        %2838 = vmatpush2.bf16.msra.mxu0 %v2284
        %2839 = vmatprep.subr.bf16.mxu0 %v2273
        %2840 = vmatpush2.bf16.msra.mxu0 %v2272
        %2841 = vmatprep.subr.bf16.mxu0 %v2261
        %2842 = vmatpush2.bf16.msra.mxu0 %v2260
        %2843 = vmatprep.subr.bf16.mxu0 %v2249
        %2844 = vmatpush2.bf16.msra.mxu0 %v2248
        %2845 = vmatprep.subr.bf16.mxu0 %v2237
        %2846 = vmatpush2.bf16.msra.mxu0 %v2236
        %2847 = vmatprep.subr.bf16.mxu0 %v2225
        %2848 = vmatpush2.bf16.msra.mxu0 %v2224
        %2849 = vmatprep.mubr.bf16.mxu0 %v371
        %2850 = vmatmul.mubr.bf16.gmra.mxu0 %v370
        %v2851 = vpop.f32.mrf.mxu0
        %v2852 = vadd.f32 %v2739, %v2851
        %v2853 = vpop.f32.mrf.mxu0
        %v2854 = vadd.f32 %v2741, %v2853
        %v2855 = vpop.f32.mrf.mxu0
        %v2856 = vadd.f32 %v2743, %v2855
        %v2857 = vpop.f32.mrf.mxu0
        %v2858 = vadd.f32 %v2745, %v2857
        %2859 = vmatprep.mubr.bf16.mxu0 %v375
        %2860 = vmatmul.mubr.bf16.gmra.mxu0 %v374
        %v2861 = vpop.f32.mrf.mxu0
        %v2862 = vadd.f32 %v2749, %v2861
        %v2863 = vpop.f32.mrf.mxu0
        %v2864 = vadd.f32 %v2751, %v2863
        %v2865 = vpop.f32.mrf.mxu0
        %v2866 = vadd.f32 %v2753, %v2865
        %v2867 = vpop.f32.mrf.mxu0
        %v2868 = vadd.f32 %v2755, %v2867
        %2869 = vmatprep.mubr.bf16.mxu0 %v379
        %2870 = vmatmul.mubr.bf16.gmra.mxu0 %v378
        %v2871 = vpop.f32.mrf.mxu0
        %v2872 = vadd.f32 %v2759, %v2871
        %v2873 = vpop.f32.mrf.mxu0
        %v2874 = vadd.f32 %v2761, %v2873
        %v2875 = vpop.f32.mrf.mxu0
        %v2876 = vadd.f32 %v2763, %v2875
        %v2877 = vpop.f32.mrf.mxu0
        %v2878 = vadd.f32 %v2765, %v2877
        %2879 = vmatprep.mubr.bf16.mxu0 %v383
        %2880 = vmatmul.mubr.bf16.gmra.mxu0 %v382
        %v2881 = vpop.f32.mrf.mxu0
        %v2882 = vadd.f32 %v2769, %v2881
        %v2883 = vpop.f32.mrf.mxu0
        %v2884 = vadd.f32 %v2771, %v2883
        %v2885 = vpop.f32.mrf.mxu0
        %v2886 = vadd.f32 %v2773, %v2885
        %v2887 = vpop.f32.mrf.mxu0
        %v2888 = vadd.f32 %v2775, %v2887
        %2889 = vmatprep.mubr.bf16.mxu0 %v387
        %2890 = vmatmul.mubr.bf16.gmra.mxu0 %v386
        %v2891 = vpop.f32.mrf.mxu0
        %v2892 = vadd.f32 %v2779, %v2891
        %v2893 = vpop.f32.mrf.mxu0
        %v2894 = vadd.f32 %v2781, %v2893
        %v2895 = vpop.f32.mrf.mxu0
        %v2896 = vadd.f32 %v2783, %v2895
        %v2897 = vpop.f32.mrf.mxu0
        %v2898 = vadd.f32 %v2785, %v2897
        %2899 = vmatprep.mubr.bf16.mxu0 %v391
        %2900 = vmatmul.mubr.bf16.gmra.mxu0 %v390
        %v2901 = vpop.f32.mrf.mxu0
        %v2902 = vadd.f32 %v2789, %v2901
        %v2903 = vpop.f32.mrf.mxu0
        %v2904 = vadd.f32 %v2791, %v2903
        %v2905 = vpop.f32.mrf.mxu0
        %v2906 = vadd.f32 %v2793, %v2905
        %v2907 = vpop.f32.mrf.mxu0
        %v2908 = vadd.f32 %v2795, %v2907
        %2909 = vmatprep.mubr.bf16.mxu0 %v395
        %2910 = vmatmul.mubr.bf16.gmra.mxu0 %v394
        %v2911 = vpop.f32.mrf.mxu0
        %v2912 = vadd.f32 %v2799, %v2911
        %v2913 = vpop.f32.mrf.mxu0
        %v2914 = vadd.f32 %v2801, %v2913
        %v2915 = vpop.f32.mrf.mxu0
        %v2916 = vadd.f32 %v2803, %v2915
        %v2917 = vpop.f32.mrf.mxu0
        %v2918 = vadd.f32 %v2805, %v2917
        %2919 = vmatprep.mubr.bf16.mxu0 %v399
        %2920 = vmatmul.mubr.bf16.gmra.mxu0 %v398
        %v2921 = vpop.f32.mrf.mxu0
        %v2922 = vadd.f32 %v2809, %v2921
        %v2923 = vpop.f32.mrf.mxu0
        %v2924 = vadd.f32 %v2811, %v2923
        %v2925 = vpop.f32.mrf.mxu0
        %v2926 = vadd.f32 %v2813, %v2925
        %v2927 = vpop.f32.mrf.mxu0
        %v2928 = vadd.f32 %v2815, %v2927
        %2929 = vdwg.mxu0
        %2930 = vmatprep.subr.bf16.mxu0 %v2023
        %2931 = vmatpush1.bf16.msra.mxu0 %v2022
        %2932 = vmatprep.subr.bf16.mxu0 %v2011
        %2933 = vmatpush1.bf16.msra.mxu0 %v2010
        %2934 = vmatprep.subr.bf16.mxu0 %v1999
        %2935 = vmatpush1.bf16.msra.mxu0 %v1998
        %2936 = vmatprep.subr.bf16.mxu0 %v1987
        %2937 = vmatpush1.bf16.msra.mxu0 %v1986
        %2938 = vmatprep.subr.bf16.mxu0 %v1975
        %2939 = vmatpush1.bf16.msra.mxu0 %v1974
        %2940 = vmatprep.subr.bf16.mxu0 %v1963
        %2941 = vmatpush1.bf16.msra.mxu0 %v1962
        %2942 = vmatprep.subr.bf16.mxu0 %v1951
        %2943 = vmatpush1.bf16.msra.mxu0 %v1950
        %2944 = vmatprep.subr.bf16.mxu0 %v1939
        %2945 = vmatpush1.bf16.msra.mxu0 %v1938
        %2946 = vmatprep.subr.bf16.mxu0 %v2119
        %2947 = vmatpush2.bf16.msra.mxu0 %v2118
        %2948 = vmatprep.subr.bf16.mxu0 %v2107
        %2949 = vmatpush2.bf16.msra.mxu0 %v2106
        %2950 = vmatprep.subr.bf16.mxu0 %v2095
        %2951 = vmatpush2.bf16.msra.mxu0 %v2094
        %2952 = vmatprep.subr.bf16.mxu0 %v2083
        %2953 = vmatpush2.bf16.msra.mxu0 %v2082
        %2954 = vmatprep.subr.bf16.mxu0 %v2071
        %2955 = vmatpush2.bf16.msra.mxu0 %v2070
        %2956 = vmatprep.subr.bf16.mxu0 %v2059
        %2957 = vmatpush2.bf16.msra.mxu0 %v2058
        %2958 = vmatprep.subr.bf16.mxu0 %v2047
        %2959 = vmatpush2.bf16.msra.mxu0 %v2046
        %2960 = vmatprep.subr.bf16.mxu0 %v2035
        %2961 = vmatpush2.bf16.msra.mxu0 %v2034
        %2962 = vmatprep.mubr.bf16.mxu0 %v369
        %2963 = vmatmul.mubr.bf16.gmra.mxu0 %v368
        %v2964 = vpop.f32.mrf.mxu0
        %v2965 = vadd.f32 0.0, %v2964
        %v2966 = vpop.f32.mrf.mxu0
        %v2967 = vadd.f32 0.0, %v2966
        %v2968 = vpop.f32.mrf.mxu0
        %v2969 = vadd.f32 0.0, %v2968
        %v2970 = vpop.f32.mrf.mxu0
        %v2971 = vadd.f32 0.0, %v2970
        %2972 = vmatprep.mubr.bf16.mxu0 %v373
        %2973 = vmatmul.mubr.bf16.gmra.mxu0 %v372
        %v2974 = vpop.f32.mrf.mxu0
        %v2975 = vadd.f32 0.0, %v2974
        %v2976 = vpop.f32.mrf.mxu0
        %v2977 = vadd.f32 0.0, %v2976
        %v2978 = vpop.f32.mrf.mxu0
        %v2979 = vadd.f32 0.0, %v2978
        %v2980 = vpop.f32.mrf.mxu0
        %v2981 = vadd.f32 0.0, %v2980
        %2982 = vmatprep.mubr.bf16.mxu0 %v377
        %2983 = vmatmul.mubr.bf16.gmra.mxu0 %v376
        %v2984 = vpop.f32.mrf.mxu0
        %v2985 = vadd.f32 0.0, %v2984
        %v2986 = vpop.f32.mrf.mxu0
        %v2987 = vadd.f32 0.0, %v2986
        %v2988 = vpop.f32.mrf.mxu0
        %v2989 = vadd.f32 0.0, %v2988
        %v2990 = vpop.f32.mrf.mxu0
        %v2991 = vadd.f32 0.0, %v2990
        %2992 = vmatprep.mubr.bf16.mxu0 %v381
        %2993 = vmatmul.mubr.bf16.gmra.mxu0 %v380
        %v2994 = vpop.f32.mrf.mxu0
        %v2995 = vadd.f32 0.0, %v2994
        %v2996 = vpop.f32.mrf.mxu0
        %v2997 = vadd.f32 0.0, %v2996
        %v2998 = vpop.f32.mrf.mxu0
        %v2999 = vadd.f32 0.0, %v2998
        %v3000 = vpop.f32.mrf.mxu0
        %v3001 = vadd.f32 0.0, %v3000
        %3002 = vmatprep.mubr.bf16.mxu0 %v385
        %3003 = vmatmul.mubr.bf16.gmra.mxu0 %v384
        %v3004 = vpop.f32.mrf.mxu0
        %v3005 = vadd.f32 0.0, %v3004
        %v3006 = vpop.f32.mrf.mxu0
        %v3007 = vadd.f32 0.0, %v3006
        %v3008 = vpop.f32.mrf.mxu0
        %v3009 = vadd.f32 0.0, %v3008
        %v3010 = vpop.f32.mrf.mxu0
        %v3011 = vadd.f32 0.0, %v3010
        %3012 = vmatprep.mubr.bf16.mxu0 %v389
        %3013 = vmatmul.mubr.bf16.gmra.mxu0 %v388
        %v3014 = vpop.f32.mrf.mxu0
        %v3015 = vadd.f32 0.0, %v3014
        %v3016 = vpop.f32.mrf.mxu0
        %v3017 = vadd.f32 0.0, %v3016
        %v3018 = vpop.f32.mrf.mxu0
        %v3019 = vadd.f32 0.0, %v3018
        %v3020 = vpop.f32.mrf.mxu0
        %v3021 = vadd.f32 0.0, %v3020
        %3022 = vmatprep.mubr.bf16.mxu0 %v393
        %3023 = vmatmul.mubr.bf16.gmra.mxu0 %v392
        %v3024 = vpop.f32.mrf.mxu0
        %v3025 = vadd.f32 0.0, %v3024
        %v3026 = vpop.f32.mrf.mxu0
        %v3027 = vadd.f32 0.0, %v3026
        %v3028 = vpop.f32.mrf.mxu0
        %v3029 = vadd.f32 0.0, %v3028
        %v3030 = vpop.f32.mrf.mxu0
        %v3031 = vadd.f32 0.0, %v3030
        %3032 = vmatprep.mubr.bf16.mxu0 %v397
        %3033 = vmatmul.mubr.bf16.gmra.mxu0 %v396
        %v3034 = vpop.f32.mrf.mxu0
        %v3035 = vadd.f32 0.0, %v3034
        %v3036 = vpop.f32.mrf.mxu0
        %v3037 = vadd.f32 0.0, %v3036
        %v3038 = vpop.f32.mrf.mxu0
        %v3039 = vadd.f32 0.0, %v3038
        %v3040 = vpop.f32.mrf.mxu0
        %v3041 = vadd.f32 0.0, %v3040
        %3042 = vdwg.mxu0
        %3043 = vmatprep.subr.bf16.mxu0 %v2215
        %3044 = vmatpush1.bf16.msra.mxu0 %v2214
        %3045 = vmatprep.subr.bf16.mxu0 %v2203
        %3046 = vmatpush1.bf16.msra.mxu0 %v2202
        %3047 = vmatprep.subr.bf16.mxu0 %v2191
        %3048 = vmatpush1.bf16.msra.mxu0 %v2190
        %3049 = vmatprep.subr.bf16.mxu0 %v2179
        %3050 = vmatpush1.bf16.msra.mxu0 %v2178
        %3051 = vmatprep.subr.bf16.mxu0 %v2167
        %3052 = vmatpush1.bf16.msra.mxu0 %v2166
        %3053 = vmatprep.subr.bf16.mxu0 %v2155
        %3054 = vmatpush1.bf16.msra.mxu0 %v2154
        %3055 = vmatprep.subr.bf16.mxu0 %v2143
        %3056 = vmatpush1.bf16.msra.mxu0 %v2142
        %3057 = vmatprep.subr.bf16.mxu0 %v2131
        %3058 = vmatpush1.bf16.msra.mxu0 %v2130
        %3059 = vmatprep.subr.bf16.mxu0 %v2311
        %3060 = vmatpush2.bf16.msra.mxu0 %v2310
        %3061 = vmatprep.subr.bf16.mxu0 %v2299
        %3062 = vmatpush2.bf16.msra.mxu0 %v2298
        %3063 = vmatprep.subr.bf16.mxu0 %v2287
        %3064 = vmatpush2.bf16.msra.mxu0 %v2286
        %3065 = vmatprep.subr.bf16.mxu0 %v2275
        %3066 = vmatpush2.bf16.msra.mxu0 %v2274
        %3067 = vmatprep.subr.bf16.mxu0 %v2263
        %3068 = vmatpush2.bf16.msra.mxu0 %v2262
        %3069 = vmatprep.subr.bf16.mxu0 %v2251
        %3070 = vmatpush2.bf16.msra.mxu0 %v2250
        %3071 = vmatprep.subr.bf16.mxu0 %v2239
        %3072 = vmatpush2.bf16.msra.mxu0 %v2238
        %3073 = vmatprep.subr.bf16.mxu0 %v2227
        %3074 = vmatpush2.bf16.msra.mxu0 %v2226
        %3075 = vmatprep.mubr.bf16.mxu0 %v371
        %3076 = vmatmul.mubr.bf16.gmra.mxu0 %v370
        %v3077 = vpop.f32.mrf.mxu0
        %v3078 = vadd.f32 %v2965, %v3077
        %v3079 = vpop.f32.mrf.mxu0
        %v3080 = vadd.f32 %v2967, %v3079
        %v3081 = vpop.f32.mrf.mxu0
        %v3082 = vadd.f32 %v2969, %v3081
        %v3083 = vpop.f32.mrf.mxu0
        %v3084 = vadd.f32 %v2971, %v3083
        %3085 = vmatprep.mubr.bf16.mxu0 %v375
        %3086 = vmatmul.mubr.bf16.gmra.mxu0 %v374
        %v3087 = vpop.f32.mrf.mxu0
        %v3088 = vadd.f32 %v2975, %v3087
        %v3089 = vpop.f32.mrf.mxu0
        %v3090 = vadd.f32 %v2977, %v3089
        %v3091 = vpop.f32.mrf.mxu0
        %v3092 = vadd.f32 %v2979, %v3091
        %v3093 = vpop.f32.mrf.mxu0
        %v3094 = vadd.f32 %v2981, %v3093
        %3095 = vmatprep.mubr.bf16.mxu0 %v379
        %3096 = vmatmul.mubr.bf16.gmra.mxu0 %v378
        %v3097 = vpop.f32.mrf.mxu0
        %v3098 = vadd.f32 %v2985, %v3097
        %v3099 = vpop.f32.mrf.mxu0
        %v3100 = vadd.f32 %v2987, %v3099
        %v3101 = vpop.f32.mrf.mxu0
        %v3102 = vadd.f32 %v2989, %v3101
        %v3103 = vpop.f32.mrf.mxu0
        %v3104 = vadd.f32 %v2991, %v3103
        %3105 = vmatprep.mubr.bf16.mxu0 %v383
        %3106 = vmatmul.mubr.bf16.gmra.mxu0 %v382
        %v3107 = vpop.f32.mrf.mxu0
        %v3108 = vadd.f32 %v2995, %v3107
        %v3109 = vpop.f32.mrf.mxu0
        %v3110 = vadd.f32 %v2997, %v3109
        %v3111 = vpop.f32.mrf.mxu0
        %v3112 = vadd.f32 %v2999, %v3111
        %v3113 = vpop.f32.mrf.mxu0
        %v3114 = vadd.f32 %v3001, %v3113
        %3115 = vmatprep.mubr.bf16.mxu0 %v387
        %3116 = vmatmul.mubr.bf16.gmra.mxu0 %v386
        %v3117 = vpop.f32.mrf.mxu0
        %v3118 = vadd.f32 %v3005, %v3117
        %v3119 = vpop.f32.mrf.mxu0
        %v3120 = vadd.f32 %v3007, %v3119
        %v3121 = vpop.f32.mrf.mxu0
        %v3122 = vadd.f32 %v3009, %v3121
        %v3123 = vpop.f32.mrf.mxu0
        %v3124 = vadd.f32 %v3011, %v3123
        %3125 = vmatprep.mubr.bf16.mxu0 %v391
        %3126 = vmatmul.mubr.bf16.gmra.mxu0 %v390
        %v3127 = vpop.f32.mrf.mxu0
        %v3128 = vadd.f32 %v3015, %v3127
        %v3129 = vpop.f32.mrf.mxu0
        %v3130 = vadd.f32 %v3017, %v3129
        %v3131 = vpop.f32.mrf.mxu0
        %v3132 = vadd.f32 %v3019, %v3131
        %v3133 = vpop.f32.mrf.mxu0
        %v3134 = vadd.f32 %v3021, %v3133
        %3135 = vmatprep.mubr.bf16.mxu0 %v395
        %3136 = vmatmul.mubr.bf16.gmra.mxu0 %v394
        %v3137 = vpop.f32.mrf.mxu0
        %v3138 = vadd.f32 %v3025, %v3137
        %v3139 = vpop.f32.mrf.mxu0
        %v3140 = vadd.f32 %v3027, %v3139
        %v3141 = vpop.f32.mrf.mxu0
        %v3142 = vadd.f32 %v3029, %v3141
        %v3143 = vpop.f32.mrf.mxu0
        %v3144 = vadd.f32 %v3031, %v3143
        %3145 = vmatprep.mubr.bf16.mxu0 %v399
        %3146 = vmatmul.mubr.bf16.gmra.mxu0 %v398
        %v3147 = vpop.f32.mrf.mxu0
        %v3148 = vadd.f32 %v3035, %v3147
        %v3149 = vpop.f32.mrf.mxu0
        %v3150 = vadd.f32 %v3037, %v3149
        %v3151 = vpop.f32.mrf.mxu0
        %v3152 = vadd.f32 %v3039, %v3151
        %v3153 = vpop.f32.mrf.mxu0
        %v3154 = vadd.f32 %v3041, %v3153
        %3155 = vdwg.mxu0
        %3156 = vmatprep.subr.bf16.mxu0 %v2025
        %3157 = vmatpush1.bf16.msra.mxu0 %v2024
        %3158 = vmatprep.subr.bf16.mxu0 %v2013
        %3159 = vmatpush1.bf16.msra.mxu0 %v2012
        %3160 = vmatprep.subr.bf16.mxu0 %v2001
        %3161 = vmatpush1.bf16.msra.mxu0 %v2000
        %3162 = vmatprep.subr.bf16.mxu0 %v1989
        %3163 = vmatpush1.bf16.msra.mxu0 %v1988
        %3164 = vmatprep.subr.bf16.mxu0 %v1977
        %3165 = vmatpush1.bf16.msra.mxu0 %v1976
        %3166 = vmatprep.subr.bf16.mxu0 %v1965
        %3167 = vmatpush1.bf16.msra.mxu0 %v1964
        %3168 = vmatprep.subr.bf16.mxu0 %v1953
        %3169 = vmatpush1.bf16.msra.mxu0 %v1952
        %3170 = vmatprep.subr.bf16.mxu0 %v1941
        %3171 = vmatpush1.bf16.msra.mxu0 %v1940
        %3172 = vmatprep.subr.bf16.mxu0 %v2121
        %3173 = vmatpush2.bf16.msra.mxu0 %v2120
        %3174 = vmatprep.subr.bf16.mxu0 %v2109
        %3175 = vmatpush2.bf16.msra.mxu0 %v2108
        %3176 = vmatprep.subr.bf16.mxu0 %v2097
        %3177 = vmatpush2.bf16.msra.mxu0 %v2096
        %3178 = vmatprep.subr.bf16.mxu0 %v2085
        %3179 = vmatpush2.bf16.msra.mxu0 %v2084
        %3180 = vmatprep.subr.bf16.mxu0 %v2073
        %3181 = vmatpush2.bf16.msra.mxu0 %v2072
        %3182 = vmatprep.subr.bf16.mxu0 %v2061
        %3183 = vmatpush2.bf16.msra.mxu0 %v2060
        %3184 = vmatprep.subr.bf16.mxu0 %v2049
        %3185 = vmatpush2.bf16.msra.mxu0 %v2048
        %3186 = vmatprep.subr.bf16.mxu0 %v2037
        %3187 = vmatpush2.bf16.msra.mxu0 %v2036
        %3188 = vmatprep.mubr.bf16.mxu0 %v369
        %3189 = vmatmul.mubr.bf16.gmra.mxu0 %v368
        %v3190 = vpop.f32.mrf.mxu0
        %v3191 = vadd.f32 0.0, %v3190
        %v3192 = vpop.f32.mrf.mxu0
        %v3193 = vadd.f32 0.0, %v3192
        %v3194 = vpop.f32.mrf.mxu0
        %v3195 = vadd.f32 0.0, %v3194
        %v3196 = vpop.f32.mrf.mxu0
        %v3197 = vadd.f32 0.0, %v3196
        %3198 = vmatprep.mubr.bf16.mxu0 %v373
        %3199 = vmatmul.mubr.bf16.gmra.mxu0 %v372
        %v3200 = vpop.f32.mrf.mxu0
        %v3201 = vadd.f32 0.0, %v3200
        %v3202 = vpop.f32.mrf.mxu0
        %v3203 = vadd.f32 0.0, %v3202
        %v3204 = vpop.f32.mrf.mxu0
        %v3205 = vadd.f32 0.0, %v3204
        %v3206 = vpop.f32.mrf.mxu0
        %v3207 = vadd.f32 0.0, %v3206
        %3208 = vmatprep.mubr.bf16.mxu0 %v377
        %3209 = vmatmul.mubr.bf16.gmra.mxu0 %v376
        %v3210 = vpop.f32.mrf.mxu0
        %v3211 = vadd.f32 0.0, %v3210
        %v3212 = vpop.f32.mrf.mxu0
        %v3213 = vadd.f32 0.0, %v3212
        %v3214 = vpop.f32.mrf.mxu0
        %v3215 = vadd.f32 0.0, %v3214
        %v3216 = vpop.f32.mrf.mxu0
        %v3217 = vadd.f32 0.0, %v3216
        %3218 = vmatprep.mubr.bf16.mxu0 %v381
        %3219 = vmatmul.mubr.bf16.gmra.mxu0 %v380
        %v3220 = vpop.f32.mrf.mxu0
        %v3221 = vadd.f32 0.0, %v3220
        %v3222 = vpop.f32.mrf.mxu0
        %v3223 = vadd.f32 0.0, %v3222
        %v3224 = vpop.f32.mrf.mxu0
        %v3225 = vadd.f32 0.0, %v3224
        %v3226 = vpop.f32.mrf.mxu0
        %v3227 = vadd.f32 0.0, %v3226
        %3228 = vmatprep.mubr.bf16.mxu0 %v385
        %3229 = vmatmul.mubr.bf16.gmra.mxu0 %v384
        %v3230 = vpop.f32.mrf.mxu0
        %v3231 = vadd.f32 0.0, %v3230
        %v3232 = vpop.f32.mrf.mxu0
        %v3233 = vadd.f32 0.0, %v3232
        %v3234 = vpop.f32.mrf.mxu0
        %v3235 = vadd.f32 0.0, %v3234
        %v3236 = vpop.f32.mrf.mxu0
        %v3237 = vadd.f32 0.0, %v3236
        %3238 = vmatprep.mubr.bf16.mxu0 %v389
        %3239 = vmatmul.mubr.bf16.gmra.mxu0 %v388
        %v3240 = vpop.f32.mrf.mxu0
        %v3241 = vadd.f32 0.0, %v3240
        %v3242 = vpop.f32.mrf.mxu0
        %v3243 = vadd.f32 0.0, %v3242
        %v3244 = vpop.f32.mrf.mxu0
        %v3245 = vadd.f32 0.0, %v3244
        %v3246 = vpop.f32.mrf.mxu0
        %v3247 = vadd.f32 0.0, %v3246
        %3248 = vmatprep.mubr.bf16.mxu0 %v393
        %3249 = vmatmul.mubr.bf16.gmra.mxu0 %v392
        %v3250 = vpop.f32.mrf.mxu0
        %v3251 = vadd.f32 0.0, %v3250
        %v3252 = vpop.f32.mrf.mxu0
        %v3253 = vadd.f32 0.0, %v3252
        %v3254 = vpop.f32.mrf.mxu0
        %v3255 = vadd.f32 0.0, %v3254
        %v3256 = vpop.f32.mrf.mxu0
        %v3257 = vadd.f32 0.0, %v3256
        %3258 = vmatprep.mubr.bf16.mxu0 %v397
        %3259 = vmatmul.mubr.bf16.gmra.mxu0 %v396
        %v3260 = vpop.f32.mrf.mxu0
        %v3261 = vadd.f32 0.0, %v3260
        %v3262 = vpop.f32.mrf.mxu0
        %v3263 = vadd.f32 0.0, %v3262
        %v3264 = vpop.f32.mrf.mxu0
        %v3265 = vadd.f32 0.0, %v3264
        %v3266 = vpop.f32.mrf.mxu0
        %v3267 = vadd.f32 0.0, %v3266
        %3268 = vdwg.mxu0
        %3269 = vmatprep.subr.bf16.mxu0 %v2217
        %3270 = vmatpush1.bf16.msra.mxu0 %v2216
        %3271 = vmatprep.subr.bf16.mxu0 %v2205
        %3272 = vmatpush1.bf16.msra.mxu0 %v2204
        %3273 = vmatprep.subr.bf16.mxu0 %v2193
        %3274 = vmatpush1.bf16.msra.mxu0 %v2192
        %3275 = vmatprep.subr.bf16.mxu0 %v2181
        %3276 = vmatpush1.bf16.msra.mxu0 %v2180
        %3277 = vmatprep.subr.bf16.mxu0 %v2169
        %3278 = vmatpush1.bf16.msra.mxu0 %v2168
        %3279 = vmatprep.subr.bf16.mxu0 %v2157
        %3280 = vmatpush1.bf16.msra.mxu0 %v2156
        %3281 = vmatprep.subr.bf16.mxu0 %v2145
        %3282 = vmatpush1.bf16.msra.mxu0 %v2144
        %3283 = vmatprep.subr.bf16.mxu0 %v2133
        %3284 = vmatpush1.bf16.msra.mxu0 %v2132
        %3285 = vmatprep.subr.bf16.mxu0 %v2313
        %3286 = vmatpush2.bf16.msra.mxu0 %v2312
        %3287 = vmatprep.subr.bf16.mxu0 %v2301
        %3288 = vmatpush2.bf16.msra.mxu0 %v2300
        %3289 = vmatprep.subr.bf16.mxu0 %v2289
        %3290 = vmatpush2.bf16.msra.mxu0 %v2288
        %3291 = vmatprep.subr.bf16.mxu0 %v2277
        %3292 = vmatpush2.bf16.msra.mxu0 %v2276
        %3293 = vmatprep.subr.bf16.mxu0 %v2265
        %3294 = vmatpush2.bf16.msra.mxu0 %v2264
        %3295 = vmatprep.subr.bf16.mxu0 %v2253
        %3296 = vmatpush2.bf16.msra.mxu0 %v2252
        %3297 = vmatprep.subr.bf16.mxu0 %v2241
        %3298 = vmatpush2.bf16.msra.mxu0 %v2240
        %3299 = vmatprep.subr.bf16.mxu0 %v2229
        %3300 = vmatpush2.bf16.msra.mxu0 %v2228
        %3301 = vmatprep.mubr.bf16.mxu0 %v371
        %3302 = vmatmul.mubr.bf16.gmra.mxu0 %v370
        %v3303 = vpop.f32.mrf.mxu0
        %v3304 = vadd.f32 %v3191, %v3303
        %v3305 = vpop.f32.mrf.mxu0
        %v3306 = vadd.f32 %v3193, %v3305
        %v3307 = vpop.f32.mrf.mxu0
        %v3308 = vadd.f32 %v3195, %v3307
        %v3309 = vpop.f32.mrf.mxu0
        %v3310 = vadd.f32 %v3197, %v3309
        %3311 = vmatprep.mubr.bf16.mxu0 %v375
        %3312 = vmatmul.mubr.bf16.gmra.mxu0 %v374
        %v3313 = vpop.f32.mrf.mxu0
        %v3314 = vadd.f32 %v3201, %v3313
        %v3315 = vpop.f32.mrf.mxu0
        %v3316 = vadd.f32 %v3203, %v3315
        %v3317 = vpop.f32.mrf.mxu0
        %v3318 = vadd.f32 %v3205, %v3317
        %v3319 = vpop.f32.mrf.mxu0
        %v3320 = vadd.f32 %v3207, %v3319
        %3321 = vmatprep.mubr.bf16.mxu0 %v379
        %3322 = vmatmul.mubr.bf16.gmra.mxu0 %v378
        %v3323 = vpop.f32.mrf.mxu0
        %v3324 = vadd.f32 %v3211, %v3323
        %v3325 = vpop.f32.mrf.mxu0
        %v3326 = vadd.f32 %v3213, %v3325
        %v3327 = vpop.f32.mrf.mxu0
        %v3328 = vadd.f32 %v3215, %v3327
        %v3329 = vpop.f32.mrf.mxu0
        %v3330 = vadd.f32 %v3217, %v3329
        %3331 = vmatprep.mubr.bf16.mxu0 %v383
        %3332 = vmatmul.mubr.bf16.gmra.mxu0 %v382
        %v3333 = vpop.f32.mrf.mxu0
        %v3334 = vadd.f32 %v3221, %v3333
        %v3335 = vpop.f32.mrf.mxu0
        %v3336 = vadd.f32 %v3223, %v3335
        %v3337 = vpop.f32.mrf.mxu0
        %v3338 = vadd.f32 %v3225, %v3337
        %v3339 = vpop.f32.mrf.mxu0
        %v3340 = vadd.f32 %v3227, %v3339
        %3341 = vmatprep.mubr.bf16.mxu0 %v387
        %3342 = vmatmul.mubr.bf16.gmra.mxu0 %v386
        %v3343 = vpop.f32.mrf.mxu0
        %v3344 = vadd.f32 %v3231, %v3343
        %v3345 = vpop.f32.mrf.mxu0
        %v3346 = vadd.f32 %v3233, %v3345
        %v3347 = vpop.f32.mrf.mxu0
        %v3348 = vadd.f32 %v3235, %v3347
        %v3349 = vpop.f32.mrf.mxu0
        %v3350 = vadd.f32 %v3237, %v3349
        %3351 = vmatprep.mubr.bf16.mxu0 %v391
        %3352 = vmatmul.mubr.bf16.gmra.mxu0 %v390
        %v3353 = vpop.f32.mrf.mxu0
        %v3354 = vadd.f32 %v3241, %v3353
        %v3355 = vpop.f32.mrf.mxu0
        %v3356 = vadd.f32 %v3243, %v3355
        %v3357 = vpop.f32.mrf.mxu0
        %v3358 = vadd.f32 %v3245, %v3357
        %v3359 = vpop.f32.mrf.mxu0
        %v3360 = vadd.f32 %v3247, %v3359
        %3361 = vmatprep.mubr.bf16.mxu0 %v395
        %3362 = vmatmul.mubr.bf16.gmra.mxu0 %v394
        %v3363 = vpop.f32.mrf.mxu0
        %v3364 = vadd.f32 %v3251, %v3363
        %v3365 = vpop.f32.mrf.mxu0
        %v3366 = vadd.f32 %v3253, %v3365
        %v3367 = vpop.f32.mrf.mxu0
        %v3368 = vadd.f32 %v3255, %v3367
        %v3369 = vpop.f32.mrf.mxu0
        %v3370 = vadd.f32 %v3257, %v3369
        %3371 = vmatprep.mubr.bf16.mxu0 %v399
        %3372 = vmatmul.mubr.bf16.gmra.mxu0 %v398
        %v3373 = vpop.f32.mrf.mxu0
        %v3374 = vadd.f32 %v3261, %v3373
        %v3375 = vpop.f32.mrf.mxu0
        %v3376 = vadd.f32 %v3263, %v3375
        %v3377 = vpop.f32.mrf.mxu0
        %v3378 = vadd.f32 %v3265, %v3377
        %v3379 = vpop.f32.mrf.mxu0
        %v3380 = vadd.f32 %v3267, %v3379
        %3381 = vdwg.mxu0
        %3382 = vmatprep.subr.bf16.mxu0 %v2027
        %3383 = vmatpush1.bf16.msra.mxu0 %v2026
        %3384 = vmatprep.subr.bf16.mxu0 %v2015
        %3385 = vmatpush1.bf16.msra.mxu0 %v2014
        %3386 = vmatprep.subr.bf16.mxu0 %v2003
        %3387 = vmatpush1.bf16.msra.mxu0 %v2002
        %3388 = vmatprep.subr.bf16.mxu0 %v1991
        %3389 = vmatpush1.bf16.msra.mxu0 %v1990
        %3390 = vmatprep.subr.bf16.mxu0 %v1979
        %3391 = vmatpush1.bf16.msra.mxu0 %v1978
        %3392 = vmatprep.subr.bf16.mxu0 %v1967
        %3393 = vmatpush1.bf16.msra.mxu0 %v1966
        %3394 = vmatprep.subr.bf16.mxu0 %v1955
        %3395 = vmatpush1.bf16.msra.mxu0 %v1954
        %3396 = vmatprep.subr.bf16.mxu0 %v1943
        %3397 = vmatpush1.bf16.msra.mxu0 %v1942
        %3398 = vmatprep.subr.bf16.mxu0 %v2123
        %3399 = vmatpush2.bf16.msra.mxu0 %v2122
        %3400 = vmatprep.subr.bf16.mxu0 %v2111
        %3401 = vmatpush2.bf16.msra.mxu0 %v2110
        %3402 = vmatprep.subr.bf16.mxu0 %v2099
        %3403 = vmatpush2.bf16.msra.mxu0 %v2098
        %3404 = vmatprep.subr.bf16.mxu0 %v2087
        %3405 = vmatpush2.bf16.msra.mxu0 %v2086
        %3406 = vmatprep.subr.bf16.mxu0 %v2075
        %3407 = vmatpush2.bf16.msra.mxu0 %v2074
        %3408 = vmatprep.subr.bf16.mxu0 %v2063
        %3409 = vmatpush2.bf16.msra.mxu0 %v2062
        %3410 = vmatprep.subr.bf16.mxu0 %v2051
        %3411 = vmatpush2.bf16.msra.mxu0 %v2050
        %3412 = vmatprep.subr.bf16.mxu0 %v2039
        %3413 = vmatpush2.bf16.msra.mxu0 %v2038
        %3414 = vmatprep.mubr.bf16.mxu0 %v369
        %3415 = vmatmul.mubr.bf16.gmra.mxu0 %v368
        %v3416 = vpop.f32.mrf.mxu0
        %v3417 = vadd.f32 0.0, %v3416
        %v3418 = vpop.f32.mrf.mxu0
        %v3419 = vadd.f32 0.0, %v3418
        %v3420 = vpop.f32.mrf.mxu0
        %v3421 = vadd.f32 0.0, %v3420
        %v3422 = vpop.f32.mrf.mxu0
        %v3423 = vadd.f32 0.0, %v3422
        %3424 = vmatprep.mubr.bf16.mxu0 %v373
        %3425 = vmatmul.mubr.bf16.gmra.mxu0 %v372
        %v3426 = vpop.f32.mrf.mxu0
        %v3427 = vadd.f32 0.0, %v3426
        %v3428 = vpop.f32.mrf.mxu0
        %v3429 = vadd.f32 0.0, %v3428
        %v3430 = vpop.f32.mrf.mxu0
        %v3431 = vadd.f32 0.0, %v3430
        %v3432 = vpop.f32.mrf.mxu0
        %v3433 = vadd.f32 0.0, %v3432
        %3434 = vmatprep.mubr.bf16.mxu0 %v377
        %3435 = vmatmul.mubr.bf16.gmra.mxu0 %v376
        %v3436 = vpop.f32.mrf.mxu0
        %v3437 = vadd.f32 0.0, %v3436
        %v3438 = vpop.f32.mrf.mxu0
        %v3439 = vadd.f32 0.0, %v3438
        %v3440 = vpop.f32.mrf.mxu0
        %v3441 = vadd.f32 0.0, %v3440
        %v3442 = vpop.f32.mrf.mxu0
        %v3443 = vadd.f32 0.0, %v3442
        %3444 = vmatprep.mubr.bf16.mxu0 %v381
        %3445 = vmatmul.mubr.bf16.gmra.mxu0 %v380
        %v3446 = vpop.f32.mrf.mxu0
        %v3447 = vadd.f32 0.0, %v3446
        %v3448 = vpop.f32.mrf.mxu0
        %v3449 = vadd.f32 0.0, %v3448
        %v3450 = vpop.f32.mrf.mxu0
        %v3451 = vadd.f32 0.0, %v3450
        %v3452 = vpop.f32.mrf.mxu0
        %v3453 = vadd.f32 0.0, %v3452
        %3454 = vmatprep.mubr.bf16.mxu0 %v385
        %3455 = vmatmul.mubr.bf16.gmra.mxu0 %v384
        %v3456 = vpop.f32.mrf.mxu0
        %v3457 = vadd.f32 0.0, %v3456
        %v3458 = vpop.f32.mrf.mxu0
        %v3459 = vadd.f32 0.0, %v3458
        %v3460 = vpop.f32.mrf.mxu0
        %v3461 = vadd.f32 0.0, %v3460
        %v3462 = vpop.f32.mrf.mxu0
        %v3463 = vadd.f32 0.0, %v3462
        %3464 = vmatprep.mubr.bf16.mxu0 %v389
        %3465 = vmatmul.mubr.bf16.gmra.mxu0 %v388
        %v3466 = vpop.f32.mrf.mxu0
        %v3467 = vadd.f32 0.0, %v3466
        %v3468 = vpop.f32.mrf.mxu0
        %v3469 = vadd.f32 0.0, %v3468
        %v3470 = vpop.f32.mrf.mxu0
        %v3471 = vadd.f32 0.0, %v3470
        %v3472 = vpop.f32.mrf.mxu0
        %v3473 = vadd.f32 0.0, %v3472
        %3474 = vmatprep.mubr.bf16.mxu0 %v393
        %3475 = vmatmul.mubr.bf16.gmra.mxu0 %v392
        %v3476 = vpop.f32.mrf.mxu0
        %v3477 = vadd.f32 0.0, %v3476
        %v3478 = vpop.f32.mrf.mxu0
        %v3479 = vadd.f32 0.0, %v3478
        %v3480 = vpop.f32.mrf.mxu0
        %v3481 = vadd.f32 0.0, %v3480
        %v3482 = vpop.f32.mrf.mxu0
        %v3483 = vadd.f32 0.0, %v3482
        %3484 = vmatprep.mubr.bf16.mxu0 %v397
        %3485 = vmatmul.mubr.bf16.gmra.mxu0 %v396
        %v3486 = vpop.f32.mrf.mxu0
        %v3487 = vadd.f32 0.0, %v3486
        %v3488 = vpop.f32.mrf.mxu0
        %v3489 = vadd.f32 0.0, %v3488
        %v3490 = vpop.f32.mrf.mxu0
        %v3491 = vadd.f32 0.0, %v3490
        %v3492 = vpop.f32.mrf.mxu0
        %v3493 = vadd.f32 0.0, %v3492
        %3494 = vdwg.mxu0
        %3495 = vmatprep.subr.bf16.mxu0 %v2219
        %3496 = vmatpush1.bf16.msra.mxu0 %v2218
        %3497 = vmatprep.subr.bf16.mxu0 %v2207
        %3498 = vmatpush1.bf16.msra.mxu0 %v2206
        %3499 = vmatprep.subr.bf16.mxu0 %v2195
        %3500 = vmatpush1.bf16.msra.mxu0 %v2194
        %3501 = vmatprep.subr.bf16.mxu0 %v2183
        %3502 = vmatpush1.bf16.msra.mxu0 %v2182
        %3503 = vmatprep.subr.bf16.mxu0 %v2171
        %3504 = vmatpush1.bf16.msra.mxu0 %v2170
        %3505 = vmatprep.subr.bf16.mxu0 %v2159
        %3506 = vmatpush1.bf16.msra.mxu0 %v2158
        %3507 = vmatprep.subr.bf16.mxu0 %v2147
        %3508 = vmatpush1.bf16.msra.mxu0 %v2146
        %3509 = vmatprep.subr.bf16.mxu0 %v2135
        %3510 = vmatpush1.bf16.msra.mxu0 %v2134
        %3511 = vmatprep.subr.bf16.mxu0 %v2315
        %3512 = vmatpush2.bf16.msra.mxu0 %v2314
        %3513 = vmatprep.subr.bf16.mxu0 %v2303
        %3514 = vmatpush2.bf16.msra.mxu0 %v2302
        %3515 = vmatprep.subr.bf16.mxu0 %v2291
        %3516 = vmatpush2.bf16.msra.mxu0 %v2290
        %3517 = vmatprep.subr.bf16.mxu0 %v2279
        %3518 = vmatpush2.bf16.msra.mxu0 %v2278
        %3519 = vmatprep.subr.bf16.mxu0 %v2267
        %3520 = vmatpush2.bf16.msra.mxu0 %v2266
        %3521 = vmatprep.subr.bf16.mxu0 %v2255
        %3522 = vmatpush2.bf16.msra.mxu0 %v2254
        %3523 = vmatprep.subr.bf16.mxu0 %v2243
        %3524 = vmatpush2.bf16.msra.mxu0 %v2242
        %3525 = vmatprep.subr.bf16.mxu0 %v2231
        %3526 = vmatpush2.bf16.msra.mxu0 %v2230
        %3527 = vmatprep.mubr.bf16.mxu0 %v371
        %3528 = vmatmul.mubr.bf16.gmra.mxu0 %v370
        %v3529 = vpop.f32.mrf.mxu0
        %v3530 = vadd.f32 %v3417, %v3529
        %v3531 = vpop.f32.mrf.mxu0
        %v3532 = vadd.f32 %v3419, %v3531
        %v3533 = vpop.f32.mrf.mxu0
        %v3534 = vadd.f32 %v3421, %v3533
        %v3535 = vpop.f32.mrf.mxu0
        %v3536 = vadd.f32 %v3423, %v3535
        %3537 = vmatprep.mubr.bf16.mxu0 %v375
        %3538 = vmatmul.mubr.bf16.gmra.mxu0 %v374
        %v3539 = vpop.f32.mrf.mxu0
        %v3540 = vadd.f32 %v3427, %v3539
        %v3541 = vpop.f32.mrf.mxu0
        %v3542 = vadd.f32 %v3429, %v3541
        %v3543 = vpop.f32.mrf.mxu0
        %v3544 = vadd.f32 %v3431, %v3543
        %v3545 = vpop.f32.mrf.mxu0
        %v3546 = vadd.f32 %v3433, %v3545
        %3547 = vmatprep.mubr.bf16.mxu0 %v379
        %3548 = vmatmul.mubr.bf16.gmra.mxu0 %v378
        %v3549 = vpop.f32.mrf.mxu0
        %v3550 = vadd.f32 %v3437, %v3549
        %v3551 = vpop.f32.mrf.mxu0
        %v3552 = vadd.f32 %v3439, %v3551
        %v3553 = vpop.f32.mrf.mxu0
        %v3554 = vadd.f32 %v3441, %v3553
        %v3555 = vpop.f32.mrf.mxu0
        %v3556 = vadd.f32 %v3443, %v3555
        %3557 = vmatprep.mubr.bf16.mxu0 %v383
        %3558 = vmatmul.mubr.bf16.gmra.mxu0 %v382
        %v3559 = vpop.f32.mrf.mxu0
        %v3560 = vadd.f32 %v3447, %v3559
        %v3561 = vpop.f32.mrf.mxu0
        %v3562 = vadd.f32 %v3449, %v3561
        %v3563 = vpop.f32.mrf.mxu0
        %v3564 = vadd.f32 %v3451, %v3563
        %v3565 = vpop.f32.mrf.mxu0
        %v3566 = vadd.f32 %v3453, %v3565
        %3567 = vmatprep.mubr.bf16.mxu0 %v387
        %3568 = vmatmul.mubr.bf16.gmra.mxu0 %v386
        %v3569 = vpop.f32.mrf.mxu0
        %v3570 = vadd.f32 %v3457, %v3569
        %v3571 = vpop.f32.mrf.mxu0
        %v3572 = vadd.f32 %v3459, %v3571
        %v3573 = vpop.f32.mrf.mxu0
        %v3574 = vadd.f32 %v3461, %v3573
        %v3575 = vpop.f32.mrf.mxu0
        %v3576 = vadd.f32 %v3463, %v3575
        %3577 = vmatprep.mubr.bf16.mxu0 %v391
        %3578 = vmatmul.mubr.bf16.gmra.mxu0 %v390
        %v3579 = vpop.f32.mrf.mxu0
        %v3580 = vadd.f32 %v3467, %v3579
        %v3581 = vpop.f32.mrf.mxu0
        %v3582 = vadd.f32 %v3469, %v3581
        %v3583 = vpop.f32.mrf.mxu0
        %v3584 = vadd.f32 %v3471, %v3583
        %v3585 = vpop.f32.mrf.mxu0
        %v3586 = vadd.f32 %v3473, %v3585
        %3587 = vmatprep.mubr.bf16.mxu0 %v395
        %3588 = vmatmul.mubr.bf16.gmra.mxu0 %v394
        %v3589 = vpop.f32.mrf.mxu0
        %v3590 = vadd.f32 %v3477, %v3589
        %v3591 = vpop.f32.mrf.mxu0
        %v3592 = vadd.f32 %v3479, %v3591
        %v3593 = vpop.f32.mrf.mxu0
        %v3594 = vadd.f32 %v3481, %v3593
        %v3595 = vpop.f32.mrf.mxu0
        %v3596 = vadd.f32 %v3483, %v3595
        %3597 = vmatprep.mubr.bf16.mxu0 %v399
        %3598 = vmatmul.mubr.bf16.gmra.mxu0 %v398
        %v3599 = vpop.f32.mrf.mxu0
        %v3600 = vadd.f32 %v3487, %v3599
        %v3601 = vpop.f32.mrf.mxu0
        %v3602 = vadd.f32 %v3489, %v3601
        %v3603 = vpop.f32.mrf.mxu0
        %v3604 = vadd.f32 %v3491, %v3603
        %v3605 = vpop.f32.mrf.mxu0
        %v3606 = vadd.f32 %v3493, %v3605
        %3607 = vdwg.mxu0
        %3608 = vmatprep.subr.bf16.mxu0 %v2029
        %3609 = vmatpush1.bf16.msra.mxu0 %v2028
        %3610 = vmatprep.subr.bf16.mxu0 %v2017
        %3611 = vmatpush1.bf16.msra.mxu0 %v2016
        %3612 = vmatprep.subr.bf16.mxu0 %v2005
        %3613 = vmatpush1.bf16.msra.mxu0 %v2004
        %3614 = vmatprep.subr.bf16.mxu0 %v1993
        %3615 = vmatpush1.bf16.msra.mxu0 %v1992
        %3616 = vmatprep.subr.bf16.mxu0 %v1981
        %3617 = vmatpush1.bf16.msra.mxu0 %v1980
        %3618 = vmatprep.subr.bf16.mxu0 %v1969
        %3619 = vmatpush1.bf16.msra.mxu0 %v1968
        %3620 = vmatprep.subr.bf16.mxu0 %v1957
        %3621 = vmatpush1.bf16.msra.mxu0 %v1956
        %3622 = vmatprep.subr.bf16.mxu0 %v1945
        %3623 = vmatpush1.bf16.msra.mxu0 %v1944
        %3624 = vmatprep.subr.bf16.mxu0 %v2125
        %3625 = vmatpush2.bf16.msra.mxu0 %v2124
        %3626 = vmatprep.subr.bf16.mxu0 %v2113
        %3627 = vmatpush2.bf16.msra.mxu0 %v2112
        %3628 = vmatprep.subr.bf16.mxu0 %v2101
        %3629 = vmatpush2.bf16.msra.mxu0 %v2100
        %3630 = vmatprep.subr.bf16.mxu0 %v2089
        %3631 = vmatpush2.bf16.msra.mxu0 %v2088
        %3632 = vmatprep.subr.bf16.mxu0 %v2077
        %3633 = vmatpush2.bf16.msra.mxu0 %v2076
        %3634 = vmatprep.subr.bf16.mxu0 %v2065
        %3635 = vmatpush2.bf16.msra.mxu0 %v2064
        %3636 = vmatprep.subr.bf16.mxu0 %v2053
        %3637 = vmatpush2.bf16.msra.mxu0 %v2052
        %3638 = vmatprep.subr.bf16.mxu0 %v2041
        %3639 = vmatpush2.bf16.msra.mxu0 %v2040
        %3640 = vmatprep.mubr.bf16.mxu0 %v369
        %3641 = vmatmul.mubr.bf16.gmra.mxu0 %v368
        %v3642 = vpop.f32.mrf.mxu0
        %v3643 = vadd.f32 0.0, %v3642
        %v3644 = vpop.f32.mrf.mxu0
        %v3645 = vadd.f32 0.0, %v3644
        %v3646 = vpop.f32.mrf.mxu0
        %v3647 = vadd.f32 0.0, %v3646
        %v3648 = vpop.f32.mrf.mxu0
        %v3649 = vadd.f32 0.0, %v3648
        %3650 = vmatprep.mubr.bf16.mxu0 %v373
        %3651 = vmatmul.mubr.bf16.gmra.mxu0 %v372
        %v3652 = vpop.f32.mrf.mxu0
        %v3653 = vadd.f32 0.0, %v3652
        %v3654 = vpop.f32.mrf.mxu0
        %v3655 = vadd.f32 0.0, %v3654
        %v3656 = vpop.f32.mrf.mxu0
        %v3657 = vadd.f32 0.0, %v3656
        %v3658 = vpop.f32.mrf.mxu0
        %v3659 = vadd.f32 0.0, %v3658
        %3660 = vmatprep.mubr.bf16.mxu0 %v377
        %3661 = vmatmul.mubr.bf16.gmra.mxu0 %v376
        %v3662 = vpop.f32.mrf.mxu0
        %v3663 = vadd.f32 0.0, %v3662
        %v3664 = vpop.f32.mrf.mxu0
        %v3665 = vadd.f32 0.0, %v3664
        %v3666 = vpop.f32.mrf.mxu0
        %v3667 = vadd.f32 0.0, %v3666
        %v3668 = vpop.f32.mrf.mxu0
        %v3669 = vadd.f32 0.0, %v3668
        %3670 = vmatprep.mubr.bf16.mxu0 %v381
        %3671 = vmatmul.mubr.bf16.gmra.mxu0 %v380
        %v3672 = vpop.f32.mrf.mxu0
        %v3673 = vadd.f32 0.0, %v3672
        %v3674 = vpop.f32.mrf.mxu0
        %v3675 = vadd.f32 0.0, %v3674
        %v3676 = vpop.f32.mrf.mxu0
        %v3677 = vadd.f32 0.0, %v3676
        %v3678 = vpop.f32.mrf.mxu0
        %v3679 = vadd.f32 0.0, %v3678
        %3680 = vmatprep.mubr.bf16.mxu0 %v385
        %3681 = vmatmul.mubr.bf16.gmra.mxu0 %v384
        %v3682 = vpop.f32.mrf.mxu0
        %v3683 = vadd.f32 0.0, %v3682
        %v3684 = vpop.f32.mrf.mxu0
        %v3685 = vadd.f32 0.0, %v3684
        %v3686 = vpop.f32.mrf.mxu0
        %v3687 = vadd.f32 0.0, %v3686
        %v3688 = vpop.f32.mrf.mxu0
        %v3689 = vadd.f32 0.0, %v3688
        %3690 = vmatprep.mubr.bf16.mxu0 %v389
        %3691 = vmatmul.mubr.bf16.gmra.mxu0 %v388
        %v3692 = vpop.f32.mrf.mxu0
        %v3693 = vadd.f32 0.0, %v3692
        %v3694 = vpop.f32.mrf.mxu0
        %v3695 = vadd.f32 0.0, %v3694
        %v3696 = vpop.f32.mrf.mxu0
        %v3697 = vadd.f32 0.0, %v3696
        %v3698 = vpop.f32.mrf.mxu0
        %v3699 = vadd.f32 0.0, %v3698
        %3700 = vmatprep.mubr.bf16.mxu0 %v393
        %3701 = vmatmul.mubr.bf16.gmra.mxu0 %v392
        %v3702 = vpop.f32.mrf.mxu0
        %v3703 = vadd.f32 0.0, %v3702
        %v3704 = vpop.f32.mrf.mxu0
        %v3705 = vadd.f32 0.0, %v3704
        %v3706 = vpop.f32.mrf.mxu0
        %v3707 = vadd.f32 0.0, %v3706
        %v3708 = vpop.f32.mrf.mxu0
        %v3709 = vadd.f32 0.0, %v3708
        %3710 = vmatprep.mubr.bf16.mxu0 %v397
        %3711 = vmatmul.mubr.bf16.gmra.mxu0 %v396
        %v3712 = vpop.f32.mrf.mxu0
        %v3713 = vadd.f32 0.0, %v3712
        %v3714 = vpop.f32.mrf.mxu0
        %v3715 = vadd.f32 0.0, %v3714
        %v3716 = vpop.f32.mrf.mxu0
        %v3717 = vadd.f32 0.0, %v3716
        %v3718 = vpop.f32.mrf.mxu0
        %v3719 = vadd.f32 0.0, %v3718
        %3720 = vdwg.mxu0
        %3721 = vmatprep.subr.bf16.mxu0 %v2221
        %3722 = vmatpush1.bf16.msra.mxu0 %v2220
        %3723 = vmatprep.subr.bf16.mxu0 %v2209
        %3724 = vmatpush1.bf16.msra.mxu0 %v2208
        %3725 = vmatprep.subr.bf16.mxu0 %v2197
        %3726 = vmatpush1.bf16.msra.mxu0 %v2196
        %3727 = vmatprep.subr.bf16.mxu0 %v2185
        %3728 = vmatpush1.bf16.msra.mxu0 %v2184
        %3729 = vmatprep.subr.bf16.mxu0 %v2173
        %3730 = vmatpush1.bf16.msra.mxu0 %v2172
        %3731 = vmatprep.subr.bf16.mxu0 %v2161
        %3732 = vmatpush1.bf16.msra.mxu0 %v2160
        %3733 = vmatprep.subr.bf16.mxu0 %v2149
        %3734 = vmatpush1.bf16.msra.mxu0 %v2148
        %3735 = vmatprep.subr.bf16.mxu0 %v2137
        %3736 = vmatpush1.bf16.msra.mxu0 %v2136
        %3737 = vmatprep.subr.bf16.mxu0 %v2317
        %3738 = vmatpush2.bf16.msra.mxu0 %v2316
        %3739 = vmatprep.subr.bf16.mxu0 %v2305
        %3740 = vmatpush2.bf16.msra.mxu0 %v2304
        %3741 = vmatprep.subr.bf16.mxu0 %v2293
        %3742 = vmatpush2.bf16.msra.mxu0 %v2292
        %3743 = vmatprep.subr.bf16.mxu0 %v2281
        %3744 = vmatpush2.bf16.msra.mxu0 %v2280
        %3745 = vmatprep.subr.bf16.mxu0 %v2269
        %3746 = vmatpush2.bf16.msra.mxu0 %v2268
        %3747 = vmatprep.subr.bf16.mxu0 %v2257
        %3748 = vmatpush2.bf16.msra.mxu0 %v2256
        %3749 = vmatprep.subr.bf16.mxu0 %v2245
        %3750 = vmatpush2.bf16.msra.mxu0 %v2244
        %3751 = vmatprep.subr.bf16.mxu0 %v2233
        %3752 = vmatpush2.bf16.msra.mxu0 %v2232
        %3753 = vmatprep.mubr.bf16.mxu0 %v371
        %3754 = vmatmul.mubr.bf16.gmra.mxu0 %v370
        %v3755 = vpop.f32.mrf.mxu0
        %v3756 = vadd.f32 %v3643, %v3755
        %v3757 = vpop.f32.mrf.mxu0
        %v3758 = vadd.f32 %v3645, %v3757
        %v3759 = vpop.f32.mrf.mxu0
        %v3760 = vadd.f32 %v3647, %v3759
        %v3761 = vpop.f32.mrf.mxu0
        %v3762 = vadd.f32 %v3649, %v3761
        %3763 = vmatprep.mubr.bf16.mxu0 %v375
        %3764 = vmatmul.mubr.bf16.gmra.mxu0 %v374
        %v3765 = vpop.f32.mrf.mxu0
        %v3766 = vadd.f32 %v3653, %v3765
        %v3767 = vpop.f32.mrf.mxu0
        %v3768 = vadd.f32 %v3655, %v3767
        %v3769 = vpop.f32.mrf.mxu0
        %v3770 = vadd.f32 %v3657, %v3769
        %v3771 = vpop.f32.mrf.mxu0
        %v3772 = vadd.f32 %v3659, %v3771
        %3773 = vmatprep.mubr.bf16.mxu0 %v379
        %3774 = vmatmul.mubr.bf16.gmra.mxu0 %v378
        %v3775 = vpop.f32.mrf.mxu0
        %v3776 = vadd.f32 %v3663, %v3775
        %v3777 = vpop.f32.mrf.mxu0
        %v3778 = vadd.f32 %v3665, %v3777
        %v3779 = vpop.f32.mrf.mxu0
        %v3780 = vadd.f32 %v3667, %v3779
        %v3781 = vpop.f32.mrf.mxu0
        %v3782 = vadd.f32 %v3669, %v3781
        %3783 = vmatprep.mubr.bf16.mxu0 %v383
        %3784 = vmatmul.mubr.bf16.gmra.mxu0 %v382
        %v3785 = vpop.f32.mrf.mxu0
        %v3786 = vadd.f32 %v3673, %v3785
        %v3787 = vpop.f32.mrf.mxu0
        %v3788 = vadd.f32 %v3675, %v3787
        %v3789 = vpop.f32.mrf.mxu0
        %v3790 = vadd.f32 %v3677, %v3789
        %v3791 = vpop.f32.mrf.mxu0
        %v3792 = vadd.f32 %v3679, %v3791
        %3793 = vmatprep.mubr.bf16.mxu0 %v387
        %3794 = vmatmul.mubr.bf16.gmra.mxu0 %v386
        %v3795 = vpop.f32.mrf.mxu0
        %v3796 = vadd.f32 %v3683, %v3795
        %v3797 = vpop.f32.mrf.mxu0
        %v3798 = vadd.f32 %v3685, %v3797
        %v3799 = vpop.f32.mrf.mxu0
        %v3800 = vadd.f32 %v3687, %v3799
        %v3801 = vpop.f32.mrf.mxu0
        %v3802 = vadd.f32 %v3689, %v3801
        %3803 = vmatprep.mubr.bf16.mxu0 %v391
        %3804 = vmatmul.mubr.bf16.gmra.mxu0 %v390
        %v3805 = vpop.f32.mrf.mxu0
        %v3806 = vadd.f32 %v3693, %v3805
        %v3807 = vpop.f32.mrf.mxu0
        %v3808 = vadd.f32 %v3695, %v3807
        %v3809 = vpop.f32.mrf.mxu0
        %v3810 = vadd.f32 %v3697, %v3809
        %v3811 = vpop.f32.mrf.mxu0
        %v3812 = vadd.f32 %v3699, %v3811
        %3813 = vmatprep.mubr.bf16.mxu0 %v395
        %3814 = vmatmul.mubr.bf16.gmra.mxu0 %v394
        %v3815 = vpop.f32.mrf.mxu0
        %v3816 = vadd.f32 %v3703, %v3815
        %v3817 = vpop.f32.mrf.mxu0
        %v3818 = vadd.f32 %v3705, %v3817
        %v3819 = vpop.f32.mrf.mxu0
        %v3820 = vadd.f32 %v3707, %v3819
        %v3821 = vpop.f32.mrf.mxu0
        %v3822 = vadd.f32 %v3709, %v3821
        %3823 = vmatprep.mubr.bf16.mxu0 %v399
        %3824 = vmatmul.mubr.bf16.gmra.mxu0 %v398
        %v3825 = vpop.f32.mrf.mxu0
        %v3826 = vadd.f32 %v3713, %v3825
        %v3827 = vpop.f32.mrf.mxu0
        %v3828 = vadd.f32 %v3715, %v3827
        %v3829 = vpop.f32.mrf.mxu0
        %v3830 = vadd.f32 %v3717, %v3829
        %v3831 = vpop.f32.mrf.mxu0
        %v3832 = vadd.f32 %v3719, %v3831
        %3833 = vdwg.mxu0
        %3834 = vmatprep.subr.bf16.mxu0 %v2031
        %3835 = vmatpush1.bf16.msra.mxu0 %v2030
        %3836 = vmatprep.subr.bf16.mxu0 %v2019
        %3837 = vmatpush1.bf16.msra.mxu0 %v2018
        %3838 = vmatprep.subr.bf16.mxu0 %v2007
        %3839 = vmatpush1.bf16.msra.mxu0 %v2006
        %3840 = vmatprep.subr.bf16.mxu0 %v1995
        %3841 = vmatpush1.bf16.msra.mxu0 %v1994
        %3842 = vmatprep.subr.bf16.mxu0 %v1983
        %3843 = vmatpush1.bf16.msra.mxu0 %v1982
        %3844 = vmatprep.subr.bf16.mxu0 %v1971
        %3845 = vmatpush1.bf16.msra.mxu0 %v1970
        %3846 = vmatprep.subr.bf16.mxu0 %v1959
        %3847 = vmatpush1.bf16.msra.mxu0 %v1958
        %3848 = vmatprep.subr.bf16.mxu0 %v1947
        %3849 = vmatpush1.bf16.msra.mxu0 %v1946
        %3850 = vmatprep.subr.bf16.mxu0 %v2127
        %3851 = vmatpush2.bf16.msra.mxu0 %v2126
        %3852 = vmatprep.subr.bf16.mxu0 %v2115
        %3853 = vmatpush2.bf16.msra.mxu0 %v2114
        %3854 = vmatprep.subr.bf16.mxu0 %v2103
        %3855 = vmatpush2.bf16.msra.mxu0 %v2102
        %3856 = vmatprep.subr.bf16.mxu0 %v2091
        %3857 = vmatpush2.bf16.msra.mxu0 %v2090
        %3858 = vmatprep.subr.bf16.mxu0 %v2079
        %3859 = vmatpush2.bf16.msra.mxu0 %v2078
        %3860 = vmatprep.subr.bf16.mxu0 %v2067
        %3861 = vmatpush2.bf16.msra.mxu0 %v2066
        %3862 = vmatprep.subr.bf16.mxu0 %v2055
        %3863 = vmatpush2.bf16.msra.mxu0 %v2054
        %3864 = vmatprep.subr.bf16.mxu0 %v2043
        %3865 = vmatpush2.bf16.msra.mxu0 %v2042
        %3866 = vmatprep.mubr.bf16.mxu0 %v369
        %3867 = vmatmul.mubr.bf16.gmra.mxu0 %v368
        %v3868 = vpop.f32.mrf.mxu0
        %v3869 = vadd.f32 0.0, %v3868
        %v3870 = vpop.f32.mrf.mxu0
        %v3871 = vadd.f32 0.0, %v3870
        %v3872 = vpop.f32.mrf.mxu0
        %v3873 = vadd.f32 0.0, %v3872
        %v3874 = vpop.f32.mrf.mxu0
        %v3875 = vadd.f32 0.0, %v3874
        %3876 = vmatprep.mubr.bf16.mxu0 %v373
        %3877 = vmatmul.mubr.bf16.gmra.mxu0 %v372
        %v3878 = vpop.f32.mrf.mxu0
        %v3879 = vadd.f32 0.0, %v3878
        %v3880 = vpop.f32.mrf.mxu0
        %v3881 = vadd.f32 0.0, %v3880
        %v3882 = vpop.f32.mrf.mxu0
        %v3883 = vadd.f32 0.0, %v3882
        %v3884 = vpop.f32.mrf.mxu0
        %v3885 = vadd.f32 0.0, %v3884
        %3886 = vmatprep.mubr.bf16.mxu0 %v377
        %3887 = vmatmul.mubr.bf16.gmra.mxu0 %v376
        %v3888 = vpop.f32.mrf.mxu0
        %v3889 = vadd.f32 0.0, %v3888
        %v3890 = vpop.f32.mrf.mxu0
        %v3891 = vadd.f32 0.0, %v3890
        %v3892 = vpop.f32.mrf.mxu0
        %v3893 = vadd.f32 0.0, %v3892
        %v3894 = vpop.f32.mrf.mxu0
        %v3895 = vadd.f32 0.0, %v3894
        %3896 = vmatprep.mubr.bf16.mxu0 %v381
        %3897 = vmatmul.mubr.bf16.gmra.mxu0 %v380
        %v3898 = vpop.f32.mrf.mxu0
        %v3899 = vadd.f32 0.0, %v3898
        %v3900 = vpop.f32.mrf.mxu0
        %v3901 = vadd.f32 0.0, %v3900
        %v3902 = vpop.f32.mrf.mxu0
        %v3903 = vadd.f32 0.0, %v3902
        %v3904 = vpop.f32.mrf.mxu0
        %v3905 = vadd.f32 0.0, %v3904
        %3906 = vmatprep.mubr.bf16.mxu0 %v385
        %3907 = vmatmul.mubr.bf16.gmra.mxu0 %v384
        %v3908 = vpop.f32.mrf.mxu0
        %v3909 = vadd.f32 0.0, %v3908
        %v3910 = vpop.f32.mrf.mxu0
        %v3911 = vadd.f32 0.0, %v3910
        %v3912 = vpop.f32.mrf.mxu0
        %v3913 = vadd.f32 0.0, %v3912
        %v3914 = vpop.f32.mrf.mxu0
        %v3915 = vadd.f32 0.0, %v3914
        %3916 = vmatprep.mubr.bf16.mxu0 %v389
        %3917 = vmatmul.mubr.bf16.gmra.mxu0 %v388
        %v3918 = vpop.f32.mrf.mxu0
        %v3919 = vadd.f32 0.0, %v3918
        %v3920 = vpop.f32.mrf.mxu0
        %v3921 = vadd.f32 0.0, %v3920
        %v3922 = vpop.f32.mrf.mxu0
        %v3923 = vadd.f32 0.0, %v3922
        %v3924 = vpop.f32.mrf.mxu0
        %v3925 = vadd.f32 0.0, %v3924
        %3926 = vmatprep.mubr.bf16.mxu0 %v393
        %3927 = vmatmul.mubr.bf16.gmra.mxu0 %v392
        %v3928 = vpop.f32.mrf.mxu0
        %v3929 = vadd.f32 0.0, %v3928
        %v3930 = vpop.f32.mrf.mxu0
        %v3931 = vadd.f32 0.0, %v3930
        %v3932 = vpop.f32.mrf.mxu0
        %v3933 = vadd.f32 0.0, %v3932
        %v3934 = vpop.f32.mrf.mxu0
        %v3935 = vadd.f32 0.0, %v3934
        %3936 = vmatprep.mubr.bf16.mxu0 %v397
        %3937 = vmatmul.mubr.bf16.gmra.mxu0 %v396
        %v3938 = vpop.f32.mrf.mxu0
        %v3939 = vadd.f32 0.0, %v3938
        %v3940 = vpop.f32.mrf.mxu0
        %v3941 = vadd.f32 0.0, %v3940
        %v3942 = vpop.f32.mrf.mxu0
        %v3943 = vadd.f32 0.0, %v3942
        %v3944 = vpop.f32.mrf.mxu0
        %v3945 = vadd.f32 0.0, %v3944
        %3946 = vdwg.mxu0
        %3947 = vmatprep.subr.bf16.mxu0 %v2223
        %3948 = vmatpush1.bf16.msra.mxu0 %v2222
        %3949 = vmatprep.subr.bf16.mxu0 %v2211
        %3950 = vmatpush1.bf16.msra.mxu0 %v2210
        %3951 = vmatprep.subr.bf16.mxu0 %v2199
        %3952 = vmatpush1.bf16.msra.mxu0 %v2198
        %3953 = vmatprep.subr.bf16.mxu0 %v2187
        %3954 = vmatpush1.bf16.msra.mxu0 %v2186
        %3955 = vmatprep.subr.bf16.mxu0 %v2175
        %3956 = vmatpush1.bf16.msra.mxu0 %v2174
        %3957 = vmatprep.subr.bf16.mxu0 %v2163
        %3958 = vmatpush1.bf16.msra.mxu0 %v2162
        %3959 = vmatprep.subr.bf16.mxu0 %v2151
        %3960 = vmatpush1.bf16.msra.mxu0 %v2150
        %3961 = vmatprep.subr.bf16.mxu0 %v2139
        %3962 = vmatpush1.bf16.msra.mxu0 %v2138
        %3963 = vmatprep.subr.bf16.mxu0 %v2319
        %3964 = vmatpush2.bf16.msra.mxu0 %v2318
        %3965 = vmatprep.subr.bf16.mxu0 %v2307
        %3966 = vmatpush2.bf16.msra.mxu0 %v2306
        %3967 = vmatprep.subr.bf16.mxu0 %v2295
        %3968 = vmatpush2.bf16.msra.mxu0 %v2294
        %3969 = vmatprep.subr.bf16.mxu0 %v2283
        %3970 = vmatpush2.bf16.msra.mxu0 %v2282
        %3971 = vmatprep.subr.bf16.mxu0 %v2271
        %3972 = vmatpush2.bf16.msra.mxu0 %v2270
        %3973 = vmatprep.subr.bf16.mxu0 %v2259
        %3974 = vmatpush2.bf16.msra.mxu0 %v2258
        %3975 = vmatprep.subr.bf16.mxu0 %v2247
        %3976 = vmatpush2.bf16.msra.mxu0 %v2246
        %3977 = vmatprep.subr.bf16.mxu0 %v2235
        %3978 = vmatpush2.bf16.msra.mxu0 %v2234
        %3979 = vmatprep.mubr.bf16.mxu0 %v371
        %3980 = vmatmul.mubr.bf16.gmra.mxu0 %v370
        %v3981 = vpop.f32.mrf.mxu0
        %v3982 = vadd.f32 %v3869, %v3981
        %v3983 = vpop.f32.mrf.mxu0
        %v3984 = vadd.f32 %v3871, %v3983
        %v3985 = vpop.f32.mrf.mxu0
        %v3986 = vadd.f32 %v3873, %v3985
        %v3987 = vpop.f32.mrf.mxu0
        %v3988 = vadd.f32 %v3875, %v3987
        %3989 = vmatprep.mubr.bf16.mxu0 %v375
        %3990 = vmatmul.mubr.bf16.gmra.mxu0 %v374
        %v3991 = vpop.f32.mrf.mxu0
        %v3992 = vadd.f32 %v3879, %v3991
        %v3993 = vpop.f32.mrf.mxu0
        %v3994 = vadd.f32 %v3881, %v3993
        %v3995 = vpop.f32.mrf.mxu0
        %v3996 = vadd.f32 %v3883, %v3995
        %v3997 = vpop.f32.mrf.mxu0
        %v3998 = vadd.f32 %v3885, %v3997
        %3999 = vmatprep.mubr.bf16.mxu0 %v379
        %4000 = vmatmul.mubr.bf16.gmra.mxu0 %v378
        %v4001 = vpop.f32.mrf.mxu0
        %v4002 = vadd.f32 %v3889, %v4001
        %v4003 = vpop.f32.mrf.mxu0
        %v4004 = vadd.f32 %v3891, %v4003
        %v4005 = vpop.f32.mrf.mxu0
        %v4006 = vadd.f32 %v3893, %v4005
        %v4007 = vpop.f32.mrf.mxu0
        %v4008 = vadd.f32 %v3895, %v4007
        %4009 = vmatprep.mubr.bf16.mxu0 %v383
        %4010 = vmatmul.mubr.bf16.gmra.mxu0 %v382
        %v4011 = vpop.f32.mrf.mxu0
        %v4012 = vadd.f32 %v3899, %v4011
        %v4013 = vpop.f32.mrf.mxu0
        %v4014 = vadd.f32 %v3901, %v4013
        %v4015 = vpop.f32.mrf.mxu0
        %v4016 = vadd.f32 %v3903, %v4015
        %v4017 = vpop.f32.mrf.mxu0
        %v4018 = vadd.f32 %v3905, %v4017
        %4019 = vmatprep.mubr.bf16.mxu0 %v387
        %4020 = vmatmul.mubr.bf16.gmra.mxu0 %v386
        %v4021 = vpop.f32.mrf.mxu0
        %v4022 = vadd.f32 %v3909, %v4021
        %v4023 = vpop.f32.mrf.mxu0
        %v4024 = vadd.f32 %v3911, %v4023
        %v4025 = vpop.f32.mrf.mxu0
        %v4026 = vadd.f32 %v3913, %v4025
        %v4027 = vpop.f32.mrf.mxu0
        %v4028 = vadd.f32 %v3915, %v4027
        %4029 = vmatprep.mubr.bf16.mxu0 %v391
        %4030 = vmatmul.mubr.bf16.gmra.mxu0 %v390
        %v4031 = vpop.f32.mrf.mxu0
        %v4032 = vadd.f32 %v3919, %v4031
        %v4033 = vpop.f32.mrf.mxu0
        %v4034 = vadd.f32 %v3921, %v4033
        %v4035 = vpop.f32.mrf.mxu0
        %v4036 = vadd.f32 %v3923, %v4035
        %v4037 = vpop.f32.mrf.mxu0
        %v4038 = vadd.f32 %v3925, %v4037
        %4039 = vmatprep.mubr.bf16.mxu0 %v395
        %4040 = vmatmul.mubr.bf16.gmra.mxu0 %v394
        %v4041 = vpop.f32.mrf.mxu0
        %v4042 = vadd.f32 %v3929, %v4041
        %v4043 = vpop.f32.mrf.mxu0
        %v4044 = vadd.f32 %v3931, %v4043
        %v4045 = vpop.f32.mrf.mxu0
        %v4046 = vadd.f32 %v3933, %v4045
        %v4047 = vpop.f32.mrf.mxu0
        %v4048 = vadd.f32 %v3935, %v4047
        %4049 = vmatprep.mubr.bf16.mxu0 %v399
        %4050 = vmatmul.mubr.bf16.gmra.mxu0 %v398
        %v4051 = vpop.f32.mrf.mxu0
        %v4052 = vadd.f32 %v3939, %v4051
        %v4053 = vpop.f32.mrf.mxu0
        %v4054 = vadd.f32 %v3941, %v4053
        %v4055 = vpop.f32.mrf.mxu0
        %v4056 = vadd.f32 %v3943, %v4055
        %v4057 = vpop.f32.mrf.mxu0
        %v4058 = vadd.f32 %v3945, %v4057
        %4059 = vdwg.mxu0
        %v4060 = vld [vmem:[#allocation12] ss:$8 sm:$0xf]
        %v4062 = vlaneseq
        %v4063 = vshrl.u32 %v4062, 7
        %v4064 = vsub.s32 0, %v4063
        %v4065 = vrot.slane %v4060, %v4064
        %v4066 = vlaneseq
        %v4067 = vshrl.u32 %v4066, 7
        %v4068 = vsub.s32 1, %v4067
        %v4069 = vrot.slane %v4060, %v4068
        %v4070 = vlaneseq
        %v4071 = vshrl.u32 %v4070, 7
        %v4072 = vsub.s32 2, %v4071
        %v4073 = vrot.slane %v4060, %v4072
        %v4074 = vlaneseq
        %v4075 = vshrl.u32 %v4074, 7
        %v4076 = vsub.s32 3, %v4075
        %v4077 = vrot.slane %v4060, %v4076
        %v4082 = vadd.f32 %v2852, %v4065
        %v4083 = vadd.f32 %v2854, %v4069
        %v4084 = vadd.f32 %v3078, %v4073
        %v4085 = vadd.f32 %v3080, %v4077
        %v4086 = vadd.f32 %v2856, %v4065
        %v4087 = vadd.f32 %v2858, %v4069
        %v4088 = vadd.f32 %v3082, %v4073
        %v4089 = vadd.f32 %v3084, %v4077
        %v4090 = vadd.f32 %v2862, %v4065
        %v4091 = vadd.f32 %v2864, %v4069
        %v4092 = vadd.f32 %v3088, %v4073
        %v4093 = vadd.f32 %v3090, %v4077
        %v4094 = vadd.f32 %v2866, %v4065
        %v4095 = vadd.f32 %v2868, %v4069
        %v4096 = vadd.f32 %v3092, %v4073
        %v4097 = vadd.f32 %v3094, %v4077
        %v4098 = vadd.f32 %v2872, %v4065
        %v4099 = vadd.f32 %v2874, %v4069
        %v4100 = vadd.f32 %v3098, %v4073
        %v4101 = vadd.f32 %v3100, %v4077
        %v4102 = vadd.f32 %v2876, %v4065
        %v4103 = vadd.f32 %v2878, %v4069
        %v4104 = vadd.f32 %v3102, %v4073
        %v4105 = vadd.f32 %v3104, %v4077
        %v4106 = vadd.f32 %v2882, %v4065
        %v4107 = vadd.f32 %v2884, %v4069
        %v4108 = vadd.f32 %v3108, %v4073
        %v4109 = vadd.f32 %v3110, %v4077
        %v4110 = vadd.f32 %v2886, %v4065
        %v4111 = vadd.f32 %v2888, %v4069
        %v4112 = vadd.f32 %v3112, %v4073
        %v4113 = vadd.f32 %v3114, %v4077
        %v4114 = vadd.f32 %v2892, %v4065
        %v4115 = vadd.f32 %v2894, %v4069
        %v4116 = vadd.f32 %v3118, %v4073
        %v4117 = vadd.f32 %v3120, %v4077
        %v4118 = vadd.f32 %v2896, %v4065
        %v4119 = vadd.f32 %v2898, %v4069
        %v4120 = vadd.f32 %v3122, %v4073
        %v4121 = vadd.f32 %v3124, %v4077
        %v4122 = vadd.f32 %v2902, %v4065
        %v4123 = vadd.f32 %v2904, %v4069
        %v4124 = vadd.f32 %v3128, %v4073
        %v4125 = vadd.f32 %v3130, %v4077
        %v4126 = vadd.f32 %v2906, %v4065
        %v4127 = vadd.f32 %v2908, %v4069
        %v4128 = vadd.f32 %v3132, %v4073
        %v4129 = vadd.f32 %v3134, %v4077
        %v4130 = vadd.f32 %v2912, %v4065
        %v4131 = vadd.f32 %v2914, %v4069
        %v4132 = vadd.f32 %v3138, %v4073
        %v4133 = vadd.f32 %v3140, %v4077
        %v4134 = vadd.f32 %v2916, %v4065
        %v4135 = vadd.f32 %v2918, %v4069
        %v4136 = vadd.f32 %v3142, %v4073
        %v4137 = vadd.f32 %v3144, %v4077
        %v4138 = vadd.f32 %v2922, %v4065
        %v4139 = vadd.f32 %v2924, %v4069
        %v4140 = vadd.f32 %v3148, %v4073
        %v4141 = vadd.f32 %v3150, %v4077
        %v4142 = vadd.f32 %v2926, %v4065
        %v4143 = vadd.f32 %v2928, %v4069
        %v4144 = vadd.f32 %v3152, %v4073
        %v4145 = vadd.f32 %v3154, %v4077
        %v4146 = vpack.c.bf16 %v4086, %v4082
        %v4147 = vpack.c.bf16 %v4087, %v4083
        %v4148 = vpack.c.bf16 %v4088, %v4084
        %v4149 = vpack.c.bf16 %v4089, %v4085
        %v4150 = vpack.c.bf16 %v4094, %v4090
        %v4151 = vpack.c.bf16 %v4095, %v4091
        %v4152 = vpack.c.bf16 %v4096, %v4092
        %v4153 = vpack.c.bf16 %v4097, %v4093
        %v4154 = vpack.c.bf16 %v4102, %v4098
        %v4155 = vpack.c.bf16 %v4103, %v4099
        %v4156 = vpack.c.bf16 %v4104, %v4100
        %v4157 = vpack.c.bf16 %v4105, %v4101
        %v4158 = vpack.c.bf16 %v4110, %v4106
        %v4159 = vpack.c.bf16 %v4111, %v4107
        %v4160 = vpack.c.bf16 %v4112, %v4108
        %v4161 = vpack.c.bf16 %v4113, %v4109
        %v4162 = vpack.c.bf16 %v4118, %v4114
        %v4163 = vpack.c.bf16 %v4119, %v4115
        %v4164 = vpack.c.bf16 %v4120, %v4116
        %v4165 = vpack.c.bf16 %v4121, %v4117
        %v4166 = vpack.c.bf16 %v4126, %v4122
        %v4167 = vpack.c.bf16 %v4127, %v4123
        %v4168 = vpack.c.bf16 %v4128, %v4124
        %v4169 = vpack.c.bf16 %v4129, %v4125
        %v4170 = vpack.c.bf16 %v4134, %v4130
        %v4171 = vpack.c.bf16 %v4135, %v4131
        %v4172 = vpack.c.bf16 %v4136, %v4132
        %v4173 = vpack.c.bf16 %v4137, %v4133
        %v4174 = vpack.c.bf16 %v4142, %v4138
        %v4175 = vpack.c.bf16 %v4143, %v4139
        %v4176 = vpack.c.bf16 %v4144, %v4140
        %v4177 = vpack.c.bf16 %v4145, %v4141
        %s4178 = scalar_lea.vmem [#allocation12], 1
        %v4179 = vld [vmem:[%s4178] ss:$8 sm:$0xf]
        %v4181 = vlaneseq
        %v4182 = vshrl.u32 %v4181, 7
        %v4183 = vsub.s32 0, %v4182
        %v4184 = vrot.slane %v4179, %v4183
        %v4185 = vlaneseq
        %v4186 = vshrl.u32 %v4185, 7
        %v4187 = vsub.s32 1, %v4186
        %v4188 = vrot.slane %v4179, %v4187
        %v4189 = vlaneseq
        %v4190 = vshrl.u32 %v4189, 7
        %v4191 = vsub.s32 2, %v4190
        %v4192 = vrot.slane %v4179, %v4191
        %v4193 = vlaneseq
        %v4194 = vshrl.u32 %v4193, 7
        %v4195 = vsub.s32 3, %v4194
        %v4196 = vrot.slane %v4179, %v4195
        %v4201 = vadd.f32 %v3304, %v4184
        %v4202 = vadd.f32 %v3306, %v4188
        %v4203 = vadd.f32 %v3530, %v4192
        %v4204 = vadd.f32 %v3532, %v4196
        %v4205 = vadd.f32 %v3308, %v4184
        %v4206 = vadd.f32 %v3310, %v4188
        %v4207 = vadd.f32 %v3534, %v4192
        %v4208 = vadd.f32 %v3536, %v4196
        %v4209 = vadd.f32 %v3314, %v4184
        %v4210 = vadd.f32 %v3316, %v4188
        %v4211 = vadd.f32 %v3540, %v4192
        %v4212 = vadd.f32 %v3542, %v4196
        %v4213 = vadd.f32 %v3318, %v4184
        %v4214 = vadd.f32 %v3320, %v4188
        %v4215 = vadd.f32 %v3544, %v4192
        %v4216 = vadd.f32 %v3546, %v4196
        %v4217 = vadd.f32 %v3324, %v4184
        %v4218 = vadd.f32 %v3326, %v4188
        %v4219 = vadd.f32 %v3550, %v4192
        %v4220 = vadd.f32 %v3552, %v4196
        %v4221 = vadd.f32 %v3328, %v4184
        %v4222 = vadd.f32 %v3330, %v4188
        %v4223 = vadd.f32 %v3554, %v4192
        %v4224 = vadd.f32 %v3556, %v4196
        %v4225 = vadd.f32 %v3334, %v4184
        %v4226 = vadd.f32 %v3336, %v4188
        %v4227 = vadd.f32 %v3560, %v4192
        %v4228 = vadd.f32 %v3562, %v4196
        %v4229 = vadd.f32 %v3338, %v4184
        %v4230 = vadd.f32 %v3340, %v4188
        %v4231 = vadd.f32 %v3564, %v4192
        %v4232 = vadd.f32 %v3566, %v4196
        %v4233 = vadd.f32 %v3344, %v4184
        %v4234 = vadd.f32 %v3346, %v4188
        %v4235 = vadd.f32 %v3570, %v4192
        %v4236 = vadd.f32 %v3572, %v4196
        %v4237 = vadd.f32 %v3348, %v4184
        %v4238 = vadd.f32 %v3350, %v4188
        %v4239 = vadd.f32 %v3574, %v4192
        %v4240 = vadd.f32 %v3576, %v4196
        %v4241 = vadd.f32 %v3354, %v4184
        %v4242 = vadd.f32 %v3356, %v4188
        %v4243 = vadd.f32 %v3580, %v4192
        %v4244 = vadd.f32 %v3582, %v4196
        %v4245 = vadd.f32 %v3358, %v4184
        %v4246 = vadd.f32 %v3360, %v4188
        %v4247 = vadd.f32 %v3584, %v4192
        %v4248 = vadd.f32 %v3586, %v4196
        %v4249 = vadd.f32 %v3364, %v4184
        %v4250 = vadd.f32 %v3366, %v4188
        %v4251 = vadd.f32 %v3590, %v4192
        %v4252 = vadd.f32 %v3592, %v4196
        %v4253 = vadd.f32 %v3368, %v4184
        %v4254 = vadd.f32 %v3370, %v4188
        %v4255 = vadd.f32 %v3594, %v4192
        %v4256 = vadd.f32 %v3596, %v4196
        %v4257 = vadd.f32 %v3374, %v4184
        %v4258 = vadd.f32 %v3376, %v4188
        %v4259 = vadd.f32 %v3600, %v4192
        %v4260 = vadd.f32 %v3602, %v4196
        %v4261 = vadd.f32 %v3378, %v4184
        %v4262 = vadd.f32 %v3380, %v4188
        %v4263 = vadd.f32 %v3604, %v4192
        %v4264 = vadd.f32 %v3606, %v4196
        %v4265 = vpack.c.bf16 %v4205, %v4201
        %v4266 = vpack.c.bf16 %v4206, %v4202
        %v4267 = vpack.c.bf16 %v4207, %v4203
        %v4268 = vpack.c.bf16 %v4208, %v4204
        %v4269 = vpack.c.bf16 %v4213, %v4209
        %v4270 = vpack.c.bf16 %v4214, %v4210
        %v4271 = vpack.c.bf16 %v4215, %v4211
        %v4272 = vpack.c.bf16 %v4216, %v4212
        %v4273 = vpack.c.bf16 %v4221, %v4217
        %v4274 = vpack.c.bf16 %v4222, %v4218
        %v4275 = vpack.c.bf16 %v4223, %v4219
        %v4276 = vpack.c.bf16 %v4224, %v4220
        %v4277 = vpack.c.bf16 %v4229, %v4225
        %v4278 = vpack.c.bf16 %v4230, %v4226
        %v4279 = vpack.c.bf16 %v4231, %v4227
        %v4280 = vpack.c.bf16 %v4232, %v4228
        %v4281 = vpack.c.bf16 %v4237, %v4233
        %v4282 = vpack.c.bf16 %v4238, %v4234
        %v4283 = vpack.c.bf16 %v4239, %v4235
        %v4284 = vpack.c.bf16 %v4240, %v4236
        %v4285 = vpack.c.bf16 %v4245, %v4241
        %v4286 = vpack.c.bf16 %v4246, %v4242
        %v4287 = vpack.c.bf16 %v4247, %v4243
        %v4288 = vpack.c.bf16 %v4248, %v4244
        %v4289 = vpack.c.bf16 %v4253, %v4249
        %v4290 = vpack.c.bf16 %v4254, %v4250
        %v4291 = vpack.c.bf16 %v4255, %v4251
        %v4292 = vpack.c.bf16 %v4256, %v4252
        %v4293 = vpack.c.bf16 %v4261, %v4257
        %v4294 = vpack.c.bf16 %v4262, %v4258
        %v4295 = vpack.c.bf16 %v4263, %v4259
        %v4296 = vpack.c.bf16 %v4264, %v4260
        %s4297 = scalar_lea.vmem [#allocation12], 2
        %v4298 = vld [vmem:[%s4297] ss:$8 sm:$0xf]
        %v4300 = vlaneseq
        %v4301 = vshrl.u32 %v4300, 7
        %v4302 = vsub.s32 0, %v4301
        %v4303 = vrot.slane %v4298, %v4302
        %v4304 = vlaneseq
        %v4305 = vshrl.u32 %v4304, 7
        %v4306 = vsub.s32 1, %v4305
        %v4307 = vrot.slane %v4298, %v4306
        %v4308 = vlaneseq
        %v4309 = vshrl.u32 %v4308, 7
        %v4310 = vsub.s32 2, %v4309
        %v4311 = vrot.slane %v4298, %v4310
        %v4312 = vlaneseq
        %v4313 = vshrl.u32 %v4312, 7
        %v4314 = vsub.s32 3, %v4313
        %v4315 = vrot.slane %v4298, %v4314
        %v4320 = vadd.f32 %v3756, %v4303
        %v4321 = vadd.f32 %v3758, %v4307
        %v4322 = vadd.f32 %v3982, %v4311
        %v4323 = vadd.f32 %v3984, %v4315
        %v4324 = vadd.f32 %v3760, %v4303
        %v4325 = vadd.f32 %v3762, %v4307
        %v4326 = vadd.f32 %v3986, %v4311
        %v4327 = vadd.f32 %v3988, %v4315
        %v4328 = vadd.f32 %v3766, %v4303
        %v4329 = vadd.f32 %v3768, %v4307
        %v4330 = vadd.f32 %v3992, %v4311
        %v4331 = vadd.f32 %v3994, %v4315
        %v4332 = vadd.f32 %v3770, %v4303
        %v4333 = vadd.f32 %v3772, %v4307
        %v4334 = vadd.f32 %v3996, %v4311
        %v4335 = vadd.f32 %v3998, %v4315
        %v4336 = vadd.f32 %v3776, %v4303
        %v4337 = vadd.f32 %v3778, %v4307
        %v4338 = vadd.f32 %v4002, %v4311
        %v4339 = vadd.f32 %v4004, %v4315
        %v4340 = vadd.f32 %v3780, %v4303
        %v4341 = vadd.f32 %v3782, %v4307
        %v4342 = vadd.f32 %v4006, %v4311
        %v4343 = vadd.f32 %v4008, %v4315
        %v4344 = vadd.f32 %v3786, %v4303
        %v4345 = vadd.f32 %v3788, %v4307
        %v4346 = vadd.f32 %v4012, %v4311
        %v4347 = vadd.f32 %v4014, %v4315
        %v4348 = vadd.f32 %v3790, %v4303
        %v4349 = vadd.f32 %v3792, %v4307
        %v4350 = vadd.f32 %v4016, %v4311
        %v4351 = vadd.f32 %v4018, %v4315
        %v4352 = vadd.f32 %v3796, %v4303
        %v4353 = vadd.f32 %v3798, %v4307
        %v4354 = vadd.f32 %v4022, %v4311
        %v4355 = vadd.f32 %v4024, %v4315
        %v4356 = vadd.f32 %v3800, %v4303
        %v4357 = vadd.f32 %v3802, %v4307
        %v4358 = vadd.f32 %v4026, %v4311
        %v4359 = vadd.f32 %v4028, %v4315
        %v4360 = vadd.f32 %v3806, %v4303
        %v4361 = vadd.f32 %v3808, %v4307
        %v4362 = vadd.f32 %v4032, %v4311
        %v4363 = vadd.f32 %v4034, %v4315
        %v4364 = vadd.f32 %v3810, %v4303
        %v4365 = vadd.f32 %v3812, %v4307
        %v4366 = vadd.f32 %v4036, %v4311
        %v4367 = vadd.f32 %v4038, %v4315
        %v4368 = vadd.f32 %v3816, %v4303
        %v4369 = vadd.f32 %v3818, %v4307
        %v4370 = vadd.f32 %v4042, %v4311
        %v4371 = vadd.f32 %v4044, %v4315
        %v4372 = vadd.f32 %v3820, %v4303
        %v4373 = vadd.f32 %v3822, %v4307
        %v4374 = vadd.f32 %v4046, %v4311
        %v4375 = vadd.f32 %v4048, %v4315
        %v4376 = vadd.f32 %v3826, %v4303
        %v4377 = vadd.f32 %v3828, %v4307
        %v4378 = vadd.f32 %v4052, %v4311
        %v4379 = vadd.f32 %v4054, %v4315
        %v4380 = vadd.f32 %v3830, %v4303
        %v4381 = vadd.f32 %v3832, %v4307
        %v4382 = vadd.f32 %v4056, %v4311
        %v4383 = vadd.f32 %v4058, %v4315
        %v4384 = vpack.c.bf16 %v4324, %v4320
        %v4385 = vpack.c.bf16 %v4325, %v4321
        %v4386 = vpack.c.bf16 %v4326, %v4322
        %v4387 = vpack.c.bf16 %v4327, %v4323
        %v4388 = vpack.c.bf16 %v4332, %v4328
        %v4389 = vpack.c.bf16 %v4333, %v4329
        %v4390 = vpack.c.bf16 %v4334, %v4330
        %v4391 = vpack.c.bf16 %v4335, %v4331
        %v4392 = vpack.c.bf16 %v4340, %v4336
        %v4393 = vpack.c.bf16 %v4341, %v4337
        %v4394 = vpack.c.bf16 %v4342, %v4338
        %v4395 = vpack.c.bf16 %v4343, %v4339
        %v4396 = vpack.c.bf16 %v4348, %v4344
        %v4397 = vpack.c.bf16 %v4349, %v4345
        %v4398 = vpack.c.bf16 %v4350, %v4346
        %v4399 = vpack.c.bf16 %v4351, %v4347
        %v4400 = vpack.c.bf16 %v4356, %v4352
        %v4401 = vpack.c.bf16 %v4357, %v4353
        %v4402 = vpack.c.bf16 %v4358, %v4354
        %v4403 = vpack.c.bf16 %v4359, %v4355
        %v4404 = vpack.c.bf16 %v4364, %v4360
        %v4405 = vpack.c.bf16 %v4365, %v4361
        %v4406 = vpack.c.bf16 %v4366, %v4362
        %v4407 = vpack.c.bf16 %v4367, %v4363
        %v4408 = vpack.c.bf16 %v4372, %v4368
        %v4409 = vpack.c.bf16 %v4373, %v4369
        %v4410 = vpack.c.bf16 %v4374, %v4370
        %v4411 = vpack.c.bf16 %v4375, %v4371
        %v4412 = vpack.c.bf16 %v4380, %v4376
        %v4413 = vpack.c.bf16 %v4381, %v4377
        %v4414 = vpack.c.bf16 %v4382, %v4378
        %v4415 = vpack.c.bf16 %v4383, %v4379
        %4416 = vmatprep.subr.bf16.mxu0 %v4294
        %4417 = vmatpush1.bf16.xpose.msra.mxu0 %v4293
        %4418 = vmatprep.subr.bf16.mxu0 %v4290
        %4419 = vmatpush1.bf16.xpose.msra.mxu0 %v4289
        %4420 = vmatprep.subr.bf16.mxu0 %v4286
        %4421 = vmatpush1.bf16.xpose.msra.mxu0 %v4285
        %4422 = vmatprep.subr.bf16.mxu0 %v4282
        %4423 = vmatpush1.bf16.xpose.msra.mxu0 %v4281
        %4424 = vmatprep.subr.bf16.mxu0 %v4278
        %4425 = vmatpush1.bf16.xpose.msra.mxu0 %v4277
        %4426 = vmatprep.subr.bf16.mxu0 %v4274
        %4427 = vmatpush1.bf16.xpose.msra.mxu0 %v4273
        %4428 = vmatprep.subr.bf16.mxu0 %v4270
        %4429 = vmatpush1.bf16.xpose.msra.mxu0 %v4269
        %4430 = vmatprep.subr.bf16.mxu0 %v4266
        %4431 = vmatpush1.bf16.xpose.msra.mxu0 %v4265
        %4432 = vmatprep.subr.bf16.mxu0 0
        %4433 = vmatpush2.bf16.xpose.msra.mxu0 0
        %4434 = vmatprep.subr.bf16.mxu0 0
        %4435 = vmatpush2.bf16.xpose.msra.mxu0 0
        %4436 = vmatprep.subr.bf16.mxu0 0
        %4437 = vmatpush2.bf16.xpose.msra.mxu0 0
        %4438 = vmatprep.subr.bf16.mxu0 0
        %4439 = vmatpush2.bf16.xpose.msra.mxu0 0
        %4440 = vmatprep.subr.bf16.mxu0 0
        %4441 = vmatpush2.bf16.xpose.msra.mxu0 0
        %4442 = vmatprep.subr.bf16.mxu0 0
        %4443 = vmatpush2.bf16.xpose.msra.mxu0 0
        %4444 = vmatprep.subr.bf16.mxu0 0
        %4445 = vmatpush2.bf16.xpose.msra.mxu0 0
        %4446 = vmatprep.subr.bf16.mxu0 0
        %4447 = vmatpush2.bf16.xpose.msra.mxu0 0
        %4448 = vmatprep.mubr.bf16.mxu0 %v4147
        %4449 = vmatmul.mubr.bf16.gmra.mxu0 %v4146
        %v4450 = vpop.f32.mrf.mxu0
        %v4451 = vadd.f32 0.0, %v4450
        %v4452 = vpop.f32.mrf.mxu0
        %v4453 = vpop.f32.mrf.mxu0
        %v4454 = vadd.f32 0.0, %v4453
        %v4455 = vpop.f32.mrf.mxu0
        %4456 = vmatprep.mubr.bf16.mxu0 %v4151
        %4457 = vmatmul.mubr.bf16.gmra.mxu0 %v4150
        %v4458 = vpop.f32.mrf.mxu0
        %v4459 = vadd.f32 0.0, %v4458
        %v4460 = vpop.f32.mrf.mxu0
        %v4461 = vpop.f32.mrf.mxu0
        %v4462 = vadd.f32 0.0, %v4461
        %v4463 = vpop.f32.mrf.mxu0
        %4464 = vmatprep.mubr.bf16.mxu0 %v4155
        %4465 = vmatmul.mubr.bf16.gmra.mxu0 %v4154
        %v4466 = vpop.f32.mrf.mxu0
        %v4467 = vadd.f32 0.0, %v4466
        %v4468 = vpop.f32.mrf.mxu0
        %v4469 = vpop.f32.mrf.mxu0
        %v4470 = vadd.f32 0.0, %v4469
        %v4471 = vpop.f32.mrf.mxu0
        %4472 = vmatprep.mubr.bf16.mxu0 %v4159
        %4473 = vmatmul.mubr.bf16.gmra.mxu0 %v4158
        %v4474 = vpop.f32.mrf.mxu0
        %v4475 = vadd.f32 0.0, %v4474
        %v4476 = vpop.f32.mrf.mxu0
        %v4477 = vpop.f32.mrf.mxu0
        %v4478 = vadd.f32 0.0, %v4477
        %v4479 = vpop.f32.mrf.mxu0
        %4480 = vmatprep.mubr.bf16.mxu0 %v4163
        %4481 = vmatmul.mubr.bf16.gmra.mxu0 %v4162
        %v4482 = vpop.f32.mrf.mxu0
        %v4483 = vadd.f32 0.0, %v4482
        %v4484 = vpop.f32.mrf.mxu0
        %v4485 = vpop.f32.mrf.mxu0
        %v4486 = vadd.f32 0.0, %v4485
        %v4487 = vpop.f32.mrf.mxu0
        %4488 = vmatprep.mubr.bf16.mxu0 %v4167
        %4489 = vmatmul.mubr.bf16.gmra.mxu0 %v4166
        %v4490 = vpop.f32.mrf.mxu0
        %v4491 = vadd.f32 0.0, %v4490
        %v4492 = vpop.f32.mrf.mxu0
        %v4493 = vpop.f32.mrf.mxu0
        %v4494 = vadd.f32 0.0, %v4493
        %v4495 = vpop.f32.mrf.mxu0
        %4496 = vmatprep.mubr.bf16.mxu0 %v4171
        %4497 = vmatmul.mubr.bf16.gmra.mxu0 %v4170
        %v4498 = vpop.f32.mrf.mxu0
        %v4499 = vadd.f32 0.0, %v4498
        %v4500 = vpop.f32.mrf.mxu0
        %v4501 = vpop.f32.mrf.mxu0
        %v4502 = vadd.f32 0.0, %v4501
        %v4503 = vpop.f32.mrf.mxu0
        %4504 = vmatprep.mubr.bf16.mxu0 %v4175
        %4505 = vmatmul.mubr.bf16.gmra.mxu0 %v4174
        %v4506 = vpop.f32.mrf.mxu0
        %v4507 = vadd.f32 0.0, %v4506
        %v4508 = vpop.f32.mrf.mxu0
        %v4509 = vpop.f32.mrf.mxu0
        %v4510 = vadd.f32 0.0, %v4509
        %v4511 = vpop.f32.mrf.mxu0
        %4512 = vdwg.mxu0
        %4513 = vmatprep.subr.bf16.mxu0 %v4296
        %4514 = vmatpush1.bf16.xpose.msra.mxu0 %v4295
        %4515 = vmatprep.subr.bf16.mxu0 %v4292
        %4516 = vmatpush1.bf16.xpose.msra.mxu0 %v4291
        %4517 = vmatprep.subr.bf16.mxu0 %v4288
        %4518 = vmatpush1.bf16.xpose.msra.mxu0 %v4287
        %4519 = vmatprep.subr.bf16.mxu0 %v4284
        %4520 = vmatpush1.bf16.xpose.msra.mxu0 %v4283
        %4521 = vmatprep.subr.bf16.mxu0 %v4280
        %4522 = vmatpush1.bf16.xpose.msra.mxu0 %v4279
        %4523 = vmatprep.subr.bf16.mxu0 %v4276
        %4524 = vmatpush1.bf16.xpose.msra.mxu0 %v4275
        %4525 = vmatprep.subr.bf16.mxu0 %v4272
        %4526 = vmatpush1.bf16.xpose.msra.mxu0 %v4271
        %4527 = vmatprep.subr.bf16.mxu0 %v4268
        %4528 = vmatpush1.bf16.xpose.msra.mxu0 %v4267
        %4529 = vmatprep.subr.bf16.mxu0 0
        %4530 = vmatpush2.bf16.xpose.msra.mxu0 0
        %4531 = vmatprep.subr.bf16.mxu0 0
        %4532 = vmatpush2.bf16.xpose.msra.mxu0 0
        %4533 = vmatprep.subr.bf16.mxu0 0
        %4534 = vmatpush2.bf16.xpose.msra.mxu0 0
        %4535 = vmatprep.subr.bf16.mxu0 0
        %4536 = vmatpush2.bf16.xpose.msra.mxu0 0
        %4537 = vmatprep.subr.bf16.mxu0 0
        %4538 = vmatpush2.bf16.xpose.msra.mxu0 0
        %4539 = vmatprep.subr.bf16.mxu0 0
        %4540 = vmatpush2.bf16.xpose.msra.mxu0 0
        %4541 = vmatprep.subr.bf16.mxu0 0
        %4542 = vmatpush2.bf16.xpose.msra.mxu0 0
        %4543 = vmatprep.subr.bf16.mxu0 0
        %4544 = vmatpush2.bf16.xpose.msra.mxu0 0
        %4545 = vmatprep.mubr.bf16.mxu0 %v4149
        %4546 = vmatmul.mubr.bf16.gmra.mxu0 %v4148
        %v4547 = vpop.f32.mrf.mxu0
        %v4548 = vadd.f32 %v4451, %v4547
        %v4549 = vpop.f32.mrf.mxu0
        %v4550 = vpop.f32.mrf.mxu0
        %v4551 = vadd.f32 %v4454, %v4550
        %v4552 = vpop.f32.mrf.mxu0
        %4553 = vmatprep.mubr.bf16.mxu0 %v4153
        %4554 = vmatmul.mubr.bf16.gmra.mxu0 %v4152
        %v4555 = vpop.f32.mrf.mxu0
        %v4556 = vadd.f32 %v4459, %v4555
        %v4557 = vpop.f32.mrf.mxu0
        %v4558 = vpop.f32.mrf.mxu0
        %v4559 = vadd.f32 %v4462, %v4558
        %v4560 = vpop.f32.mrf.mxu0
        %4561 = vmatprep.mubr.bf16.mxu0 %v4157
        %4562 = vmatmul.mubr.bf16.gmra.mxu0 %v4156
        %v4563 = vpop.f32.mrf.mxu0
        %v4564 = vadd.f32 %v4467, %v4563
        %v4565 = vpop.f32.mrf.mxu0
        %v4566 = vpop.f32.mrf.mxu0
        %v4567 = vadd.f32 %v4470, %v4566
        %v4568 = vpop.f32.mrf.mxu0
        %4569 = vmatprep.mubr.bf16.mxu0 %v4161
        %4570 = vmatmul.mubr.bf16.gmra.mxu0 %v4160
        %v4571 = vpop.f32.mrf.mxu0
        %v4572 = vadd.f32 %v4475, %v4571
        %v4573 = vpop.f32.mrf.mxu0
        %v4574 = vpop.f32.mrf.mxu0
        %v4575 = vadd.f32 %v4478, %v4574
        %v4576 = vpop.f32.mrf.mxu0
        %4577 = vmatprep.mubr.bf16.mxu0 %v4165
        %4578 = vmatmul.mubr.bf16.gmra.mxu0 %v4164
        %v4579 = vpop.f32.mrf.mxu0
        %v4580 = vadd.f32 %v4483, %v4579
        %v4581 = vpop.f32.mrf.mxu0
        %v4582 = vpop.f32.mrf.mxu0
        %v4583 = vadd.f32 %v4486, %v4582
        %v4584 = vpop.f32.mrf.mxu0
        %4585 = vmatprep.mubr.bf16.mxu0 %v4169
        %4586 = vmatmul.mubr.bf16.gmra.mxu0 %v4168
        %v4587 = vpop.f32.mrf.mxu0
        %v4588 = vadd.f32 %v4491, %v4587
        %v4589 = vpop.f32.mrf.mxu0
        %v4590 = vpop.f32.mrf.mxu0
        %v4591 = vadd.f32 %v4494, %v4590
        %v4592 = vpop.f32.mrf.mxu0
        %4593 = vmatprep.mubr.bf16.mxu0 %v4173
        %4594 = vmatmul.mubr.bf16.gmra.mxu0 %v4172
        %v4595 = vpop.f32.mrf.mxu0
        %v4596 = vadd.f32 %v4499, %v4595
        %v4597 = vpop.f32.mrf.mxu0
        %v4598 = vpop.f32.mrf.mxu0
        %v4599 = vadd.f32 %v4502, %v4598
        %v4600 = vpop.f32.mrf.mxu0
        %4601 = vmatprep.mubr.bf16.mxu0 %v4177
        %4602 = vmatmul.mubr.bf16.gmra.mxu0 %v4176
        %v4603 = vpop.f32.mrf.mxu0
        %v4604 = vadd.f32 %v4507, %v4603
        %v4605 = vpop.f32.mrf.mxu0
        %v4606 = vpop.f32.mrf.mxu0
        %v4607 = vadd.f32 %v4510, %v4606
        %v4608 = vpop.f32.mrf.mxu0
        %4609 = vdwg.mxu0
        %4610 = vmax.xlane.f32.xlu0 %v4548
        %v4611 = vpop.xlane.xlu0 %4610
        %4612 = vmax.xlane.f32.xlu0 %v4551
        %v4613 = vpop.xlane.xlu0 %4612
        %4614 = vmax.xlane.f32.xlu0 %v4556
        %v4615 = vpop.xlane.xlu0 %4614
        %4616 = vmax.xlane.f32.xlu0 %v4559
        %v4617 = vpop.xlane.xlu0 %4616
        %4618 = vmax.xlane.f32.xlu0 %v4564
        %v4619 = vpop.xlane.xlu0 %4618
        %4620 = vmax.xlane.f32.xlu0 %v4567
        %v4621 = vpop.xlane.xlu0 %4620
        %4622 = vmax.xlane.f32.xlu0 %v4572
        %v4623 = vpop.xlane.xlu0 %4622
        %4624 = vmax.xlane.f32.xlu0 %v4575
        %v4625 = vpop.xlane.xlu0 %4624
        %4626 = vmax.xlane.f32.xlu0 %v4580
        %v4627 = vpop.xlane.xlu0 %4626
        %4628 = vmax.xlane.f32.xlu0 %v4583
        %v4629 = vpop.xlane.xlu0 %4628
        %4630 = vmax.xlane.f32.xlu0 %v4588
        %v4631 = vpop.xlane.xlu0 %4630
        %4632 = vmax.xlane.f32.xlu0 %v4591
        %v4633 = vpop.xlane.xlu0 %4632
        %4634 = vmax.xlane.f32.xlu0 %v4596
        %v4635 = vpop.xlane.xlu0 %4634
        %4636 = vmax.xlane.f32.xlu0 %v4599
        %v4637 = vpop.xlane.xlu0 %4636
        %4638 = vmax.xlane.f32.xlu0 %v4604
        %v4639 = vpop.xlane.xlu0 %4638
        %4640 = vmax.xlane.f32.xlu0 %v4607
        %v4641 = vpop.xlane.xlu0 %4640
        %v4642 = vsub.f32 %v4548, %v4611
        %v4643 = vsub.f32 %v4551, %v4613
        %v4644 = vsub.f32 %v4556, %v4615
        %v4645 = vsub.f32 %v4559, %v4617
        %v4646 = vsub.f32 %v4564, %v4619
        %v4647 = vsub.f32 %v4567, %v4621
        %v4648 = vsub.f32 %v4572, %v4623
        %v4649 = vsub.f32 %v4575, %v4625
        %v4650 = vsub.f32 %v4580, %v4627
        %v4651 = vsub.f32 %v4583, %v4629
        %v4652 = vsub.f32 %v4588, %v4631
        %v4653 = vsub.f32 %v4591, %v4633
        %v4654 = vsub.f32 %v4596, %v4635
        %v4655 = vsub.f32 %v4599, %v4637
        %v4656 = vsub.f32 %v4604, %v4639
        %v4657 = vsub.f32 %v4607, %v4641
        %v4658 = vmul.f32 %v4642, 1.442695
        %v4659 = vpow.pop %v4658
        %v4660 = vmul.f32 %v4643, 1.442695
        %v4661 = vpow.pop %v4660
        %v4662 = vmul.f32 %v4644, 1.442695
        %v4663 = vpow.pop %v4662
        %v4664 = vmul.f32 %v4645, 1.442695
        %v4665 = vpow.pop %v4664
        %v4666 = vmul.f32 %v4646, 1.442695
        %v4667 = vpow.pop %v4666
        %v4668 = vmul.f32 %v4647, 1.442695
        %v4669 = vpow.pop %v4668
        %v4670 = vmul.f32 %v4648, 1.442695
        %v4671 = vpow.pop %v4670
        %v4672 = vmul.f32 %v4649, 1.442695
        %v4673 = vpow.pop %v4672
        %v4674 = vmul.f32 %v4650, 1.442695
        %v4675 = vpow.pop %v4674
        %v4676 = vmul.f32 %v4651, 1.442695
        %v4677 = vpow.pop %v4676
        %v4678 = vmul.f32 %v4652, 1.442695
        %v4679 = vpow.pop %v4678
        %v4680 = vmul.f32 %v4653, 1.442695
        %v4681 = vpow.pop %v4680
        %v4682 = vmul.f32 %v4654, 1.442695
        %v4683 = vpow.pop %v4682
        %v4684 = vmul.f32 %v4655, 1.442695
        %v4685 = vpow.pop %v4684
        %v4686 = vmul.f32 %v4656, 1.442695
        %v4687 = vpow.pop %v4686
        %v4688 = vmul.f32 %v4657, 1.442695
        %v4689 = vpow.pop %v4688
        %4690 = vadd.xlane.f32.xlu0 %v4659
        %v4691 = vpop.xlane.xlu0 %4690
        %4692 = vadd.xlane.f32.xlu0 %v4661
        %v4693 = vpop.xlane.xlu0 %4692
        %4694 = vadd.xlane.f32.xlu0 %v4663
        %v4695 = vpop.xlane.xlu0 %4694
        %4696 = vadd.xlane.f32.xlu0 %v4665
        %v4697 = vpop.xlane.xlu0 %4696
        %4698 = vadd.xlane.f32.xlu0 %v4667
        %v4699 = vpop.xlane.xlu0 %4698
        %4700 = vadd.xlane.f32.xlu0 %v4669
        %v4701 = vpop.xlane.xlu0 %4700
        %4702 = vadd.xlane.f32.xlu0 %v4671
        %v4703 = vpop.xlane.xlu0 %4702
        %4704 = vadd.xlane.f32.xlu0 %v4673
        %v4705 = vpop.xlane.xlu0 %4704
        %4706 = vadd.xlane.f32.xlu0 %v4675
        %v4707 = vpop.xlane.xlu0 %4706
        %4708 = vadd.xlane.f32.xlu0 %v4677
        %v4709 = vpop.xlane.xlu0 %4708
        %4710 = vadd.xlane.f32.xlu0 %v4679
        %v4711 = vpop.xlane.xlu0 %4710
        %4712 = vadd.xlane.f32.xlu0 %v4681
        %v4713 = vpop.xlane.xlu0 %4712
        %4714 = vadd.xlane.f32.xlu0 %v4683
        %v4715 = vpop.xlane.xlu0 %4714
        %4716 = vadd.xlane.f32.xlu0 %v4685
        %v4717 = vpop.xlane.xlu0 %4716
        %4718 = vadd.xlane.f32.xlu0 %v4687
        %v4719 = vpop.xlane.xlu0 %4718
        %4720 = vadd.xlane.f32.xlu0 %v4689
        %v4721 = vpop.xlane.xlu0 %4720
        %v4722 = vrcp.pop %v4691
        %v4723 = vrcp.pop %v4693
        %v4724 = vrcp.pop %v4695
        %v4725 = vrcp.pop %v4697
        %v4726 = vrcp.pop %v4699
        %v4727 = vrcp.pop %v4701
        %v4728 = vrcp.pop %v4703
        %v4729 = vrcp.pop %v4705
        %v4730 = vrcp.pop %v4707
        %v4731 = vrcp.pop %v4709
        %v4732 = vrcp.pop %v4711
        %v4733 = vrcp.pop %v4713
        %v4734 = vrcp.pop %v4715
        %v4735 = vrcp.pop %v4717
        %v4736 = vrcp.pop %v4719
        %v4737 = vrcp.pop %v4721
        %v4738 = vmul.f32 %v4659, %v4722
        %v4739 = vmul.f32 %v4661, %v4723
        %v4740 = vmul.f32 %v4663, %v4724
        %v4741 = vmul.f32 %v4665, %v4725
        %v4742 = vmul.f32 %v4667, %v4726
        %v4743 = vmul.f32 %v4669, %v4727
        %v4744 = vmul.f32 %v4671, %v4728
        %v4745 = vmul.f32 %v4673, %v4729
        %v4746 = vmul.f32 %v4675, %v4730
        %v4747 = vmul.f32 %v4677, %v4731
        %v4748 = vmul.f32 %v4679, %v4732
        %v4749 = vmul.f32 %v4681, %v4733
        %v4750 = vmul.f32 %v4683, %v4734
        %v4751 = vmul.f32 %v4685, %v4735
        %v4752 = vmul.f32 %v4687, %v4736
        %v4753 = vmul.f32 %v4689, %v4737
        %v4754 = vpack.c.bf16 %v4739, %v4738
        %v4755 = vpack.c.bf16 %v4741, %v4740
        %v4756 = vpack.c.bf16 %v4743, %v4742
        %v4757 = vpack.c.bf16 %v4745, %v4744
        %v4758 = vpack.c.bf16 %v4747, %v4746
        %v4759 = vpack.c.bf16 %v4749, %v4748
        %v4760 = vpack.c.bf16 %v4751, %v4750
        %v4761 = vpack.c.bf16 %v4753, %v4752
        %4762 = vmatprep.subr.bf16.mxu0 %v4413
        %4763 = vmatpush1.bf16.msra.mxu0 %v4412
        %4764 = vmatprep.subr.bf16.mxu0 %v4409
        %4765 = vmatpush1.bf16.msra.mxu0 %v4408
        %4766 = vmatprep.subr.bf16.mxu0 %v4405
        %4767 = vmatpush1.bf16.msra.mxu0 %v4404
        %4768 = vmatprep.subr.bf16.mxu0 %v4401
        %4769 = vmatpush1.bf16.msra.mxu0 %v4400
        %4770 = vmatprep.subr.bf16.mxu0 %v4397
        %4771 = vmatpush1.bf16.msra.mxu0 %v4396
        %4772 = vmatprep.subr.bf16.mxu0 %v4393
        %4773 = vmatpush1.bf16.msra.mxu0 %v4392
        %4774 = vmatprep.subr.bf16.mxu0 %v4389
        %4775 = vmatpush1.bf16.msra.mxu0 %v4388
        %4776 = vmatprep.subr.bf16.mxu0 %v4385
        %4777 = vmatpush1.bf16.msra.mxu0 %v4384
        %4778 = vmatprep.subr.bf16.mxu0 0
        %4779 = vmatpush2.bf16.msra.mxu0 0
        %4780 = vmatprep.subr.bf16.mxu0 0
        %4781 = vmatpush2.bf16.msra.mxu0 0
        %4782 = vmatprep.subr.bf16.mxu0 0
        %4783 = vmatpush2.bf16.msra.mxu0 0
        %4784 = vmatprep.subr.bf16.mxu0 0
        %4785 = vmatpush2.bf16.msra.mxu0 0
        %4786 = vmatprep.subr.bf16.mxu0 0
        %4787 = vmatpush2.bf16.msra.mxu0 0
        %4788 = vmatprep.subr.bf16.mxu0 0
        %4789 = vmatpush2.bf16.msra.mxu0 0
        %4790 = vmatprep.subr.bf16.mxu0 0
        %4791 = vmatpush2.bf16.msra.mxu0 0
        %4792 = vmatprep.subr.bf16.mxu0 0
        %4793 = vmatpush2.bf16.msra.mxu0 0
        %4794 = vmatprep.mubr.bf16.mxu0 0
        %4795 = vmatmul.mubr.bf16.gmra.mxu0 %v4754
        %v4796 = vpop.f32.mrf.mxu0
        %v4797 = vadd.f32 0.0, %v4796
        %v4798 = vpop.f32.mrf.mxu0
        %v4799 = vadd.f32 0.0, %v4798
        %v4800 = vpop.f32.mrf.mxu0
        %v4801 = vadd.f32 0.0, %v4800
        %v4802 = vpop.f32.mrf.mxu0
        %v4803 = vadd.f32 0.0, %v4802
        %4804 = vmatprep.mubr.bf16.mxu0 0
        %4805 = vmatmul.mubr.bf16.gmra.mxu0 %v4755
        %v4806 = vpop.f32.mrf.mxu0
        %v4807 = vadd.f32 0.0, %v4806
        %v4808 = vpop.f32.mrf.mxu0
        %v4809 = vadd.f32 0.0, %v4808
        %v4810 = vpop.f32.mrf.mxu0
        %v4811 = vadd.f32 0.0, %v4810
        %v4812 = vpop.f32.mrf.mxu0
        %v4813 = vadd.f32 0.0, %v4812
        %4814 = vmatprep.mubr.bf16.mxu0 0
        %4815 = vmatmul.mubr.bf16.gmra.mxu0 %v4756
        %v4816 = vpop.f32.mrf.mxu0
        %v4817 = vadd.f32 0.0, %v4816
        %v4818 = vpop.f32.mrf.mxu0
        %v4819 = vadd.f32 0.0, %v4818
        %v4820 = vpop.f32.mrf.mxu0
        %v4821 = vadd.f32 0.0, %v4820
        %v4822 = vpop.f32.mrf.mxu0
        %v4823 = vadd.f32 0.0, %v4822
        %4824 = vmatprep.mubr.bf16.mxu0 0
        %4825 = vmatmul.mubr.bf16.gmra.mxu0 %v4757
        %v4826 = vpop.f32.mrf.mxu0
        %v4827 = vadd.f32 0.0, %v4826
        %v4828 = vpop.f32.mrf.mxu0
        %v4829 = vadd.f32 0.0, %v4828
        %v4830 = vpop.f32.mrf.mxu0
        %v4831 = vadd.f32 0.0, %v4830
        %v4832 = vpop.f32.mrf.mxu0
        %v4833 = vadd.f32 0.0, %v4832
        %4834 = vmatprep.mubr.bf16.mxu0 0
        %4835 = vmatmul.mubr.bf16.gmra.mxu0 %v4758
        %v4836 = vpop.f32.mrf.mxu0
        %v4837 = vadd.f32 0.0, %v4836
        %v4838 = vpop.f32.mrf.mxu0
        %v4839 = vadd.f32 0.0, %v4838
        %v4840 = vpop.f32.mrf.mxu0
        %v4841 = vadd.f32 0.0, %v4840
        %v4842 = vpop.f32.mrf.mxu0
        %v4843 = vadd.f32 0.0, %v4842
        %4844 = vmatprep.mubr.bf16.mxu0 0
        %4845 = vmatmul.mubr.bf16.gmra.mxu0 %v4759
        %v4846 = vpop.f32.mrf.mxu0
        %v4847 = vadd.f32 0.0, %v4846
        %v4848 = vpop.f32.mrf.mxu0
        %v4849 = vadd.f32 0.0, %v4848
        %v4850 = vpop.f32.mrf.mxu0
        %v4851 = vadd.f32 0.0, %v4850
        %v4852 = vpop.f32.mrf.mxu0
        %v4853 = vadd.f32 0.0, %v4852
        %4854 = vmatprep.mubr.bf16.mxu0 0
        %4855 = vmatmul.mubr.bf16.gmra.mxu0 %v4760
        %v4856 = vpop.f32.mrf.mxu0
        %v4857 = vadd.f32 0.0, %v4856
        %v4858 = vpop.f32.mrf.mxu0
        %v4859 = vadd.f32 0.0, %v4858
        %v4860 = vpop.f32.mrf.mxu0
        %v4861 = vadd.f32 0.0, %v4860
        %v4862 = vpop.f32.mrf.mxu0
        %v4863 = vadd.f32 0.0, %v4862
        %4864 = vmatprep.mubr.bf16.mxu0 0
        %4865 = vmatmul.mubr.bf16.gmra.mxu0 %v4761
        %v4866 = vpop.f32.mrf.mxu0
        %v4867 = vadd.f32 0.0, %v4866
        %v4868 = vpop.f32.mrf.mxu0
        %v4869 = vadd.f32 0.0, %v4868
        %v4870 = vpop.f32.mrf.mxu0
        %v4871 = vadd.f32 0.0, %v4870
        %v4872 = vpop.f32.mrf.mxu0
        %v4873 = vadd.f32 0.0, %v4872
        %4874 = vdwg.mxu0
        %4875 = vmatprep.subr.bf16.mxu0 %v4415
        %4876 = vmatpush1.bf16.msra.mxu0 %v4414
        %4877 = vmatprep.subr.bf16.mxu0 %v4411
        %4878 = vmatpush1.bf16.msra.mxu0 %v4410
        %4879 = vmatprep.subr.bf16.mxu0 %v4407
        %4880 = vmatpush1.bf16.msra.mxu0 %v4406
        %4881 = vmatprep.subr.bf16.mxu0 %v4403
        %4882 = vmatpush1.bf16.msra.mxu0 %v4402
        %4883 = vmatprep.subr.bf16.mxu0 %v4399
        %4884 = vmatpush1.bf16.msra.mxu0 %v4398
        %4885 = vmatprep.subr.bf16.mxu0 %v4395
        %4886 = vmatpush1.bf16.msra.mxu0 %v4394
        %4887 = vmatprep.subr.bf16.mxu0 %v4391
        %4888 = vmatpush1.bf16.msra.mxu0 %v4390
        %4889 = vmatprep.subr.bf16.mxu0 %v4387
        %4890 = vmatpush1.bf16.msra.mxu0 %v4386
        %4891 = vmatprep.subr.bf16.mxu0 0
        %4892 = vmatpush2.bf16.msra.mxu0 0
        %4893 = vmatprep.subr.bf16.mxu0 0
        %4894 = vmatpush2.bf16.msra.mxu0 0
        %4895 = vmatprep.subr.bf16.mxu0 0
        %4896 = vmatpush2.bf16.msra.mxu0 0
        %4897 = vmatprep.subr.bf16.mxu0 0
        %4898 = vmatpush2.bf16.msra.mxu0 0
        %4899 = vmatprep.subr.bf16.mxu0 0
        %4900 = vmatpush2.bf16.msra.mxu0 0
        %4901 = vmatprep.subr.bf16.mxu0 0
        %4902 = vmatpush2.bf16.msra.mxu0 0
        %4903 = vmatprep.subr.bf16.mxu0 0
        %4904 = vmatpush2.bf16.msra.mxu0 0
        %4905 = vmatprep.subr.bf16.mxu0 0
        %4906 = vmatpush2.bf16.msra.mxu0 0
        %4907 = vmatprep.mubr.bf16.mxu0 0
        %4908 = vmatmul.mubr.bf16.gmra.mxu0 %v4754
        %v4909 = vpop.f32.mrf.mxu0
        %v4910 = vadd.f32 0.0, %v4909
        %v4911 = vpop.f32.mrf.mxu0
        %v4912 = vadd.f32 0.0, %v4911
        %v4913 = vpop.f32.mrf.mxu0
        %v4914 = vadd.f32 0.0, %v4913
        %v4915 = vpop.f32.mrf.mxu0
        %v4916 = vadd.f32 0.0, %v4915
        %4917 = vmatprep.mubr.bf16.mxu0 0
        %4918 = vmatmul.mubr.bf16.gmra.mxu0 %v4755
        %v4919 = vpop.f32.mrf.mxu0
        %v4920 = vadd.f32 0.0, %v4919
        %v4921 = vpop.f32.mrf.mxu0
        %v4922 = vadd.f32 0.0, %v4921
        %v4923 = vpop.f32.mrf.mxu0
        %v4924 = vadd.f32 0.0, %v4923
        %v4925 = vpop.f32.mrf.mxu0
        %v4926 = vadd.f32 0.0, %v4925
        %4927 = vmatprep.mubr.bf16.mxu0 0
        %4928 = vmatmul.mubr.bf16.gmra.mxu0 %v4756
        %v4929 = vpop.f32.mrf.mxu0
        %v4930 = vadd.f32 0.0, %v4929
        %v4931 = vpop.f32.mrf.mxu0
        %v4932 = vadd.f32 0.0, %v4931
        %v4933 = vpop.f32.mrf.mxu0
        %v4934 = vadd.f32 0.0, %v4933
        %v4935 = vpop.f32.mrf.mxu0
        %v4936 = vadd.f32 0.0, %v4935
        %4937 = vmatprep.mubr.bf16.mxu0 0
        %4938 = vmatmul.mubr.bf16.gmra.mxu0 %v4757
        %v4939 = vpop.f32.mrf.mxu0
        %v4940 = vadd.f32 0.0, %v4939
        %v4941 = vpop.f32.mrf.mxu0
        %v4942 = vadd.f32 0.0, %v4941
        %v4943 = vpop.f32.mrf.mxu0
        %v4944 = vadd.f32 0.0, %v4943
        %v4945 = vpop.f32.mrf.mxu0
        %v4946 = vadd.f32 0.0, %v4945
        %4947 = vmatprep.mubr.bf16.mxu0 0
        %4948 = vmatmul.mubr.bf16.gmra.mxu0 %v4758
        %v4949 = vpop.f32.mrf.mxu0
        %v4950 = vadd.f32 0.0, %v4949
        %v4951 = vpop.f32.mrf.mxu0
        %v4952 = vadd.f32 0.0, %v4951
        %v4953 = vpop.f32.mrf.mxu0
        %v4954 = vadd.f32 0.0, %v4953
        %v4955 = vpop.f32.mrf.mxu0
        %v4956 = vadd.f32 0.0, %v4955
        %4957 = vmatprep.mubr.bf16.mxu0 0
        %4958 = vmatmul.mubr.bf16.gmra.mxu0 %v4759
        %v4959 = vpop.f32.mrf.mxu0
        %v4960 = vadd.f32 0.0, %v4959
        %v4961 = vpop.f32.mrf.mxu0
        %v4962 = vadd.f32 0.0, %v4961
        %v4963 = vpop.f32.mrf.mxu0
        %v4964 = vadd.f32 0.0, %v4963
        %v4965 = vpop.f32.mrf.mxu0
        %v4966 = vadd.f32 0.0, %v4965
        %4967 = vmatprep.mubr.bf16.mxu0 0
        %4968 = vmatmul.mubr.bf16.gmra.mxu0 %v4760
        %v4969 = vpop.f32.mrf.mxu0
        %v4970 = vadd.f32 0.0, %v4969
        %v4971 = vpop.f32.mrf.mxu0
        %v4972 = vadd.f32 0.0, %v4971
        %v4973 = vpop.f32.mrf.mxu0
        %v4974 = vadd.f32 0.0, %v4973
        %v4975 = vpop.f32.mrf.mxu0
        %v4976 = vadd.f32 0.0, %v4975
        %4977 = vmatprep.mubr.bf16.mxu0 0
        %4978 = vmatmul.mubr.bf16.gmra.mxu0 %v4761
        %v4979 = vpop.f32.mrf.mxu0
        %v4980 = vadd.f32 0.0, %v4979
        %v4981 = vpop.f32.mrf.mxu0
        %v4982 = vadd.f32 0.0, %v4981
        %v4983 = vpop.f32.mrf.mxu0
        %v4984 = vadd.f32 0.0, %v4983
        %v4985 = vpop.f32.mrf.mxu0
        %v4986 = vadd.f32 0.0, %v4985
        %4987 = vdwg.mxu0
        %s4988 = sld [smem:[#allocation3]]
        %v4989 = vsub.f32 %v304, %v4797
        %v4990 = vsub.f32 %v305, %v4799
        %v4991 = vsub.f32 %v306, %v4910
        %v4992 = vsub.f32 %v307, %v4912
        %v4993 = vsub.f32 %v308, %v4801
        %v4994 = vsub.f32 %v309, %v4803
        %v4995 = vsub.f32 %v310, %v4914
        %v4996 = vsub.f32 %v311, %v4916
        %v4997 = vsub.f32 %v312, %v4807
        %v4998 = vsub.f32 %v313, %v4809
        %v4999 = vsub.f32 %v314, %v4920
        %v5000 = vsub.f32 %v315, %v4922
        %v5001 = vsub.f32 %v316, %v4811
        %v5002 = vsub.f32 %v317, %v4813
        %v5003 = vsub.f32 %v318, %v4924
        %v5004 = vsub.f32 %v319, %v4926
        %v5005 = vsub.f32 %v320, %v4817
        %v5006 = vsub.f32 %v321, %v4819
        %v5007 = vsub.f32 %v322, %v4930
        %v5008 = vsub.f32 %v323, %v4932
        %v5009 = vsub.f32 %v324, %v4821
        %v5010 = vsub.f32 %v325, %v4823
        %v5011 = vsub.f32 %v326, %v4934
        %v5012 = vsub.f32 %v327, %v4936
        %v5013 = vsub.f32 %v328, %v4827
        %v5014 = vsub.f32 %v329, %v4829
        %v5015 = vsub.f32 %v330, %v4940
        %v5016 = vsub.f32 %v331, %v4942
        %v5017 = vsub.f32 %v332, %v4831
        %v5018 = vsub.f32 %v333, %v4833
        %v5019 = vsub.f32 %v334, %v4944
        %v5020 = vsub.f32 %v335, %v4946
        %v5021 = vsub.f32 %v336, %v4837
        %v5022 = vsub.f32 %v337, %v4839
        %v5023 = vsub.f32 %v338, %v4950
        %v5024 = vsub.f32 %v339, %v4952
        %v5025 = vsub.f32 %v340, %v4841
        %v5026 = vsub.f32 %v341, %v4843
        %v5027 = vsub.f32 %v342, %v4954
        %v5028 = vsub.f32 %v343, %v4956
        %v5029 = vsub.f32 %v344, %v4847
        %v5030 = vsub.f32 %v345, %v4849
        %v5031 = vsub.f32 %v346, %v4960
        %v5032 = vsub.f32 %v347, %v4962
        %v5033 = vsub.f32 %v348, %v4851
        %v5034 = vsub.f32 %v349, %v4853
        %v5035 = vsub.f32 %v350, %v4964
        %v5036 = vsub.f32 %v351, %v4966
        %v5037 = vsub.f32 %v352, %v4857
        %v5038 = vsub.f32 %v353, %v4859
        %v5039 = vsub.f32 %v354, %v4970
        %v5040 = vsub.f32 %v355, %v4972
        %v5041 = vsub.f32 %v356, %v4861
        %v5042 = vsub.f32 %v357, %v4863
        %v5043 = vsub.f32 %v358, %v4974
        %v5044 = vsub.f32 %v359, %v4976
        %v5045 = vsub.f32 %v360, %v4867
        %v5046 = vsub.f32 %v361, %v4869
        %v5047 = vsub.f32 %v362, %v4980
        %v5048 = vsub.f32 %v363, %v4982
        %v5049 = vsub.f32 %v364, %v4871
        %v5050 = vsub.f32 %v365, %v4873
        %v5051 = vsub.f32 %v366, %v4984
        %v5052 = vsub.f32 %v367, %v4986
        %v5053 = vstv %s4988
        %v5054 = vmul.f32 %v5053, %v4989
        %v5055 = vmul.f32 %v5053, %v4990
        %v5056 = vmul.f32 %v5053, %v4991
        %v5057 = vmul.f32 %v5053, %v4992
        %v5058 = vmul.f32 %v5053, %v4993
        %v5059 = vmul.f32 %v5053, %v4994
        %v5060 = vmul.f32 %v5053, %v4995
        %v5061 = vmul.f32 %v5053, %v4996
        %v5062 = vmul.f32 %v5053, %v4997
        %v5063 = vmul.f32 %v5053, %v4998
        %v5064 = vmul.f32 %v5053, %v4999
        %v5065 = vmul.f32 %v5053, %v5000
        %v5066 = vmul.f32 %v5053, %v5001
        %v5067 = vmul.f32 %v5053, %v5002
        %v5068 = vmul.f32 %v5053, %v5003
        %v5069 = vmul.f32 %v5053, %v5004
        %v5070 = vmul.f32 %v5053, %v5005
        %v5071 = vmul.f32 %v5053, %v5006
        %v5072 = vmul.f32 %v5053, %v5007
        %v5073 = vmul.f32 %v5053, %v5008
        %v5074 = vmul.f32 %v5053, %v5009
        %v5075 = vmul.f32 %v5053, %v5010
        %v5076 = vmul.f32 %v5053, %v5011
        %v5077 = vmul.f32 %v5053, %v5012
        %v5078 = vmul.f32 %v5053, %v5013
        %v5079 = vmul.f32 %v5053, %v5014
        %v5080 = vmul.f32 %v5053, %v5015
        %v5081 = vmul.f32 %v5053, %v5016
        %v5082 = vmul.f32 %v5053, %v5017
        %v5083 = vmul.f32 %v5053, %v5018
        %v5084 = vmul.f32 %v5053, %v5019
        %v5085 = vmul.f32 %v5053, %v5020
        %v5086 = vmul.f32 %v5053, %v5021
        %v5087 = vmul.f32 %v5053, %v5022
        %v5088 = vmul.f32 %v5053, %v5023
        %v5089 = vmul.f32 %v5053, %v5024
        %v5090 = vmul.f32 %v5053, %v5025
        %v5091 = vmul.f32 %v5053, %v5026
        %v5092 = vmul.f32 %v5053, %v5027
        %v5093 = vmul.f32 %v5053, %v5028
        %v5094 = vmul.f32 %v5053, %v5029
        %v5095 = vmul.f32 %v5053, %v5030
        %v5096 = vmul.f32 %v5053, %v5031
        %v5097 = vmul.f32 %v5053, %v5032
        %v5098 = vmul.f32 %v5053, %v5033
        %v5099 = vmul.f32 %v5053, %v5034
        %v5100 = vmul.f32 %v5053, %v5035
        %v5101 = vmul.f32 %v5053, %v5036
        %v5102 = vmul.f32 %v5053, %v5037
        %v5103 = vmul.f32 %v5053, %v5038
        %v5104 = vmul.f32 %v5053, %v5039
        %v5105 = vmul.f32 %v5053, %v5040
        %v5106 = vmul.f32 %v5053, %v5041
        %v5107 = vmul.f32 %v5053, %v5042
        %v5108 = vmul.f32 %v5053, %v5043
        %v5109 = vmul.f32 %v5053, %v5044
        %v5110 = vmul.f32 %v5053, %v5045
        %v5111 = vmul.f32 %v5053, %v5046
        %v5112 = vmul.f32 %v5053, %v5047
        %v5113 = vmul.f32 %v5053, %v5048
        %v5114 = vmul.f32 %v5053, %v5049
        %v5115 = vmul.f32 %v5053, %v5050
        %v5116 = vmul.f32 %v5053, %v5051
        %v5117 = vmul.f32 %v5053, %v5052
        %v5118 = vadd.f32 %v4797, %v5054
        %v5119 = vadd.f32 %v4799, %v5055
        %v5120 = vadd.f32 %v4910, %v5056
        %v5121 = vadd.f32 %v4912, %v5057
        %v5122 = vadd.f32 %v4801, %v5058
        %v5123 = vadd.f32 %v4803, %v5059
        %v5124 = vadd.f32 %v4914, %v5060
        %v5125 = vadd.f32 %v4916, %v5061
        %v5126 = vadd.f32 %v4807, %v5062
        %v5127 = vadd.f32 %v4809, %v5063
        %v5128 = vadd.f32 %v4920, %v5064
        %v5129 = vadd.f32 %v4922, %v5065
        %v5130 = vadd.f32 %v4811, %v5066
        %v5131 = vadd.f32 %v4813, %v5067
        %v5132 = vadd.f32 %v4924, %v5068
        %v5133 = vadd.f32 %v4926, %v5069
        %v5134 = vadd.f32 %v4817, %v5070
        %v5135 = vadd.f32 %v4819, %v5071
        %v5136 = vadd.f32 %v4930, %v5072
        %v5137 = vadd.f32 %v4932, %v5073
        %v5138 = vadd.f32 %v4821, %v5074
        %v5139 = vadd.f32 %v4823, %v5075
        %v5140 = vadd.f32 %v4934, %v5076
        %v5141 = vadd.f32 %v4936, %v5077
        %v5142 = vadd.f32 %v4827, %v5078
        %v5143 = vadd.f32 %v4829, %v5079
        %v5144 = vadd.f32 %v4940, %v5080
        %v5145 = vadd.f32 %v4942, %v5081
        %v5146 = vadd.f32 %v4831, %v5082
        %v5147 = vadd.f32 %v4833, %v5083
        %v5148 = vadd.f32 %v4944, %v5084
        %v5149 = vadd.f32 %v4946, %v5085
        %v5150 = vadd.f32 %v4837, %v5086
        %v5151 = vadd.f32 %v4839, %v5087
        %v5152 = vadd.f32 %v4950, %v5088
        %v5153 = vadd.f32 %v4952, %v5089
        %v5154 = vadd.f32 %v4841, %v5090
        %v5155 = vadd.f32 %v4843, %v5091
        %v5156 = vadd.f32 %v4954, %v5092
        %v5157 = vadd.f32 %v4956, %v5093
        %v5158 = vadd.f32 %v4847, %v5094
        %v5159 = vadd.f32 %v4849, %v5095
        %v5160 = vadd.f32 %v4960, %v5096
        %v5161 = vadd.f32 %v4962, %v5097
        %v5162 = vadd.f32 %v4851, %v5098
        %v5163 = vadd.f32 %v4853, %v5099
        %v5164 = vadd.f32 %v4964, %v5100
        %v5165 = vadd.f32 %v4966, %v5101
        %v5166 = vadd.f32 %v4857, %v5102
        %v5167 = vadd.f32 %v4859, %v5103
        %v5168 = vadd.f32 %v4970, %v5104
        %v5169 = vadd.f32 %v4972, %v5105
        %v5170 = vadd.f32 %v4861, %v5106
        %v5171 = vadd.f32 %v4863, %v5107
        %v5172 = vadd.f32 %v4974, %v5108
        %v5173 = vadd.f32 %v4976, %v5109
        %v5174 = vadd.f32 %v4867, %v5110
        %v5175 = vadd.f32 %v4869, %v5111
        %v5176 = vadd.f32 %v4980, %v5112
        %v5177 = vadd.f32 %v4982, %v5113
        %v5178 = vadd.f32 %v4871, %v5114
        %v5179 = vadd.f32 %v4873, %v5115
        %v5180 = vadd.f32 %v4984, %v5116
        %v5181 = vadd.f32 %v4986, %v5117
        %s5182 = scalar_lea.vmem [#allocation12], 5
        %v5183 = vld [vmem:[%s5182] ss:$8 sm:$0xf]
        %s5184 = scalar_lea.vmem [#allocation12], 6
        %v5185 = vld [vmem:[%s5184] ss:$8 sm:$0xf]
        %v5186 = vadd.f32 %v5118, %v5119
        %v5187 = vadd.f32 %v5186, %v5120
        %v5188 = vadd.f32 %v5187, %v5121
        %5189 = vadd.xlane.f32.xlu0 %v5188
        %v5190 = vpop.xlane.xlu0 %5189
        %v5191 = vadd.f32 %v5122, %v5123
        %v5192 = vadd.f32 %v5191, %v5124
        %v5193 = vadd.f32 %v5192, %v5125
        %5194 = vadd.xlane.f32.xlu0 %v5193
        %v5195 = vpop.xlane.xlu0 %5194
        %v5196 = vadd.f32 %v5126, %v5127
        %v5197 = vadd.f32 %v5196, %v5128
        %v5198 = vadd.f32 %v5197, %v5129
        %5199 = vadd.xlane.f32.xlu0 %v5198
        %v5200 = vpop.xlane.xlu0 %5199
        %v5201 = vadd.f32 %v5130, %v5131
        %v5202 = vadd.f32 %v5201, %v5132
        %v5203 = vadd.f32 %v5202, %v5133
        %5204 = vadd.xlane.f32.xlu0 %v5203
        %v5205 = vpop.xlane.xlu0 %5204
        %v5206 = vadd.f32 %v5134, %v5135
        %v5207 = vadd.f32 %v5206, %v5136
        %v5208 = vadd.f32 %v5207, %v5137
        %5209 = vadd.xlane.f32.xlu0 %v5208
        %v5210 = vpop.xlane.xlu0 %5209
        %v5211 = vadd.f32 %v5138, %v5139
        %v5212 = vadd.f32 %v5211, %v5140
        %v5213 = vadd.f32 %v5212, %v5141
        %5214 = vadd.xlane.f32.xlu0 %v5213
        %v5215 = vpop.xlane.xlu0 %5214
        %v5216 = vadd.f32 %v5142, %v5143
        %v5217 = vadd.f32 %v5216, %v5144
        %v5218 = vadd.f32 %v5217, %v5145
        %5219 = vadd.xlane.f32.xlu0 %v5218
        %v5220 = vpop.xlane.xlu0 %5219
        %v5221 = vadd.f32 %v5146, %v5147
        %v5222 = vadd.f32 %v5221, %v5148
        %v5223 = vadd.f32 %v5222, %v5149
        %5224 = vadd.xlane.f32.xlu0 %v5223
        %v5225 = vpop.xlane.xlu0 %5224
        %v5226 = vadd.f32 %v5150, %v5151
        %v5227 = vadd.f32 %v5226, %v5152
        %v5228 = vadd.f32 %v5227, %v5153
        %5229 = vadd.xlane.f32.xlu0 %v5228
        %v5230 = vpop.xlane.xlu0 %5229
        %v5231 = vadd.f32 %v5154, %v5155
        %v5232 = vadd.f32 %v5231, %v5156
        %v5233 = vadd.f32 %v5232, %v5157
        %5234 = vadd.xlane.f32.xlu0 %v5233
        %v5235 = vpop.xlane.xlu0 %5234
        %v5236 = vadd.f32 %v5158, %v5159
        %v5237 = vadd.f32 %v5236, %v5160
        %v5238 = vadd.f32 %v5237, %v5161
        %5239 = vadd.xlane.f32.xlu0 %v5238
        %v5240 = vpop.xlane.xlu0 %5239
        %v5241 = vadd.f32 %v5162, %v5163
        %v5242 = vadd.f32 %v5241, %v5164
        %v5243 = vadd.f32 %v5242, %v5165
        %5244 = vadd.xlane.f32.xlu0 %v5243
        %v5245 = vpop.xlane.xlu0 %5244
        %v5246 = vadd.f32 %v5166, %v5167
        %v5247 = vadd.f32 %v5246, %v5168
        %v5248 = vadd.f32 %v5247, %v5169
        %5249 = vadd.xlane.f32.xlu0 %v5248
        %v5250 = vpop.xlane.xlu0 %5249
        %v5251 = vadd.f32 %v5170, %v5171
        %v5252 = vadd.f32 %v5251, %v5172
        %v5253 = vadd.f32 %v5252, %v5173
        %5254 = vadd.xlane.f32.xlu0 %v5253
        %v5255 = vpop.xlane.xlu0 %5254
        %v5256 = vadd.f32 %v5174, %v5175
        %v5257 = vadd.f32 %v5256, %v5176
        %v5258 = vadd.f32 %v5257, %v5177
        %5259 = vadd.xlane.f32.xlu0 %v5258
        %v5260 = vpop.xlane.xlu0 %5259
        %v5261 = vadd.f32 %v5178, %v5179
        %v5262 = vadd.f32 %v5261, %v5180
        %v5263 = vadd.f32 %v5262, %v5181
        %5264 = vadd.xlane.f32.xlu0 %v5263
        %v5265 = vpop.xlane.xlu0 %5264
        %v5266 = vrcp.pop 512.0
        %v5267 = vmul.f32 %v5190, %v5266
        %v5268 = vmul.f32 %v5195, %v5266
        %v5269 = vmul.f32 %v5200, %v5266
        %v5270 = vmul.f32 %v5205, %v5266
        %v5271 = vmul.f32 %v5210, %v5266
        %v5272 = vmul.f32 %v5215, %v5266
        %v5273 = vmul.f32 %v5220, %v5266
        %v5274 = vmul.f32 %v5225, %v5266
        %v5275 = vmul.f32 %v5230, %v5266
        %v5276 = vmul.f32 %v5235, %v5266
        %v5277 = vmul.f32 %v5240, %v5266
        %v5278 = vmul.f32 %v5245, %v5266
        %v5279 = vmul.f32 %v5250, %v5266
        %v5280 = vmul.f32 %v5255, %v5266
        %v5281 = vmul.f32 %v5260, %v5266
        %v5282 = vmul.f32 %v5265, %v5266
        %v5283 = vsub.f32 %v5118, %v5267
        %v5284 = vsub.f32 %v5119, %v5267
        %v5285 = vsub.f32 %v5120, %v5267
        %v5286 = vsub.f32 %v5121, %v5267
        %v5287 = vsub.f32 %v5122, %v5268
        %v5288 = vsub.f32 %v5123, %v5268
        %v5289 = vsub.f32 %v5124, %v5268
        %v5290 = vsub.f32 %v5125, %v5268
        %v5291 = vsub.f32 %v5126, %v5269
        %v5292 = vsub.f32 %v5127, %v5269
        %v5293 = vsub.f32 %v5128, %v5269
        %v5294 = vsub.f32 %v5129, %v5269
        %v5295 = vsub.f32 %v5130, %v5270
        %v5296 = vsub.f32 %v5131, %v5270
        %v5297 = vsub.f32 %v5132, %v5270
        %v5298 = vsub.f32 %v5133, %v5270
        %v5299 = vsub.f32 %v5134, %v5271
        %v5300 = vsub.f32 %v5135, %v5271
        %v5301 = vsub.f32 %v5136, %v5271
        %v5302 = vsub.f32 %v5137, %v5271
        %v5303 = vsub.f32 %v5138, %v5272
        %v5304 = vsub.f32 %v5139, %v5272
        %v5305 = vsub.f32 %v5140, %v5272
        %v5306 = vsub.f32 %v5141, %v5272
        %v5307 = vsub.f32 %v5142, %v5273
        %v5308 = vsub.f32 %v5143, %v5273
        %v5309 = vsub.f32 %v5144, %v5273
        %v5310 = vsub.f32 %v5145, %v5273
        %v5311 = vsub.f32 %v5146, %v5274
        %v5312 = vsub.f32 %v5147, %v5274
        %v5313 = vsub.f32 %v5148, %v5274
        %v5314 = vsub.f32 %v5149, %v5274
        %v5315 = vsub.f32 %v5150, %v5275
        %v5316 = vsub.f32 %v5151, %v5275
        %v5317 = vsub.f32 %v5152, %v5275
        %v5318 = vsub.f32 %v5153, %v5275
        %v5319 = vsub.f32 %v5154, %v5276
        %v5320 = vsub.f32 %v5155, %v5276
        %v5321 = vsub.f32 %v5156, %v5276
        %v5322 = vsub.f32 %v5157, %v5276
        %v5323 = vsub.f32 %v5158, %v5277
        %v5324 = vsub.f32 %v5159, %v5277
        %v5325 = vsub.f32 %v5160, %v5277
        %v5326 = vsub.f32 %v5161, %v5277
        %v5327 = vsub.f32 %v5162, %v5278
        %v5328 = vsub.f32 %v5163, %v5278
        %v5329 = vsub.f32 %v5164, %v5278
        %v5330 = vsub.f32 %v5165, %v5278
        %v5331 = vsub.f32 %v5166, %v5279
        %v5332 = vsub.f32 %v5167, %v5279
        %v5333 = vsub.f32 %v5168, %v5279
        %v5334 = vsub.f32 %v5169, %v5279
        %v5335 = vsub.f32 %v5170, %v5280
        %v5336 = vsub.f32 %v5171, %v5280
        %v5337 = vsub.f32 %v5172, %v5280
        %v5338 = vsub.f32 %v5173, %v5280
        %v5339 = vsub.f32 %v5174, %v5281
        %v5340 = vsub.f32 %v5175, %v5281
        %v5341 = vsub.f32 %v5176, %v5281
        %v5342 = vsub.f32 %v5177, %v5281
        %v5343 = vsub.f32 %v5178, %v5282
        %v5344 = vsub.f32 %v5179, %v5282
        %v5345 = vsub.f32 %v5180, %v5282
        %v5346 = vsub.f32 %v5181, %v5282
        %v5347 = vmul.f32 %v5283, %v5283
        %v5348 = vmul.f32 %v5284, %v5284
        %v5349 = vmul.f32 %v5285, %v5285
        %v5350 = vmul.f32 %v5286, %v5286
        %v5351 = vmul.f32 %v5287, %v5287
        %v5352 = vmul.f32 %v5288, %v5288
        %v5353 = vmul.f32 %v5289, %v5289
        %v5354 = vmul.f32 %v5290, %v5290
        %v5355 = vmul.f32 %v5291, %v5291
        %v5356 = vmul.f32 %v5292, %v5292
        %v5357 = vmul.f32 %v5293, %v5293
        %v5358 = vmul.f32 %v5294, %v5294
        %v5359 = vmul.f32 %v5295, %v5295
        %v5360 = vmul.f32 %v5296, %v5296
        %v5361 = vmul.f32 %v5297, %v5297
        %v5362 = vmul.f32 %v5298, %v5298
        %v5363 = vmul.f32 %v5299, %v5299
        %v5364 = vmul.f32 %v5300, %v5300
        %v5365 = vmul.f32 %v5301, %v5301
        %v5366 = vmul.f32 %v5302, %v5302
        %v5367 = vmul.f32 %v5303, %v5303
        %v5368 = vmul.f32 %v5304, %v5304
        %v5369 = vmul.f32 %v5305, %v5305
        %v5370 = vmul.f32 %v5306, %v5306
        %v5371 = vmul.f32 %v5307, %v5307
        %v5372 = vmul.f32 %v5308, %v5308
        %v5373 = vmul.f32 %v5309, %v5309
        %v5374 = vmul.f32 %v5310, %v5310
        %v5375 = vmul.f32 %v5311, %v5311
        %v5376 = vmul.f32 %v5312, %v5312
        %v5377 = vmul.f32 %v5313, %v5313
        %v5378 = vmul.f32 %v5314, %v5314
        %v5379 = vmul.f32 %v5315, %v5315
        %v5380 = vmul.f32 %v5316, %v5316
        %v5381 = vmul.f32 %v5317, %v5317
        %v5382 = vmul.f32 %v5318, %v5318
        %v5383 = vmul.f32 %v5319, %v5319
        %v5384 = vmul.f32 %v5320, %v5320
        %v5385 = vmul.f32 %v5321, %v5321
        %v5386 = vmul.f32 %v5322, %v5322
        %v5387 = vmul.f32 %v5323, %v5323
        %v5388 = vmul.f32 %v5324, %v5324
        %v5389 = vmul.f32 %v5325, %v5325
        %v5390 = vmul.f32 %v5326, %v5326
        %v5391 = vmul.f32 %v5327, %v5327
        %v5392 = vmul.f32 %v5328, %v5328
        %v5393 = vmul.f32 %v5329, %v5329
        %v5394 = vmul.f32 %v5330, %v5330
        %v5395 = vmul.f32 %v5331, %v5331
        %v5396 = vmul.f32 %v5332, %v5332
        %v5397 = vmul.f32 %v5333, %v5333
        %v5398 = vmul.f32 %v5334, %v5334
        %v5399 = vmul.f32 %v5335, %v5335
        %v5400 = vmul.f32 %v5336, %v5336
        %v5401 = vmul.f32 %v5337, %v5337
        %v5402 = vmul.f32 %v5338, %v5338
        %v5403 = vmul.f32 %v5339, %v5339
        %v5404 = vmul.f32 %v5340, %v5340
        %v5405 = vmul.f32 %v5341, %v5341
        %v5406 = vmul.f32 %v5342, %v5342
        %v5407 = vmul.f32 %v5343, %v5343
        %v5408 = vmul.f32 %v5344, %v5344
        %v5409 = vmul.f32 %v5345, %v5345
        %v5410 = vmul.f32 %v5346, %v5346
        %v5411 = vadd.f32 %v5347, %v5348
        %v5412 = vadd.f32 %v5411, %v5349
        %v5413 = vadd.f32 %v5412, %v5350
        %5414 = vadd.xlane.f32.xlu0 %v5413
        %v5415 = vpop.xlane.xlu0 %5414
        %v5416 = vadd.f32 %v5351, %v5352
        %v5417 = vadd.f32 %v5416, %v5353
        %v5418 = vadd.f32 %v5417, %v5354
        %5419 = vadd.xlane.f32.xlu0 %v5418
        %v5420 = vpop.xlane.xlu0 %5419
        %v5421 = vadd.f32 %v5355, %v5356
        %v5422 = vadd.f32 %v5421, %v5357
        %v5423 = vadd.f32 %v5422, %v5358
        %5424 = vadd.xlane.f32.xlu0 %v5423
        %v5425 = vpop.xlane.xlu0 %5424
        %v5426 = vadd.f32 %v5359, %v5360
        %v5427 = vadd.f32 %v5426, %v5361
        %v5428 = vadd.f32 %v5427, %v5362
        %5429 = vadd.xlane.f32.xlu0 %v5428
        %v5430 = vpop.xlane.xlu0 %5429
        %v5431 = vadd.f32 %v5363, %v5364
        %v5432 = vadd.f32 %v5431, %v5365
        %v5433 = vadd.f32 %v5432, %v5366
        %5434 = vadd.xlane.f32.xlu0 %v5433
        %v5435 = vpop.xlane.xlu0 %5434
        %v5436 = vadd.f32 %v5367, %v5368
        %v5437 = vadd.f32 %v5436, %v5369
        %v5438 = vadd.f32 %v5437, %v5370
        %5439 = vadd.xlane.f32.xlu0 %v5438
        %v5440 = vpop.xlane.xlu0 %5439
        %v5441 = vadd.f32 %v5371, %v5372
        %v5442 = vadd.f32 %v5441, %v5373
        %v5443 = vadd.f32 %v5442, %v5374
        %5444 = vadd.xlane.f32.xlu0 %v5443
        %v5445 = vpop.xlane.xlu0 %5444
        %v5446 = vadd.f32 %v5375, %v5376
        %v5447 = vadd.f32 %v5446, %v5377
        %v5448 = vadd.f32 %v5447, %v5378
        %5449 = vadd.xlane.f32.xlu0 %v5448
        %v5450 = vpop.xlane.xlu0 %5449
        %v5451 = vadd.f32 %v5379, %v5380
        %v5452 = vadd.f32 %v5451, %v5381
        %v5453 = vadd.f32 %v5452, %v5382
        %5454 = vadd.xlane.f32.xlu0 %v5453
        %v5455 = vpop.xlane.xlu0 %5454
        %v5456 = vadd.f32 %v5383, %v5384
        %v5457 = vadd.f32 %v5456, %v5385
        %v5458 = vadd.f32 %v5457, %v5386
        %5459 = vadd.xlane.f32.xlu0 %v5458
        %v5460 = vpop.xlane.xlu0 %5459
        %v5461 = vadd.f32 %v5387, %v5388
        %v5462 = vadd.f32 %v5461, %v5389
        %v5463 = vadd.f32 %v5462, %v5390
        %5464 = vadd.xlane.f32.xlu0 %v5463
        %v5465 = vpop.xlane.xlu0 %5464
        %v5466 = vadd.f32 %v5391, %v5392
        %v5467 = vadd.f32 %v5466, %v5393
        %v5468 = vadd.f32 %v5467, %v5394
        %5469 = vadd.xlane.f32.xlu0 %v5468
        %v5470 = vpop.xlane.xlu0 %5469
        %v5471 = vadd.f32 %v5395, %v5396
        %v5472 = vadd.f32 %v5471, %v5397
        %v5473 = vadd.f32 %v5472, %v5398
        %5474 = vadd.xlane.f32.xlu0 %v5473
        %v5475 = vpop.xlane.xlu0 %5474
        %v5476 = vadd.f32 %v5399, %v5400
        %v5477 = vadd.f32 %v5476, %v5401
        %v5478 = vadd.f32 %v5477, %v5402
        %5479 = vadd.xlane.f32.xlu0 %v5478
        %v5480 = vpop.xlane.xlu0 %5479
        %v5481 = vadd.f32 %v5403, %v5404
        %v5482 = vadd.f32 %v5481, %v5405
        %v5483 = vadd.f32 %v5482, %v5406
        %5484 = vadd.xlane.f32.xlu0 %v5483
        %v5485 = vpop.xlane.xlu0 %5484
        %v5486 = vadd.f32 %v5407, %v5408
        %v5487 = vadd.f32 %v5486, %v5409
        %v5488 = vadd.f32 %v5487, %v5410
        %5489 = vadd.xlane.f32.xlu0 %v5488
        %v5490 = vpop.xlane.xlu0 %5489
        %v5491 = vmul.f32 %v5415, %v5266
        %v5492 = vmul.f32 %v5420, %v5266
        %v5493 = vmul.f32 %v5425, %v5266
        %v5494 = vmul.f32 %v5430, %v5266
        %v5495 = vmul.f32 %v5435, %v5266
        %v5496 = vmul.f32 %v5440, %v5266
        %v5497 = vmul.f32 %v5445, %v5266
        %v5498 = vmul.f32 %v5450, %v5266
        %v5499 = vmul.f32 %v5455, %v5266
        %v5500 = vmul.f32 %v5460, %v5266
        %v5501 = vmul.f32 %v5465, %v5266
        %v5502 = vmul.f32 %v5470, %v5266
        %v5503 = vmul.f32 %v5475, %v5266
        %v5504 = vmul.f32 %v5480, %v5266
        %v5505 = vmul.f32 %v5485, %v5266
        %v5506 = vmul.f32 %v5490, %v5266
        %v5507 = vadd.f32 %v5491, 1e-05
        %v5508 = vadd.f32 %v5492, 1e-05
        %v5509 = vadd.f32 %v5493, 1e-05
        %v5510 = vadd.f32 %v5494, 1e-05
        %v5511 = vadd.f32 %v5495, 1e-05
        %v5512 = vadd.f32 %v5496, 1e-05
        %v5513 = vadd.f32 %v5497, 1e-05
        %v5514 = vadd.f32 %v5498, 1e-05
        %v5515 = vadd.f32 %v5499, 1e-05
        %v5516 = vadd.f32 %v5500, 1e-05
        %v5517 = vadd.f32 %v5501, 1e-05
        %v5518 = vadd.f32 %v5502, 1e-05
        %v5519 = vadd.f32 %v5503, 1e-05
        %v5520 = vadd.f32 %v5504, 1e-05
        %v5521 = vadd.f32 %v5505, 1e-05
        %v5522 = vadd.f32 %v5506, 1e-05
        %v5523 = vrsqrt.pop %v5507
        %v5524 = vrsqrt.pop %v5508
        %v5525 = vrsqrt.pop %v5509
        %v5526 = vrsqrt.pop %v5510
        %v5527 = vrsqrt.pop %v5511
        %v5528 = vrsqrt.pop %v5512
        %v5529 = vrsqrt.pop %v5513
        %v5530 = vrsqrt.pop %v5514
        %v5531 = vrsqrt.pop %v5515
        %v5532 = vrsqrt.pop %v5516
        %v5533 = vrsqrt.pop %v5517
        %v5534 = vrsqrt.pop %v5518
        %v5535 = vrsqrt.pop %v5519
        %v5536 = vrsqrt.pop %v5520
        %v5537 = vrsqrt.pop %v5521
        %v5538 = vrsqrt.pop %v5522
        %v5539 = vmul.f32 %v5283, %v5523
        %v5540 = vmul.f32 %v5284, %v5523
        %v5541 = vmul.f32 %v5285, %v5523
        %v5542 = vmul.f32 %v5286, %v5523
        %v5543 = vmul.f32 %v5287, %v5524
        %v5544 = vmul.f32 %v5288, %v5524
        %v5545 = vmul.f32 %v5289, %v5524
        %v5546 = vmul.f32 %v5290, %v5524
        %v5547 = vmul.f32 %v5291, %v5525
        %v5548 = vmul.f32 %v5292, %v5525
        %v5549 = vmul.f32 %v5293, %v5525
        %v5550 = vmul.f32 %v5294, %v5525
        %v5551 = vmul.f32 %v5295, %v5526
        %v5552 = vmul.f32 %v5296, %v5526
        %v5553 = vmul.f32 %v5297, %v5526
        %v5554 = vmul.f32 %v5298, %v5526
        %v5555 = vmul.f32 %v5299, %v5527
        %v5556 = vmul.f32 %v5300, %v5527
        %v5557 = vmul.f32 %v5301, %v5527
        %v5558 = vmul.f32 %v5302, %v5527
        %v5559 = vmul.f32 %v5303, %v5528
        %v5560 = vmul.f32 %v5304, %v5528
        %v5561 = vmul.f32 %v5305, %v5528
        %v5562 = vmul.f32 %v5306, %v5528
        %v5563 = vmul.f32 %v5307, %v5529
        %v5564 = vmul.f32 %v5308, %v5529
        %v5565 = vmul.f32 %v5309, %v5529
        %v5566 = vmul.f32 %v5310, %v5529
        %v5567 = vmul.f32 %v5311, %v5530
        %v5568 = vmul.f32 %v5312, %v5530
        %v5569 = vmul.f32 %v5313, %v5530
        %v5570 = vmul.f32 %v5314, %v5530
        %v5571 = vmul.f32 %v5315, %v5531
        %v5572 = vmul.f32 %v5316, %v5531
        %v5573 = vmul.f32 %v5317, %v5531
        %v5574 = vmul.f32 %v5318, %v5531
        %v5575 = vmul.f32 %v5319, %v5532
        %v5576 = vmul.f32 %v5320, %v5532
        %v5577 = vmul.f32 %v5321, %v5532
        %v5578 = vmul.f32 %v5322, %v5532
        %v5579 = vmul.f32 %v5323, %v5533
        %v5580 = vmul.f32 %v5324, %v5533
        %v5581 = vmul.f32 %v5325, %v5533
        %v5582 = vmul.f32 %v5326, %v5533
        %v5583 = vmul.f32 %v5327, %v5534
        %v5584 = vmul.f32 %v5328, %v5534
        %v5585 = vmul.f32 %v5329, %v5534
        %v5586 = vmul.f32 %v5330, %v5534
        %v5587 = vmul.f32 %v5331, %v5535
        %v5588 = vmul.f32 %v5332, %v5535
        %v5589 = vmul.f32 %v5333, %v5535
        %v5590 = vmul.f32 %v5334, %v5535
        %v5591 = vmul.f32 %v5335, %v5536
        %v5592 = vmul.f32 %v5336, %v5536
        %v5593 = vmul.f32 %v5337, %v5536
        %v5594 = vmul.f32 %v5338, %v5536
        %v5595 = vmul.f32 %v5339, %v5537
        %v5596 = vmul.f32 %v5340, %v5537
        %v5597 = vmul.f32 %v5341, %v5537
        %v5598 = vmul.f32 %v5342, %v5537
        %v5599 = vmul.f32 %v5343, %v5538
        %v5600 = vmul.f32 %v5344, %v5538
        %v5601 = vmul.f32 %v5345, %v5538
        %v5602 = vmul.f32 %v5346, %v5538
        %v5604 = vlaneseq
        %v5605 = vshrl.u32 %v5604, 7
        %v5606 = vsub.s32 0, %v5605
        %v5607 = vrot.slane %v5183, %v5606
        %v5608 = vlaneseq
        %v5609 = vshrl.u32 %v5608, 7
        %v5610 = vsub.s32 1, %v5609
        %v5611 = vrot.slane %v5183, %v5610
        %v5612 = vlaneseq
        %v5613 = vshrl.u32 %v5612, 7
        %v5614 = vsub.s32 2, %v5613
        %v5615 = vrot.slane %v5183, %v5614
        %v5616 = vlaneseq
        %v5617 = vshrl.u32 %v5616, 7
        %v5618 = vsub.s32 3, %v5617
        %v5619 = vrot.slane %v5183, %v5618
        %v5624 = vmul.f32 %v5539, %v5607
        %v5625 = vmul.f32 %v5540, %v5611
        %v5626 = vmul.f32 %v5541, %v5615
        %v5627 = vmul.f32 %v5542, %v5619
        %v5628 = vmul.f32 %v5543, %v5607
        %v5629 = vmul.f32 %v5544, %v5611
        %v5630 = vmul.f32 %v5545, %v5615
        %v5631 = vmul.f32 %v5546, %v5619
        %v5632 = vmul.f32 %v5547, %v5607
        %v5633 = vmul.f32 %v5548, %v5611
        %v5634 = vmul.f32 %v5549, %v5615
        %v5635 = vmul.f32 %v5550, %v5619
        %v5636 = vmul.f32 %v5551, %v5607
        %v5637 = vmul.f32 %v5552, %v5611
        %v5638 = vmul.f32 %v5553, %v5615
        %v5639 = vmul.f32 %v5554, %v5619
        %v5640 = vmul.f32 %v5555, %v5607
        %v5641 = vmul.f32 %v5556, %v5611
        %v5642 = vmul.f32 %v5557, %v5615
        %v5643 = vmul.f32 %v5558, %v5619
        %v5644 = vmul.f32 %v5559, %v5607
        %v5645 = vmul.f32 %v5560, %v5611
        %v5646 = vmul.f32 %v5561, %v5615
        %v5647 = vmul.f32 %v5562, %v5619
        %v5648 = vmul.f32 %v5563, %v5607
        %v5649 = vmul.f32 %v5564, %v5611
        %v5650 = vmul.f32 %v5565, %v5615
        %v5651 = vmul.f32 %v5566, %v5619
        %v5652 = vmul.f32 %v5567, %v5607
        %v5653 = vmul.f32 %v5568, %v5611
        %v5654 = vmul.f32 %v5569, %v5615
        %v5655 = vmul.f32 %v5570, %v5619
        %v5656 = vmul.f32 %v5571, %v5607
        %v5657 = vmul.f32 %v5572, %v5611
        %v5658 = vmul.f32 %v5573, %v5615
        %v5659 = vmul.f32 %v5574, %v5619
        %v5660 = vmul.f32 %v5575, %v5607
        %v5661 = vmul.f32 %v5576, %v5611
        %v5662 = vmul.f32 %v5577, %v5615
        %v5663 = vmul.f32 %v5578, %v5619
        %v5664 = vmul.f32 %v5579, %v5607
        %v5665 = vmul.f32 %v5580, %v5611
        %v5666 = vmul.f32 %v5581, %v5615
        %v5667 = vmul.f32 %v5582, %v5619
        %v5668 = vmul.f32 %v5583, %v5607
        %v5669 = vmul.f32 %v5584, %v5611
        %v5670 = vmul.f32 %v5585, %v5615
        %v5671 = vmul.f32 %v5586, %v5619
        %v5672 = vmul.f32 %v5587, %v5607
        %v5673 = vmul.f32 %v5588, %v5611
        %v5674 = vmul.f32 %v5589, %v5615
        %v5675 = vmul.f32 %v5590, %v5619
        %v5676 = vmul.f32 %v5591, %v5607
        %v5677 = vmul.f32 %v5592, %v5611
        %v5678 = vmul.f32 %v5593, %v5615
        %v5679 = vmul.f32 %v5594, %v5619
        %v5680 = vmul.f32 %v5595, %v5607
        %v5681 = vmul.f32 %v5596, %v5611
        %v5682 = vmul.f32 %v5597, %v5615
        %v5683 = vmul.f32 %v5598, %v5619
        %v5684 = vmul.f32 %v5599, %v5607
        %v5685 = vmul.f32 %v5600, %v5611
        %v5686 = vmul.f32 %v5601, %v5615
        %v5687 = vmul.f32 %v5602, %v5619
        %v5689 = vlaneseq
        %v5690 = vshrl.u32 %v5689, 7
        %v5691 = vsub.s32 0, %v5690
        %v5692 = vrot.slane %v5185, %v5691
        %v5693 = vlaneseq
        %v5694 = vshrl.u32 %v5693, 7
        %v5695 = vsub.s32 1, %v5694
        %v5696 = vrot.slane %v5185, %v5695
        %v5697 = vlaneseq
        %v5698 = vshrl.u32 %v5697, 7
        %v5699 = vsub.s32 2, %v5698
        %v5700 = vrot.slane %v5185, %v5699
        %v5701 = vlaneseq
        %v5702 = vshrl.u32 %v5701, 7
        %v5703 = vsub.s32 3, %v5702
        %v5704 = vrot.slane %v5185, %v5703
        %v5709 = vadd.f32 %v5624, %v5692
        %v5710 = vadd.f32 %v5625, %v5696
        %v5711 = vadd.f32 %v5626, %v5700
        %v5712 = vadd.f32 %v5627, %v5704
        %v5713 = vadd.f32 %v5628, %v5692
        %v5714 = vadd.f32 %v5629, %v5696
        %v5715 = vadd.f32 %v5630, %v5700
        %v5716 = vadd.f32 %v5631, %v5704
        %v5717 = vadd.f32 %v5632, %v5692
        %v5718 = vadd.f32 %v5633, %v5696
        %v5719 = vadd.f32 %v5634, %v5700
        %v5720 = vadd.f32 %v5635, %v5704
        %v5721 = vadd.f32 %v5636, %v5692
        %v5722 = vadd.f32 %v5637, %v5696
        %v5723 = vadd.f32 %v5638, %v5700
        %v5724 = vadd.f32 %v5639, %v5704
        %v5725 = vadd.f32 %v5640, %v5692
        %v5726 = vadd.f32 %v5641, %v5696
        %v5727 = vadd.f32 %v5642, %v5700
        %v5728 = vadd.f32 %v5643, %v5704
        %v5729 = vadd.f32 %v5644, %v5692
        %v5730 = vadd.f32 %v5645, %v5696
        %v5731 = vadd.f32 %v5646, %v5700
        %v5732 = vadd.f32 %v5647, %v5704
        %v5733 = vadd.f32 %v5648, %v5692
        %v5734 = vadd.f32 %v5649, %v5696
        %v5735 = vadd.f32 %v5650, %v5700
        %v5736 = vadd.f32 %v5651, %v5704
        %v5737 = vadd.f32 %v5652, %v5692
        %v5738 = vadd.f32 %v5653, %v5696
        %v5739 = vadd.f32 %v5654, %v5700
        %v5740 = vadd.f32 %v5655, %v5704
        %v5741 = vadd.f32 %v5656, %v5692
        %v5742 = vadd.f32 %v5657, %v5696
        %v5743 = vadd.f32 %v5658, %v5700
        %v5744 = vadd.f32 %v5659, %v5704
        %v5745 = vadd.f32 %v5660, %v5692
        %v5746 = vadd.f32 %v5661, %v5696
        %v5747 = vadd.f32 %v5662, %v5700
        %v5748 = vadd.f32 %v5663, %v5704
        %v5749 = vadd.f32 %v5664, %v5692
        %v5750 = vadd.f32 %v5665, %v5696
        %v5751 = vadd.f32 %v5666, %v5700
        %v5752 = vadd.f32 %v5667, %v5704
        %v5753 = vadd.f32 %v5668, %v5692
        %v5754 = vadd.f32 %v5669, %v5696
        %v5755 = vadd.f32 %v5670, %v5700
        %v5756 = vadd.f32 %v5671, %v5704
        %v5757 = vadd.f32 %v5672, %v5692
        %v5758 = vadd.f32 %v5673, %v5696
        %v5759 = vadd.f32 %v5674, %v5700
        %v5760 = vadd.f32 %v5675, %v5704
        %v5761 = vadd.f32 %v5676, %v5692
        %v5762 = vadd.f32 %v5677, %v5696
        %v5763 = vadd.f32 %v5678, %v5700
        %v5764 = vadd.f32 %v5679, %v5704
        %v5765 = vadd.f32 %v5680, %v5692
        %v5766 = vadd.f32 %v5681, %v5696
        %v5767 = vadd.f32 %v5682, %v5700
        %v5768 = vadd.f32 %v5683, %v5704
        %v5769 = vadd.f32 %v5684, %v5692
        %v5770 = vadd.f32 %v5685, %v5696
        %v5771 = vadd.f32 %v5686, %v5700
        %v5772 = vadd.f32 %v5687, %v5704
        %v5773 = vpack.c.bf16 %v5713, %v5709
        %v5774 = vpack.c.bf16 %v5714, %v5710
        %v5775 = vpack.c.bf16 %v5715, %v5711
        %v5776 = vpack.c.bf16 %v5716, %v5712
        %v5777 = vpack.c.bf16 %v5721, %v5717
        %v5778 = vpack.c.bf16 %v5722, %v5718
        %v5779 = vpack.c.bf16 %v5723, %v5719
        %v5780 = vpack.c.bf16 %v5724, %v5720
        %v5781 = vpack.c.bf16 %v5729, %v5725
        %v5782 = vpack.c.bf16 %v5730, %v5726
        %v5783 = vpack.c.bf16 %v5731, %v5727
        %v5784 = vpack.c.bf16 %v5732, %v5728
        %v5785 = vpack.c.bf16 %v5737, %v5733
        %v5786 = vpack.c.bf16 %v5738, %v5734
        %v5787 = vpack.c.bf16 %v5739, %v5735
        %v5788 = vpack.c.bf16 %v5740, %v5736
        %v5789 = vpack.c.bf16 %v5745, %v5741
        %v5790 = vpack.c.bf16 %v5746, %v5742
        %v5791 = vpack.c.bf16 %v5747, %v5743
        %v5792 = vpack.c.bf16 %v5748, %v5744
        %v5793 = vpack.c.bf16 %v5753, %v5749
        %v5794 = vpack.c.bf16 %v5754, %v5750
        %v5795 = vpack.c.bf16 %v5755, %v5751
        %v5796 = vpack.c.bf16 %v5756, %v5752
        %v5797 = vpack.c.bf16 %v5761, %v5757
        %v5798 = vpack.c.bf16 %v5762, %v5758
        %v5799 = vpack.c.bf16 %v5763, %v5759
        %v5800 = vpack.c.bf16 %v5764, %v5760
        %v5801 = vpack.c.bf16 %v5769, %v5765
        %v5802 = vpack.c.bf16 %v5770, %v5766
        %v5803 = vpack.c.bf16 %v5771, %v5767
        %v5804 = vpack.c.bf16 %v5772, %v5768
        %v5805 = vld [vmem:[#allocation9] sm:$0xff]
        %v5806 = vld [vmem:[#allocation9 + $0x8] sm:$0xff]
        %v5807 = vld [vmem:[#allocation9 + $0x10] sm:$0xff]
        %v5808 = vld [vmem:[#allocation9 + $0x18] sm:$0xff]
        %v5809 = vld [vmem:[#allocation9 + $0x20] sm:$0xff]
        %v5810 = vld [vmem:[#allocation9 + $0x28] sm:$0xff]
        %v5811 = vld [vmem:[#allocation9 + $0x30] sm:$0xff]
        %v5812 = vld [vmem:[#allocation9 + $0x38] sm:$0xff]
        %v5813 = vld [vmem:[#allocation9 + $0x40] sm:$0xff]
        %v5814 = vld [vmem:[#allocation9 + $0x48] sm:$0xff]
        %v5815 = vld [vmem:[#allocation9 + $0x50] sm:$0xff]
        %v5816 = vld [vmem:[#allocation9 + $0x58] sm:$0xff]
        %v5817 = vld [vmem:[#allocation9 + $0x60] sm:$0xff]
        %v5818 = vld [vmem:[#allocation9 + $0x68] sm:$0xff]
        %v5819 = vld [vmem:[#allocation9 + $0x70] sm:$0xff]
        %v5820 = vld [vmem:[#allocation9 + $0x78] sm:$0xff]
        %v5821 = vld [vmem:[#allocation9 + $0x80] sm:$0xff]
        %v5822 = vld [vmem:[#allocation9 + $0x88] sm:$0xff]
        %v5823 = vld [vmem:[#allocation9 + $0x90] sm:$0xff]
        %v5824 = vld [vmem:[#allocation9 + $0x98] sm:$0xff]
        %v5825 = vld [vmem:[#allocation9 + $0xa0] sm:$0xff]
        %v5826 = vld [vmem:[#allocation9 + $0xa8] sm:$0xff]
        %v5827 = vld [vmem:[#allocation9 + $0xb0] sm:$0xff]
        %v5828 = vld [vmem:[#allocation9 + $0xb8] sm:$0xff]
        %v5829 = vld [vmem:[#allocation9 + $0xc0] sm:$0xff]
        %v5830 = vld [vmem:[#allocation9 + $0xc8] sm:$0xff]
        %v5831 = vld [vmem:[#allocation9 + $0xd0] sm:$0xff]
        %v5832 = vld [vmem:[#allocation9 + $0xd8] sm:$0xff]
        %v5833 = vld [vmem:[#allocation9 + $0xe0] sm:$0xff]
        %v5834 = vld [vmem:[#allocation9 + $0xe8] sm:$0xff]
        %v5835 = vld [vmem:[#allocation9 + $0xf0] sm:$0xff]
        %v5836 = vld [vmem:[#allocation9 + $0xf8] sm:$0xff]
        %v5837 = vld [vmem:[#allocation9 + $0x100] sm:$0xff]
        %v5838 = vld [vmem:[#allocation9 + $0x108] sm:$0xff]
        %v5839 = vld [vmem:[#allocation9 + $0x110] sm:$0xff]
        %v5840 = vld [vmem:[#allocation9 + $0x118] sm:$0xff]
        %v5841 = vld [vmem:[#allocation9 + $0x120] sm:$0xff]
        %v5842 = vld [vmem:[#allocation9 + $0x128] sm:$0xff]
        %v5843 = vld [vmem:[#allocation9 + $0x130] sm:$0xff]
        %v5844 = vld [vmem:[#allocation9 + $0x138] sm:$0xff]
        %v5845 = vld [vmem:[#allocation9 + $0x140] sm:$0xff]
        %v5846 = vld [vmem:[#allocation9 + $0x148] sm:$0xff]
        %v5847 = vld [vmem:[#allocation9 + $0x150] sm:$0xff]
        %v5848 = vld [vmem:[#allocation9 + $0x158] sm:$0xff]
        %v5849 = vld [vmem:[#allocation9 + $0x160] sm:$0xff]
        %v5850 = vld [vmem:[#allocation9 + $0x168] sm:$0xff]
        %v5851 = vld [vmem:[#allocation9 + $0x170] sm:$0xff]
        %v5852 = vld [vmem:[#allocation9 + $0x178] sm:$0xff]
        %v5853 = vld [vmem:[#allocation9 + $0x180] sm:$0xff]
        %v5854 = vld [vmem:[#allocation9 + $0x188] sm:$0xff]
        %v5855 = vld [vmem:[#allocation9 + $0x190] sm:$0xff]
        %v5856 = vld [vmem:[#allocation9 + $0x198] sm:$0xff]
        %v5857 = vld [vmem:[#allocation9 + $0x1a0] sm:$0xff]
        %v5858 = vld [vmem:[#allocation9 + $0x1a8] sm:$0xff]
        %v5859 = vld [vmem:[#allocation9 + $0x1b0] sm:$0xff]
        %v5860 = vld [vmem:[#allocation9 + $0x1b8] sm:$0xff]
        %v5861 = vld [vmem:[#allocation9 + $0x1c0] sm:$0xff]
        %v5862 = vld [vmem:[#allocation9 + $0x1c8] sm:$0xff]
        %v5863 = vld [vmem:[#allocation9 + $0x1d0] sm:$0xff]
        %v5864 = vld [vmem:[#allocation9 + $0x1d8] sm:$0xff]
        %v5865 = vld [vmem:[#allocation9 + $0x1e0] sm:$0xff]
        %v5866 = vld [vmem:[#allocation9 + $0x1e8] sm:$0xff]
        %v5867 = vld [vmem:[#allocation9 + $0x1f0] sm:$0xff]
        %v5868 = vld [vmem:[#allocation9 + $0x1f8] sm:$0xff]
        %v5869 = vld [vmem:[#allocation9 + $0x200] sm:$0xff]
        %v5870 = vld [vmem:[#allocation9 + $0x208] sm:$0xff]
        %v5871 = vld [vmem:[#allocation9 + $0x210] sm:$0xff]
        %v5872 = vld [vmem:[#allocation9 + $0x218] sm:$0xff]
        %v5873 = vld [vmem:[#allocation9 + $0x220] sm:$0xff]
        %v5874 = vld [vmem:[#allocation9 + $0x228] sm:$0xff]
        %v5875 = vld [vmem:[#allocation9 + $0x230] sm:$0xff]
        %v5876 = vld [vmem:[#allocation9 + $0x238] sm:$0xff]
        %v5877 = vld [vmem:[#allocation9 + $0x240] sm:$0xff]
        %v5878 = vld [vmem:[#allocation9 + $0x248] sm:$0xff]
        %v5879 = vld [vmem:[#allocation9 + $0x250] sm:$0xff]
        %v5880 = vld [vmem:[#allocation9 + $0x258] sm:$0xff]
        %v5881 = vld [vmem:[#allocation9 + $0x260] sm:$0xff]
        %v5882 = vld [vmem:[#allocation9 + $0x268] sm:$0xff]
        %v5883 = vld [vmem:[#allocation9 + $0x270] sm:$0xff]
        %v5884 = vld [vmem:[#allocation9 + $0x278] sm:$0xff]
        %v5885 = vld [vmem:[#allocation9 + $0x280] sm:$0xff]
        %v5886 = vld [vmem:[#allocation9 + $0x288] sm:$0xff]
        %v5887 = vld [vmem:[#allocation9 + $0x290] sm:$0xff]
        %v5888 = vld [vmem:[#allocation9 + $0x298] sm:$0xff]
        %v5889 = vld [vmem:[#allocation9 + $0x2a0] sm:$0xff]
        %v5890 = vld [vmem:[#allocation9 + $0x2a8] sm:$0xff]
        %v5891 = vld [vmem:[#allocation9 + $0x2b0] sm:$0xff]
        %v5892 = vld [vmem:[#allocation9 + $0x2b8] sm:$0xff]
        %v5893 = vld [vmem:[#allocation9 + $0x2c0] sm:$0xff]
        %v5894 = vld [vmem:[#allocation9 + $0x2c8] sm:$0xff]
        %v5895 = vld [vmem:[#allocation9 + $0x2d0] sm:$0xff]
        %v5896 = vld [vmem:[#allocation9 + $0x2d8] sm:$0xff]
        %v5897 = vld [vmem:[#allocation9 + $0x2e0] sm:$0xff]
        %v5898 = vld [vmem:[#allocation9 + $0x2e8] sm:$0xff]
        %v5899 = vld [vmem:[#allocation9 + $0x2f0] sm:$0xff]
        %v5900 = vld [vmem:[#allocation9 + $0x2f8] sm:$0xff]
        %v5901 = vld [vmem:[#allocation9 + $0x300] sm:$0xff]
        %v5902 = vld [vmem:[#allocation9 + $0x308] sm:$0xff]
        %v5903 = vld [vmem:[#allocation9 + $0x310] sm:$0xff]
        %v5904 = vld [vmem:[#allocation9 + $0x318] sm:$0xff]
        %v5905 = vld [vmem:[#allocation9 + $0x320] sm:$0xff]
        %v5906 = vld [vmem:[#allocation9 + $0x328] sm:$0xff]
        %v5907 = vld [vmem:[#allocation9 + $0x330] sm:$0xff]
        %v5908 = vld [vmem:[#allocation9 + $0x338] sm:$0xff]
        %v5909 = vld [vmem:[#allocation9 + $0x340] sm:$0xff]
        %v5910 = vld [vmem:[#allocation9 + $0x348] sm:$0xff]
        %v5911 = vld [vmem:[#allocation9 + $0x350] sm:$0xff]
        %v5912 = vld [vmem:[#allocation9 + $0x358] sm:$0xff]
        %v5913 = vld [vmem:[#allocation9 + $0x360] sm:$0xff]
        %v5914 = vld [vmem:[#allocation9 + $0x368] sm:$0xff]
        %v5915 = vld [vmem:[#allocation9 + $0x370] sm:$0xff]
        %v5916 = vld [vmem:[#allocation9 + $0x378] sm:$0xff]
        %v5917 = vld [vmem:[#allocation9 + $0x380] sm:$0xff]
        %v5918 = vld [vmem:[#allocation9 + $0x388] sm:$0xff]
        %v5919 = vld [vmem:[#allocation9 + $0x390] sm:$0xff]
        %v5920 = vld [vmem:[#allocation9 + $0x398] sm:$0xff]
        %v5921 = vld [vmem:[#allocation9 + $0x3a0] sm:$0xff]
        %v5922 = vld [vmem:[#allocation9 + $0x3a8] sm:$0xff]
        %v5923 = vld [vmem:[#allocation9 + $0x3b0] sm:$0xff]
        %v5924 = vld [vmem:[#allocation9 + $0x3b8] sm:$0xff]
        %v5925 = vld [vmem:[#allocation9 + $0x3c0] sm:$0xff]
        %v5926 = vld [vmem:[#allocation9 + $0x3c8] sm:$0xff]
        %v5927 = vld [vmem:[#allocation9 + $0x3d0] sm:$0xff]
        %v5928 = vld [vmem:[#allocation9 + $0x3d8] sm:$0xff]
        %v5929 = vld [vmem:[#allocation9 + $0x3e0] sm:$0xff]
        %v5930 = vld [vmem:[#allocation9 + $0x3e8] sm:$0xff]
        %v5931 = vld [vmem:[#allocation9 + $0x3f0] sm:$0xff]
        %v5932 = vld [vmem:[#allocation9 + $0x3f8] sm:$0xff]
        %s5933 = scalar_lea.vmem [#allocation12], 3
        %v5934 = vld [vmem:[%s5933] ss:$8 sm:$0xf]
        %v5936 = vlaneseq
        %v5937 = vshrl.u32 %v5936, 7
        %v5938 = vsub.s32 0, %v5937
        %v5939 = vrot.slane %v5934, %v5938
        %v5940 = vlaneseq
        %v5941 = vshrl.u32 %v5940, 7
        %v5942 = vsub.s32 1, %v5941
        %v5943 = vrot.slane %v5934, %v5942
        %v5944 = vlaneseq
        %v5945 = vshrl.u32 %v5944, 7
        %v5946 = vsub.s32 2, %v5945
        %v5947 = vrot.slane %v5934, %v5946
        %v5948 = vlaneseq
        %v5949 = vshrl.u32 %v5948, 7
        %v5950 = vsub.s32 3, %v5949
        %v5951 = vrot.slane %v5934, %v5950
        %v6084 = vunpack.c.l.b16 %v5805
        %v6085 = vunpack.c.h.b16 %v5805
        %v6086 = vunpack.c.l.b16 %v5806
        %v6087 = vunpack.c.h.b16 %v5806
        %v6088 = vunpack.c.l.b16 %v5807
        %v6089 = vunpack.c.h.b16 %v5807
        %v6090 = vunpack.c.l.b16 %v5808
        %v6091 = vunpack.c.h.b16 %v5808
        %v6092 = vunpack.c.l.b16 %v5809
        %v6093 = vunpack.c.h.b16 %v5809
        %v6094 = vunpack.c.l.b16 %v5810
        %v6095 = vunpack.c.h.b16 %v5810
        %v6096 = vunpack.c.l.b16 %v5811
        %v6097 = vunpack.c.h.b16 %v5811
        %v6098 = vunpack.c.l.b16 %v5812
        %v6099 = vunpack.c.h.b16 %v5812
        %v6100 = vunpack.c.l.b16 %v5813
        %v6101 = vunpack.c.h.b16 %v5813
        %v6102 = vunpack.c.l.b16 %v5814
        %v6103 = vunpack.c.h.b16 %v5814
        %v6104 = vunpack.c.l.b16 %v5815
        %v6105 = vunpack.c.h.b16 %v5815
        %v6106 = vunpack.c.l.b16 %v5816
        %v6107 = vunpack.c.h.b16 %v5816
        %v6108 = vunpack.c.l.b16 %v5817
        %v6109 = vunpack.c.h.b16 %v5817
        %v6110 = vunpack.c.l.b16 %v5818
        %v6111 = vunpack.c.h.b16 %v5818
        %v6112 = vunpack.c.l.b16 %v5819
        %v6113 = vunpack.c.h.b16 %v5819
        %v6114 = vunpack.c.l.b16 %v5820
        %v6115 = vunpack.c.h.b16 %v5820
        %v6116 = vunpack.c.l.b16 %v5821
        %v6117 = vunpack.c.h.b16 %v5821
        %v6118 = vunpack.c.l.b16 %v5822
        %v6119 = vunpack.c.h.b16 %v5822
        %v6120 = vunpack.c.l.b16 %v5823
        %v6121 = vunpack.c.h.b16 %v5823
        %v6122 = vunpack.c.l.b16 %v5824
        %v6123 = vunpack.c.h.b16 %v5824
        %v6124 = vunpack.c.l.b16 %v5825
        %v6125 = vunpack.c.h.b16 %v5825
        %v6126 = vunpack.c.l.b16 %v5826
        %v6127 = vunpack.c.h.b16 %v5826
        %v6128 = vunpack.c.l.b16 %v5827
        %v6129 = vunpack.c.h.b16 %v5827
        %v6130 = vunpack.c.l.b16 %v5828
        %v6131 = vunpack.c.h.b16 %v5828
        %v6132 = vunpack.c.l.b16 %v5829
        %v6133 = vunpack.c.h.b16 %v5829
        %v6134 = vunpack.c.l.b16 %v5830
        %v6135 = vunpack.c.h.b16 %v5830
        %v6136 = vunpack.c.l.b16 %v5831
        %v6137 = vunpack.c.h.b16 %v5831
        %v6138 = vunpack.c.l.b16 %v5832
        %v6139 = vunpack.c.h.b16 %v5832
        %v6140 = vunpack.c.l.b16 %v5833
        %v6141 = vunpack.c.h.b16 %v5833
        %v6142 = vunpack.c.l.b16 %v5834
        %v6143 = vunpack.c.h.b16 %v5834
        %v6144 = vunpack.c.l.b16 %v5835
        %v6145 = vunpack.c.h.b16 %v5835
        %v6146 = vunpack.c.l.b16 %v5836
        %v6147 = vunpack.c.h.b16 %v5836
        %v6148 = vunpack.c.l.b16 %v5837
        %v6149 = vunpack.c.h.b16 %v5837
        %v6150 = vunpack.c.l.b16 %v5838
        %v6151 = vunpack.c.h.b16 %v5838
        %v6152 = vunpack.c.l.b16 %v5839
        %v6153 = vunpack.c.h.b16 %v5839
        %v6154 = vunpack.c.l.b16 %v5840
        %v6155 = vunpack.c.h.b16 %v5840
        %v6156 = vunpack.c.l.b16 %v5841
        %v6157 = vunpack.c.h.b16 %v5841
        %v6158 = vunpack.c.l.b16 %v5842
        %v6159 = vunpack.c.h.b16 %v5842
        %v6160 = vunpack.c.l.b16 %v5843
        %v6161 = vunpack.c.h.b16 %v5843
        %v6162 = vunpack.c.l.b16 %v5844
        %v6163 = vunpack.c.h.b16 %v5844
        %v6164 = vunpack.c.l.b16 %v5845
        %v6165 = vunpack.c.h.b16 %v5845
        %v6166 = vunpack.c.l.b16 %v5846
        %v6167 = vunpack.c.h.b16 %v5846
        %v6168 = vunpack.c.l.b16 %v5847
        %v6169 = vunpack.c.h.b16 %v5847
        %v6170 = vunpack.c.l.b16 %v5848
        %v6171 = vunpack.c.h.b16 %v5848
        %v6172 = vunpack.c.l.b16 %v5849
        %v6173 = vunpack.c.h.b16 %v5849
        %v6174 = vunpack.c.l.b16 %v5850
        %v6175 = vunpack.c.h.b16 %v5850
        %v6176 = vunpack.c.l.b16 %v5851
        %v6177 = vunpack.c.h.b16 %v5851
        %v6178 = vunpack.c.l.b16 %v5852
        %v6179 = vunpack.c.h.b16 %v5852
        %v6180 = vunpack.c.l.b16 %v5853
        %v6181 = vunpack.c.h.b16 %v5853
        %v6182 = vunpack.c.l.b16 %v5854
        %v6183 = vunpack.c.h.b16 %v5854
        %v6184 = vunpack.c.l.b16 %v5855
        %v6185 = vunpack.c.h.b16 %v5855
        %v6186 = vunpack.c.l.b16 %v5856
        %v6187 = vunpack.c.h.b16 %v5856
        %v6188 = vunpack.c.l.b16 %v5857
        %v6189 = vunpack.c.h.b16 %v5857
        %v6190 = vunpack.c.l.b16 %v5858
        %v6191 = vunpack.c.h.b16 %v5858
        %v6192 = vunpack.c.l.b16 %v5859
        %v6193 = vunpack.c.h.b16 %v5859
        %v6194 = vunpack.c.l.b16 %v5860
        %v6195 = vunpack.c.h.b16 %v5860
        %v6196 = vunpack.c.l.b16 %v5861
        %v6197 = vunpack.c.h.b16 %v5861
        %v6198 = vunpack.c.l.b16 %v5862
        %v6199 = vunpack.c.h.b16 %v5862
        %v6200 = vunpack.c.l.b16 %v5863
        %v6201 = vunpack.c.h.b16 %v5863
        %v6202 = vunpack.c.l.b16 %v5864
        %v6203 = vunpack.c.h.b16 %v5864
        %v6204 = vunpack.c.l.b16 %v5865
        %v6205 = vunpack.c.h.b16 %v5865
        %v6206 = vunpack.c.l.b16 %v5866
        %v6207 = vunpack.c.h.b16 %v5866
        %v6208 = vunpack.c.l.b16 %v5867
        %v6209 = vunpack.c.h.b16 %v5867
        %v6210 = vunpack.c.l.b16 %v5868
        %v6211 = vunpack.c.h.b16 %v5868
        %v6212 = vunpack.c.l.b16 %v5869
        %v6213 = vunpack.c.h.b16 %v5869
        %v6214 = vunpack.c.l.b16 %v5870
        %v6215 = vunpack.c.h.b16 %v5870
        %v6216 = vunpack.c.l.b16 %v5871
        %v6217 = vunpack.c.h.b16 %v5871
        %v6218 = vunpack.c.l.b16 %v5872
        %v6219 = vunpack.c.h.b16 %v5872
        %v6220 = vunpack.c.l.b16 %v5873
        %v6221 = vunpack.c.h.b16 %v5873
        %v6222 = vunpack.c.l.b16 %v5874
        %v6223 = vunpack.c.h.b16 %v5874
        %v6224 = vunpack.c.l.b16 %v5875
        %v6225 = vunpack.c.h.b16 %v5875
        %v6226 = vunpack.c.l.b16 %v5876
        %v6227 = vunpack.c.h.b16 %v5876
        %v6228 = vunpack.c.l.b16 %v5877
        %v6229 = vunpack.c.h.b16 %v5877
        %v6230 = vunpack.c.l.b16 %v5878
        %v6231 = vunpack.c.h.b16 %v5878
        %v6232 = vunpack.c.l.b16 %v5879
        %v6233 = vunpack.c.h.b16 %v5879
        %v6234 = vunpack.c.l.b16 %v5880
        %v6235 = vunpack.c.h.b16 %v5880
        %v6236 = vunpack.c.l.b16 %v5881
        %v6237 = vunpack.c.h.b16 %v5881
        %v6238 = vunpack.c.l.b16 %v5882
        %v6239 = vunpack.c.h.b16 %v5882
        %v6240 = vunpack.c.l.b16 %v5883
        %v6241 = vunpack.c.h.b16 %v5883
        %v6242 = vunpack.c.l.b16 %v5884
        %v6243 = vunpack.c.h.b16 %v5884
        %v6244 = vunpack.c.l.b16 %v5885
        %v6245 = vunpack.c.h.b16 %v5885
        %v6246 = vunpack.c.l.b16 %v5886
        %v6247 = vunpack.c.h.b16 %v5886
        %v6248 = vunpack.c.l.b16 %v5887
        %v6249 = vunpack.c.h.b16 %v5887
        %v6250 = vunpack.c.l.b16 %v5888
        %v6251 = vunpack.c.h.b16 %v5888
        %v6252 = vunpack.c.l.b16 %v5889
        %v6253 = vunpack.c.h.b16 %v5889
        %v6254 = vunpack.c.l.b16 %v5890
        %v6255 = vunpack.c.h.b16 %v5890
        %v6256 = vunpack.c.l.b16 %v5891
        %v6257 = vunpack.c.h.b16 %v5891
        %v6258 = vunpack.c.l.b16 %v5892
        %v6259 = vunpack.c.h.b16 %v5892
        %v6260 = vunpack.c.l.b16 %v5893
        %v6261 = vunpack.c.h.b16 %v5893
        %v6262 = vunpack.c.l.b16 %v5894
        %v6263 = vunpack.c.h.b16 %v5894
        %v6264 = vunpack.c.l.b16 %v5895
        %v6265 = vunpack.c.h.b16 %v5895
        %v6266 = vunpack.c.l.b16 %v5896
        %v6267 = vunpack.c.h.b16 %v5896
        %v6268 = vunpack.c.l.b16 %v5897
        %v6269 = vunpack.c.h.b16 %v5897
        %v6270 = vunpack.c.l.b16 %v5898
        %v6271 = vunpack.c.h.b16 %v5898
        %v6272 = vunpack.c.l.b16 %v5899
        %v6273 = vunpack.c.h.b16 %v5899
        %v6274 = vunpack.c.l.b16 %v5900
        %v6275 = vunpack.c.h.b16 %v5900
        %v6276 = vunpack.c.l.b16 %v5901
        %v6277 = vunpack.c.h.b16 %v5901
        %v6278 = vunpack.c.l.b16 %v5902
        %v6279 = vunpack.c.h.b16 %v5902
        %v6280 = vunpack.c.l.b16 %v5903
        %v6281 = vunpack.c.h.b16 %v5903
        %v6282 = vunpack.c.l.b16 %v5904
        %v6283 = vunpack.c.h.b16 %v5904
        %v6284 = vunpack.c.l.b16 %v5905
        %v6285 = vunpack.c.h.b16 %v5905
        %v6286 = vunpack.c.l.b16 %v5906
        %v6287 = vunpack.c.h.b16 %v5906
        %v6288 = vunpack.c.l.b16 %v5907
        %v6289 = vunpack.c.h.b16 %v5907
        %v6290 = vunpack.c.l.b16 %v5908
        %v6291 = vunpack.c.h.b16 %v5908
        %v6292 = vunpack.c.l.b16 %v5909
        %v6293 = vunpack.c.h.b16 %v5909
        %v6294 = vunpack.c.l.b16 %v5910
        %v6295 = vunpack.c.h.b16 %v5910
        %v6296 = vunpack.c.l.b16 %v5911
        %v6297 = vunpack.c.h.b16 %v5911
        %v6298 = vunpack.c.l.b16 %v5912
        %v6299 = vunpack.c.h.b16 %v5912
        %v6300 = vunpack.c.l.b16 %v5913
        %v6301 = vunpack.c.h.b16 %v5913
        %v6302 = vunpack.c.l.b16 %v5914
        %v6303 = vunpack.c.h.b16 %v5914
        %v6304 = vunpack.c.l.b16 %v5915
        %v6305 = vunpack.c.h.b16 %v5915
        %v6306 = vunpack.c.l.b16 %v5916
        %v6307 = vunpack.c.h.b16 %v5916
        %v6308 = vunpack.c.l.b16 %v5917
        %v6309 = vunpack.c.h.b16 %v5917
        %v6310 = vunpack.c.l.b16 %v5918
        %v6311 = vunpack.c.h.b16 %v5918
        %v6312 = vunpack.c.l.b16 %v5919
        %v6313 = vunpack.c.h.b16 %v5919
        %v6314 = vunpack.c.l.b16 %v5920
        %v6315 = vunpack.c.h.b16 %v5920
        %v6316 = vunpack.c.l.b16 %v5921
        %v6317 = vunpack.c.h.b16 %v5921
        %v6318 = vunpack.c.l.b16 %v5922
        %v6319 = vunpack.c.h.b16 %v5922
        %v6320 = vunpack.c.l.b16 %v5923
        %v6321 = vunpack.c.h.b16 %v5923
        %v6322 = vunpack.c.l.b16 %v5924
        %v6323 = vunpack.c.h.b16 %v5924
        %v6324 = vunpack.c.l.b16 %v5925
        %v6325 = vunpack.c.h.b16 %v5925
        %v6326 = vunpack.c.l.b16 %v5926
        %v6327 = vunpack.c.h.b16 %v5926
        %v6328 = vunpack.c.l.b16 %v5927
        %v6329 = vunpack.c.h.b16 %v5927
        %v6330 = vunpack.c.l.b16 %v5928
        %v6331 = vunpack.c.h.b16 %v5928
        %v6332 = vunpack.c.l.b16 %v5929
        %v6333 = vunpack.c.h.b16 %v5929
        %v6334 = vunpack.c.l.b16 %v5930
        %v6335 = vunpack.c.h.b16 %v5930
        %v6336 = vunpack.c.l.b16 %v5931
        %v6337 = vunpack.c.h.b16 %v5931
        %v6338 = vunpack.c.l.b16 %v5932
        %v6339 = vunpack.c.h.b16 %v5932
        %v6340 = vpack.c.b16 %v6088, %v6084
        %v6341 = vpack.c.b16 %v6089, %v6085
        %v6342 = vpack.c.b16 %v6090, %v6086
        %v6343 = vpack.c.b16 %v6091, %v6087
        %v6344 = vpack.c.b16 %v6096, %v6092
        %v6345 = vpack.c.b16 %v6097, %v6093
        %v6346 = vpack.c.b16 %v6098, %v6094
        %v6347 = vpack.c.b16 %v6099, %v6095
        %v6348 = vpack.c.b16 %v6104, %v6100
        %v6349 = vpack.c.b16 %v6105, %v6101
        %v6350 = vpack.c.b16 %v6106, %v6102
        %v6351 = vpack.c.b16 %v6107, %v6103
        %v6352 = vpack.c.b16 %v6112, %v6108
        %v6353 = vpack.c.b16 %v6113, %v6109
        %v6354 = vpack.c.b16 %v6114, %v6110
        %v6355 = vpack.c.b16 %v6115, %v6111
        %v6356 = vpack.c.b16 %v6120, %v6116
        %v6357 = vpack.c.b16 %v6121, %v6117
        %v6358 = vpack.c.b16 %v6122, %v6118
        %v6359 = vpack.c.b16 %v6123, %v6119
        %v6360 = vpack.c.b16 %v6128, %v6124
        %v6361 = vpack.c.b16 %v6129, %v6125
        %v6362 = vpack.c.b16 %v6130, %v6126
        %v6363 = vpack.c.b16 %v6131, %v6127
        %v6364 = vpack.c.b16 %v6136, %v6132
        %v6365 = vpack.c.b16 %v6137, %v6133
        %v6366 = vpack.c.b16 %v6138, %v6134
        %v6367 = vpack.c.b16 %v6139, %v6135
        %v6368 = vpack.c.b16 %v6144, %v6140
        %v6369 = vpack.c.b16 %v6145, %v6141
        %v6370 = vpack.c.b16 %v6146, %v6142
        %v6371 = vpack.c.b16 %v6147, %v6143
        %v6372 = vpack.c.b16 %v6152, %v6148
        %v6373 = vpack.c.b16 %v6153, %v6149
        %v6374 = vpack.c.b16 %v6154, %v6150
        %v6375 = vpack.c.b16 %v6155, %v6151
        %v6376 = vpack.c.b16 %v6160, %v6156
        %v6377 = vpack.c.b16 %v6161, %v6157
        %v6378 = vpack.c.b16 %v6162, %v6158
        %v6379 = vpack.c.b16 %v6163, %v6159
        %v6380 = vpack.c.b16 %v6168, %v6164
        %v6381 = vpack.c.b16 %v6169, %v6165
        %v6382 = vpack.c.b16 %v6170, %v6166
        %v6383 = vpack.c.b16 %v6171, %v6167
        %v6384 = vpack.c.b16 %v6176, %v6172
        %v6385 = vpack.c.b16 %v6177, %v6173
        %v6386 = vpack.c.b16 %v6178, %v6174
        %v6387 = vpack.c.b16 %v6179, %v6175
        %v6388 = vpack.c.b16 %v6184, %v6180
        %v6389 = vpack.c.b16 %v6185, %v6181
        %v6390 = vpack.c.b16 %v6186, %v6182
        %v6391 = vpack.c.b16 %v6187, %v6183
        %v6392 = vpack.c.b16 %v6192, %v6188
        %v6393 = vpack.c.b16 %v6193, %v6189
        %v6394 = vpack.c.b16 %v6194, %v6190
        %v6395 = vpack.c.b16 %v6195, %v6191
        %v6396 = vpack.c.b16 %v6200, %v6196
        %v6397 = vpack.c.b16 %v6201, %v6197
        %v6398 = vpack.c.b16 %v6202, %v6198
        %v6399 = vpack.c.b16 %v6203, %v6199
        %v6400 = vpack.c.b16 %v6208, %v6204
        %v6401 = vpack.c.b16 %v6209, %v6205
        %v6402 = vpack.c.b16 %v6210, %v6206
        %v6403 = vpack.c.b16 %v6211, %v6207
        %v6404 = vpack.c.b16 %v6216, %v6212
        %v6405 = vpack.c.b16 %v6217, %v6213
        %v6406 = vpack.c.b16 %v6218, %v6214
        %v6407 = vpack.c.b16 %v6219, %v6215
        %v6408 = vpack.c.b16 %v6224, %v6220
        %v6409 = vpack.c.b16 %v6225, %v6221
        %v6410 = vpack.c.b16 %v6226, %v6222
        %v6411 = vpack.c.b16 %v6227, %v6223
        %v6412 = vpack.c.b16 %v6232, %v6228
        %v6413 = vpack.c.b16 %v6233, %v6229
        %v6414 = vpack.c.b16 %v6234, %v6230
        %v6415 = vpack.c.b16 %v6235, %v6231
        %v6416 = vpack.c.b16 %v6240, %v6236
        %v6417 = vpack.c.b16 %v6241, %v6237
        %v6418 = vpack.c.b16 %v6242, %v6238
        %v6419 = vpack.c.b16 %v6243, %v6239
        %v6420 = vpack.c.b16 %v6248, %v6244
        %v6421 = vpack.c.b16 %v6249, %v6245
        %v6422 = vpack.c.b16 %v6250, %v6246
        %v6423 = vpack.c.b16 %v6251, %v6247
        %v6424 = vpack.c.b16 %v6256, %v6252
        %v6425 = vpack.c.b16 %v6257, %v6253
        %v6426 = vpack.c.b16 %v6258, %v6254
        %v6427 = vpack.c.b16 %v6259, %v6255
        %v6428 = vpack.c.b16 %v6264, %v6260
        %v6429 = vpack.c.b16 %v6265, %v6261
        %v6430 = vpack.c.b16 %v6266, %v6262
        %v6431 = vpack.c.b16 %v6267, %v6263
        %v6432 = vpack.c.b16 %v6272, %v6268
        %v6433 = vpack.c.b16 %v6273, %v6269
        %v6434 = vpack.c.b16 %v6274, %v6270
        %v6435 = vpack.c.b16 %v6275, %v6271
        %v6436 = vpack.c.b16 %v6280, %v6276
        %v6437 = vpack.c.b16 %v6281, %v6277
        %v6438 = vpack.c.b16 %v6282, %v6278
        %v6439 = vpack.c.b16 %v6283, %v6279
        %v6440 = vpack.c.b16 %v6288, %v6284
        %v6441 = vpack.c.b16 %v6289, %v6285
        %v6442 = vpack.c.b16 %v6290, %v6286
        %v6443 = vpack.c.b16 %v6291, %v6287
        %v6444 = vpack.c.b16 %v6296, %v6292
        %v6445 = vpack.c.b16 %v6297, %v6293
        %v6446 = vpack.c.b16 %v6298, %v6294
        %v6447 = vpack.c.b16 %v6299, %v6295
        %v6448 = vpack.c.b16 %v6304, %v6300
        %v6449 = vpack.c.b16 %v6305, %v6301
        %v6450 = vpack.c.b16 %v6306, %v6302
        %v6451 = vpack.c.b16 %v6307, %v6303
        %v6452 = vpack.c.b16 %v6312, %v6308
        %v6453 = vpack.c.b16 %v6313, %v6309
        %v6454 = vpack.c.b16 %v6314, %v6310
        %v6455 = vpack.c.b16 %v6315, %v6311
        %v6456 = vpack.c.b16 %v6320, %v6316
        %v6457 = vpack.c.b16 %v6321, %v6317
        %v6458 = vpack.c.b16 %v6322, %v6318
        %v6459 = vpack.c.b16 %v6323, %v6319
        %v6460 = vpack.c.b16 %v6328, %v6324
        %v6461 = vpack.c.b16 %v6329, %v6325
        %v6462 = vpack.c.b16 %v6330, %v6326
        %v6463 = vpack.c.b16 %v6331, %v6327
        %v6464 = vpack.c.b16 %v6336, %v6332
        %v6465 = vpack.c.b16 %v6337, %v6333
        %v6466 = vpack.c.b16 %v6338, %v6334
        %v6467 = vpack.c.b16 %v6339, %v6335
        %6596 = vmatprep.subr.bf16.mxu0 %v6369
        %6597 = vmatpush1.bf16.msra.mxu0 %v6368
        %6598 = vmatprep.subr.bf16.mxu0 %v6365
        %6599 = vmatpush1.bf16.msra.mxu0 %v6364
        %6600 = vmatprep.subr.bf16.mxu0 %v6361
        %6601 = vmatpush1.bf16.msra.mxu0 %v6360
        %6602 = vmatprep.subr.bf16.mxu0 %v6357
        %6603 = vmatpush1.bf16.msra.mxu0 %v6356
        %6604 = vmatprep.subr.bf16.mxu0 %v6353
        %6605 = vmatpush1.bf16.msra.mxu0 %v6352
        %6606 = vmatprep.subr.bf16.mxu0 %v6349
        %6607 = vmatpush1.bf16.msra.mxu0 %v6348
        %6608 = vmatprep.subr.bf16.mxu0 %v6345
        %6609 = vmatpush1.bf16.msra.mxu0 %v6344
        %6610 = vmatprep.subr.bf16.mxu0 %v6341
        %6611 = vmatpush1.bf16.msra.mxu0 %v6340
        %6612 = vmatprep.subr.bf16.mxu0 %v6401
        %6613 = vmatpush2.bf16.msra.mxu0 %v6400
        %6614 = vmatprep.subr.bf16.mxu0 %v6397
        %6615 = vmatpush2.bf16.msra.mxu0 %v6396
        %6616 = vmatprep.subr.bf16.mxu0 %v6393
        %6617 = vmatpush2.bf16.msra.mxu0 %v6392
        %6618 = vmatprep.subr.bf16.mxu0 %v6389
        %6619 = vmatpush2.bf16.msra.mxu0 %v6388
        %6620 = vmatprep.subr.bf16.mxu0 %v6385
        %6621 = vmatpush2.bf16.msra.mxu0 %v6384
        %6622 = vmatprep.subr.bf16.mxu0 %v6381
        %6623 = vmatpush2.bf16.msra.mxu0 %v6380
        %6624 = vmatprep.subr.bf16.mxu0 %v6377
        %6625 = vmatpush2.bf16.msra.mxu0 %v6376
        %6626 = vmatprep.subr.bf16.mxu0 %v6373
        %6627 = vmatpush2.bf16.msra.mxu0 %v6372
        %6628 = vmatprep.mubr.bf16.mxu0 %v5774
        %6629 = vmatmul.mubr.bf16.gmra.mxu0 %v5773
        %v6630 = vpop.f32.mrf.mxu0
        %v6631 = vadd.f32 %v5939, %v6630
        %v6632 = vpop.f32.mrf.mxu0
        %v6633 = vadd.f32 %v5943, %v6632
        %v6634 = vpop.f32.mrf.mxu0
        %v6635 = vadd.f32 %v5939, %v6634
        %v6636 = vpop.f32.mrf.mxu0
        %v6637 = vadd.f32 %v5943, %v6636
        %6638 = vmatprep.mubr.bf16.mxu0 %v5778
        %6639 = vmatmul.mubr.bf16.gmra.mxu0 %v5777
        %v6640 = vpop.f32.mrf.mxu0
        %v6641 = vadd.f32 %v5939, %v6640
        %v6642 = vpop.f32.mrf.mxu0
        %v6643 = vadd.f32 %v5943, %v6642
        %v6644 = vpop.f32.mrf.mxu0
        %v6645 = vadd.f32 %v5939, %v6644
        %v6646 = vpop.f32.mrf.mxu0
        %v6647 = vadd.f32 %v5943, %v6646
        %6648 = vmatprep.mubr.bf16.mxu0 %v5782
        %6649 = vmatmul.mubr.bf16.gmra.mxu0 %v5781
        %v6650 = vpop.f32.mrf.mxu0
        %v6651 = vadd.f32 %v5939, %v6650
        %v6652 = vpop.f32.mrf.mxu0
        %v6653 = vadd.f32 %v5943, %v6652
        %v6654 = vpop.f32.mrf.mxu0
        %v6655 = vadd.f32 %v5939, %v6654
        %v6656 = vpop.f32.mrf.mxu0
        %v6657 = vadd.f32 %v5943, %v6656
        %6658 = vmatprep.mubr.bf16.mxu0 %v5786
        %6659 = vmatmul.mubr.bf16.gmra.mxu0 %v5785
        %v6660 = vpop.f32.mrf.mxu0
        %v6661 = vadd.f32 %v5939, %v6660
        %v6662 = vpop.f32.mrf.mxu0
        %v6663 = vadd.f32 %v5943, %v6662
        %v6664 = vpop.f32.mrf.mxu0
        %v6665 = vadd.f32 %v5939, %v6664
        %v6666 = vpop.f32.mrf.mxu0
        %v6667 = vadd.f32 %v5943, %v6666
        %6668 = vmatprep.mubr.bf16.mxu0 %v5790
        %6669 = vmatmul.mubr.bf16.gmra.mxu0 %v5789
        %v6670 = vpop.f32.mrf.mxu0
        %v6671 = vadd.f32 %v5939, %v6670
        %v6672 = vpop.f32.mrf.mxu0
        %v6673 = vadd.f32 %v5943, %v6672
        %v6674 = vpop.f32.mrf.mxu0
        %v6675 = vadd.f32 %v5939, %v6674
        %v6676 = vpop.f32.mrf.mxu0
        %v6677 = vadd.f32 %v5943, %v6676
        %6678 = vmatprep.mubr.bf16.mxu0 %v5794
        %6679 = vmatmul.mubr.bf16.gmra.mxu0 %v5793
        %v6680 = vpop.f32.mrf.mxu0
        %v6681 = vadd.f32 %v5939, %v6680
        %v6682 = vpop.f32.mrf.mxu0
        %v6683 = vadd.f32 %v5943, %v6682
        %v6684 = vpop.f32.mrf.mxu0
        %v6685 = vadd.f32 %v5939, %v6684
        %v6686 = vpop.f32.mrf.mxu0
        %v6687 = vadd.f32 %v5943, %v6686
        %6688 = vmatprep.mubr.bf16.mxu0 %v5798
        %6689 = vmatmul.mubr.bf16.gmra.mxu0 %v5797
        %v6690 = vpop.f32.mrf.mxu0
        %v6691 = vadd.f32 %v5939, %v6690
        %v6692 = vpop.f32.mrf.mxu0
        %v6693 = vadd.f32 %v5943, %v6692
        %v6694 = vpop.f32.mrf.mxu0
        %v6695 = vadd.f32 %v5939, %v6694
        %v6696 = vpop.f32.mrf.mxu0
        %v6697 = vadd.f32 %v5943, %v6696
        %6698 = vmatprep.mubr.bf16.mxu0 %v5802
        %6699 = vmatmul.mubr.bf16.gmra.mxu0 %v5801
        %v6700 = vpop.f32.mrf.mxu0
        %v6701 = vadd.f32 %v5939, %v6700
        %v6702 = vpop.f32.mrf.mxu0
        %v6703 = vadd.f32 %v5943, %v6702
        %v6704 = vpop.f32.mrf.mxu0
        %v6705 = vadd.f32 %v5939, %v6704
        %v6706 = vpop.f32.mrf.mxu0
        %v6707 = vadd.f32 %v5943, %v6706
        %6708 = vdwg.mxu0
        %6709 = vmatprep.subr.bf16.mxu0 %v6433
        %6710 = vmatpush1.bf16.msra.mxu0 %v6432
        %6711 = vmatprep.subr.bf16.mxu0 %v6429
        %6712 = vmatpush1.bf16.msra.mxu0 %v6428
        %6713 = vmatprep.subr.bf16.mxu0 %v6425
        %6714 = vmatpush1.bf16.msra.mxu0 %v6424
        %6715 = vmatprep.subr.bf16.mxu0 %v6421
        %6716 = vmatpush1.bf16.msra.mxu0 %v6420
        %6717 = vmatprep.subr.bf16.mxu0 %v6417
        %6718 = vmatpush1.bf16.msra.mxu0 %v6416
        %6719 = vmatprep.subr.bf16.mxu0 %v6413
        %6720 = vmatpush1.bf16.msra.mxu0 %v6412
        %6721 = vmatprep.subr.bf16.mxu0 %v6409
        %6722 = vmatpush1.bf16.msra.mxu0 %v6408
        %6723 = vmatprep.subr.bf16.mxu0 %v6405
        %6724 = vmatpush1.bf16.msra.mxu0 %v6404
        %6725 = vmatprep.subr.bf16.mxu0 %v6465
        %6726 = vmatpush2.bf16.msra.mxu0 %v6464
        %6727 = vmatprep.subr.bf16.mxu0 %v6461
        %6728 = vmatpush2.bf16.msra.mxu0 %v6460
        %6729 = vmatprep.subr.bf16.mxu0 %v6457
        %6730 = vmatpush2.bf16.msra.mxu0 %v6456
        %6731 = vmatprep.subr.bf16.mxu0 %v6453
        %6732 = vmatpush2.bf16.msra.mxu0 %v6452
        %6733 = vmatprep.subr.bf16.mxu0 %v6449
        %6734 = vmatpush2.bf16.msra.mxu0 %v6448
        %6735 = vmatprep.subr.bf16.mxu0 %v6445
        %6736 = vmatpush2.bf16.msra.mxu0 %v6444
        %6737 = vmatprep.subr.bf16.mxu0 %v6441
        %6738 = vmatpush2.bf16.msra.mxu0 %v6440
        %6739 = vmatprep.subr.bf16.mxu0 %v6437
        %6740 = vmatpush2.bf16.msra.mxu0 %v6436
        %6741 = vmatprep.mubr.bf16.mxu0 %v5776
        %6742 = vmatmul.mubr.bf16.gmra.mxu0 %v5775
        %v6743 = vpop.f32.mrf.mxu0
        %v6744 = vadd.f32 %v6631, %v6743
        %v6745 = vpop.f32.mrf.mxu0
        %v6746 = vadd.f32 %v6633, %v6745
        %v6747 = vpop.f32.mrf.mxu0
        %v6748 = vadd.f32 %v6635, %v6747
        %v6749 = vpop.f32.mrf.mxu0
        %v6750 = vadd.f32 %v6637, %v6749
        %6751 = vmatprep.mubr.bf16.mxu0 %v5780
        %6752 = vmatmul.mubr.bf16.gmra.mxu0 %v5779
        %v6753 = vpop.f32.mrf.mxu0
        %v6754 = vadd.f32 %v6641, %v6753
        %v6755 = vpop.f32.mrf.mxu0
        %v6756 = vadd.f32 %v6643, %v6755
        %v6757 = vpop.f32.mrf.mxu0
        %v6758 = vadd.f32 %v6645, %v6757
        %v6759 = vpop.f32.mrf.mxu0
        %v6760 = vadd.f32 %v6647, %v6759
        %6761 = vmatprep.mubr.bf16.mxu0 %v5784
        %6762 = vmatmul.mubr.bf16.gmra.mxu0 %v5783
        %v6763 = vpop.f32.mrf.mxu0
        %v6764 = vadd.f32 %v6651, %v6763
        %v6765 = vpop.f32.mrf.mxu0
        %v6766 = vadd.f32 %v6653, %v6765
        %v6767 = vpop.f32.mrf.mxu0
        %v6768 = vadd.f32 %v6655, %v6767
        %v6769 = vpop.f32.mrf.mxu0
        %v6770 = vadd.f32 %v6657, %v6769
        %6771 = vmatprep.mubr.bf16.mxu0 %v5788
        %6772 = vmatmul.mubr.bf16.gmra.mxu0 %v5787
        %v6773 = vpop.f32.mrf.mxu0
        %v6774 = vadd.f32 %v6661, %v6773
        %v6775 = vpop.f32.mrf.mxu0
        %v6776 = vadd.f32 %v6663, %v6775
        %v6777 = vpop.f32.mrf.mxu0
        %v6778 = vadd.f32 %v6665, %v6777
        %v6779 = vpop.f32.mrf.mxu0
        %v6780 = vadd.f32 %v6667, %v6779
        %6781 = vmatprep.mubr.bf16.mxu0 %v5792
        %6782 = vmatmul.mubr.bf16.gmra.mxu0 %v5791
        %v6783 = vpop.f32.mrf.mxu0
        %v6784 = vadd.f32 %v6671, %v6783
        %v6785 = vpop.f32.mrf.mxu0
        %v6786 = vadd.f32 %v6673, %v6785
        %v6787 = vpop.f32.mrf.mxu0
        %v6788 = vadd.f32 %v6675, %v6787
        %v6789 = vpop.f32.mrf.mxu0
        %v6790 = vadd.f32 %v6677, %v6789
        %6791 = vmatprep.mubr.bf16.mxu0 %v5796
        %6792 = vmatmul.mubr.bf16.gmra.mxu0 %v5795
        %v6793 = vpop.f32.mrf.mxu0
        %v6794 = vadd.f32 %v6681, %v6793
        %v6795 = vpop.f32.mrf.mxu0
        %v6796 = vadd.f32 %v6683, %v6795
        %v6797 = vpop.f32.mrf.mxu0
        %v6798 = vadd.f32 %v6685, %v6797
        %v6799 = vpop.f32.mrf.mxu0
        %v6800 = vadd.f32 %v6687, %v6799
        %6801 = vmatprep.mubr.bf16.mxu0 %v5800
        %6802 = vmatmul.mubr.bf16.gmra.mxu0 %v5799
        %v6803 = vpop.f32.mrf.mxu0
        %v6804 = vadd.f32 %v6691, %v6803
        %v6805 = vpop.f32.mrf.mxu0
        %v6806 = vadd.f32 %v6693, %v6805
        %v6807 = vpop.f32.mrf.mxu0
        %v6808 = vadd.f32 %v6695, %v6807
        %v6809 = vpop.f32.mrf.mxu0
        %v6810 = vadd.f32 %v6697, %v6809
        %6811 = vmatprep.mubr.bf16.mxu0 %v5804
        %6812 = vmatmul.mubr.bf16.gmra.mxu0 %v5803
        %v6813 = vpop.f32.mrf.mxu0
        %v6814 = vadd.f32 %v6701, %v6813
        %v6815 = vpop.f32.mrf.mxu0
        %v6816 = vadd.f32 %v6703, %v6815
        %v6817 = vpop.f32.mrf.mxu0
        %v6818 = vadd.f32 %v6705, %v6817
        %v6819 = vpop.f32.mrf.mxu0
        %v6820 = vadd.f32 %v6707, %v6819
        %6821 = vdwg.mxu0
        %6822 = vmatprep.subr.bf16.mxu0 %v6371
        %6823 = vmatpush1.bf16.msra.mxu0 %v6370
        %6824 = vmatprep.subr.bf16.mxu0 %v6367
        %6825 = vmatpush1.bf16.msra.mxu0 %v6366
        %6826 = vmatprep.subr.bf16.mxu0 %v6363
        %6827 = vmatpush1.bf16.msra.mxu0 %v6362
        %6828 = vmatprep.subr.bf16.mxu0 %v6359
        %6829 = vmatpush1.bf16.msra.mxu0 %v6358
        %6830 = vmatprep.subr.bf16.mxu0 %v6355
        %6831 = vmatpush1.bf16.msra.mxu0 %v6354
        %6832 = vmatprep.subr.bf16.mxu0 %v6351
        %6833 = vmatpush1.bf16.msra.mxu0 %v6350
        %6834 = vmatprep.subr.bf16.mxu0 %v6347
        %6835 = vmatpush1.bf16.msra.mxu0 %v6346
        %6836 = vmatprep.subr.bf16.mxu0 %v6343
        %6837 = vmatpush1.bf16.msra.mxu0 %v6342
        %6838 = vmatprep.subr.bf16.mxu0 %v6403
        %6839 = vmatpush2.bf16.msra.mxu0 %v6402
        %6840 = vmatprep.subr.bf16.mxu0 %v6399
        %6841 = vmatpush2.bf16.msra.mxu0 %v6398
        %6842 = vmatprep.subr.bf16.mxu0 %v6395
        %6843 = vmatpush2.bf16.msra.mxu0 %v6394
        %6844 = vmatprep.subr.bf16.mxu0 %v6391
        %6845 = vmatpush2.bf16.msra.mxu0 %v6390
        %6846 = vmatprep.subr.bf16.mxu0 %v6387
        %6847 = vmatpush2.bf16.msra.mxu0 %v6386
        %6848 = vmatprep.subr.bf16.mxu0 %v6383
        %6849 = vmatpush2.bf16.msra.mxu0 %v6382
        %6850 = vmatprep.subr.bf16.mxu0 %v6379
        %6851 = vmatpush2.bf16.msra.mxu0 %v6378
        %6852 = vmatprep.subr.bf16.mxu0 %v6375
        %6853 = vmatpush2.bf16.msra.mxu0 %v6374
        %6854 = vmatprep.mubr.bf16.mxu0 %v5774
        %6855 = vmatmul.mubr.bf16.gmra.mxu0 %v5773
        %v6856 = vpop.f32.mrf.mxu0
        %v6857 = vadd.f32 %v5947, %v6856
        %v6858 = vpop.f32.mrf.mxu0
        %v6859 = vadd.f32 %v5951, %v6858
        %v6860 = vpop.f32.mrf.mxu0
        %v6861 = vadd.f32 %v5947, %v6860
        %v6862 = vpop.f32.mrf.mxu0
        %v6863 = vadd.f32 %v5951, %v6862
        %6864 = vmatprep.mubr.bf16.mxu0 %v5778
        %6865 = vmatmul.mubr.bf16.gmra.mxu0 %v5777
        %v6866 = vpop.f32.mrf.mxu0
        %v6867 = vadd.f32 %v5947, %v6866
        %v6868 = vpop.f32.mrf.mxu0
        %v6869 = vadd.f32 %v5951, %v6868
        %v6870 = vpop.f32.mrf.mxu0
        %v6871 = vadd.f32 %v5947, %v6870
        %v6872 = vpop.f32.mrf.mxu0
        %v6873 = vadd.f32 %v5951, %v6872
        %6874 = vmatprep.mubr.bf16.mxu0 %v5782
        %6875 = vmatmul.mubr.bf16.gmra.mxu0 %v5781
        %v6876 = vpop.f32.mrf.mxu0
        %v6877 = vadd.f32 %v5947, %v6876
        %v6878 = vpop.f32.mrf.mxu0
        %v6879 = vadd.f32 %v5951, %v6878
        %v6880 = vpop.f32.mrf.mxu0
        %v6881 = vadd.f32 %v5947, %v6880
        %v6882 = vpop.f32.mrf.mxu0
        %v6883 = vadd.f32 %v5951, %v6882
        %6884 = vmatprep.mubr.bf16.mxu0 %v5786
        %6885 = vmatmul.mubr.bf16.gmra.mxu0 %v5785
        %v6886 = vpop.f32.mrf.mxu0
        %v6887 = vadd.f32 %v5947, %v6886
        %v6888 = vpop.f32.mrf.mxu0
        %v6889 = vadd.f32 %v5951, %v6888
        %v6890 = vpop.f32.mrf.mxu0
        %v6891 = vadd.f32 %v5947, %v6890
        %v6892 = vpop.f32.mrf.mxu0
        %v6893 = vadd.f32 %v5951, %v6892
        %6894 = vmatprep.mubr.bf16.mxu0 %v5790
        %6895 = vmatmul.mubr.bf16.gmra.mxu0 %v5789
        %v6896 = vpop.f32.mrf.mxu0
        %v6897 = vadd.f32 %v5947, %v6896
        %v6898 = vpop.f32.mrf.mxu0
        %v6899 = vadd.f32 %v5951, %v6898
        %v6900 = vpop.f32.mrf.mxu0
        %v6901 = vadd.f32 %v5947, %v6900
        %v6902 = vpop.f32.mrf.mxu0
        %v6903 = vadd.f32 %v5951, %v6902
        %6904 = vmatprep.mubr.bf16.mxu0 %v5794
        %6905 = vmatmul.mubr.bf16.gmra.mxu0 %v5793
        %v6906 = vpop.f32.mrf.mxu0
        %v6907 = vadd.f32 %v5947, %v6906
        %v6908 = vpop.f32.mrf.mxu0
        %v6909 = vadd.f32 %v5951, %v6908
        %v6910 = vpop.f32.mrf.mxu0
        %v6911 = vadd.f32 %v5947, %v6910
        %v6912 = vpop.f32.mrf.mxu0
        %v6913 = vadd.f32 %v5951, %v6912
        %6914 = vmatprep.mubr.bf16.mxu0 %v5798
        %6915 = vmatmul.mubr.bf16.gmra.mxu0 %v5797
        %v6916 = vpop.f32.mrf.mxu0
        %v6917 = vadd.f32 %v5947, %v6916
        %v6918 = vpop.f32.mrf.mxu0
        %v6919 = vadd.f32 %v5951, %v6918
        %v6920 = vpop.f32.mrf.mxu0
        %v6921 = vadd.f32 %v5947, %v6920
        %v6922 = vpop.f32.mrf.mxu0
        %v6923 = vadd.f32 %v5951, %v6922
        %6924 = vmatprep.mubr.bf16.mxu0 %v5802
        %6925 = vmatmul.mubr.bf16.gmra.mxu0 %v5801
        %v6926 = vpop.f32.mrf.mxu0
        %v6927 = vadd.f32 %v5947, %v6926
        %v6928 = vpop.f32.mrf.mxu0
        %v6929 = vadd.f32 %v5951, %v6928
        %v6930 = vpop.f32.mrf.mxu0
        %v6931 = vadd.f32 %v5947, %v6930
        %v6932 = vpop.f32.mrf.mxu0
        %v6933 = vadd.f32 %v5951, %v6932
        %6934 = vdwg.mxu0
        %6935 = vmatprep.subr.bf16.mxu0 %v6435
        %6936 = vmatpush1.bf16.msra.mxu0 %v6434
        %6937 = vmatprep.subr.bf16.mxu0 %v6431
        %6938 = vmatpush1.bf16.msra.mxu0 %v6430
        %6939 = vmatprep.subr.bf16.mxu0 %v6427
        %6940 = vmatpush1.bf16.msra.mxu0 %v6426
        %6941 = vmatprep.subr.bf16.mxu0 %v6423
        %6942 = vmatpush1.bf16.msra.mxu0 %v6422
        %6943 = vmatprep.subr.bf16.mxu0 %v6419
        %6944 = vmatpush1.bf16.msra.mxu0 %v6418
        %6945 = vmatprep.subr.bf16.mxu0 %v6415
        %6946 = vmatpush1.bf16.msra.mxu0 %v6414
        %6947 = vmatprep.subr.bf16.mxu0 %v6411
        %6948 = vmatpush1.bf16.msra.mxu0 %v6410
        %6949 = vmatprep.subr.bf16.mxu0 %v6407
        %6950 = vmatpush1.bf16.msra.mxu0 %v6406
        %6951 = vmatprep.subr.bf16.mxu0 %v6467
        %6952 = vmatpush2.bf16.msra.mxu0 %v6466
        %6953 = vmatprep.subr.bf16.mxu0 %v6463
        %6954 = vmatpush2.bf16.msra.mxu0 %v6462
        %6955 = vmatprep.subr.bf16.mxu0 %v6459
        %6956 = vmatpush2.bf16.msra.mxu0 %v6458
        %6957 = vmatprep.subr.bf16.mxu0 %v6455
        %6958 = vmatpush2.bf16.msra.mxu0 %v6454
        %6959 = vmatprep.subr.bf16.mxu0 %v6451
        %6960 = vmatpush2.bf16.msra.mxu0 %v6450
        %6961 = vmatprep.subr.bf16.mxu0 %v6447
        %6962 = vmatpush2.bf16.msra.mxu0 %v6446
        %6963 = vmatprep.subr.bf16.mxu0 %v6443
        %6964 = vmatpush2.bf16.msra.mxu0 %v6442
        %6965 = vmatprep.subr.bf16.mxu0 %v6439
        %6966 = vmatpush2.bf16.msra.mxu0 %v6438
        %6967 = vmatprep.mubr.bf16.mxu0 %v5776
        %6968 = vmatmul.mubr.bf16.gmra.mxu0 %v5775
        %v6969 = vpop.f32.mrf.mxu0
        %v6970 = vadd.f32 %v6857, %v6969
        %v6971 = vpop.f32.mrf.mxu0
        %v6972 = vadd.f32 %v6859, %v6971
        %v6973 = vpop.f32.mrf.mxu0
        %v6974 = vadd.f32 %v6861, %v6973
        %v6975 = vpop.f32.mrf.mxu0
        %v6976 = vadd.f32 %v6863, %v6975
        %6977 = vmatprep.mubr.bf16.mxu0 %v5780
        %6978 = vmatmul.mubr.bf16.gmra.mxu0 %v5779
        %v6979 = vpop.f32.mrf.mxu0
        %v6980 = vadd.f32 %v6867, %v6979
        %v6981 = vpop.f32.mrf.mxu0
        %v6982 = vadd.f32 %v6869, %v6981
        %v6983 = vpop.f32.mrf.mxu0
        %v6984 = vadd.f32 %v6871, %v6983
        %v6985 = vpop.f32.mrf.mxu0
        %v6986 = vadd.f32 %v6873, %v6985
        %6987 = vmatprep.mubr.bf16.mxu0 %v5784
        %6988 = vmatmul.mubr.bf16.gmra.mxu0 %v5783
        %v6989 = vpop.f32.mrf.mxu0
        %v6990 = vadd.f32 %v6877, %v6989
        %v6991 = vpop.f32.mrf.mxu0
        %v6992 = vadd.f32 %v6879, %v6991
        %v6993 = vpop.f32.mrf.mxu0
        %v6994 = vadd.f32 %v6881, %v6993
        %v6995 = vpop.f32.mrf.mxu0
        %v6996 = vadd.f32 %v6883, %v6995
        %6997 = vmatprep.mubr.bf16.mxu0 %v5788
        %6998 = vmatmul.mubr.bf16.gmra.mxu0 %v5787
        %v6999 = vpop.f32.mrf.mxu0
        %v7000 = vadd.f32 %v6887, %v6999
        %v7001 = vpop.f32.mrf.mxu0
        %v7002 = vadd.f32 %v6889, %v7001
        %v7003 = vpop.f32.mrf.mxu0
        %v7004 = vadd.f32 %v6891, %v7003
        %v7005 = vpop.f32.mrf.mxu0
        %v7006 = vadd.f32 %v6893, %v7005
        %7007 = vmatprep.mubr.bf16.mxu0 %v5792
        %7008 = vmatmul.mubr.bf16.gmra.mxu0 %v5791
        %v7009 = vpop.f32.mrf.mxu0
        %v7010 = vadd.f32 %v6897, %v7009
        %v7011 = vpop.f32.mrf.mxu0
        %v7012 = vadd.f32 %v6899, %v7011
        %v7013 = vpop.f32.mrf.mxu0
        %v7014 = vadd.f32 %v6901, %v7013
        %v7015 = vpop.f32.mrf.mxu0
        %v7016 = vadd.f32 %v6903, %v7015
        %7017 = vmatprep.mubr.bf16.mxu0 %v5796
        %7018 = vmatmul.mubr.bf16.gmra.mxu0 %v5795
        %v7019 = vpop.f32.mrf.mxu0
        %v7020 = vadd.f32 %v6907, %v7019
        %v7021 = vpop.f32.mrf.mxu0
        %v7022 = vadd.f32 %v6909, %v7021
        %v7023 = vpop.f32.mrf.mxu0
        %v7024 = vadd.f32 %v6911, %v7023
        %v7025 = vpop.f32.mrf.mxu0
        %v7026 = vadd.f32 %v6913, %v7025
        %7027 = vmatprep.mubr.bf16.mxu0 %v5800
        %7028 = vmatmul.mubr.bf16.gmra.mxu0 %v5799
        %v7029 = vpop.f32.mrf.mxu0
        %v7030 = vadd.f32 %v6917, %v7029
        %v7031 = vpop.f32.mrf.mxu0
        %v7032 = vadd.f32 %v6919, %v7031
        %v7033 = vpop.f32.mrf.mxu0
        %v7034 = vadd.f32 %v6921, %v7033
        %v7035 = vpop.f32.mrf.mxu0
        %v7036 = vadd.f32 %v6923, %v7035
        %7037 = vmatprep.mubr.bf16.mxu0 %v5804
        %7038 = vmatmul.mubr.bf16.gmra.mxu0 %v5803
        %v7039 = vpop.f32.mrf.mxu0
        %v7040 = vadd.f32 %v6927, %v7039
        %v7041 = vpop.f32.mrf.mxu0
        %v7042 = vadd.f32 %v6929, %v7041
        %v7043 = vpop.f32.mrf.mxu0
        %v7044 = vadd.f32 %v6931, %v7043
        %v7045 = vpop.f32.mrf.mxu0
        %v7046 = vadd.f32 %v6933, %v7045
        %7047 = vdwg.mxu0
        %v7048 = vadd.f32 %v5709, %v6744
        %v7049 = vadd.f32 %v5710, %v6746
        %v7050 = vadd.f32 %v5711, %v6970
        %v7051 = vadd.f32 %v5712, %v6972
        %v7052 = vadd.f32 %v5713, %v6748
        %v7053 = vadd.f32 %v5714, %v6750
        %v7054 = vadd.f32 %v5715, %v6974
        %v7055 = vadd.f32 %v5716, %v6976
        %v7056 = vadd.f32 %v5717, %v6754
        %v7057 = vadd.f32 %v5718, %v6756
        %v7058 = vadd.f32 %v5719, %v6980
        %v7059 = vadd.f32 %v5720, %v6982
        %v7060 = vadd.f32 %v5721, %v6758
        %v7061 = vadd.f32 %v5722, %v6760
        %v7062 = vadd.f32 %v5723, %v6984
        %v7063 = vadd.f32 %v5724, %v6986
        %v7064 = vadd.f32 %v5725, %v6764
        %v7065 = vadd.f32 %v5726, %v6766
        %v7066 = vadd.f32 %v5727, %v6990
        %v7067 = vadd.f32 %v5728, %v6992
        %v7068 = vadd.f32 %v5729, %v6768
        %v7069 = vadd.f32 %v5730, %v6770
        %v7070 = vadd.f32 %v5731, %v6994
        %v7071 = vadd.f32 %v5732, %v6996
        %v7072 = vadd.f32 %v5733, %v6774
        %v7073 = vadd.f32 %v5734, %v6776
        %v7074 = vadd.f32 %v5735, %v7000
        %v7075 = vadd.f32 %v5736, %v7002
        %v7076 = vadd.f32 %v5737, %v6778
        %v7077 = vadd.f32 %v5738, %v6780
        %v7078 = vadd.f32 %v5739, %v7004
        %v7079 = vadd.f32 %v5740, %v7006
        %v7080 = vadd.f32 %v5741, %v6784
        %v7081 = vadd.f32 %v5742, %v6786
        %v7082 = vadd.f32 %v5743, %v7010
        %v7083 = vadd.f32 %v5744, %v7012
        %v7084 = vadd.f32 %v5745, %v6788
        %v7085 = vadd.f32 %v5746, %v6790
        %v7086 = vadd.f32 %v5747, %v7014
        %v7087 = vadd.f32 %v5748, %v7016
        %v7088 = vadd.f32 %v5749, %v6794
        %v7089 = vadd.f32 %v5750, %v6796
        %v7090 = vadd.f32 %v5751, %v7020
        %v7091 = vadd.f32 %v5752, %v7022
        %v7092 = vadd.f32 %v5753, %v6798
        %v7093 = vadd.f32 %v5754, %v6800
        %v7094 = vadd.f32 %v5755, %v7024
        %v7095 = vadd.f32 %v5756, %v7026
        %v7096 = vadd.f32 %v5757, %v6804
        %v7097 = vadd.f32 %v5758, %v6806
        %v7098 = vadd.f32 %v5759, %v7030
        %v7099 = vadd.f32 %v5760, %v7032
        %v7100 = vadd.f32 %v5761, %v6808
        %v7101 = vadd.f32 %v5762, %v6810
        %v7102 = vadd.f32 %v5763, %v7034
        %v7103 = vadd.f32 %v5764, %v7036
        %v7104 = vadd.f32 %v5765, %v6814
        %v7105 = vadd.f32 %v5766, %v6816
        %v7106 = vadd.f32 %v5767, %v7040
        %v7107 = vadd.f32 %v5768, %v7042
        %v7108 = vadd.f32 %v5769, %v6818
        %v7109 = vadd.f32 %v5770, %v6820
        %v7110 = vadd.f32 %v5771, %v7044
        %v7111 = vadd.f32 %v5772, %v7046
        %s7112 = scalar_lea.vmem [#allocation12], 7
        %v7113 = vld [vmem:[%s7112] ss:$8 sm:$0xf]
        %s7114 = scalar_lea.vmem [#allocation12], 32
        %v7115 = vld [vmem:[%s7114] ss:$8 sm:$0xf]
        %v7116 = vadd.f32 %v7048, %v7049
        %v7117 = vadd.f32 %v7116, %v7050
        %v7118 = vadd.f32 %v7117, %v7051
        %7119 = vadd.xlane.f32.xlu0 %v7118
        %v7120 = vpop.xlane.xlu0 %7119
        %v7121 = vadd.f32 %v7052, %v7053
        %v7122 = vadd.f32 %v7121, %v7054
        %v7123 = vadd.f32 %v7122, %v7055
        %7124 = vadd.xlane.f32.xlu0 %v7123
        %v7125 = vpop.xlane.xlu0 %7124
        %v7126 = vadd.f32 %v7056, %v7057
        %v7127 = vadd.f32 %v7126, %v7058
        %v7128 = vadd.f32 %v7127, %v7059
        %7129 = vadd.xlane.f32.xlu0 %v7128
        %v7130 = vpop.xlane.xlu0 %7129
        %v7131 = vadd.f32 %v7060, %v7061
        %v7132 = vadd.f32 %v7131, %v7062
        %v7133 = vadd.f32 %v7132, %v7063
        %7134 = vadd.xlane.f32.xlu0 %v7133
        %v7135 = vpop.xlane.xlu0 %7134
        %v7136 = vadd.f32 %v7064, %v7065
        %v7137 = vadd.f32 %v7136, %v7066
        %v7138 = vadd.f32 %v7137, %v7067
        %7139 = vadd.xlane.f32.xlu0 %v7138
        %v7140 = vpop.xlane.xlu0 %7139
        %v7141 = vadd.f32 %v7068, %v7069
        %v7142 = vadd.f32 %v7141, %v7070
        %v7143 = vadd.f32 %v7142, %v7071
        %7144 = vadd.xlane.f32.xlu0 %v7143
        %v7145 = vpop.xlane.xlu0 %7144
        %v7146 = vadd.f32 %v7072, %v7073
        %v7147 = vadd.f32 %v7146, %v7074
        %v7148 = vadd.f32 %v7147, %v7075
        %7149 = vadd.xlane.f32.xlu0 %v7148
        %v7150 = vpop.xlane.xlu0 %7149
        %v7151 = vadd.f32 %v7076, %v7077
        %v7152 = vadd.f32 %v7151, %v7078
        %v7153 = vadd.f32 %v7152, %v7079
        %7154 = vadd.xlane.f32.xlu0 %v7153
        %v7155 = vpop.xlane.xlu0 %7154
        %v7156 = vadd.f32 %v7080, %v7081
        %v7157 = vadd.f32 %v7156, %v7082
        %v7158 = vadd.f32 %v7157, %v7083
        %7159 = vadd.xlane.f32.xlu0 %v7158
        %v7160 = vpop.xlane.xlu0 %7159
        %v7161 = vadd.f32 %v7084, %v7085
        %v7162 = vadd.f32 %v7161, %v7086
        %v7163 = vadd.f32 %v7162, %v7087
        %7164 = vadd.xlane.f32.xlu0 %v7163
        %v7165 = vpop.xlane.xlu0 %7164
        %v7166 = vadd.f32 %v7088, %v7089
        %v7167 = vadd.f32 %v7166, %v7090
        %v7168 = vadd.f32 %v7167, %v7091
        %7169 = vadd.xlane.f32.xlu0 %v7168
        %v7170 = vpop.xlane.xlu0 %7169
        %v7171 = vadd.f32 %v7092, %v7093
        %v7172 = vadd.f32 %v7171, %v7094
        %v7173 = vadd.f32 %v7172, %v7095
        %7174 = vadd.xlane.f32.xlu0 %v7173
        %v7175 = vpop.xlane.xlu0 %7174
        %v7176 = vadd.f32 %v7096, %v7097
        %v7177 = vadd.f32 %v7176, %v7098
        %v7178 = vadd.f32 %v7177, %v7099
        %7179 = vadd.xlane.f32.xlu0 %v7178
        %v7180 = vpop.xlane.xlu0 %7179
        %v7181 = vadd.f32 %v7100, %v7101
        %v7182 = vadd.f32 %v7181, %v7102
        %v7183 = vadd.f32 %v7182, %v7103
        %7184 = vadd.xlane.f32.xlu0 %v7183
        %v7185 = vpop.xlane.xlu0 %7184
        %v7186 = vadd.f32 %v7104, %v7105
        %v7187 = vadd.f32 %v7186, %v7106
        %v7188 = vadd.f32 %v7187, %v7107
        %7189 = vadd.xlane.f32.xlu0 %v7188
        %v7190 = vpop.xlane.xlu0 %7189
        %v7191 = vadd.f32 %v7108, %v7109
        %v7192 = vadd.f32 %v7191, %v7110
        %v7193 = vadd.f32 %v7192, %v7111
        %7194 = vadd.xlane.f32.xlu0 %v7193
        %v7195 = vpop.xlane.xlu0 %7194
        %v7196 = vmul.f32 %v7120, %v5266
        %v7197 = vmul.f32 %v7125, %v5266
        %v7198 = vmul.f32 %v7130, %v5266
        %v7199 = vmul.f32 %v7135, %v5266
        %v7200 = vmul.f32 %v7140, %v5266
        %v7201 = vmul.f32 %v7145, %v5266
        %v7202 = vmul.f32 %v7150, %v5266
        %v7203 = vmul.f32 %v7155, %v5266
        %v7204 = vmul.f32 %v7160, %v5266
        %v7205 = vmul.f32 %v7165, %v5266
        %v7206 = vmul.f32 %v7170, %v5266
        %v7207 = vmul.f32 %v7175, %v5266
        %v7208 = vmul.f32 %v7180, %v5266
        %v7209 = vmul.f32 %v7185, %v5266
        %v7210 = vmul.f32 %v7190, %v5266
        %v7211 = vmul.f32 %v7195, %v5266
        %v7212 = vsub.f32 %v7048, %v7196
        %v7213 = vsub.f32 %v7049, %v7196
        %v7214 = vsub.f32 %v7050, %v7196
        %v7215 = vsub.f32 %v7051, %v7196
        %v7216 = vsub.f32 %v7052, %v7197
        %v7217 = vsub.f32 %v7053, %v7197
        %v7218 = vsub.f32 %v7054, %v7197
        %v7219 = vsub.f32 %v7055, %v7197
        %v7220 = vsub.f32 %v7056, %v7198
        %v7221 = vsub.f32 %v7057, %v7198
        %v7222 = vsub.f32 %v7058, %v7198
        %v7223 = vsub.f32 %v7059, %v7198
        %v7224 = vsub.f32 %v7060, %v7199
        %v7225 = vsub.f32 %v7061, %v7199
        %v7226 = vsub.f32 %v7062, %v7199
        %v7227 = vsub.f32 %v7063, %v7199
        %v7228 = vsub.f32 %v7064, %v7200
        %v7229 = vsub.f32 %v7065, %v7200
        %v7230 = vsub.f32 %v7066, %v7200
        %v7231 = vsub.f32 %v7067, %v7200
        %v7232 = vsub.f32 %v7068, %v7201
        %v7233 = vsub.f32 %v7069, %v7201
        %v7234 = vsub.f32 %v7070, %v7201
        %v7235 = vsub.f32 %v7071, %v7201
        %v7236 = vsub.f32 %v7072, %v7202
        %v7237 = vsub.f32 %v7073, %v7202
        %v7238 = vsub.f32 %v7074, %v7202
        %v7239 = vsub.f32 %v7075, %v7202
        %v7240 = vsub.f32 %v7076, %v7203
        %v7241 = vsub.f32 %v7077, %v7203
        %v7242 = vsub.f32 %v7078, %v7203
        %v7243 = vsub.f32 %v7079, %v7203
        %v7244 = vsub.f32 %v7080, %v7204
        %v7245 = vsub.f32 %v7081, %v7204
        %v7246 = vsub.f32 %v7082, %v7204
        %v7247 = vsub.f32 %v7083, %v7204
        %v7248 = vsub.f32 %v7084, %v7205
        %v7249 = vsub.f32 %v7085, %v7205
        %v7250 = vsub.f32 %v7086, %v7205
        %v7251 = vsub.f32 %v7087, %v7205
        %v7252 = vsub.f32 %v7088, %v7206
        %v7253 = vsub.f32 %v7089, %v7206
        %v7254 = vsub.f32 %v7090, %v7206
        %v7255 = vsub.f32 %v7091, %v7206
        %v7256 = vsub.f32 %v7092, %v7207
        %v7257 = vsub.f32 %v7093, %v7207
        %v7258 = vsub.f32 %v7094, %v7207
        %v7259 = vsub.f32 %v7095, %v7207
        %v7260 = vsub.f32 %v7096, %v7208
        %v7261 = vsub.f32 %v7097, %v7208
        %v7262 = vsub.f32 %v7098, %v7208
        %v7263 = vsub.f32 %v7099, %v7208
        %v7264 = vsub.f32 %v7100, %v7209
        %v7265 = vsub.f32 %v7101, %v7209
        %v7266 = vsub.f32 %v7102, %v7209
        %v7267 = vsub.f32 %v7103, %v7209
        %v7268 = vsub.f32 %v7104, %v7210
        %v7269 = vsub.f32 %v7105, %v7210
        %v7270 = vsub.f32 %v7106, %v7210
        %v7271 = vsub.f32 %v7107, %v7210
        %v7272 = vsub.f32 %v7108, %v7211
        %v7273 = vsub.f32 %v7109, %v7211
        %v7274 = vsub.f32 %v7110, %v7211
        %v7275 = vsub.f32 %v7111, %v7211
        %v7276 = vmul.f32 %v7212, %v7212
        %v7277 = vmul.f32 %v7213, %v7213
        %v7278 = vmul.f32 %v7214, %v7214
        %v7279 = vmul.f32 %v7215, %v7215
        %v7280 = vmul.f32 %v7216, %v7216
        %v7281 = vmul.f32 %v7217, %v7217
        %v7282 = vmul.f32 %v7218, %v7218
        %v7283 = vmul.f32 %v7219, %v7219
        %v7284 = vmul.f32 %v7220, %v7220
        %v7285 = vmul.f32 %v7221, %v7221
        %v7286 = vmul.f32 %v7222, %v7222
        %v7287 = vmul.f32 %v7223, %v7223
        %v7288 = vmul.f32 %v7224, %v7224
        %v7289 = vmul.f32 %v7225, %v7225
        %v7290 = vmul.f32 %v7226, %v7226
        %v7291 = vmul.f32 %v7227, %v7227
        %v7292 = vmul.f32 %v7228, %v7228
        %v7293 = vmul.f32 %v7229, %v7229
        %v7294 = vmul.f32 %v7230, %v7230
        %v7295 = vmul.f32 %v7231, %v7231
        %v7296 = vmul.f32 %v7232, %v7232
        %v7297 = vmul.f32 %v7233, %v7233
        %v7298 = vmul.f32 %v7234, %v7234
        %v7299 = vmul.f32 %v7235, %v7235
        %v7300 = vmul.f32 %v7236, %v7236
        %v7301 = vmul.f32 %v7237, %v7237
        %v7302 = vmul.f32 %v7238, %v7238
        %v7303 = vmul.f32 %v7239, %v7239
        %v7304 = vmul.f32 %v7240, %v7240
        %v7305 = vmul.f32 %v7241, %v7241
        %v7306 = vmul.f32 %v7242, %v7242
        %v7307 = vmul.f32 %v7243, %v7243
        %v7308 = vmul.f32 %v7244, %v7244
        %v7309 = vmul.f32 %v7245, %v7245
        %v7310 = vmul.f32 %v7246, %v7246
        %v7311 = vmul.f32 %v7247, %v7247
        %v7312 = vmul.f32 %v7248, %v7248
        %v7313 = vmul.f32 %v7249, %v7249
        %v7314 = vmul.f32 %v7250, %v7250
        %v7315 = vmul.f32 %v7251, %v7251
        %v7316 = vmul.f32 %v7252, %v7252
        %v7317 = vmul.f32 %v7253, %v7253
        %v7318 = vmul.f32 %v7254, %v7254
        %v7319 = vmul.f32 %v7255, %v7255
        %v7320 = vmul.f32 %v7256, %v7256
        %v7321 = vmul.f32 %v7257, %v7257
        %v7322 = vmul.f32 %v7258, %v7258
        %v7323 = vmul.f32 %v7259, %v7259
        %v7324 = vmul.f32 %v7260, %v7260
        %v7325 = vmul.f32 %v7261, %v7261
        %v7326 = vmul.f32 %v7262, %v7262
        %v7327 = vmul.f32 %v7263, %v7263
        %v7328 = vmul.f32 %v7264, %v7264
        %v7329 = vmul.f32 %v7265, %v7265
        %v7330 = vmul.f32 %v7266, %v7266
        %v7331 = vmul.f32 %v7267, %v7267
        %v7332 = vmul.f32 %v7268, %v7268
        %v7333 = vmul.f32 %v7269, %v7269
        %v7334 = vmul.f32 %v7270, %v7270
        %v7335 = vmul.f32 %v7271, %v7271
        %v7336 = vmul.f32 %v7272, %v7272
        %v7337 = vmul.f32 %v7273, %v7273
        %v7338 = vmul.f32 %v7274, %v7274
        %v7339 = vmul.f32 %v7275, %v7275
        %v7340 = vadd.f32 %v7276, %v7277
        %v7341 = vadd.f32 %v7340, %v7278
        %v7342 = vadd.f32 %v7341, %v7279
        %7343 = vadd.xlane.f32.xlu0 %v7342
        %v7344 = vpop.xlane.xlu0 %7343
        %v7345 = vadd.f32 %v7280, %v7281
        %v7346 = vadd.f32 %v7345, %v7282
        %v7347 = vadd.f32 %v7346, %v7283
        %7348 = vadd.xlane.f32.xlu0 %v7347
        %v7349 = vpop.xlane.xlu0 %7348
        %v7350 = vadd.f32 %v7284, %v7285
        %v7351 = vadd.f32 %v7350, %v7286
        %v7352 = vadd.f32 %v7351, %v7287
        %7353 = vadd.xlane.f32.xlu0 %v7352
        %v7354 = vpop.xlane.xlu0 %7353
        %v7355 = vadd.f32 %v7288, %v7289
        %v7356 = vadd.f32 %v7355, %v7290
        %v7357 = vadd.f32 %v7356, %v7291
        %7358 = vadd.xlane.f32.xlu0 %v7357
        %v7359 = vpop.xlane.xlu0 %7358
        %v7360 = vadd.f32 %v7292, %v7293
        %v7361 = vadd.f32 %v7360, %v7294
        %v7362 = vadd.f32 %v7361, %v7295
        %7363 = vadd.xlane.f32.xlu0 %v7362
        %v7364 = vpop.xlane.xlu0 %7363
        %v7365 = vadd.f32 %v7296, %v7297
        %v7366 = vadd.f32 %v7365, %v7298
        %v7367 = vadd.f32 %v7366, %v7299
        %7368 = vadd.xlane.f32.xlu0 %v7367
        %v7369 = vpop.xlane.xlu0 %7368
        %v7370 = vadd.f32 %v7300, %v7301
        %v7371 = vadd.f32 %v7370, %v7302
        %v7372 = vadd.f32 %v7371, %v7303
        %7373 = vadd.xlane.f32.xlu0 %v7372
        %v7374 = vpop.xlane.xlu0 %7373
        %v7375 = vadd.f32 %v7304, %v7305
        %v7376 = vadd.f32 %v7375, %v7306
        %v7377 = vadd.f32 %v7376, %v7307
        %7378 = vadd.xlane.f32.xlu0 %v7377
        %v7379 = vpop.xlane.xlu0 %7378
        %v7380 = vadd.f32 %v7308, %v7309
        %v7381 = vadd.f32 %v7380, %v7310
        %v7382 = vadd.f32 %v7381, %v7311
        %7383 = vadd.xlane.f32.xlu0 %v7382
        %v7384 = vpop.xlane.xlu0 %7383
        %v7385 = vadd.f32 %v7312, %v7313
        %v7386 = vadd.f32 %v7385, %v7314
        %v7387 = vadd.f32 %v7386, %v7315
        %7388 = vadd.xlane.f32.xlu0 %v7387
        %v7389 = vpop.xlane.xlu0 %7388
        %v7390 = vadd.f32 %v7316, %v7317
        %v7391 = vadd.f32 %v7390, %v7318
        %v7392 = vadd.f32 %v7391, %v7319
        %7393 = vadd.xlane.f32.xlu0 %v7392
        %v7394 = vpop.xlane.xlu0 %7393
        %v7395 = vadd.f32 %v7320, %v7321
        %v7396 = vadd.f32 %v7395, %v7322
        %v7397 = vadd.f32 %v7396, %v7323
        %7398 = vadd.xlane.f32.xlu0 %v7397
        %v7399 = vpop.xlane.xlu0 %7398
        %v7400 = vadd.f32 %v7324, %v7325
        %v7401 = vadd.f32 %v7400, %v7326
        %v7402 = vadd.f32 %v7401, %v7327
        %7403 = vadd.xlane.f32.xlu0 %v7402
        %v7404 = vpop.xlane.xlu0 %7403
        %v7405 = vadd.f32 %v7328, %v7329
        %v7406 = vadd.f32 %v7405, %v7330
        %v7407 = vadd.f32 %v7406, %v7331
        %7408 = vadd.xlane.f32.xlu0 %v7407
        %v7409 = vpop.xlane.xlu0 %7408
        %v7410 = vadd.f32 %v7332, %v7333
        %v7411 = vadd.f32 %v7410, %v7334
        %v7412 = vadd.f32 %v7411, %v7335
        %7413 = vadd.xlane.f32.xlu0 %v7412
        %v7414 = vpop.xlane.xlu0 %7413
        %v7415 = vadd.f32 %v7336, %v7337
        %v7416 = vadd.f32 %v7415, %v7338
        %v7417 = vadd.f32 %v7416, %v7339
        %7418 = vadd.xlane.f32.xlu0 %v7417
        %v7419 = vpop.xlane.xlu0 %7418
        %v7420 = vmul.f32 %v7344, %v5266
        %v7421 = vmul.f32 %v7349, %v5266
        %v7422 = vmul.f32 %v7354, %v5266
        %v7423 = vmul.f32 %v7359, %v5266
        %v7424 = vmul.f32 %v7364, %v5266
        %v7425 = vmul.f32 %v7369, %v5266
        %v7426 = vmul.f32 %v7374, %v5266
        %v7427 = vmul.f32 %v7379, %v5266
        %v7428 = vmul.f32 %v7384, %v5266
        %v7429 = vmul.f32 %v7389, %v5266
        %v7430 = vmul.f32 %v7394, %v5266
        %v7431 = vmul.f32 %v7399, %v5266
        %v7432 = vmul.f32 %v7404, %v5266
        %v7433 = vmul.f32 %v7409, %v5266
        %v7434 = vmul.f32 %v7414, %v5266
        %v7435 = vmul.f32 %v7419, %v5266
        %v7436 = vadd.f32 %v7420, 1e-05
        %v7437 = vadd.f32 %v7421, 1e-05
        %v7438 = vadd.f32 %v7422, 1e-05
        %v7439 = vadd.f32 %v7423, 1e-05
        %v7440 = vadd.f32 %v7424, 1e-05
        %v7441 = vadd.f32 %v7425, 1e-05
        %v7442 = vadd.f32 %v7426, 1e-05
        %v7443 = vadd.f32 %v7427, 1e-05
        %v7444 = vadd.f32 %v7428, 1e-05
        %v7445 = vadd.f32 %v7429, 1e-05
        %v7446 = vadd.f32 %v7430, 1e-05
        %v7447 = vadd.f32 %v7431, 1e-05
        %v7448 = vadd.f32 %v7432, 1e-05
        %v7449 = vadd.f32 %v7433, 1e-05
        %v7450 = vadd.f32 %v7434, 1e-05
        %v7451 = vadd.f32 %v7435, 1e-05
        %v7452 = vrsqrt.pop %v7436
        %v7453 = vrsqrt.pop %v7437
        %v7454 = vrsqrt.pop %v7438
        %v7455 = vrsqrt.pop %v7439
        %v7456 = vrsqrt.pop %v7440
        %v7457 = vrsqrt.pop %v7441
        %v7458 = vrsqrt.pop %v7442
        %v7459 = vrsqrt.pop %v7443
        %v7460 = vrsqrt.pop %v7444
        %v7461 = vrsqrt.pop %v7445
        %v7462 = vrsqrt.pop %v7446
        %v7463 = vrsqrt.pop %v7447
        %v7464 = vrsqrt.pop %v7448
        %v7465 = vrsqrt.pop %v7449
        %v7466 = vrsqrt.pop %v7450
        %v7467 = vrsqrt.pop %v7451
        %v7468 = vmul.f32 %v7212, %v7452
        %v7469 = vmul.f32 %v7213, %v7452
        %v7470 = vmul.f32 %v7214, %v7452
        %v7471 = vmul.f32 %v7215, %v7452
        %v7472 = vmul.f32 %v7216, %v7453
        %v7473 = vmul.f32 %v7217, %v7453
        %v7474 = vmul.f32 %v7218, %v7453
        %v7475 = vmul.f32 %v7219, %v7453
        %v7476 = vmul.f32 %v7220, %v7454
        %v7477 = vmul.f32 %v7221, %v7454
        %v7478 = vmul.f32 %v7222, %v7454
        %v7479 = vmul.f32 %v7223, %v7454
        %v7480 = vmul.f32 %v7224, %v7455
        %v7481 = vmul.f32 %v7225, %v7455
        %v7482 = vmul.f32 %v7226, %v7455
        %v7483 = vmul.f32 %v7227, %v7455
        %v7484 = vmul.f32 %v7228, %v7456
        %v7485 = vmul.f32 %v7229, %v7456
        %v7486 = vmul.f32 %v7230, %v7456
        %v7487 = vmul.f32 %v7231, %v7456
        %v7488 = vmul.f32 %v7232, %v7457
        %v7489 = vmul.f32 %v7233, %v7457
        %v7490 = vmul.f32 %v7234, %v7457
        %v7491 = vmul.f32 %v7235, %v7457
        %v7492 = vmul.f32 %v7236, %v7458
        %v7493 = vmul.f32 %v7237, %v7458
        %v7494 = vmul.f32 %v7238, %v7458
        %v7495 = vmul.f32 %v7239, %v7458
        %v7496 = vmul.f32 %v7240, %v7459
        %v7497 = vmul.f32 %v7241, %v7459
        %v7498 = vmul.f32 %v7242, %v7459
        %v7499 = vmul.f32 %v7243, %v7459
        %v7500 = vmul.f32 %v7244, %v7460
        %v7501 = vmul.f32 %v7245, %v7460
        %v7502 = vmul.f32 %v7246, %v7460
        %v7503 = vmul.f32 %v7247, %v7460
        %v7504 = vmul.f32 %v7248, %v7461
        %v7505 = vmul.f32 %v7249, %v7461
        %v7506 = vmul.f32 %v7250, %v7461
        %v7507 = vmul.f32 %v7251, %v7461
        %v7508 = vmul.f32 %v7252, %v7462
        %v7509 = vmul.f32 %v7253, %v7462
        %v7510 = vmul.f32 %v7254, %v7462
        %v7511 = vmul.f32 %v7255, %v7462
        %v7512 = vmul.f32 %v7256, %v7463
        %v7513 = vmul.f32 %v7257, %v7463
        %v7514 = vmul.f32 %v7258, %v7463
        %v7515 = vmul.f32 %v7259, %v7463
        %v7516 = vmul.f32 %v7260, %v7464
        %v7517 = vmul.f32 %v7261, %v7464
        %v7518 = vmul.f32 %v7262, %v7464
        %v7519 = vmul.f32 %v7263, %v7464
        %v7520 = vmul.f32 %v7264, %v7465
        %v7521 = vmul.f32 %v7265, %v7465
        %v7522 = vmul.f32 %v7266, %v7465
        %v7523 = vmul.f32 %v7267, %v7465
        %v7524 = vmul.f32 %v7268, %v7466
        %v7525 = vmul.f32 %v7269, %v7466
        %v7526 = vmul.f32 %v7270, %v7466
        %v7527 = vmul.f32 %v7271, %v7466
        %v7528 = vmul.f32 %v7272, %v7467
        %v7529 = vmul.f32 %v7273, %v7467
        %v7530 = vmul.f32 %v7274, %v7467
        %v7531 = vmul.f32 %v7275, %v7467
        %v7533 = vlaneseq
        %v7534 = vshrl.u32 %v7533, 7
        %v7535 = vsub.s32 0, %v7534
        %v7536 = vrot.slane %v7113, %v7535
        %v7537 = vlaneseq
        %v7538 = vshrl.u32 %v7537, 7
        %v7539 = vsub.s32 1, %v7538
        %v7540 = vrot.slane %v7113, %v7539
        %v7541 = vlaneseq
        %v7542 = vshrl.u32 %v7541, 7
        %v7543 = vsub.s32 2, %v7542
        %v7544 = vrot.slane %v7113, %v7543
        %v7545 = vlaneseq
        %v7546 = vshrl.u32 %v7545, 7
        %v7547 = vsub.s32 3, %v7546
        %v7548 = vrot.slane %v7113, %v7547
        %v7553 = vmul.f32 %v7468, %v7536
        %v7554 = vmul.f32 %v7469, %v7540
        %v7555 = vmul.f32 %v7470, %v7544
        %v7556 = vmul.f32 %v7471, %v7548
        %v7557 = vmul.f32 %v7472, %v7536
        %v7558 = vmul.f32 %v7473, %v7540
        %v7559 = vmul.f32 %v7474, %v7544
        %v7560 = vmul.f32 %v7475, %v7548
        %v7561 = vmul.f32 %v7476, %v7536
        %v7562 = vmul.f32 %v7477, %v7540
        %v7563 = vmul.f32 %v7478, %v7544
        %v7564 = vmul.f32 %v7479, %v7548
        %v7565 = vmul.f32 %v7480, %v7536
        %v7566 = vmul.f32 %v7481, %v7540
        %v7567 = vmul.f32 %v7482, %v7544
        %v7568 = vmul.f32 %v7483, %v7548
        %v7569 = vmul.f32 %v7484, %v7536
        %v7570 = vmul.f32 %v7485, %v7540
        %v7571 = vmul.f32 %v7486, %v7544
        %v7572 = vmul.f32 %v7487, %v7548
        %v7573 = vmul.f32 %v7488, %v7536
        %v7574 = vmul.f32 %v7489, %v7540
        %v7575 = vmul.f32 %v7490, %v7544
        %v7576 = vmul.f32 %v7491, %v7548
        %v7577 = vmul.f32 %v7492, %v7536
        %v7578 = vmul.f32 %v7493, %v7540
        %v7579 = vmul.f32 %v7494, %v7544
        %v7580 = vmul.f32 %v7495, %v7548
        %v7581 = vmul.f32 %v7496, %v7536
        %v7582 = vmul.f32 %v7497, %v7540
        %v7583 = vmul.f32 %v7498, %v7544
        %v7584 = vmul.f32 %v7499, %v7548
        %v7585 = vmul.f32 %v7500, %v7536
        %v7586 = vmul.f32 %v7501, %v7540
        %v7587 = vmul.f32 %v7502, %v7544
        %v7588 = vmul.f32 %v7503, %v7548
        %v7589 = vmul.f32 %v7504, %v7536
        %v7590 = vmul.f32 %v7505, %v7540
        %v7591 = vmul.f32 %v7506, %v7544
        %v7592 = vmul.f32 %v7507, %v7548
        %v7593 = vmul.f32 %v7508, %v7536
        %v7594 = vmul.f32 %v7509, %v7540
        %v7595 = vmul.f32 %v7510, %v7544
        %v7596 = vmul.f32 %v7511, %v7548
        %v7597 = vmul.f32 %v7512, %v7536
        %v7598 = vmul.f32 %v7513, %v7540
        %v7599 = vmul.f32 %v7514, %v7544
        %v7600 = vmul.f32 %v7515, %v7548
        %v7601 = vmul.f32 %v7516, %v7536
        %v7602 = vmul.f32 %v7517, %v7540
        %v7603 = vmul.f32 %v7518, %v7544
        %v7604 = vmul.f32 %v7519, %v7548
        %v7605 = vmul.f32 %v7520, %v7536
        %v7606 = vmul.f32 %v7521, %v7540
        %v7607 = vmul.f32 %v7522, %v7544
        %v7608 = vmul.f32 %v7523, %v7548
        %v7609 = vmul.f32 %v7524, %v7536
        %v7610 = vmul.f32 %v7525, %v7540
        %v7611 = vmul.f32 %v7526, %v7544
        %v7612 = vmul.f32 %v7527, %v7548
        %v7613 = vmul.f32 %v7528, %v7536
        %v7614 = vmul.f32 %v7529, %v7540
        %v7615 = vmul.f32 %v7530, %v7544
        %v7616 = vmul.f32 %v7531, %v7548
        %v7618 = vlaneseq
        %v7619 = vshrl.u32 %v7618, 7
        %v7620 = vsub.s32 0, %v7619
        %v7621 = vrot.slane %v7115, %v7620
        %v7622 = vlaneseq
        %v7623 = vshrl.u32 %v7622, 7
        %v7624 = vsub.s32 1, %v7623
        %v7625 = vrot.slane %v7115, %v7624
        %v7626 = vlaneseq
        %v7627 = vshrl.u32 %v7626, 7
        %v7628 = vsub.s32 2, %v7627
        %v7629 = vrot.slane %v7115, %v7628
        %v7630 = vlaneseq
        %v7631 = vshrl.u32 %v7630, 7
        %v7632 = vsub.s32 3, %v7631
        %v7633 = vrot.slane %v7115, %v7632
        %v7638 = vadd.f32 %v7553, %v7621
        %v7639 = vadd.f32 %v7554, %v7625
        %v7640 = vadd.f32 %v7555, %v7629
        %v7641 = vadd.f32 %v7556, %v7633
        %v7642 = vadd.f32 %v7557, %v7621
        %v7643 = vadd.f32 %v7558, %v7625
        %v7644 = vadd.f32 %v7559, %v7629
        %v7645 = vadd.f32 %v7560, %v7633
        %v7646 = vadd.f32 %v7561, %v7621
        %v7647 = vadd.f32 %v7562, %v7625
        %v7648 = vadd.f32 %v7563, %v7629
        %v7649 = vadd.f32 %v7564, %v7633
        %v7650 = vadd.f32 %v7565, %v7621
        %v7651 = vadd.f32 %v7566, %v7625
        %v7652 = vadd.f32 %v7567, %v7629
        %v7653 = vadd.f32 %v7568, %v7633
        %v7654 = vadd.f32 %v7569, %v7621
        %v7655 = vadd.f32 %v7570, %v7625
        %v7656 = vadd.f32 %v7571, %v7629
        %v7657 = vadd.f32 %v7572, %v7633
        %v7658 = vadd.f32 %v7573, %v7621
        %v7659 = vadd.f32 %v7574, %v7625
        %v7660 = vadd.f32 %v7575, %v7629
        %v7661 = vadd.f32 %v7576, %v7633
        %v7662 = vadd.f32 %v7577, %v7621
        %v7663 = vadd.f32 %v7578, %v7625
        %v7664 = vadd.f32 %v7579, %v7629
        %v7665 = vadd.f32 %v7580, %v7633
        %v7666 = vadd.f32 %v7581, %v7621
        %v7667 = vadd.f32 %v7582, %v7625
        %v7668 = vadd.f32 %v7583, %v7629
        %v7669 = vadd.f32 %v7584, %v7633
        %v7670 = vadd.f32 %v7585, %v7621
        %v7671 = vadd.f32 %v7586, %v7625
        %v7672 = vadd.f32 %v7587, %v7629
        %v7673 = vadd.f32 %v7588, %v7633
        %v7674 = vadd.f32 %v7589, %v7621
        %v7675 = vadd.f32 %v7590, %v7625
        %v7676 = vadd.f32 %v7591, %v7629
        %v7677 = vadd.f32 %v7592, %v7633
        %v7678 = vadd.f32 %v7593, %v7621
        %v7679 = vadd.f32 %v7594, %v7625
        %v7680 = vadd.f32 %v7595, %v7629
        %v7681 = vadd.f32 %v7596, %v7633
        %v7682 = vadd.f32 %v7597, %v7621
        %v7683 = vadd.f32 %v7598, %v7625
        %v7684 = vadd.f32 %v7599, %v7629
        %v7685 = vadd.f32 %v7600, %v7633
        %v7686 = vadd.f32 %v7601, %v7621
        %v7687 = vadd.f32 %v7602, %v7625
        %v7688 = vadd.f32 %v7603, %v7629
        %v7689 = vadd.f32 %v7604, %v7633
        %v7690 = vadd.f32 %v7605, %v7621
        %v7691 = vadd.f32 %v7606, %v7625
        %v7692 = vadd.f32 %v7607, %v7629
        %v7693 = vadd.f32 %v7608, %v7633
        %v7694 = vadd.f32 %v7609, %v7621
        %v7695 = vadd.f32 %v7610, %v7625
        %v7696 = vadd.f32 %v7611, %v7629
        %v7697 = vadd.f32 %v7612, %v7633
        %v7698 = vadd.f32 %v7613, %v7621
        %v7699 = vadd.f32 %v7614, %v7625
        %v7700 = vadd.f32 %v7615, %v7629
        %v7701 = vadd.f32 %v7616, %v7633
        %v7702 = vpack.c.bf16 %v7642, %v7638
        %v7703 = vpack.c.bf16 %v7643, %v7639
        %v7704 = vpack.c.bf16 %v7644, %v7640
        %v7705 = vpack.c.bf16 %v7645, %v7641
        %v7706 = vpack.c.bf16 %v7650, %v7646
        %v7707 = vpack.c.bf16 %v7651, %v7647
        %v7708 = vpack.c.bf16 %v7652, %v7648
        %v7709 = vpack.c.bf16 %v7653, %v7649
        %v7710 = vpack.c.bf16 %v7658, %v7654
        %v7711 = vpack.c.bf16 %v7659, %v7655
        %v7712 = vpack.c.bf16 %v7660, %v7656
        %v7713 = vpack.c.bf16 %v7661, %v7657
        %v7714 = vpack.c.bf16 %v7666, %v7662
        %v7715 = vpack.c.bf16 %v7667, %v7663
        %v7716 = vpack.c.bf16 %v7668, %v7664
        %v7717 = vpack.c.bf16 %v7669, %v7665
        %v7718 = vpack.c.bf16 %v7674, %v7670
        %v7719 = vpack.c.bf16 %v7675, %v7671
        %v7720 = vpack.c.bf16 %v7676, %v7672
        %v7721 = vpack.c.bf16 %v7677, %v7673
        %v7722 = vpack.c.bf16 %v7682, %v7678
        %v7723 = vpack.c.bf16 %v7683, %v7679
        %v7724 = vpack.c.bf16 %v7684, %v7680
        %v7725 = vpack.c.bf16 %v7685, %v7681
        %v7726 = vpack.c.bf16 %v7690, %v7686
        %v7727 = vpack.c.bf16 %v7691, %v7687
        %v7728 = vpack.c.bf16 %v7692, %v7688
        %v7729 = vpack.c.bf16 %v7693, %v7689
        %v7730 = vpack.c.bf16 %v7698, %v7694
        %v7731 = vpack.c.bf16 %v7699, %v7695
        %v7732 = vpack.c.bf16 %v7700, %v7696
        %v7733 = vpack.c.bf16 %v7701, %v7697
        %v7734 = vld [vmem:[#allocation10] sm:$0xff]
        %v7735 = vld [vmem:[#allocation10 + $0x8] sm:$0xff]
        %v7736 = vld [vmem:[#allocation10 + $0x10] sm:$0xff]
        %v7737 = vld [vmem:[#allocation10 + $0x18] sm:$0xff]
        %v7738 = vld [vmem:[#allocation10 + $0x20] sm:$0xff]
        %v7739 = vld [vmem:[#allocation10 + $0x28] sm:$0xff]
        %v7740 = vld [vmem:[#allocation10 + $0x30] sm:$0xff]
        %v7741 = vld [vmem:[#allocation10 + $0x38] sm:$0xff]
        %v7742 = vld [vmem:[#allocation10 + $0x40] sm:$0xff]
        %v7743 = vld [vmem:[#allocation10 + $0x48] sm:$0xff]
        %v7744 = vld [vmem:[#allocation10 + $0x50] sm:$0xff]
        %v7745 = vld [vmem:[#allocation10 + $0x58] sm:$0xff]
        %v7746 = vld [vmem:[#allocation10 + $0x60] sm:$0xff]
        %v7747 = vld [vmem:[#allocation10 + $0x68] sm:$0xff]
        %v7748 = vld [vmem:[#allocation10 + $0x70] sm:$0xff]
        %v7749 = vld [vmem:[#allocation10 + $0x78] sm:$0xff]
        %v7750 = vld [vmem:[#allocation10 + $0x80] sm:$0xff]
        %v7751 = vld [vmem:[#allocation10 + $0x88] sm:$0xff]
        %v7752 = vld [vmem:[#allocation10 + $0x90] sm:$0xff]
        %v7753 = vld [vmem:[#allocation10 + $0x98] sm:$0xff]
        %v7754 = vld [vmem:[#allocation10 + $0xa0] sm:$0xff]
        %v7755 = vld [vmem:[#allocation10 + $0xa8] sm:$0xff]
        %v7756 = vld [vmem:[#allocation10 + $0xb0] sm:$0xff]
        %v7757 = vld [vmem:[#allocation10 + $0xb8] sm:$0xff]
        %v7758 = vld [vmem:[#allocation10 + $0xc0] sm:$0xff]
        %v7759 = vld [vmem:[#allocation10 + $0xc8] sm:$0xff]
        %v7760 = vld [vmem:[#allocation10 + $0xd0] sm:$0xff]
        %v7761 = vld [vmem:[#allocation10 + $0xd8] sm:$0xff]
        %v7762 = vld [vmem:[#allocation10 + $0xe0] sm:$0xff]
        %v7763 = vld [vmem:[#allocation10 + $0xe8] sm:$0xff]
        %v7764 = vld [vmem:[#allocation10 + $0xf0] sm:$0xff]
        %v7765 = vld [vmem:[#allocation10 + $0xf8] sm:$0xff]
        %v7766 = vld [vmem:[#allocation10 + $0x100] sm:$0xff]
        %v7767 = vld [vmem:[#allocation10 + $0x108] sm:$0xff]
        %v7768 = vld [vmem:[#allocation10 + $0x110] sm:$0xff]
        %v7769 = vld [vmem:[#allocation10 + $0x118] sm:$0xff]
        %v7770 = vld [vmem:[#allocation10 + $0x120] sm:$0xff]
        %v7771 = vld [vmem:[#allocation10 + $0x128] sm:$0xff]
        %v7772 = vld [vmem:[#allocation10 + $0x130] sm:$0xff]
        %v7773 = vld [vmem:[#allocation10 + $0x138] sm:$0xff]
        %v7774 = vld [vmem:[#allocation10 + $0x140] sm:$0xff]
        %v7775 = vld [vmem:[#allocation10 + $0x148] sm:$0xff]
        %v7776 = vld [vmem:[#allocation10 + $0x150] sm:$0xff]
        %v7777 = vld [vmem:[#allocation10 + $0x158] sm:$0xff]
        %v7778 = vld [vmem:[#allocation10 + $0x160] sm:$0xff]
        %v7779 = vld [vmem:[#allocation10 + $0x168] sm:$0xff]
        %v7780 = vld [vmem:[#allocation10 + $0x170] sm:$0xff]
        %v7781 = vld [vmem:[#allocation10 + $0x178] sm:$0xff]
        %v7782 = vld [vmem:[#allocation10 + $0x180] sm:$0xff]
        %v7783 = vld [vmem:[#allocation10 + $0x188] sm:$0xff]
        %v7784 = vld [vmem:[#allocation10 + $0x190] sm:$0xff]
        %v7785 = vld [vmem:[#allocation10 + $0x198] sm:$0xff]
        %v7786 = vld [vmem:[#allocation10 + $0x1a0] sm:$0xff]
        %v7787 = vld [vmem:[#allocation10 + $0x1a8] sm:$0xff]
        %v7788 = vld [vmem:[#allocation10 + $0x1b0] sm:$0xff]
        %v7789 = vld [vmem:[#allocation10 + $0x1b8] sm:$0xff]
        %v7790 = vld [vmem:[#allocation10 + $0x1c0] sm:$0xff]
        %v7791 = vld [vmem:[#allocation10 + $0x1c8] sm:$0xff]
        %v7792 = vld [vmem:[#allocation10 + $0x1d0] sm:$0xff]
        %v7793 = vld [vmem:[#allocation10 + $0x1d8] sm:$0xff]
        %v7794 = vld [vmem:[#allocation10 + $0x1e0] sm:$0xff]
        %v7795 = vld [vmem:[#allocation10 + $0x1e8] sm:$0xff]
        %v7796 = vld [vmem:[#allocation10 + $0x1f0] sm:$0xff]
        %v7797 = vld [vmem:[#allocation10 + $0x1f8] sm:$0xff]
        %v7798 = vld [vmem:[#allocation10 + $0x200] sm:$0xff]
        %v7799 = vld [vmem:[#allocation10 + $0x208] sm:$0xff]
        %v7800 = vld [vmem:[#allocation10 + $0x210] sm:$0xff]
        %v7801 = vld [vmem:[#allocation10 + $0x218] sm:$0xff]
        %v7802 = vld [vmem:[#allocation10 + $0x220] sm:$0xff]
        %v7803 = vld [vmem:[#allocation10 + $0x228] sm:$0xff]
        %v7804 = vld [vmem:[#allocation10 + $0x230] sm:$0xff]
        %v7805 = vld [vmem:[#allocation10 + $0x238] sm:$0xff]
        %v7806 = vld [vmem:[#allocation10 + $0x240] sm:$0xff]
        %v7807 = vld [vmem:[#allocation10 + $0x248] sm:$0xff]
        %v7808 = vld [vmem:[#allocation10 + $0x250] sm:$0xff]
        %v7809 = vld [vmem:[#allocation10 + $0x258] sm:$0xff]
        %v7810 = vld [vmem:[#allocation10 + $0x260] sm:$0xff]
        %v7811 = vld [vmem:[#allocation10 + $0x268] sm:$0xff]
        %v7812 = vld [vmem:[#allocation10 + $0x270] sm:$0xff]
        %v7813 = vld [vmem:[#allocation10 + $0x278] sm:$0xff]
        %v7814 = vld [vmem:[#allocation10 + $0x280] sm:$0xff]
        %v7815 = vld [vmem:[#allocation10 + $0x288] sm:$0xff]
        %v7816 = vld [vmem:[#allocation10 + $0x290] sm:$0xff]
        %v7817 = vld [vmem:[#allocation10 + $0x298] sm:$0xff]
        %v7818 = vld [vmem:[#allocation10 + $0x2a0] sm:$0xff]
        %v7819 = vld [vmem:[#allocation10 + $0x2a8] sm:$0xff]
        %v7820 = vld [vmem:[#allocation10 + $0x2b0] sm:$0xff]
        %v7821 = vld [vmem:[#allocation10 + $0x2b8] sm:$0xff]
        %v7822 = vld [vmem:[#allocation10 + $0x2c0] sm:$0xff]
        %v7823 = vld [vmem:[#allocation10 + $0x2c8] sm:$0xff]
        %v7824 = vld [vmem:[#allocation10 + $0x2d0] sm:$0xff]
        %v7825 = vld [vmem:[#allocation10 + $0x2d8] sm:$0xff]
        %v7826 = vld [vmem:[#allocation10 + $0x2e0] sm:$0xff]
        %v7827 = vld [vmem:[#allocation10 + $0x2e8] sm:$0xff]
        %v7828 = vld [vmem:[#allocation10 + $0x2f0] sm:$0xff]
        %v7829 = vld [vmem:[#allocation10 + $0x2f8] sm:$0xff]
        %v7830 = vld [vmem:[#allocation10 + $0x300] sm:$0xff]
        %v7831 = vld [vmem:[#allocation10 + $0x308] sm:$0xff]
        %v7832 = vld [vmem:[#allocation10 + $0x310] sm:$0xff]
        %v7833 = vld [vmem:[#allocation10 + $0x318] sm:$0xff]
        %v7834 = vld [vmem:[#allocation10 + $0x320] sm:$0xff]
        %v7835 = vld [vmem:[#allocation10 + $0x328] sm:$0xff]
        %v7836 = vld [vmem:[#allocation10 + $0x330] sm:$0xff]
        %v7837 = vld [vmem:[#allocation10 + $0x338] sm:$0xff]
        %v7838 = vld [vmem:[#allocation10 + $0x340] sm:$0xff]
        %v7839 = vld [vmem:[#allocation10 + $0x348] sm:$0xff]
        %v7840 = vld [vmem:[#allocation10 + $0x350] sm:$0xff]
        %v7841 = vld [vmem:[#allocation10 + $0x358] sm:$0xff]
        %v7842 = vld [vmem:[#allocation10 + $0x360] sm:$0xff]
        %v7843 = vld [vmem:[#allocation10 + $0x368] sm:$0xff]
        %v7844 = vld [vmem:[#allocation10 + $0x370] sm:$0xff]
        %v7845 = vld [vmem:[#allocation10 + $0x378] sm:$0xff]
        %v7846 = vld [vmem:[#allocation10 + $0x380] sm:$0xff]
        %v7847 = vld [vmem:[#allocation10 + $0x388] sm:$0xff]
        %v7848 = vld [vmem:[#allocation10 + $0x390] sm:$0xff]
        %v7849 = vld [vmem:[#allocation10 + $0x398] sm:$0xff]
        %v7850 = vld [vmem:[#allocation10 + $0x3a0] sm:$0xff]
        %v7851 = vld [vmem:[#allocation10 + $0x3a8] sm:$0xff]
        %v7852 = vld [vmem:[#allocation10 + $0x3b0] sm:$0xff]
        %v7853 = vld [vmem:[#allocation10 + $0x3b8] sm:$0xff]
        %v7854 = vld [vmem:[#allocation10 + $0x3c0] sm:$0xff]
        %v7855 = vld [vmem:[#allocation10 + $0x3c8] sm:$0xff]
        %v7856 = vld [vmem:[#allocation10 + $0x3d0] sm:$0xff]
        %v7857 = vld [vmem:[#allocation10 + $0x3d8] sm:$0xff]
        %v7858 = vld [vmem:[#allocation10 + $0x3e0] sm:$0xff]
        %v7859 = vld [vmem:[#allocation10 + $0x3e8] sm:$0xff]
        %v7860 = vld [vmem:[#allocation10 + $0x3f0] sm:$0xff]
        %v7861 = vld [vmem:[#allocation10 + $0x3f8] sm:$0xff]
        %s7862 = scalar_lea.vmem [#allocation12], 4
        %v7863 = vld [vmem:[%s7862] ss:$8 sm:$0xf]
        %v7865 = vlaneseq
        %v7866 = vshrl.u32 %v7865, 7
        %v7867 = vsub.s32 0, %v7866
        %v7868 = vrot.slane %v7863, %v7867
        %v7869 = vlaneseq
        %v7870 = vshrl.u32 %v7869, 7
        %v7871 = vsub.s32 1, %v7870
        %v7872 = vrot.slane %v7863, %v7871
        %v7873 = vlaneseq
        %v7874 = vshrl.u32 %v7873, 7
        %v7875 = vsub.s32 2, %v7874
        %v7876 = vrot.slane %v7863, %v7875
        %v7877 = vlaneseq
        %v7878 = vshrl.u32 %v7877, 7
        %v7879 = vsub.s32 3, %v7878
        %v7880 = vrot.slane %v7863, %v7879
        %v8013 = vunpack.c.l.b16 %v7734
        %v8014 = vunpack.c.h.b16 %v7734
        %v8015 = vunpack.c.l.b16 %v7735
        %v8016 = vunpack.c.h.b16 %v7735
        %v8017 = vunpack.c.l.b16 %v7736
        %v8018 = vunpack.c.h.b16 %v7736
        %v8019 = vunpack.c.l.b16 %v7737
        %v8020 = vunpack.c.h.b16 %v7737
        %v8021 = vunpack.c.l.b16 %v7738
        %v8022 = vunpack.c.h.b16 %v7738
        %v8023 = vunpack.c.l.b16 %v7739
        %v8024 = vunpack.c.h.b16 %v7739
        %v8025 = vunpack.c.l.b16 %v7740
        %v8026 = vunpack.c.h.b16 %v7740
        %v8027 = vunpack.c.l.b16 %v7741
        %v8028 = vunpack.c.h.b16 %v7741
        %v8029 = vunpack.c.l.b16 %v7742
        %v8030 = vunpack.c.h.b16 %v7742
        %v8031 = vunpack.c.l.b16 %v7743
        %v8032 = vunpack.c.h.b16 %v7743
        %v8033 = vunpack.c.l.b16 %v7744
        %v8034 = vunpack.c.h.b16 %v7744
        %v8035 = vunpack.c.l.b16 %v7745
        %v8036 = vunpack.c.h.b16 %v7745
        %v8037 = vunpack.c.l.b16 %v7746
        %v8038 = vunpack.c.h.b16 %v7746
        %v8039 = vunpack.c.l.b16 %v7747
        %v8040 = vunpack.c.h.b16 %v7747
        %v8041 = vunpack.c.l.b16 %v7748
        %v8042 = vunpack.c.h.b16 %v7748
        %v8043 = vunpack.c.l.b16 %v7749
        %v8044 = vunpack.c.h.b16 %v7749
        %v8045 = vunpack.c.l.b16 %v7750
        %v8046 = vunpack.c.h.b16 %v7750
        %v8047 = vunpack.c.l.b16 %v7751
        %v8048 = vunpack.c.h.b16 %v7751
        %v8049 = vunpack.c.l.b16 %v7752
        %v8050 = vunpack.c.h.b16 %v7752
        %v8051 = vunpack.c.l.b16 %v7753
        %v8052 = vunpack.c.h.b16 %v7753
        %v8053 = vunpack.c.l.b16 %v7754
        %v8054 = vunpack.c.h.b16 %v7754
        %v8055 = vunpack.c.l.b16 %v7755
        %v8056 = vunpack.c.h.b16 %v7755
        %v8057 = vunpack.c.l.b16 %v7756
        %v8058 = vunpack.c.h.b16 %v7756
        %v8059 = vunpack.c.l.b16 %v7757
        %v8060 = vunpack.c.h.b16 %v7757
        %v8061 = vunpack.c.l.b16 %v7758
        %v8062 = vunpack.c.h.b16 %v7758
        %v8063 = vunpack.c.l.b16 %v7759
        %v8064 = vunpack.c.h.b16 %v7759
        %v8065 = vunpack.c.l.b16 %v7760
        %v8066 = vunpack.c.h.b16 %v7760
        %v8067 = vunpack.c.l.b16 %v7761
        %v8068 = vunpack.c.h.b16 %v7761
        %v8069 = vunpack.c.l.b16 %v7762
        %v8070 = vunpack.c.h.b16 %v7762
        %v8071 = vunpack.c.l.b16 %v7763
        %v8072 = vunpack.c.h.b16 %v7763
        %v8073 = vunpack.c.l.b16 %v7764
        %v8074 = vunpack.c.h.b16 %v7764
        %v8075 = vunpack.c.l.b16 %v7765
        %v8076 = vunpack.c.h.b16 %v7765
        %v8077 = vunpack.c.l.b16 %v7766
        %v8078 = vunpack.c.h.b16 %v7766
        %v8079 = vunpack.c.l.b16 %v7767
        %v8080 = vunpack.c.h.b16 %v7767
        %v8081 = vunpack.c.l.b16 %v7768
        %v8082 = vunpack.c.h.b16 %v7768
        %v8083 = vunpack.c.l.b16 %v7769
        %v8084 = vunpack.c.h.b16 %v7769
        %v8085 = vunpack.c.l.b16 %v7770
        %v8086 = vunpack.c.h.b16 %v7770
        %v8087 = vunpack.c.l.b16 %v7771
        %v8088 = vunpack.c.h.b16 %v7771
        %v8089 = vunpack.c.l.b16 %v7772
        %v8090 = vunpack.c.h.b16 %v7772
        %v8091 = vunpack.c.l.b16 %v7773
        %v8092 = vunpack.c.h.b16 %v7773
        %v8093 = vunpack.c.l.b16 %v7774
        %v8094 = vunpack.c.h.b16 %v7774
        %v8095 = vunpack.c.l.b16 %v7775
        %v8096 = vunpack.c.h.b16 %v7775
        %v8097 = vunpack.c.l.b16 %v7776
        %v8098 = vunpack.c.h.b16 %v7776
        %v8099 = vunpack.c.l.b16 %v7777
        %v8100 = vunpack.c.h.b16 %v7777
        %v8101 = vunpack.c.l.b16 %v7778
        %v8102 = vunpack.c.h.b16 %v7778
        %v8103 = vunpack.c.l.b16 %v7779
        %v8104 = vunpack.c.h.b16 %v7779
        %v8105 = vunpack.c.l.b16 %v7780
        %v8106 = vunpack.c.h.b16 %v7780
        %v8107 = vunpack.c.l.b16 %v7781
        %v8108 = vunpack.c.h.b16 %v7781
        %v8109 = vunpack.c.l.b16 %v7782
        %v8110 = vunpack.c.h.b16 %v7782
        %v8111 = vunpack.c.l.b16 %v7783
        %v8112 = vunpack.c.h.b16 %v7783
        %v8113 = vunpack.c.l.b16 %v7784
        %v8114 = vunpack.c.h.b16 %v7784
        %v8115 = vunpack.c.l.b16 %v7785
        %v8116 = vunpack.c.h.b16 %v7785
        %v8117 = vunpack.c.l.b16 %v7786
        %v8118 = vunpack.c.h.b16 %v7786
        %v8119 = vunpack.c.l.b16 %v7787
        %v8120 = vunpack.c.h.b16 %v7787
        %v8121 = vunpack.c.l.b16 %v7788
        %v8122 = vunpack.c.h.b16 %v7788
        %v8123 = vunpack.c.l.b16 %v7789
        %v8124 = vunpack.c.h.b16 %v7789
        %v8125 = vunpack.c.l.b16 %v7790
        %v8126 = vunpack.c.h.b16 %v7790
        %v8127 = vunpack.c.l.b16 %v7791
        %v8128 = vunpack.c.h.b16 %v7791
        %v8129 = vunpack.c.l.b16 %v7792
        %v8130 = vunpack.c.h.b16 %v7792
        %v8131 = vunpack.c.l.b16 %v7793
        %v8132 = vunpack.c.h.b16 %v7793
        %v8133 = vunpack.c.l.b16 %v7794
        %v8134 = vunpack.c.h.b16 %v7794
        %v8135 = vunpack.c.l.b16 %v7795
        %v8136 = vunpack.c.h.b16 %v7795
        %v8137 = vunpack.c.l.b16 %v7796
        %v8138 = vunpack.c.h.b16 %v7796
        %v8139 = vunpack.c.l.b16 %v7797
        %v8140 = vunpack.c.h.b16 %v7797
        %v8141 = vunpack.c.l.b16 %v7798
        %v8142 = vunpack.c.h.b16 %v7798
        %v8143 = vunpack.c.l.b16 %v7799
        %v8144 = vunpack.c.h.b16 %v7799
        %v8145 = vunpack.c.l.b16 %v7800
        %v8146 = vunpack.c.h.b16 %v7800
        %v8147 = vunpack.c.l.b16 %v7801
        %v8148 = vunpack.c.h.b16 %v7801
        %v8149 = vunpack.c.l.b16 %v7802
        %v8150 = vunpack.c.h.b16 %v7802
        %v8151 = vunpack.c.l.b16 %v7803
        %v8152 = vunpack.c.h.b16 %v7803
        %v8153 = vunpack.c.l.b16 %v7804
        %v8154 = vunpack.c.h.b16 %v7804
        %v8155 = vunpack.c.l.b16 %v7805
        %v8156 = vunpack.c.h.b16 %v7805
        %v8157 = vunpack.c.l.b16 %v7806
        %v8158 = vunpack.c.h.b16 %v7806
        %v8159 = vunpack.c.l.b16 %v7807
        %v8160 = vunpack.c.h.b16 %v7807
        %v8161 = vunpack.c.l.b16 %v7808
        %v8162 = vunpack.c.h.b16 %v7808
        %v8163 = vunpack.c.l.b16 %v7809
        %v8164 = vunpack.c.h.b16 %v7809
        %v8165 = vunpack.c.l.b16 %v7810
        %v8166 = vunpack.c.h.b16 %v7810
        %v8167 = vunpack.c.l.b16 %v7811
        %v8168 = vunpack.c.h.b16 %v7811
        %v8169 = vunpack.c.l.b16 %v7812
        %v8170 = vunpack.c.h.b16 %v7812
        %v8171 = vunpack.c.l.b16 %v7813
        %v8172 = vunpack.c.h.b16 %v7813
        %v8173 = vunpack.c.l.b16 %v7814
        %v8174 = vunpack.c.h.b16 %v7814
        %v8175 = vunpack.c.l.b16 %v7815
        %v8176 = vunpack.c.h.b16 %v7815
        %v8177 = vunpack.c.l.b16 %v7816
        %v8178 = vunpack.c.h.b16 %v7816
        %v8179 = vunpack.c.l.b16 %v7817
        %v8180 = vunpack.c.h.b16 %v7817
        %v8181 = vunpack.c.l.b16 %v7818
        %v8182 = vunpack.c.h.b16 %v7818
        %v8183 = vunpack.c.l.b16 %v7819
        %v8184 = vunpack.c.h.b16 %v7819
        %v8185 = vunpack.c.l.b16 %v7820
        %v8186 = vunpack.c.h.b16 %v7820
        %v8187 = vunpack.c.l.b16 %v7821
        %v8188 = vunpack.c.h.b16 %v7821
        %v8189 = vunpack.c.l.b16 %v7822
        %v8190 = vunpack.c.h.b16 %v7822
        %v8191 = vunpack.c.l.b16 %v7823
        %v8192 = vunpack.c.h.b16 %v7823
        %v8193 = vunpack.c.l.b16 %v7824
        %v8194 = vunpack.c.h.b16 %v7824
        %v8195 = vunpack.c.l.b16 %v7825
        %v8196 = vunpack.c.h.b16 %v7825
        %v8197 = vunpack.c.l.b16 %v7826
        %v8198 = vunpack.c.h.b16 %v7826
        %v8199 = vunpack.c.l.b16 %v7827
        %v8200 = vunpack.c.h.b16 %v7827
        %v8201 = vunpack.c.l.b16 %v7828
        %v8202 = vunpack.c.h.b16 %v7828
        %v8203 = vunpack.c.l.b16 %v7829
        %v8204 = vunpack.c.h.b16 %v7829
        %v8205 = vunpack.c.l.b16 %v7830
        %v8206 = vunpack.c.h.b16 %v7830
        %v8207 = vunpack.c.l.b16 %v7831
        %v8208 = vunpack.c.h.b16 %v7831
        %v8209 = vunpack.c.l.b16 %v7832
        %v8210 = vunpack.c.h.b16 %v7832
        %v8211 = vunpack.c.l.b16 %v7833
        %v8212 = vunpack.c.h.b16 %v7833
        %v8213 = vunpack.c.l.b16 %v7834
        %v8214 = vunpack.c.h.b16 %v7834
        %v8215 = vunpack.c.l.b16 %v7835
        %v8216 = vunpack.c.h.b16 %v7835
        %v8217 = vunpack.c.l.b16 %v7836
        %v8218 = vunpack.c.h.b16 %v7836
        %v8219 = vunpack.c.l.b16 %v7837
        %v8220 = vunpack.c.h.b16 %v7837
        %v8221 = vunpack.c.l.b16 %v7838
        %v8222 = vunpack.c.h.b16 %v7838
        %v8223 = vunpack.c.l.b16 %v7839
        %v8224 = vunpack.c.h.b16 %v7839
        %v8225 = vunpack.c.l.b16 %v7840
        %v8226 = vunpack.c.h.b16 %v7840
        %v8227 = vunpack.c.l.b16 %v7841
        %v8228 = vunpack.c.h.b16 %v7841
        %v8229 = vunpack.c.l.b16 %v7842
        %v8230 = vunpack.c.h.b16 %v7842
        %v8231 = vunpack.c.l.b16 %v7843
        %v8232 = vunpack.c.h.b16 %v7843
        %v8233 = vunpack.c.l.b16 %v7844
        %v8234 = vunpack.c.h.b16 %v7844
        %v8235 = vunpack.c.l.b16 %v7845
        %v8236 = vunpack.c.h.b16 %v7845
        %v8237 = vunpack.c.l.b16 %v7846
        %v8238 = vunpack.c.h.b16 %v7846
        %v8239 = vunpack.c.l.b16 %v7847
        %v8240 = vunpack.c.h.b16 %v7847
        %v8241 = vunpack.c.l.b16 %v7848
        %v8242 = vunpack.c.h.b16 %v7848
        %v8243 = vunpack.c.l.b16 %v7849
        %v8244 = vunpack.c.h.b16 %v7849
        %v8245 = vunpack.c.l.b16 %v7850
        %v8246 = vunpack.c.h.b16 %v7850
        %v8247 = vunpack.c.l.b16 %v7851
        %v8248 = vunpack.c.h.b16 %v7851
        %v8249 = vunpack.c.l.b16 %v7852
        %v8250 = vunpack.c.h.b16 %v7852
        %v8251 = vunpack.c.l.b16 %v7853
        %v8252 = vunpack.c.h.b16 %v7853
        %v8253 = vunpack.c.l.b16 %v7854
        %v8254 = vunpack.c.h.b16 %v7854
        %v8255 = vunpack.c.l.b16 %v7855
        %v8256 = vunpack.c.h.b16 %v7855
        %v8257 = vunpack.c.l.b16 %v7856
        %v8258 = vunpack.c.h.b16 %v7856
        %v8259 = vunpack.c.l.b16 %v7857
        %v8260 = vunpack.c.h.b16 %v7857
        %v8261 = vunpack.c.l.b16 %v7858
        %v8262 = vunpack.c.h.b16 %v7858
        %v8263 = vunpack.c.l.b16 %v7859
        %v8264 = vunpack.c.h.b16 %v7859
        %v8265 = vunpack.c.l.b16 %v7860
        %v8266 = vunpack.c.h.b16 %v7860
        %v8267 = vunpack.c.l.b16 %v7861
        %v8268 = vunpack.c.h.b16 %v7861
        %v8269 = vpack.c.b16 %v8017, %v8013
        %v8270 = vpack.c.b16 %v8018, %v8014
        %v8271 = vpack.c.b16 %v8019, %v8015
        %v8272 = vpack.c.b16 %v8020, %v8016
        %v8273 = vpack.c.b16 %v8025, %v8021
        %v8274 = vpack.c.b16 %v8026, %v8022
        %v8275 = vpack.c.b16 %v8027, %v8023
        %v8276 = vpack.c.b16 %v8028, %v8024
        %v8277 = vpack.c.b16 %v8033, %v8029
        %v8278 = vpack.c.b16 %v8034, %v8030
        %v8279 = vpack.c.b16 %v8035, %v8031
        %v8280 = vpack.c.b16 %v8036, %v8032
        %v8281 = vpack.c.b16 %v8041, %v8037
        %v8282 = vpack.c.b16 %v8042, %v8038
        %v8283 = vpack.c.b16 %v8043, %v8039
        %v8284 = vpack.c.b16 %v8044, %v8040
        %v8285 = vpack.c.b16 %v8049, %v8045
        %v8286 = vpack.c.b16 %v8050, %v8046
        %v8287 = vpack.c.b16 %v8051, %v8047
        %v8288 = vpack.c.b16 %v8052, %v8048
        %v8289 = vpack.c.b16 %v8057, %v8053
        %v8290 = vpack.c.b16 %v8058, %v8054
        %v8291 = vpack.c.b16 %v8059, %v8055
        %v8292 = vpack.c.b16 %v8060, %v8056
        %v8293 = vpack.c.b16 %v8065, %v8061
        %v8294 = vpack.c.b16 %v8066, %v8062
        %v8295 = vpack.c.b16 %v8067, %v8063
        %v8296 = vpack.c.b16 %v8068, %v8064
        %v8297 = vpack.c.b16 %v8073, %v8069
        %v8298 = vpack.c.b16 %v8074, %v8070
        %v8299 = vpack.c.b16 %v8075, %v8071
        %v8300 = vpack.c.b16 %v8076, %v8072
        %v8301 = vpack.c.b16 %v8081, %v8077
        %v8302 = vpack.c.b16 %v8082, %v8078
        %v8303 = vpack.c.b16 %v8083, %v8079
        %v8304 = vpack.c.b16 %v8084, %v8080
        %v8305 = vpack.c.b16 %v8089, %v8085
        %v8306 = vpack.c.b16 %v8090, %v8086
        %v8307 = vpack.c.b16 %v8091, %v8087
        %v8308 = vpack.c.b16 %v8092, %v8088
        %v8309 = vpack.c.b16 %v8097, %v8093
        %v8310 = vpack.c.b16 %v8098, %v8094
        %v8311 = vpack.c.b16 %v8099, %v8095
        %v8312 = vpack.c.b16 %v8100, %v8096
        %v8313 = vpack.c.b16 %v8105, %v8101
        %v8314 = vpack.c.b16 %v8106, %v8102
        %v8315 = vpack.c.b16 %v8107, %v8103
        %v8316 = vpack.c.b16 %v8108, %v8104
        %v8317 = vpack.c.b16 %v8113, %v8109
        %v8318 = vpack.c.b16 %v8114, %v8110
        %v8319 = vpack.c.b16 %v8115, %v8111
        %v8320 = vpack.c.b16 %v8116, %v8112
        %v8321 = vpack.c.b16 %v8121, %v8117
        %v8322 = vpack.c.b16 %v8122, %v8118
        %v8323 = vpack.c.b16 %v8123, %v8119
        %v8324 = vpack.c.b16 %v8124, %v8120
        %v8325 = vpack.c.b16 %v8129, %v8125
        %v8326 = vpack.c.b16 %v8130, %v8126
        %v8327 = vpack.c.b16 %v8131, %v8127
        %v8328 = vpack.c.b16 %v8132, %v8128
        %v8329 = vpack.c.b16 %v8137, %v8133
        %v8330 = vpack.c.b16 %v8138, %v8134
        %v8331 = vpack.c.b16 %v8139, %v8135
        %v8332 = vpack.c.b16 %v8140, %v8136
        %v8333 = vpack.c.b16 %v8145, %v8141
        %v8334 = vpack.c.b16 %v8146, %v8142
        %v8335 = vpack.c.b16 %v8147, %v8143
        %v8336 = vpack.c.b16 %v8148, %v8144
        %v8337 = vpack.c.b16 %v8153, %v8149
        %v8338 = vpack.c.b16 %v8154, %v8150
        %v8339 = vpack.c.b16 %v8155, %v8151
        %v8340 = vpack.c.b16 %v8156, %v8152
        %v8341 = vpack.c.b16 %v8161, %v8157
        %v8342 = vpack.c.b16 %v8162, %v8158
        %v8343 = vpack.c.b16 %v8163, %v8159
        %v8344 = vpack.c.b16 %v8164, %v8160
        %v8345 = vpack.c.b16 %v8169, %v8165
        %v8346 = vpack.c.b16 %v8170, %v8166
        %v8347 = vpack.c.b16 %v8171, %v8167
        %v8348 = vpack.c.b16 %v8172, %v8168
        %v8349 = vpack.c.b16 %v8177, %v8173
        %v8350 = vpack.c.b16 %v8178, %v8174
        %v8351 = vpack.c.b16 %v8179, %v8175
        %v8352 = vpack.c.b16 %v8180, %v8176
        %v8353 = vpack.c.b16 %v8185, %v8181
        %v8354 = vpack.c.b16 %v8186, %v8182
        %v8355 = vpack.c.b16 %v8187, %v8183
        %v8356 = vpack.c.b16 %v8188, %v8184
        %v8357 = vpack.c.b16 %v8193, %v8189
        %v8358 = vpack.c.b16 %v8194, %v8190
        %v8359 = vpack.c.b16 %v8195, %v8191
        %v8360 = vpack.c.b16 %v8196, %v8192
        %v8361 = vpack.c.b16 %v8201, %v8197
        %v8362 = vpack.c.b16 %v8202, %v8198
        %v8363 = vpack.c.b16 %v8203, %v8199
        %v8364 = vpack.c.b16 %v8204, %v8200
        %v8365 = vpack.c.b16 %v8209, %v8205
        %v8366 = vpack.c.b16 %v8210, %v8206
        %v8367 = vpack.c.b16 %v8211, %v8207
        %v8368 = vpack.c.b16 %v8212, %v8208
        %v8369 = vpack.c.b16 %v8217, %v8213
        %v8370 = vpack.c.b16 %v8218, %v8214
        %v8371 = vpack.c.b16 %v8219, %v8215
        %v8372 = vpack.c.b16 %v8220, %v8216
        %v8373 = vpack.c.b16 %v8225, %v8221
        %v8374 = vpack.c.b16 %v8226, %v8222
        %v8375 = vpack.c.b16 %v8227, %v8223
        %v8376 = vpack.c.b16 %v8228, %v8224
        %v8377 = vpack.c.b16 %v8233, %v8229
        %v8378 = vpack.c.b16 %v8234, %v8230
        %v8379 = vpack.c.b16 %v8235, %v8231
        %v8380 = vpack.c.b16 %v8236, %v8232
        %v8381 = vpack.c.b16 %v8241, %v8237
        %v8382 = vpack.c.b16 %v8242, %v8238
        %v8383 = vpack.c.b16 %v8243, %v8239
        %v8384 = vpack.c.b16 %v8244, %v8240
        %v8385 = vpack.c.b16 %v8249, %v8245
        %v8386 = vpack.c.b16 %v8250, %v8246
        %v8387 = vpack.c.b16 %v8251, %v8247
        %v8388 = vpack.c.b16 %v8252, %v8248
        %v8389 = vpack.c.b16 %v8257, %v8253
        %v8390 = vpack.c.b16 %v8258, %v8254
        %v8391 = vpack.c.b16 %v8259, %v8255
        %v8392 = vpack.c.b16 %v8260, %v8256
        %v8393 = vpack.c.b16 %v8265, %v8261
        %v8394 = vpack.c.b16 %v8266, %v8262
        %v8395 = vpack.c.b16 %v8267, %v8263
        %v8396 = vpack.c.b16 %v8268, %v8264
        %8525 = vmatprep.subr.bf16.mxu0 %v8298
        %8526 = vmatpush1.bf16.msra.mxu0 %v8297
        %8527 = vmatprep.subr.bf16.mxu0 %v8294
        %8528 = vmatpush1.bf16.msra.mxu0 %v8293
        %8529 = vmatprep.subr.bf16.mxu0 %v8290
        %8530 = vmatpush1.bf16.msra.mxu0 %v8289
        %8531 = vmatprep.subr.bf16.mxu0 %v8286
        %8532 = vmatpush1.bf16.msra.mxu0 %v8285
        %8533 = vmatprep.subr.bf16.mxu0 %v8282
        %8534 = vmatpush1.bf16.msra.mxu0 %v8281
        %8535 = vmatprep.subr.bf16.mxu0 %v8278
        %8536 = vmatpush1.bf16.msra.mxu0 %v8277
        %8537 = vmatprep.subr.bf16.mxu0 %v8274
        %8538 = vmatpush1.bf16.msra.mxu0 %v8273
        %8539 = vmatprep.subr.bf16.mxu0 %v8270
        %8540 = vmatpush1.bf16.msra.mxu0 %v8269
        %8541 = vmatprep.subr.bf16.mxu0 %v8330
        %8542 = vmatpush2.bf16.msra.mxu0 %v8329
        %8543 = vmatprep.subr.bf16.mxu0 %v8326
        %8544 = vmatpush2.bf16.msra.mxu0 %v8325
        %8545 = vmatprep.subr.bf16.mxu0 %v8322
        %8546 = vmatpush2.bf16.msra.mxu0 %v8321
        %8547 = vmatprep.subr.bf16.mxu0 %v8318
        %8548 = vmatpush2.bf16.msra.mxu0 %v8317
        %8549 = vmatprep.subr.bf16.mxu0 %v8314
        %8550 = vmatpush2.bf16.msra.mxu0 %v8313
        %8551 = vmatprep.subr.bf16.mxu0 %v8310
        %8552 = vmatpush2.bf16.msra.mxu0 %v8309
        %8553 = vmatprep.subr.bf16.mxu0 %v8306
        %8554 = vmatpush2.bf16.msra.mxu0 %v8305
        %8555 = vmatprep.subr.bf16.mxu0 %v8302
        %8556 = vmatpush2.bf16.msra.mxu0 %v8301
        %8557 = vmatprep.mubr.bf16.mxu0 %v7703
        %8558 = vmatmul.mubr.bf16.gmra.mxu0 %v7702
        %v8559 = vpop.f32.mrf.mxu0
        %v8560 = vadd.f32 %v7868, %v8559
        %v8561 = vpop.f32.mrf.mxu0
        %v8562 = vadd.f32 %v7872, %v8561
        %v8563 = vpop.f32.mrf.mxu0
        %v8564 = vadd.f32 %v7868, %v8563
        %v8565 = vpop.f32.mrf.mxu0
        %v8566 = vadd.f32 %v7872, %v8565
        %8567 = vmatprep.mubr.bf16.mxu0 %v7707
        %8568 = vmatmul.mubr.bf16.gmra.mxu0 %v7706
        %v8569 = vpop.f32.mrf.mxu0
        %v8570 = vadd.f32 %v7868, %v8569
        %v8571 = vpop.f32.mrf.mxu0
        %v8572 = vadd.f32 %v7872, %v8571
        %v8573 = vpop.f32.mrf.mxu0
        %v8574 = vadd.f32 %v7868, %v8573
        %v8575 = vpop.f32.mrf.mxu0
        %v8576 = vadd.f32 %v7872, %v8575
        %8577 = vmatprep.mubr.bf16.mxu0 %v7711
        %8578 = vmatmul.mubr.bf16.gmra.mxu0 %v7710
        %v8579 = vpop.f32.mrf.mxu0
        %v8580 = vadd.f32 %v7868, %v8579
        %v8581 = vpop.f32.mrf.mxu0
        %v8582 = vadd.f32 %v7872, %v8581
        %v8583 = vpop.f32.mrf.mxu0
        %v8584 = vadd.f32 %v7868, %v8583
        %v8585 = vpop.f32.mrf.mxu0
        %v8586 = vadd.f32 %v7872, %v8585
        %8587 = vmatprep.mubr.bf16.mxu0 %v7715
        %8588 = vmatmul.mubr.bf16.gmra.mxu0 %v7714
        %v8589 = vpop.f32.mrf.mxu0
        %v8590 = vadd.f32 %v7868, %v8589
        %v8591 = vpop.f32.mrf.mxu0
        %v8592 = vadd.f32 %v7872, %v8591
        %v8593 = vpop.f32.mrf.mxu0
        %v8594 = vadd.f32 %v7868, %v8593
        %v8595 = vpop.f32.mrf.mxu0
        %v8596 = vadd.f32 %v7872, %v8595
        %8597 = vmatprep.mubr.bf16.mxu0 %v7719
        %8598 = vmatmul.mubr.bf16.gmra.mxu0 %v7718
        %v8599 = vpop.f32.mrf.mxu0
        %v8600 = vadd.f32 %v7868, %v8599
        %v8601 = vpop.f32.mrf.mxu0
        %v8602 = vadd.f32 %v7872, %v8601
        %v8603 = vpop.f32.mrf.mxu0
        %v8604 = vadd.f32 %v7868, %v8603
        %v8605 = vpop.f32.mrf.mxu0
        %v8606 = vadd.f32 %v7872, %v8605
        %8607 = vmatprep.mubr.bf16.mxu0 %v7723
        %8608 = vmatmul.mubr.bf16.gmra.mxu0 %v7722
        %v8609 = vpop.f32.mrf.mxu0
        %v8610 = vadd.f32 %v7868, %v8609
        %v8611 = vpop.f32.mrf.mxu0
        %v8612 = vadd.f32 %v7872, %v8611
        %v8613 = vpop.f32.mrf.mxu0
        %v8614 = vadd.f32 %v7868, %v8613
        %v8615 = vpop.f32.mrf.mxu0
        %v8616 = vadd.f32 %v7872, %v8615
        %8617 = vmatprep.mubr.bf16.mxu0 %v7727
        %8618 = vmatmul.mubr.bf16.gmra.mxu0 %v7726
        %v8619 = vpop.f32.mrf.mxu0
        %v8620 = vadd.f32 %v7868, %v8619
        %v8621 = vpop.f32.mrf.mxu0
        %v8622 = vadd.f32 %v7872, %v8621
        %v8623 = vpop.f32.mrf.mxu0
        %v8624 = vadd.f32 %v7868, %v8623
        %v8625 = vpop.f32.mrf.mxu0
        %v8626 = vadd.f32 %v7872, %v8625
        %8627 = vmatprep.mubr.bf16.mxu0 %v7731
        %8628 = vmatmul.mubr.bf16.gmra.mxu0 %v7730
        %v8629 = vpop.f32.mrf.mxu0
        %v8630 = vadd.f32 %v7868, %v8629
        %v8631 = vpop.f32.mrf.mxu0
        %v8632 = vadd.f32 %v7872, %v8631
        %v8633 = vpop.f32.mrf.mxu0
        %v8634 = vadd.f32 %v7868, %v8633
        %v8635 = vpop.f32.mrf.mxu0
        %v8636 = vadd.f32 %v7872, %v8635
        %8637 = vdwg.mxu0
        %8638 = vmatprep.subr.bf16.mxu0 %v8362
        %8639 = vmatpush1.bf16.msra.mxu0 %v8361
        %8640 = vmatprep.subr.bf16.mxu0 %v8358
        %8641 = vmatpush1.bf16.msra.mxu0 %v8357
        %8642 = vmatprep.subr.bf16.mxu0 %v8354
        %8643 = vmatpush1.bf16.msra.mxu0 %v8353
        %8644 = vmatprep.subr.bf16.mxu0 %v8350
        %8645 = vmatpush1.bf16.msra.mxu0 %v8349
        %8646 = vmatprep.subr.bf16.mxu0 %v8346
        %8647 = vmatpush1.bf16.msra.mxu0 %v8345
        %8648 = vmatprep.subr.bf16.mxu0 %v8342
        %8649 = vmatpush1.bf16.msra.mxu0 %v8341
        %8650 = vmatprep.subr.bf16.mxu0 %v8338
        %8651 = vmatpush1.bf16.msra.mxu0 %v8337
        %8652 = vmatprep.subr.bf16.mxu0 %v8334
        %8653 = vmatpush1.bf16.msra.mxu0 %v8333
        %8654 = vmatprep.subr.bf16.mxu0 %v8394
        %8655 = vmatpush2.bf16.msra.mxu0 %v8393
        %8656 = vmatprep.subr.bf16.mxu0 %v8390
        %8657 = vmatpush2.bf16.msra.mxu0 %v8389
        %8658 = vmatprep.subr.bf16.mxu0 %v8386
        %8659 = vmatpush2.bf16.msra.mxu0 %v8385
        %8660 = vmatprep.subr.bf16.mxu0 %v8382
        %8661 = vmatpush2.bf16.msra.mxu0 %v8381
        %8662 = vmatprep.subr.bf16.mxu0 %v8378
        %8663 = vmatpush2.bf16.msra.mxu0 %v8377
        %8664 = vmatprep.subr.bf16.mxu0 %v8374
        %8665 = vmatpush2.bf16.msra.mxu0 %v8373
        %8666 = vmatprep.subr.bf16.mxu0 %v8370
        %8667 = vmatpush2.bf16.msra.mxu0 %v8369
        %8668 = vmatprep.subr.bf16.mxu0 %v8366
        %8669 = vmatpush2.bf16.msra.mxu0 %v8365
        %8670 = vmatprep.mubr.bf16.mxu0 %v7705
        %8671 = vmatmul.mubr.bf16.gmra.mxu0 %v7704
        %v8672 = vpop.f32.mrf.mxu0
        %v8673 = vadd.f32 %v8560, %v8672
        %v8674 = vpop.f32.mrf.mxu0
        %v8675 = vadd.f32 %v8562, %v8674
        %v8676 = vpop.f32.mrf.mxu0
        %v8677 = vadd.f32 %v8564, %v8676
        %v8678 = vpop.f32.mrf.mxu0
        %v8679 = vadd.f32 %v8566, %v8678
        %8680 = vmatprep.mubr.bf16.mxu0 %v7709
        %8681 = vmatmul.mubr.bf16.gmra.mxu0 %v7708
        %v8682 = vpop.f32.mrf.mxu0
        %v8683 = vadd.f32 %v8570, %v8682
        %v8684 = vpop.f32.mrf.mxu0
        %v8685 = vadd.f32 %v8572, %v8684
        %v8686 = vpop.f32.mrf.mxu0
        %v8687 = vadd.f32 %v8574, %v8686
        %v8688 = vpop.f32.mrf.mxu0
        %v8689 = vadd.f32 %v8576, %v8688
        %8690 = vmatprep.mubr.bf16.mxu0 %v7713
        %8691 = vmatmul.mubr.bf16.gmra.mxu0 %v7712
        %v8692 = vpop.f32.mrf.mxu0
        %v8693 = vadd.f32 %v8580, %v8692
        %v8694 = vpop.f32.mrf.mxu0
        %v8695 = vadd.f32 %v8582, %v8694
        %v8696 = vpop.f32.mrf.mxu0
        %v8697 = vadd.f32 %v8584, %v8696
        %v8698 = vpop.f32.mrf.mxu0
        %v8699 = vadd.f32 %v8586, %v8698
        %8700 = vmatprep.mubr.bf16.mxu0 %v7717
        %8701 = vmatmul.mubr.bf16.gmra.mxu0 %v7716
        %v8702 = vpop.f32.mrf.mxu0
        %v8703 = vadd.f32 %v8590, %v8702
        %v8704 = vpop.f32.mrf.mxu0
        %v8705 = vadd.f32 %v8592, %v8704
        %v8706 = vpop.f32.mrf.mxu0
        %v8707 = vadd.f32 %v8594, %v8706
        %v8708 = vpop.f32.mrf.mxu0
        %v8709 = vadd.f32 %v8596, %v8708
        %8710 = vmatprep.mubr.bf16.mxu0 %v7721
        %8711 = vmatmul.mubr.bf16.gmra.mxu0 %v7720
        %v8712 = vpop.f32.mrf.mxu0
        %v8713 = vadd.f32 %v8600, %v8712
        %v8714 = vpop.f32.mrf.mxu0
        %v8715 = vadd.f32 %v8602, %v8714
        %v8716 = vpop.f32.mrf.mxu0
        %v8717 = vadd.f32 %v8604, %v8716
        %v8718 = vpop.f32.mrf.mxu0
        %v8719 = vadd.f32 %v8606, %v8718
        %8720 = vmatprep.mubr.bf16.mxu0 %v7725
        %8721 = vmatmul.mubr.bf16.gmra.mxu0 %v7724
        %v8722 = vpop.f32.mrf.mxu0
        %v8723 = vadd.f32 %v8610, %v8722
        %v8724 = vpop.f32.mrf.mxu0
        %v8725 = vadd.f32 %v8612, %v8724
        %v8726 = vpop.f32.mrf.mxu0
        %v8727 = vadd.f32 %v8614, %v8726
        %v8728 = vpop.f32.mrf.mxu0
        %v8729 = vadd.f32 %v8616, %v8728
        %8730 = vmatprep.mubr.bf16.mxu0 %v7729
        %8731 = vmatmul.mubr.bf16.gmra.mxu0 %v7728
        %v8732 = vpop.f32.mrf.mxu0
        %v8733 = vadd.f32 %v8620, %v8732
        %v8734 = vpop.f32.mrf.mxu0
        %v8735 = vadd.f32 %v8622, %v8734
        %v8736 = vpop.f32.mrf.mxu0
        %v8737 = vadd.f32 %v8624, %v8736
        %v8738 = vpop.f32.mrf.mxu0
        %v8739 = vadd.f32 %v8626, %v8738
        %8740 = vmatprep.mubr.bf16.mxu0 %v7733
        %8741 = vmatmul.mubr.bf16.gmra.mxu0 %v7732
        %v8742 = vpop.f32.mrf.mxu0
        %v8743 = vadd.f32 %v8630, %v8742
        %v8744 = vpop.f32.mrf.mxu0
        %v8745 = vadd.f32 %v8632, %v8744
        %v8746 = vpop.f32.mrf.mxu0
        %v8747 = vadd.f32 %v8634, %v8746
        %v8748 = vpop.f32.mrf.mxu0
        %v8749 = vadd.f32 %v8636, %v8748
        %8750 = vdwg.mxu0
        %8751 = vmatprep.subr.bf16.mxu0 %v8300
        %8752 = vmatpush1.bf16.msra.mxu0 %v8299
        %8753 = vmatprep.subr.bf16.mxu0 %v8296
        %8754 = vmatpush1.bf16.msra.mxu0 %v8295
        %8755 = vmatprep.subr.bf16.mxu0 %v8292
        %8756 = vmatpush1.bf16.msra.mxu0 %v8291
        %8757 = vmatprep.subr.bf16.mxu0 %v8288
        %8758 = vmatpush1.bf16.msra.mxu0 %v8287
        %8759 = vmatprep.subr.bf16.mxu0 %v8284
        %8760 = vmatpush1.bf16.msra.mxu0 %v8283
        %8761 = vmatprep.subr.bf16.mxu0 %v8280
        %8762 = vmatpush1.bf16.msra.mxu0 %v8279
        %8763 = vmatprep.subr.bf16.mxu0 %v8276
        %8764 = vmatpush1.bf16.msra.mxu0 %v8275
        %8765 = vmatprep.subr.bf16.mxu0 %v8272
        %8766 = vmatpush1.bf16.msra.mxu0 %v8271
        %8767 = vmatprep.subr.bf16.mxu0 %v8332
        %8768 = vmatpush2.bf16.msra.mxu0 %v8331
        %8769 = vmatprep.subr.bf16.mxu0 %v8328
        %8770 = vmatpush2.bf16.msra.mxu0 %v8327
        %8771 = vmatprep.subr.bf16.mxu0 %v8324
        %8772 = vmatpush2.bf16.msra.mxu0 %v8323
        %8773 = vmatprep.subr.bf16.mxu0 %v8320
        %8774 = vmatpush2.bf16.msra.mxu0 %v8319
        %8775 = vmatprep.subr.bf16.mxu0 %v8316
        %8776 = vmatpush2.bf16.msra.mxu0 %v8315
        %8777 = vmatprep.subr.bf16.mxu0 %v8312
        %8778 = vmatpush2.bf16.msra.mxu0 %v8311
        %8779 = vmatprep.subr.bf16.mxu0 %v8308
        %8780 = vmatpush2.bf16.msra.mxu0 %v8307
        %8781 = vmatprep.subr.bf16.mxu0 %v8304
        %8782 = vmatpush2.bf16.msra.mxu0 %v8303
        %8783 = vmatprep.mubr.bf16.mxu0 %v7703
        %8784 = vmatmul.mubr.bf16.gmra.mxu0 %v7702
        %v8785 = vpop.f32.mrf.mxu0
        %v8786 = vadd.f32 %v7876, %v8785
        %v8787 = vpop.f32.mrf.mxu0
        %v8788 = vadd.f32 %v7880, %v8787
        %v8789 = vpop.f32.mrf.mxu0
        %v8790 = vadd.f32 %v7876, %v8789
        %v8791 = vpop.f32.mrf.mxu0
        %v8792 = vadd.f32 %v7880, %v8791
        %8793 = vmatprep.mubr.bf16.mxu0 %v7707
        %8794 = vmatmul.mubr.bf16.gmra.mxu0 %v7706
        %v8795 = vpop.f32.mrf.mxu0
        %v8796 = vadd.f32 %v7876, %v8795
        %v8797 = vpop.f32.mrf.mxu0
        %v8798 = vadd.f32 %v7880, %v8797
        %v8799 = vpop.f32.mrf.mxu0
        %v8800 = vadd.f32 %v7876, %v8799
        %v8801 = vpop.f32.mrf.mxu0
        %v8802 = vadd.f32 %v7880, %v8801
        %8803 = vmatprep.mubr.bf16.mxu0 %v7711
        %8804 = vmatmul.mubr.bf16.gmra.mxu0 %v7710
        %v8805 = vpop.f32.mrf.mxu0
        %v8806 = vadd.f32 %v7876, %v8805
        %v8807 = vpop.f32.mrf.mxu0
        %v8808 = vadd.f32 %v7880, %v8807
        %v8809 = vpop.f32.mrf.mxu0
        %v8810 = vadd.f32 %v7876, %v8809
        %v8811 = vpop.f32.mrf.mxu0
        %v8812 = vadd.f32 %v7880, %v8811
        %8813 = vmatprep.mubr.bf16.mxu0 %v7715
        %8814 = vmatmul.mubr.bf16.gmra.mxu0 %v7714
        %v8815 = vpop.f32.mrf.mxu0
        %v8816 = vadd.f32 %v7876, %v8815
        %v8817 = vpop.f32.mrf.mxu0
        %v8818 = vadd.f32 %v7880, %v8817
        %v8819 = vpop.f32.mrf.mxu0
        %v8820 = vadd.f32 %v7876, %v8819
        %v8821 = vpop.f32.mrf.mxu0
        %v8822 = vadd.f32 %v7880, %v8821
        %8823 = vmatprep.mubr.bf16.mxu0 %v7719
        %8824 = vmatmul.mubr.bf16.gmra.mxu0 %v7718
        %v8825 = vpop.f32.mrf.mxu0
        %v8826 = vadd.f32 %v7876, %v8825
        %v8827 = vpop.f32.mrf.mxu0
        %v8828 = vadd.f32 %v7880, %v8827
        %v8829 = vpop.f32.mrf.mxu0
        %v8830 = vadd.f32 %v7876, %v8829
        %v8831 = vpop.f32.mrf.mxu0
        %v8832 = vadd.f32 %v7880, %v8831
        %8833 = vmatprep.mubr.bf16.mxu0 %v7723
        %8834 = vmatmul.mubr.bf16.gmra.mxu0 %v7722
        %v8835 = vpop.f32.mrf.mxu0
        %v8836 = vadd.f32 %v7876, %v8835
        %v8837 = vpop.f32.mrf.mxu0
        %v8838 = vadd.f32 %v7880, %v8837
        %v8839 = vpop.f32.mrf.mxu0
        %v8840 = vadd.f32 %v7876, %v8839
        %v8841 = vpop.f32.mrf.mxu0
        %v8842 = vadd.f32 %v7880, %v8841
        %8843 = vmatprep.mubr.bf16.mxu0 %v7727
        %8844 = vmatmul.mubr.bf16.gmra.mxu0 %v7726
        %v8845 = vpop.f32.mrf.mxu0
        %v8846 = vadd.f32 %v7876, %v8845
        %v8847 = vpop.f32.mrf.mxu0
        %v8848 = vadd.f32 %v7880, %v8847
        %v8849 = vpop.f32.mrf.mxu0
        %v8850 = vadd.f32 %v7876, %v8849
        %v8851 = vpop.f32.mrf.mxu0
        %v8852 = vadd.f32 %v7880, %v8851
        %8853 = vmatprep.mubr.bf16.mxu0 %v7731
        %8854 = vmatmul.mubr.bf16.gmra.mxu0 %v7730
        %v8855 = vpop.f32.mrf.mxu0
        %v8856 = vadd.f32 %v7876, %v8855
        %v8857 = vpop.f32.mrf.mxu0
        %v8858 = vadd.f32 %v7880, %v8857
        %v8859 = vpop.f32.mrf.mxu0
        %v8860 = vadd.f32 %v7876, %v8859
        %v8861 = vpop.f32.mrf.mxu0
        %v8862 = vadd.f32 %v7880, %v8861
        %8863 = vdwg.mxu0
        %8864 = vmatprep.subr.bf16.mxu0 %v8364
        %8865 = vmatpush1.bf16.msra.mxu0 %v8363
        %8866 = vmatprep.subr.bf16.mxu0 %v8360
        %8867 = vmatpush1.bf16.msra.mxu0 %v8359
        %8868 = vmatprep.subr.bf16.mxu0 %v8356
        %8869 = vmatpush1.bf16.msra.mxu0 %v8355
        %8870 = vmatprep.subr.bf16.mxu0 %v8352
        %8871 = vmatpush1.bf16.msra.mxu0 %v8351
        %8872 = vmatprep.subr.bf16.mxu0 %v8348
        %8873 = vmatpush1.bf16.msra.mxu0 %v8347
        %8874 = vmatprep.subr.bf16.mxu0 %v8344
        %8875 = vmatpush1.bf16.msra.mxu0 %v8343
        %8876 = vmatprep.subr.bf16.mxu0 %v8340
        %8877 = vmatpush1.bf16.msra.mxu0 %v8339
        %8878 = vmatprep.subr.bf16.mxu0 %v8336
        %8879 = vmatpush1.bf16.msra.mxu0 %v8335
        %8880 = vmatprep.subr.bf16.mxu0 %v8396
        %8881 = vmatpush2.bf16.msra.mxu0 %v8395
        %8882 = vmatprep.subr.bf16.mxu0 %v8392
        %8883 = vmatpush2.bf16.msra.mxu0 %v8391
        %8884 = vmatprep.subr.bf16.mxu0 %v8388
        %8885 = vmatpush2.bf16.msra.mxu0 %v8387
        %8886 = vmatprep.subr.bf16.mxu0 %v8384
        %8887 = vmatpush2.bf16.msra.mxu0 %v8383
        %8888 = vmatprep.subr.bf16.mxu0 %v8380
        %8889 = vmatpush2.bf16.msra.mxu0 %v8379
        %8890 = vmatprep.subr.bf16.mxu0 %v8376
        %8891 = vmatpush2.bf16.msra.mxu0 %v8375
        %8892 = vmatprep.subr.bf16.mxu0 %v8372
        %8893 = vmatpush2.bf16.msra.mxu0 %v8371
        %8894 = vmatprep.subr.bf16.mxu0 %v8368
        %8895 = vmatpush2.bf16.msra.mxu0 %v8367
        %8896 = vmatprep.mubr.bf16.mxu0 %v7705
        %8897 = vmatmul.mubr.bf16.gmra.mxu0 %v7704
        %v8898 = vpop.f32.mrf.mxu0
        %v8899 = vadd.f32 %v8786, %v8898
        %v8900 = vpop.f32.mrf.mxu0
        %v8901 = vadd.f32 %v8788, %v8900
        %v8902 = vpop.f32.mrf.mxu0
        %v8903 = vadd.f32 %v8790, %v8902
        %v8904 = vpop.f32.mrf.mxu0
        %v8905 = vadd.f32 %v8792, %v8904
        %8906 = vmatprep.mubr.bf16.mxu0 %v7709
        %8907 = vmatmul.mubr.bf16.gmra.mxu0 %v7708
        %v8908 = vpop.f32.mrf.mxu0
        %v8909 = vadd.f32 %v8796, %v8908
        %v8910 = vpop.f32.mrf.mxu0
        %v8911 = vadd.f32 %v8798, %v8910
        %v8912 = vpop.f32.mrf.mxu0
        %v8913 = vadd.f32 %v8800, %v8912
        %v8914 = vpop.f32.mrf.mxu0
        %v8915 = vadd.f32 %v8802, %v8914
        %8916 = vmatprep.mubr.bf16.mxu0 %v7713
        %8917 = vmatmul.mubr.bf16.gmra.mxu0 %v7712
        %v8918 = vpop.f32.mrf.mxu0
        %v8919 = vadd.f32 %v8806, %v8918
        %v8920 = vpop.f32.mrf.mxu0
        %v8921 = vadd.f32 %v8808, %v8920
        %v8922 = vpop.f32.mrf.mxu0
        %v8923 = vadd.f32 %v8810, %v8922
        %v8924 = vpop.f32.mrf.mxu0
        %v8925 = vadd.f32 %v8812, %v8924
        %8926 = vmatprep.mubr.bf16.mxu0 %v7717
        %8927 = vmatmul.mubr.bf16.gmra.mxu0 %v7716
        %v8928 = vpop.f32.mrf.mxu0
        %v8929 = vadd.f32 %v8816, %v8928
        %v8930 = vpop.f32.mrf.mxu0
        %v8931 = vadd.f32 %v8818, %v8930
        %v8932 = vpop.f32.mrf.mxu0
        %v8933 = vadd.f32 %v8820, %v8932
        %v8934 = vpop.f32.mrf.mxu0
        %v8935 = vadd.f32 %v8822, %v8934
        %8936 = vmatprep.mubr.bf16.mxu0 %v7721
        %8937 = vmatmul.mubr.bf16.gmra.mxu0 %v7720
        %v8938 = vpop.f32.mrf.mxu0
        %v8939 = vadd.f32 %v8826, %v8938
        %v8940 = vpop.f32.mrf.mxu0
        %v8941 = vadd.f32 %v8828, %v8940
        %v8942 = vpop.f32.mrf.mxu0
        %v8943 = vadd.f32 %v8830, %v8942
        %v8944 = vpop.f32.mrf.mxu0
        %v8945 = vadd.f32 %v8832, %v8944
        %8946 = vmatprep.mubr.bf16.mxu0 %v7725
        %8947 = vmatmul.mubr.bf16.gmra.mxu0 %v7724
        %v8948 = vpop.f32.mrf.mxu0
        %v8949 = vadd.f32 %v8836, %v8948
        %v8950 = vpop.f32.mrf.mxu0
        %v8951 = vadd.f32 %v8838, %v8950
        %v8952 = vpop.f32.mrf.mxu0
        %v8953 = vadd.f32 %v8840, %v8952
        %v8954 = vpop.f32.mrf.mxu0
        %v8955 = vadd.f32 %v8842, %v8954
        %8956 = vmatprep.mubr.bf16.mxu0 %v7729
        %8957 = vmatmul.mubr.bf16.gmra.mxu0 %v7728
        %v8958 = vpop.f32.mrf.mxu0
        %v8959 = vadd.f32 %v8846, %v8958
        %v8960 = vpop.f32.mrf.mxu0
        %v8961 = vadd.f32 %v8848, %v8960
        %v8962 = vpop.f32.mrf.mxu0
        %v8963 = vadd.f32 %v8850, %v8962
        %v8964 = vpop.f32.mrf.mxu0
        %v8965 = vadd.f32 %v8852, %v8964
        %8966 = vmatprep.mubr.bf16.mxu0 %v7733
        %8967 = vmatmul.mubr.bf16.gmra.mxu0 %v7732
        %v8968 = vpop.f32.mrf.mxu0
        %v8969 = vadd.f32 %v8856, %v8968
        %v8970 = vpop.f32.mrf.mxu0
        %v8971 = vadd.f32 %v8858, %v8970
        %v8972 = vpop.f32.mrf.mxu0
        %v8973 = vadd.f32 %v8860, %v8972
        %v8974 = vpop.f32.mrf.mxu0
        %v8975 = vadd.f32 %v8862, %v8974
        %8976 = vdwg.mxu0
        %8977 = vst [vmem:[%s302] sm:$0xff] %v8673
        %8978 = vst [vmem:[%s302 + $0x8] sm:$0xff] %v8675
        %8979 = vst [vmem:[%s302 + $0x10] sm:$0xff] %v8899
        %8980 = vst [vmem:[%s302 + $0x18] sm:$0xff] %v8901
        %8981 = vst [vmem:[%s302 + $0x20] sm:$0xff] %v8677
        %8982 = vst [vmem:[%s302 + $0x28] sm:$0xff] %v8679
        %8983 = vst [vmem:[%s302 + $0x30] sm:$0xff] %v8903
        %8984 = vst [vmem:[%s302 + $0x38] sm:$0xff] %v8905
        %8985 = vst [vmem:[%s302 + $0x40] sm:$0xff] %v8683
        %8986 = vst [vmem:[%s302 + $0x48] sm:$0xff] %v8685
        %8987 = vst [vmem:[%s302 + $0x50] sm:$0xff] %v8909
        %8988 = vst [vmem:[%s302 + $0x58] sm:$0xff] %v8911
        %8989 = vst [vmem:[%s302 + $0x60] sm:$0xff] %v8687
        %8990 = vst [vmem:[%s302 + $0x68] sm:$0xff] %v8689
        %8991 = vst [vmem:[%s302 + $0x70] sm:$0xff] %v8913
        %8992 = vst [vmem:[%s302 + $0x78] sm:$0xff] %v8915
        %8993 = vst [vmem:[%s302 + $0x80] sm:$0xff] %v8693
        %8994 = vst [vmem:[%s302 + $0x88] sm:$0xff] %v8695
        %8995 = vst [vmem:[%s302 + $0x90] sm:$0xff] %v8919
        %8996 = vst [vmem:[%s302 + $0x98] sm:$0xff] %v8921
        %8997 = vst [vmem:[%s302 + $0xa0] sm:$0xff] %v8697
        %8998 = vst [vmem:[%s302 + $0xa8] sm:$0xff] %v8699
        %8999 = vst [vmem:[%s302 + $0xb0] sm:$0xff] %v8923
        %9000 = vst [vmem:[%s302 + $0xb8] sm:$0xff] %v8925
        %9001 = vst [vmem:[%s302 + $0xc0] sm:$0xff] %v8703
        %9002 = vst [vmem:[%s302 + $0xc8] sm:$0xff] %v8705
        %9003 = vst [vmem:[%s302 + $0xd0] sm:$0xff] %v8929
        %9004 = vst [vmem:[%s302 + $0xd8] sm:$0xff] %v8931
        %9005 = vst [vmem:[%s302 + $0xe0] sm:$0xff] %v8707
        %9006 = vst [vmem:[%s302 + $0xe8] sm:$0xff] %v8709
        %9007 = vst [vmem:[%s302 + $0xf0] sm:$0xff] %v8933
        %9008 = vst [vmem:[%s302 + $0xf8] sm:$0xff] %v8935
        %9009 = vst [vmem:[%s302 + $0x100] sm:$0xff] %v8713
        %9010 = vst [vmem:[%s302 + $0x108] sm:$0xff] %v8715
        %9011 = vst [vmem:[%s302 + $0x110] sm:$0xff] %v8939
        %9012 = vst [vmem:[%s302 + $0x118] sm:$0xff] %v8941
        %9013 = vst [vmem:[%s302 + $0x120] sm:$0xff] %v8717
        %9014 = vst [vmem:[%s302 + $0x128] sm:$0xff] %v8719
        %9015 = vst [vmem:[%s302 + $0x130] sm:$0xff] %v8943
        %9016 = vst [vmem:[%s302 + $0x138] sm:$0xff] %v8945
        %9017 = vst [vmem:[%s302 + $0x140] sm:$0xff] %v8723
        %9018 = vst [vmem:[%s302 + $0x148] sm:$0xff] %v8725
        %9019 = vst [vmem:[%s302 + $0x150] sm:$0xff] %v8949
        %9020 = vst [vmem:[%s302 + $0x158] sm:$0xff] %v8951
        %9021 = vst [vmem:[%s302 + $0x160] sm:$0xff] %v8727
        %9022 = vst [vmem:[%s302 + $0x168] sm:$0xff] %v8729
        %9023 = vst [vmem:[%s302 + $0x170] sm:$0xff] %v8953
        %9024 = vst [vmem:[%s302 + $0x178] sm:$0xff] %v8955
        %9025 = vst [vmem:[%s302 + $0x180] sm:$0xff] %v8733
        %9026 = vst [vmem:[%s302 + $0x188] sm:$0xff] %v8735
        %9027 = vst [vmem:[%s302 + $0x190] sm:$0xff] %v8959
        %9028 = vst [vmem:[%s302 + $0x198] sm:$0xff] %v8961
        %9029 = vst [vmem:[%s302 + $0x1a0] sm:$0xff] %v8737
        %9030 = vst [vmem:[%s302 + $0x1a8] sm:$0xff] %v8739
        %9031 = vst [vmem:[%s302 + $0x1b0] sm:$0xff] %v8963
        %9032 = vst [vmem:[%s302 + $0x1b8] sm:$0xff] %v8965
        %9033 = vst [vmem:[%s302 + $0x1c0] sm:$0xff] %v8743
        %9034 = vst [vmem:[%s302 + $0x1c8] sm:$0xff] %v8745
        %9035 = vst [vmem:[%s302 + $0x1d0] sm:$0xff] %v8969
        %9036 = vst [vmem:[%s302 + $0x1d8] sm:$0xff] %v8971
        %9037 = vst [vmem:[%s302 + $0x1e0] sm:$0xff] %v8747
        %9038 = vst [vmem:[%s302 + $0x1e8] sm:$0xff] %v8749
        %9039 = vst [vmem:[%s302 + $0x1f0] sm:$0xff] %v8973
        %9040 = vst [vmem:[%s302 + $0x1f8] sm:$0xff] %v8975
        %s9041 = sand.u32 %s144, 1
        %s9042 = scalar_lea.sflag [#allocation6], %s9041
        %s9043 = sand.u32 %s144, 1
        %s9044 = smul.addr %s9043, 512
        %s9045 = scalar_lea.vmem [#allocation13], %s9044
        // Predicated region
        $region61: #{initial_encoder_forward.1} parent=39 // pred_check
          %p9046 = pneg %p154
        $region62: #{initial_encoder_forward.1} parent=39 // pred_check_branch
          %9048 = sbr.rel (%p9046) target = $region64
        $region63: #{initial_encoder_forward.1} parent=39 // pred_region
          %s9050 = ssub.s32 8192, 8192
          %9051 = vsyncadd %s9042, %s9050
          %s9052 = smul.addr %s26, 64
          %s9053 = smul.addr %s9052, 128
          %s9054 = scalar_lea.hbm %s6, %s9053
          %s9055 = sshll.u32 %s9045, 4
          %s9056 = int_to_ptr.vmem [resolvable:$true] %s9055
          %9061 = dma.vmem_to_hbm [thread:$0]  %s9056, 8192, %s9054, %s9042, 512, 512, 32
        $region64: #{initial_encoder_forward.1} parent=39 // pred_fallthru
          _
      $region40: #{initial_encoder_forward.1} parent=5 // pred_fallthru
        _
      %p9062 = scmp.le.s32.totalorder 2, %s21
      // Predicated region
      $region65: #{initial_encoder_forward.1} parent=5 // pred_check
        %p9063 = pneg %p9062
      $region66: #{initial_encoder_forward.1} parent=5 // pred_check_branch
        %9065 = sbr.rel (%p9063) target = $region68
      $region67: #{initial_encoder_forward.1} parent=5 // pred_region
        %s9066 = ssub.s32 %s21, 2
        // Predicated region
        $region69: #{initial_encoder_forward.1} parent=67 // pred_check
          %p9067 = pneg %p160
        $region70: #{initial_encoder_forward.1} parent=67 // pred_check_branch
          %9069 = sbr.rel (%p9067) target = $region72
        $region71: #{initial_encoder_forward.1} parent=67 // pred_region
          %s9070 = sand.u32 %s145, 1
          %s9071 = scalar_lea.sflag [#allocation6], %s9070
          %s9072 = sand.u32 %s145, 1
          %s9073 = smul.addr %s9072, 512
          %s9074 = scalar_lea.vmem [#allocation13], %s9073
          %9075 = dma.done %s9071, 8192
        $region72: #{initial_encoder_forward.1} parent=67 // pred_fallthru
          _
      $region68: #{initial_encoder_forward.1} parent=5 // pred_fallthru
        _
    $region6: #{initial_encoder_forward.1} parent=1 // loop_footer
      %s25 = sadd.s32 1, %s21
    $region7: #{initial_encoder_forward.1} parent=1 // loop_footer_branch
      %20 = sbr.rel target = $region3
    $region8: #{initial_encoder_forward.1} parent=1 // loop_exit
      _
    %9076 = vsyncpa [#allocation5], 1
    %s9077 = scalar_lea.sflag [#allocation5], 1
    %9078 = vsyncpa %s9077, 1
    %9079 = vsyncpa [#allocation8], 1
    %9080 = vsyncpa [#allocation11], 1
    %9081 = vsyncpa [#allocation6], 1
    %s9082 = scalar_lea.sflag [#allocation6], 1
    %9083 = vsyncpa %s9082, 1

</llo_original>
